<compile_context>
chip_gen: v5e
topology: v5e:2x2
jax: 0.10.0
libtpu: 0.0.40
codegen_flags: <defaults>
</compile_context>

<pallas_src>
import math
import functools

import jax
import jax.numpy as jnp
from jax.experimental import pallas as pl
from jax.experimental.pallas import tpu as pltpu


# ----------------------------- in-kernel helpers -----------------------------

def _layernorm(x, g, b, eps=1e-5):
    """x: [R, E] f32; g, b: [1, E] f32."""
    mu = jnp.mean(x, axis=-1, keepdims=True)
    var = jnp.mean((x - mu) ** 2, axis=-1, keepdims=True)
    return (x - mu) * jax.lax.rsqrt(var + eps) * g + b


def _mha(xq_bf, xkv_bf, Nb, Tq, Tk, mask,
         wq_ref, bq_ref, wkv_ref, bkv_ref, wo_ref, bo_ref, num_head):
    """Fused-projection multi-head attention over a block of Nb batch rows.

    xq_bf : [Nb*Tq, E] bf16 (queries)    xkv_bf : [Nb*Tk, E] bf16 (keys/values)
    mask  : bool, broadcastable to [Nb, Tq, Tk]; False => weight forced to ~0
    wq_ref: [E, E] bf16   wkv_ref: [E, 2E] bf16 (k | v)   wo_ref: [E, E] bf16
    bq_ref: [1, E] f32    bkv_ref: [1, 2E] f32            bo_ref: [1, E] f32
    returns: [Nb*Tq, E] f32
    """
    E = xq_bf.shape[-1]
    dh = E // num_head
    scale = 1.0 / math.sqrt(dh)

    # Full-lane-width projections on the MXU (no per-head dh-wide dots).
    q = (jnp.dot(xq_bf, wq_ref[...], preferred_element_type=jnp.float32)
         + bq_ref[...]).astype(jnp.bfloat16)                       # [Nb*Tq, E]
    kv = (jnp.dot(xkv_bf, wkv_ref[...], preferred_element_type=jnp.float32)
          + bkv_ref[...]).astype(jnp.bfloat16)                     # [Nb*Tk, 2E]

    ctx = []
    for h in range(num_head):   # static unroll; only cheap static lane slices
        qh = q[:, h * dh:(h + 1) * dh].reshape(Nb, Tq, dh)
        kh = kv[:, h * dh:(h + 1) * dh].reshape(Nb, Tk, dh)
        vh = kv[:, E + h * dh:E + (h + 1) * dh].reshape(Nb, Tk, dh)

        s = jnp.einsum('bqd,bkd->bqk', qh, kh,
                       preferred_element_type=jnp.float32) * scale
        s = jnp.where(mask, s, -1e9)
        s = s - jnp.max(s, axis=-1, keepdims=True)
        p = jnp.exp(s)
        p = p * pl.reciprocal(jnp.sum(p, axis=-1, keepdims=True), approx=True)

        oh = jnp.einsum('bqk,bkd->bqd', p.astype(jnp.bfloat16), vh,
                        preferred_element_type=jnp.float32)
        ctx.append(oh.reshape(Nb * Tq, dh).astype(jnp.bfloat16))

    ctx = jnp.concatenate(ctx, axis=-1)                            # [Nb*Tq, E]
    # Single full-width output projection: concat_h(o_h) @ Wo.
    return jnp.dot(ctx, wo_ref[...], preferred_element_type=jnp.float32) + bo_ref[...]


# ------------------------------- Pallas kernel --------------------------------

def _decoder_layer_kernel(num_head,
                          x_ref, enc_ref, pad_ref,
                          wq_s_ref, bq_s_ref, wkv_s_ref, bkv_s_ref, wo_s_ref, bo_s_ref,
                          g1_ref, b1_ref,
                          wq_c_ref, bq_c_ref, wkv_c_ref, bkv_c_ref, wo_c_ref, bo_c_ref,
                          g2_ref, b2_ref,
                          w1_ref, b1m_ref, w2_ref, b2m_ref, g3_ref, b3_ref,
                          o_ref):
    Nb, T, E = x_ref.shape
    S = enc_ref.shape[1]

    x_bf = x_ref[...].reshape(Nb * T, E)        # bf16
    enc_bf = enc_ref[...].reshape(Nb * S, E)    # bf16

    # Causal decoder mask built in-kernel (identical per batch/head); only the
    # tiny encoder padding mask comes from HBM.
    row = jax.lax.broadcasted_iota(jnp.int32, (T, T), 0)   # query index
    col = jax.lax.broadcasted_iota(jnp.int32, (T, T), 1)   # key index
    causal = (col <= row)[None, :, :]                      # [1, T, T] bool
    pad_ok = pad_ref[...] != 0.0                           # [Nb, 1, S] bool

    # ---- self-attention block: LN(x + SelfAttn(x)) ----
    att = _mha(x_bf, x_bf, Nb, T, T, causal,
               wq_s_ref, bq_s_ref, wkv_s_ref, bkv_s_ref, wo_s_ref, bo_s_ref, num_head)
    h1 = _layernorm(x_bf.astype(jnp.float32) + att, g1_ref[...], b1_ref[...])

    # ---- cross-attention block: LN(x + CrossAttn(x, enc_out)) ----
    catt = _mha(h1.astype(jnp.bfloat16), enc_bf, Nb, T, S, pad_ok,
                wq_c_ref, bq_c_ref, wkv_c_ref, bkv_c_ref, wo_c_ref, bo_c_ref, num_head)
    h2 = _layernorm(h1 + catt, g2_ref[...], b2_ref[...])

    # ---- MLP block: LN(x + W2 relu(W1 x + b1) + b2) ----
    # TODO(synk): MLP class not provided in the assignment; Linear-ReLU-Linear assumed.
    hid = jnp.maximum(
        jnp.dot(h2.astype(jnp.bfloat16), w1_ref[...],
                preferred_element_type=jnp.float32) + b1m_ref[...], 0.0
    ).astype(jnp.bfloat16)
    m = jnp.dot(hid, w2_ref[...], preferred_element_type=jnp.float32) + b2m_ref[...]
    h3 = _layernorm(h2 + m, g3_ref[...], b3_ref[...])

    o_ref[...] = h3.astype(o_ref.dtype).reshape(Nb, T, E)


# ------------------------------- wrapper --------------------------------

_PARAM_ORDER = ('wq_s', 'bq_s', 'wkv_s', 'bkv_s', 'wo_s', 'bo_s', 'g1', 'b1',
                'wq_c', 'bq_c', 'wkv_c', 'bkv_c', 'wo_c', 'bo_c', 'g2', 'b2',
                'w1', 'b1m', 'w2', 'b2m', 'g3', 'b3')


def _pick_batch_block(N, T, S, E, M, budget_bytes=24 << 20):
    """Largest divisor of N that fits a conservative VMEM byte budget, keeps
    >=2 parallel grid steps when possible, and prefers 256-aligned Nb*T."""
    def block_bytes(nb):
        act = 2 * (nb * T * E * 2 * 2 + nb * S * E * 2 + nb * S * 4)     # I/O blocks, dbl-buffered
        inter = 4 * (4 * nb * T * E + nb * T * max(T, S) + nb * T * M)   # f32 intermediates
        return act + inter
    divisors = [d for d in range(1, N + 1) if N % d == 0]
    fits = [d for d in divisors if block_bytes(d) <= budget_bytes] or [1]
    if N >= 2:                                   # >=2 grid steps: v7x dual TC + pipelining
        multi = [d for d in fits if d <= N // 2]
        if multi:
            fits = multi
    aligned = [d for d in fits if (d * T) % 256 == 0]   # fill the 256-wide v6e/v7x MXU
    return max(aligned or fits)


def _weight_spec(shape, single_buffer):
    ndim = len(shape)
    idx = lambda n: (0,) * ndim
    if single_buffer:
        # Grid-invariant weights: no point double-buffering them.
        return pl.BlockSpec(shape, idx, pipeline_mode=pl.Buffered(1))
    return pl.BlockSpec(shape, idx)


def _layer_call(x, enc_out, enc_pad, p, num_head, nb, single_buffer_weights):
    """x: [N, T, E] bf16, enc_out: [N, S, E] bf16, enc_pad: [N, 1, S] f32."""
    N, T, E = x.shape
    S = enc_out.shape[1]
    params = [p[k] for k in _PARAM_ORDER]

    in_specs = [
        pl.BlockSpec((nb, T, E), lambda n: (n, 0, 0)),   # x block
        pl.BlockSpec((nb, S, E), lambda n: (n, 0, 0)),   # encoder output block
        pl.BlockSpec((nb, 1, S), lambda n: (n, 0, 0)),   # encoder pad mask block
    ] + [_weight_spec(w.shape, single_buffer_weights) for w in params]

    kernel = functools.partial(_decoder_layer_kernel, num_head)
    return pl.pallas_call(
        kernel,
        out_shape=jax.ShapeDtypeStruct((N, T, E), jnp.bfloat16),
        grid=(N // nb,),
        in_specs=in_specs,
        out_specs=pl.BlockSpec((nb, T, E), lambda n: (n, 0, 0)),
        compiler_params=pltpu.CompilerParams(
            dimension_semantics=("parallel",),           # independent batch blocks
            vmem_limit_bytes=32 * 1024 * 1024),          # fits v7x's 64 MiB VMEM
    )(x, enc_out, enc_pad, *params)


_SINGLE_BUFFER_WEIGHTS = [True]   # flipped off if this backend rejects Buffered(1)


def decoder_layer_pallas(x, enc_out, enc_pad, p, num_head, nb):
    if _SINGLE_BUFFER_WEIGHTS[0]:
        try:
            return _layer_call(x, enc_out, enc_pad, p, num_head, nb, True)
        except Exception:
            _SINGLE_BUFFER_WEIGHTS[0] = False
    return _layer_call(x, enc_out, enc_pad, p, num_head, nb, False)


# ------------------------- one-time weight preparation -------------------------

def prepare_params(params):
    """Split fused qkv Linears into (Wq, Wkv) and cast matmul weights to bf16.
    Called ONCE (hoisted out of the forward pass)."""
    E = params['token_emb'].shape[1]
    layers = []
    for p in params['layers']:
        def split(w, b):
            # fused Linear(E, 3E): columns ordered (q | k | v), head-major inside.
            return (w[:, :E].astype(jnp.bfloat16), b[:, :E],
                    w[:, E:].astype(jnp.bfloat16), b[:, E:])
        wq_s, bq_s, wkv_s, bkv_s = split(p['wqkv_s'], p['bqkv_s'])
        wq_c, bq_c, wkv_c, bkv_c = split(p['wqkv_c'], p['bqkv_c'])
        layers.append(dict(
            wq_s=wq_s, bq_s=bq_s, wkv_s=wkv_s, bkv_s=bkv_s,
            wo_s=p['wo_s'].astype(jnp.bfloat16), bo_s=p['bo_s'], g1=p['g1'], b1=p['b1'],
            wq_c=wq_c, bq_c=bq_c, wkv_c=wkv_c, bkv_c=bkv_c,
            wo_c=p['wo_c'].astype(jnp.bfloat16), bo_c=p['bo_c'], g2=p['g2'], b2=p['b2'],
            w1=p['w1'].astype(jnp.bfloat16), b1m=p['b1m'],
            w2=p['w2'].astype(jnp.bfloat16), b2m=p['b2m'], g3=p['g3'], b3=p['b3'],
        ))
    return dict(layers=layers, token_emb=params['token_emb'])


# ------------------------------- JAX glue --------------------------------

def pos_encoding(positions, emb_size, max_period=10000):
    """positions: [N, T] ints -> [N, T, emb_size] sinusoidal PE."""
    pos = positions.astype(jnp.float32)[..., None]                     # [N, T, 1]
    i = jnp.arange(emb_size // 2, dtype=jnp.float32)
    div = jnp.power(float(max_period), 2.0 * i / emb_size)             # [E/2]
    ang = pos / div                                                    # [N, T, E/2]
    pe = jnp.zeros(positions.shape + (emb_size,), jnp.float32)
    pe = pe.at[..., 0::2].set(jnp.sin(ang))
    pe = pe.at[..., 1::2].set(jnp.cos(ang))
    return pe


def decoder_forward(x_tokens, y, prepped, num_head, num_layers):
    """x_tokens: [N, T] int ids; y: dict(input=[N, S, E], mask=[N, S, 1])."""
    N, T = x_tokens.shape
    enc_out = y['input']
    S = enc_out.shape[1]
    E = prepped['token_emb'].shape[1]
    M = prepped['layers'][0]['w1'].shape[1]

    # PyTorch-layout masks ([N, key, query]) kept only for the output dict; the
    # kernel regenerates the causal mask in-kernel and only DMAs the tiny
    # encoder padding mask, transposed to [N, 1, S].
    dec_mask_kq = jnp.triu(jnp.ones((N, T, T), jnp.float32))
    cross_mask_kq = jnp.where((y['mask'][:, :, 0] == 0)[:, :, None],
                              0.0, jnp.ones((N, S, T), jnp.float32))
    enc_pad = jnp.transpose(y['mask'], (0, 2, 1))                      # [N, 1, S]

    positions = jnp.arange(T, dtype=x_tokens.dtype)[None, :] * jnp.ones_like(x_tokens)
    h = prepped['token_emb'][x_tokens] + pos_encoding(positions, E)

    # bf16 activation I/O across the pallas_call boundary (halves HBM traffic).
    h = h.astype(jnp.bfloat16)
    enc_bf = enc_out.astype(jnp.bfloat16)

    nb = _pick_batch_block(N, T, S, E, M)
    for l in range(num_layers):
        h = decoder_layer_pallas(h, enc_bf, enc_pad, prepped['layers'][l], num_head, nb)

    return {'input': h.astype(jnp.float32), 'decoder_mask': dec_mask_kq,
            'encoder_out': enc_out, 'encoder_mask': cross_mask_kq}


def init_params(key, emb_size, mlp_size, num_layers, vocab_size):
    E, M = emb_size, mlp_size

    def lin(k, din, dout, scale=0.02):
        kw, kb = jax.random.split(k)
        return (jax.random.normal(kw, (din, dout), jnp.float32) * scale,
                jax.random.normal(kb, (1, dout), jnp.float32) * scale)

    keys = jax.random.split(key, num_layers * 6 + 1)
    kit = iter(keys[:-1])
    layers = []
    for _ in range(num_layers):
        wqkv_s, bqkv_s = lin(next(kit), E, 3 * E)
        wo_s, bo_s = lin(next(kit), E, E)
        wqkv_c, bqkv_c = lin(next(kit), E, 3 * E)
        wo_c, bo_c = lin(next(kit), E, E)
        w1, b1m = lin(next(kit), E, M)
        w2, b2m = lin(next(kit), M, E)
        layers.append(dict(
            wqkv_s=wqkv_s, bqkv_s=bqkv_s, wo_s=wo_s, bo_s=bo_s,
            g1=jnp.ones((1, E), jnp.float32), b1=jnp.zeros((1, E), jnp.float32),
            wqkv_c=wqkv_c, bqkv_c=bqkv_c, wo_c=wo_c, bo_c=bo_c,
            g2=jnp.ones((1, E), jnp.float32), b2=jnp.zeros((1, E), jnp.float32),
            w1=w1, b1m=b1m, w2=w2, b2m=b2m,
            g3=jnp.ones((1, E), jnp.float32), b3=jnp.zeros((1, E), jnp.float32),
        ))
    token_emb = jax.random.normal(keys[-1], (vocab_size, E), jnp.float32) * 0.02
    return dict(layers=layers, token_emb=token_emb)


# --------------------------------- main ----------------------------------

if __name__ == "__main__":
    N, T, S = 4, 16, 16        # batch, decoder seq, encoder seq
    E, M = 128, 256            # emb_size (== in_size, lane-dense), mlp_size
    H, L, V = 4, 2, 50         # num_head, num_layers, vocab_size

    key = jax.random.PRNGKey(0)
    kx, ky, kp = jax.random.split(key, 3)

    x_tokens = jax.random.randint(kx, (N, T), 0, V)
    enc_out = jax.random.normal(ky, (N, S, E), jnp.float32)
    # encoder padding mask [N, S, 1]: batch 1 has its last 4 positions padded.
    enc_pad_mask = jnp.ones((N, S, 1), jnp.float32).at[1, S - 4:, :].set(0.0)

    params = init_params(kp, E, M, L, V)
    prepped = prepare_params(params)   # one-time weight prep, hoisted out of forward

    out = decoder_forward(x_tokens, {'input': enc_out, 'mask': enc_pad_mask},
                          prepped, num_head=H, num_layers=L)
    hidden = jax.block_until_ready(out['input'])

    assert hidden.shape == (N, T, E)
    assert bool(jnp.all(jnp.isfinite(hidden)))
    print("KERNEL_OK")
</pallas_src>

<mosaic_0001>
module attributes {stable_mosaic.version = 11 : i64} {
  func.func @_decoder_layer_kernel(%arg0: i32, %arg1: memref<2x16x128xbf16, #tpu.memory_space<vmem>>, %arg2: memref<2x16x128xbf16, #tpu.memory_space<vmem>>, %arg3: memref<2x1x16xf32, #tpu.memory_space<vmem>>, %arg4: memref<128x128xbf16, #tpu.memory_space<vmem>>, %arg5: memref<1x128xf32, #tpu.memory_space<vmem>>, %arg6: memref<128x256xbf16, #tpu.memory_space<vmem>>, %arg7: memref<1x256xf32, #tpu.memory_space<vmem>>, %arg8: memref<128x128xbf16, #tpu.memory_space<vmem>>, %arg9: memref<1x128xf32, #tpu.memory_space<vmem>>, %arg10: memref<1x128xf32, #tpu.memory_space<vmem>>, %arg11: memref<1x128xf32, #tpu.memory_space<vmem>>, %arg12: memref<128x128xbf16, #tpu.memory_space<vmem>>, %arg13: memref<1x128xf32, #tpu.memory_space<vmem>>, %arg14: memref<128x256xbf16, #tpu.memory_space<vmem>>, %arg15: memref<1x256xf32, #tpu.memory_space<vmem>>, %arg16: memref<128x128xbf16, #tpu.memory_space<vmem>>, %arg17: memref<1x128xf32, #tpu.memory_space<vmem>>, %arg18: memref<1x128xf32, #tpu.memory_space<vmem>>, %arg19: memref<1x128xf32, #tpu.memory_space<vmem>>, %arg20: memref<128x256xbf16, #tpu.memory_space<vmem>>, %arg21: memref<1x256xf32, #tpu.memory_space<vmem>>, %arg22: memref<256x128xbf16, #tpu.memory_space<vmem>>, %arg23: memref<1x128xf32, #tpu.memory_space<vmem>>, %arg24: memref<1x128xf32, #tpu.memory_space<vmem>>, %arg25: memref<1x128xf32, #tpu.memory_space<vmem>>, %arg26: memref<2x16x128xbf16, #tpu.memory_space<vmem>>) attributes {dimension_semantics = [#tpu.dimension_semantics<parallel>], iteration_bounds = array<i64: 2>, scalar_prefetch = 0 : i64, scratch_operands = 0 : i64, tpu.core_type = #tpu.core_type<tc>, window_params = [{transform_indices = @transform_0, window_bounds = array<i64: 2, 16, 128>}, {transform_indices = @transform_1, window_bounds = array<i64: 2, 16, 128>}, {transform_indices = @transform_2, window_bounds = array<i64: 2, 1, 16>}, {pipeline_mode = #tpu.pipeline_mode<synchronous>, transform_indices = @transform_3, window_bounds = array<i64: 128, 128>}, {pipeline_mode = #tpu.pipeline_mode<synchronous>, transform_indices = @transform_4, window_bounds = array<i64: 1, 128>}, {pipeline_mode = #tpu.pipeline_mode<synchronous>, transform_indices = @transform_5, window_bounds = array<i64: 128, 256>}, {pipeline_mode = #tpu.pipeline_mode<synchronous>, transform_indices = @transform_6, window_bounds = array<i64: 1, 256>}, {pipeline_mode = #tpu.pipeline_mode<synchronous>, transform_indices = @transform_7, window_bounds = array<i64: 128, 128>}, {pipeline_mode = #tpu.pipeline_mode<synchronous>, transform_indices = @transform_8, window_bounds = array<i64: 1, 128>}, {pipeline_mode = #tpu.pipeline_mode<synchronous>, transform_indices = @transform_9, window_bounds = array<i64: 1, 128>}, {pipeline_mode = #tpu.pipeline_mode<synchronous>, transform_indices = @transform_10, window_bounds = array<i64: 1, 128>}, {pipeline_mode = #tpu.pipeline_mode<synchronous>, transform_indices = @transform_11, window_bounds = array<i64: 128, 128>}, {pipeline_mode = #tpu.pipeline_mode<synchronous>, transform_indices = @transform_12, window_bounds = array<i64: 1, 128>}, {pipeline_mode = #tpu.pipeline_mode<synchronous>, transform_indices = @transform_13, window_bounds = array<i64: 128, 256>}, {pipeline_mode = #tpu.pipeline_mode<synchronous>, transform_indices = @transform_14, window_bounds = array<i64: 1, 256>}, {pipeline_mode = #tpu.pipeline_mode<synchronous>, transform_indices = @transform_15, window_bounds = array<i64: 128, 128>}, {pipeline_mode = #tpu.pipeline_mode<synchronous>, transform_indices = @transform_16, window_bounds = array<i64: 1, 128>}, {pipeline_mode = #tpu.pipeline_mode<synchronous>, transform_indices = @transform_17, window_bounds = array<i64: 1, 128>}, {pipeline_mode = #tpu.pipeline_mode<synchronous>, transform_indices = @transform_18, window_bounds = array<i64: 1, 128>}, {pipeline_mode = #tpu.pipeline_mode<synchronous>, transform_indices = @transform_19, window_bounds = array<i64: 128, 256>}, {pipeline_mode = #tpu.pipeline_mode<synchronous>, transform_indices = @transform_20, window_bounds = array<i64: 1, 256>}, {pipeline_mode = #tpu.pipeline_mode<synchronous>, transform_indices = @transform_21, window_bounds = array<i64: 256, 128>}, {pipeline_mode = #tpu.pipeline_mode<synchronous>, transform_indices = @transform_22, window_bounds = array<i64: 1, 128>}, {pipeline_mode = #tpu.pipeline_mode<synchronous>, transform_indices = @transform_23, window_bounds = array<i64: 1, 128>}, {pipeline_mode = #tpu.pipeline_mode<synchronous>, transform_indices = @transform_24, window_bounds = array<i64: 1, 128>}, {transform_indices = @transform_25, window_bounds = array<i64: 2, 16, 128>}]} {
    %c0 = arith.constant 0 : index
    %c0_0 = arith.constant 0 : index
    %c0_1 = arith.constant 0 : index
    %0 = vector.load %arg1[%c0, %c0_0, %c0_1] : memref<2x16x128xbf16, #tpu.memory_space<vmem>>, vector<2x16x128xbf16>
    %1 = vector.shape_cast %0 : vector<2x16x128xbf16> to vector<32x128xbf16>
    %c0_2 = arith.constant 0 : index
    %c0_3 = arith.constant 0 : index
    %c0_4 = arith.constant 0 : index
    %2 = vector.load %arg2[%c0_2, %c0_3, %c0_4] : memref<2x16x128xbf16, #tpu.memory_space<vmem>>, vector<2x16x128xbf16>
    %3 = vector.shape_cast %2 : vector<2x16x128xbf16> to vector<32x128xbf16>
    %4 = tpu.iota {dimensions = array<i32: 0>} : vector<16x16xi32>
    %5 = tpu.iota {dimensions = array<i32: 1>} : vector<16x16xi32>
    %6 = arith.cmpi sle, %5, %4 : vector<16x16xi32>
    %7 = vector.shape_cast %6 : vector<16x16xi1> to vector<1x16x16xi1>
    %c0_5 = arith.constant 0 : index
    %c0_6 = arith.constant 0 : index
    %c0_7 = arith.constant 0 : index
    %8 = vector.load %arg3[%c0_5, %c0_6, %c0_7] : memref<2x1x16xf32, #tpu.memory_space<vmem>>, vector<2x1x16xf32>
    %cst = arith.constant 0.000000e+00 : f32
    %9 = vector.broadcast %cst : f32 to vector<2x1x16xf32>
    %10 = arith.cmpf one, %8, %9 : vector<2x1x16xf32>
    %c0_8 = arith.constant 0 : index
    %c0_9 = arith.constant 0 : index
    %11 = vector.load %arg4[%c0_8, %c0_9] : memref<128x128xbf16, #tpu.memory_space<vmem>>, vector<128x128xbf16>
    %cst_10 = arith.constant dense<0.000000e+00> : vector<32x128xf32>
    %12 = tpu.matmul %1, %11, %cst_10 {dimension_numbers = #tpu.dot_dimension_numbers<[1], [0], [0], [1], [0, 0, 1, 1], [], []>} : vector<32x128xbf16>, vector<128x128xbf16>, vector<32x128xf32> -> vector<32x128xf32>
    %c0_11 = arith.constant 0 : index
    %c0_12 = arith.constant 0 : index
    %13 = vector.load %arg5[%c0_11, %c0_12] : memref<1x128xf32, #tpu.memory_space<vmem>>, vector<1x128xf32>
    %14 = vector.broadcast %13 : vector<1x128xf32> to vector<32x128xf32>
    %15 = arith.addf %12, %14 : vector<32x128xf32>
    %16 = arith.truncf %15 : vector<32x128xf32> to vector<32x128xbf16>
    %c0_13 = arith.constant 0 : index
    %c0_14 = arith.constant 0 : index
    %17 = vector.load %arg6[%c0_13, %c0_14] : memref<128x256xbf16, #tpu.memory_space<vmem>>, vector<128x256xbf16>
    %cst_15 = arith.constant dense<0.000000e+00> : vector<32x256xf32>
    %18 = tpu.matmul %1, %17, %cst_15 {dimension_numbers = #tpu.dot_dimension_numbers<[1], [0], [0], [1], [0, 0, 1, 1], [], []>} : vector<32x128xbf16>, vector<128x256xbf16>, vector<32x256xf32> -> vector<32x256xf32>
    %c0_16 = arith.constant 0 : index
    %c0_17 = arith.constant 0 : index
    %19 = vector.load %arg7[%c0_16, %c0_17] : memref<1x256xf32, #tpu.memory_space<vmem>>, vector<1x256xf32>
    %20 = vector.broadcast %19 : vector<1x256xf32> to vector<32x256xf32>
    %21 = arith.addf %18, %20 : vector<32x256xf32>
    %22 = arith.truncf %21 : vector<32x256xf32> to vector<32x256xbf16>
    %23 = vector.extract_strided_slice %16 {offsets = [0, 0], sizes = [32, 32], strides = [1, 1]} : vector<32x128xbf16> to vector<32x32xbf16>
    %24 = vector.shape_cast %23 : vector<32x32xbf16> to vector<2x16x32xbf16>
    %25 = vector.extract_strided_slice %22 {offsets = [0, 0], sizes = [32, 32], strides = [1, 1]} : vector<32x256xbf16> to vector<32x32xbf16>
    %26 = vector.shape_cast %25 : vector<32x32xbf16> to vector<2x16x32xbf16>
    %27 = vector.extract_strided_slice %22 {offsets = [0, 128], sizes = [32, 32], strides = [1, 1]} : vector<32x256xbf16> to vector<32x32xbf16>
    %28 = vector.shape_cast %27 : vector<32x32xbf16> to vector<2x16x32xbf16>
    "tpu.trace_start"() <{level = 10 : i32, message = "bqd,bkd->bqk"}> : () -> ()
    %cst_18 = arith.constant dense<0.000000e+00> : vector<2x16x16xf32>
    %29 = tpu.matmul %24, %26, %cst_18 {dimension_numbers = #tpu.dot_dimension_numbers<[2], [2], [1], [1], [0, 0, 0, 1, 1, 1], [0], [0]>} : vector<2x16x32xbf16>, vector<2x16x32xbf16>, vector<2x16x16xf32> -> vector<2x16x16xf32>
    "tpu.trace_stop"() : () -> ()
    %cst_19 = arith.constant 0.176776692 : f32
    %30 = vector.broadcast %cst_19 : f32 to vector<2x16x16xf32>
    %31 = arith.mulf %29, %30 : vector<2x16x16xf32>
    %cst_20 = arith.constant -1.000000e+09 : f32
    %32 = vector.shape_cast %7 : vector<1x16x16xi1> to vector<1x16x16xi1>
    %33 = vector.broadcast %32 : vector<1x16x16xi1> to vector<2x16x16xi1>
    %34 = vector.broadcast %cst_20 : f32 to vector<2x16x16xf32>
    %35 = arith.select %33, %31, %34 : vector<2x16x16xi1>, vector<2x16x16xf32>
    %cst_21 = arith.constant dense<0xFF800000> : vector<2x16xf32>
    %36 = vector.multi_reduction <maximumf>, %35, %cst_21 [2] : vector<2x16x16xf32> to vector<2x16xf32>
    %37 = vector.shape_cast %36 : vector<2x16xf32> to vector<2x16x1xf32>
    %38 = vector.broadcast %37 : vector<2x16x1xf32> to vector<2x16x16xf32>
    %39 = arith.subf %35, %38 : vector<2x16x16xf32>
    %40 = math.exp %39 : vector<2x16x16xf32>
    %cst_22 = arith.constant dense<0.000000e+00> : vector<2x16xf32>
    %41 = vector.multi_reduction <add>, %40, %cst_22 [2] : vector<2x16x16xf32> to vector<2x16xf32>
    %42 = vector.shape_cast %41 : vector<2x16xf32> to vector<2x16x1xf32>
    %43 = tpu.reciprocal %42 {approx = true} : vector<2x16x1xf32> -> vector<2x16x1xf32>
    %44 = vector.broadcast %43 : vector<2x16x1xf32> to vector<2x16x16xf32>
    %45 = arith.mulf %40, %44 : vector<2x16x16xf32>
    %46 = arith.truncf %45 : vector<2x16x16xf32> to vector<2x16x16xbf16>
    "tpu.trace_start"() <{level = 10 : i32, message = "bqk,bkd->bqd"}> : () -> ()
    %cst_23 = arith.constant dense<0.000000e+00> : vector<2x16x32xf32>
    %47 = tpu.matmul %46, %28, %cst_23 {dimension_numbers = #tpu.dot_dimension_numbers<[2], [1], [1], [2], [0, 0, 0, 1, 1, 2], [0], [0]>} : vector<2x16x16xbf16>, vector<2x16x32xbf16>, vector<2x16x32xf32> -> vector<2x16x32xf32>
    "tpu.trace_stop"() : () -> ()
    %48 = vector.shape_cast %47 : vector<2x16x32xf32> to vector<32x32xf32>
    %49 = arith.truncf %48 : vector<32x32xf32> to vector<32x32xbf16>
    %50 = vector.extract_strided_slice %16 {offsets = [0, 32], sizes = [32, 32], strides = [1, 1]} : vector<32x128xbf16> to vector<32x32xbf16>
    %51 = vector.shape_cast %50 : vector<32x32xbf16> to vector<2x16x32xbf16>
    %52 = vector.extract_strided_slice %22 {offsets = [0, 32], sizes = [32, 32], strides = [1, 1]} : vector<32x256xbf16> to vector<32x32xbf16>
    %53 = vector.shape_cast %52 : vector<32x32xbf16> to vector<2x16x32xbf16>
    %54 = vector.extract_strided_slice %22 {offsets = [0, 160], sizes = [32, 32], strides = [1, 1]} : vector<32x256xbf16> to vector<32x32xbf16>
    %55 = vector.shape_cast %54 : vector<32x32xbf16> to vector<2x16x32xbf16>
    "tpu.trace_start"() <{level = 10 : i32, message = "bqd,bkd->bqk"}> : () -> ()
    %cst_24 = arith.constant dense<0.000000e+00> : vector<2x16x16xf32>
    %56 = tpu.matmul %51, %53, %cst_24 {dimension_numbers = #tpu.dot_dimension_numbers<[2], [2], [1], [1], [0, 0, 0, 1, 1, 1], [0], [0]>} : vector<2x16x32xbf16>, vector<2x16x32xbf16>, vector<2x16x16xf32> -> vector<2x16x16xf32>
    "tpu.trace_stop"() : () -> ()
    %cst_25 = arith.constant 0.176776692 : f32
    %57 = vector.broadcast %cst_25 : f32 to vector<2x16x16xf32>
    %58 = arith.mulf %56, %57 : vector<2x16x16xf32>
    %cst_26 = arith.constant -1.000000e+09 : f32
    %59 = vector.shape_cast %7 : vector<1x16x16xi1> to vector<1x16x16xi1>
    %60 = vector.broadcast %59 : vector<1x16x16xi1> to vector<2x16x16xi1>
    %61 = vector.broadcast %cst_26 : f32 to vector<2x16x16xf32>
    %62 = arith.select %60, %58, %61 : vector<2x16x16xi1>, vector<2x16x16xf32>
    %cst_27 = arith.constant dense<0xFF800000> : vector<2x16xf32>
    %63 = vector.multi_reduction <maximumf>, %62, %cst_27 [2] : vector<2x16x16xf32> to vector<2x16xf32>
    %64 = vector.shape_cast %63 : vector<2x16xf32> to vector<2x16x1xf32>
    %65 = vector.broadcast %64 : vector<2x16x1xf32> to vector<2x16x16xf32>
    %66 = arith.subf %62, %65 : vector<2x16x16xf32>
    %67 = math.exp %66 : vector<2x16x16xf32>
    %cst_28 = arith.constant dense<0.000000e+00> : vector<2x16xf32>
    %68 = vector.multi_reduction <add>, %67, %cst_28 [2] : vector<2x16x16xf32> to vector<2x16xf32>
    %69 = vector.shape_cast %68 : vector<2x16xf32> to vector<2x16x1xf32>
    %70 = tpu.reciprocal %69 {approx = true} : vector<2x16x1xf32> -> vector<2x16x1xf32>
    %71 = vector.broadcast %70 : vector<2x16x1xf32> to vector<2x16x16xf32>
    %72 = arith.mulf %67, %71 : vector<2x16x16xf32>
    %73 = arith.truncf %72 : vector<2x16x16xf32> to vector<2x16x16xbf16>
    "tpu.trace_start"() <{level = 10 : i32, message = "bqk,bkd->bqd"}> : () -> ()
    %cst_29 = arith.constant dense<0.000000e+00> : vector<2x16x32xf32>
    %74 = tpu.matmul %73, %55, %cst_29 {dimension_numbers = #tpu.dot_dimension_numbers<[2], [1], [1], [2], [0, 0, 0, 1, 1, 2], [0], [0]>} : vector<2x16x16xbf16>, vector<2x16x32xbf16>, vector<2x16x32xf32> -> vector<2x16x32xf32>
    "tpu.trace_stop"() : () -> ()
    %75 = vector.shape_cast %74 : vector<2x16x32xf32> to vector<32x32xf32>
    %76 = arith.truncf %75 : vector<32x32xf32> to vector<32x32xbf16>
    %77 = vector.extract_strided_slice %16 {offsets = [0, 64], sizes = [32, 32], strides = [1, 1]} : vector<32x128xbf16> to vector<32x32xbf16>
    %78 = vector.shape_cast %77 : vector<32x32xbf16> to vector<2x16x32xbf16>
    %79 = vector.extract_strided_slice %22 {offsets = [0, 64], sizes = [32, 32], strides = [1, 1]} : vector<32x256xbf16> to vector<32x32xbf16>
    %80 = vector.shape_cast %79 : vector<32x32xbf16> to vector<2x16x32xbf16>
    %81 = vector.extract_strided_slice %22 {offsets = [0, 192], sizes = [32, 32], strides = [1, 1]} : vector<32x256xbf16> to vector<32x32xbf16>
    %82 = vector.shape_cast %81 : vector<32x32xbf16> to vector<2x16x32xbf16>
    "tpu.trace_start"() <{level = 10 : i32, message = "bqd,bkd->bqk"}> : () -> ()
    %cst_30 = arith.constant dense<0.000000e+00> : vector<2x16x16xf32>
    %83 = tpu.matmul %78, %80, %cst_30 {dimension_numbers = #tpu.dot_dimension_numbers<[2], [2], [1], [1], [0, 0, 0, 1, 1, 1], [0], [0]>} : vector<2x16x32xbf16>, vector<2x16x32xbf16>, vector<2x16x16xf32> -> vector<2x16x16xf32>
    "tpu.trace_stop"() : () -> ()
    %cst_31 = arith.constant 0.176776692 : f32
    %84 = vector.broadcast %cst_31 : f32 to vector<2x16x16xf32>
    %85 = arith.mulf %83, %84 : vector<2x16x16xf32>
    %cst_32 = arith.constant -1.000000e+09 : f32
    %86 = vector.shape_cast %7 : vector<1x16x16xi1> to vector<1x16x16xi1>
    %87 = vector.broadcast %86 : vector<1x16x16xi1> to vector<2x16x16xi1>
    %88 = vector.broadcast %cst_32 : f32 to vector<2x16x16xf32>
    %89 = arith.select %87, %85, %88 : vector<2x16x16xi1>, vector<2x16x16xf32>
    %cst_33 = arith.constant dense<0xFF800000> : vector<2x16xf32>
    %90 = vector.multi_reduction <maximumf>, %89, %cst_33 [2] : vector<2x16x16xf32> to vector<2x16xf32>
    %91 = vector.shape_cast %90 : vector<2x16xf32> to vector<2x16x1xf32>
    %92 = vector.broadcast %91 : vector<2x16x1xf32> to vector<2x16x16xf32>
    %93 = arith.subf %89, %92 : vector<2x16x16xf32>
    %94 = math.exp %93 : vector<2x16x16xf32>
    %cst_34 = arith.constant dense<0.000000e+00> : vector<2x16xf32>
    %95 = vector.multi_reduction <add>, %94, %cst_34 [2] : vector<2x16x16xf32> to vector<2x16xf32>
    %96 = vector.shape_cast %95 : vector<2x16xf32> to vector<2x16x1xf32>
    %97 = tpu.reciprocal %96 {approx = true} : vector<2x16x1xf32> -> vector<2x16x1xf32>
    %98 = vector.broadcast %97 : vector<2x16x1xf32> to vector<2x16x16xf32>
    %99 = arith.mulf %94, %98 : vector<2x16x16xf32>
    %100 = arith.truncf %99 : vector<2x16x16xf32> to vector<2x16x16xbf16>
    "tpu.trace_start"() <{level = 10 : i32, message = "bqk,bkd->bqd"}> : () -> ()
    %cst_35 = arith.constant dense<0.000000e+00> : vector<2x16x32xf32>
    %101 = tpu.matmul %100, %82, %cst_35 {dimension_numbers = #tpu.dot_dimension_numbers<[2], [1], [1], [2], [0, 0, 0, 1, 1, 2], [0], [0]>} : vector<2x16x16xbf16>, vector<2x16x32xbf16>, vector<2x16x32xf32> -> vector<2x16x32xf32>
    "tpu.trace_stop"() : () -> ()
    %102 = vector.shape_cast %101 : vector<2x16x32xf32> to vector<32x32xf32>
    %103 = arith.truncf %102 : vector<32x32xf32> to vector<32x32xbf16>
    %104 = vector.extract_strided_slice %16 {offsets = [0, 96], sizes = [32, 32], strides = [1, 1]} : vector<32x128xbf16> to vector<32x32xbf16>
    %105 = vector.shape_cast %104 : vector<32x32xbf16> to vector<2x16x32xbf16>
    %106 = vector.extract_strided_slice %22 {offsets = [0, 96], sizes = [32, 32], strides = [1, 1]} : vector<32x256xbf16> to vector<32x32xbf16>
    %107 = vector.shape_cast %106 : vector<32x32xbf16> to vector<2x16x32xbf16>
    %108 = vector.extract_strided_slice %22 {offsets = [0, 224], sizes = [32, 32], strides = [1, 1]} : vector<32x256xbf16> to vector<32x32xbf16>
    %109 = vector.shape_cast %108 : vector<32x32xbf16> to vector<2x16x32xbf16>
    "tpu.trace_start"() <{level = 10 : i32, message = "bqd,bkd->bqk"}> : () -> ()
    %cst_36 = arith.constant dense<0.000000e+00> : vector<2x16x16xf32>
    %110 = tpu.matmul %105, %107, %cst_36 {dimension_numbers = #tpu.dot_dimension_numbers<[2], [2], [1], [1], [0, 0, 0, 1, 1, 1], [0], [0]>} : vector<2x16x32xbf16>, vector<2x16x32xbf16>, vector<2x16x16xf32> -> vector<2x16x16xf32>
    "tpu.trace_stop"() : () -> ()
    %cst_37 = arith.constant 0.176776692 : f32
    %111 = vector.broadcast %cst_37 : f32 to vector<2x16x16xf32>
    %112 = arith.mulf %110, %111 : vector<2x16x16xf32>
    %cst_38 = arith.constant -1.000000e+09 : f32
    %113 = vector.shape_cast %7 : vector<1x16x16xi1> to vector<1x16x16xi1>
    %114 = vector.broadcast %113 : vector<1x16x16xi1> to vector<2x16x16xi1>
    %115 = vector.broadcast %cst_38 : f32 to vector<2x16x16xf32>
    %116 = arith.select %114, %112, %115 : vector<2x16x16xi1>, vector<2x16x16xf32>
    %cst_39 = arith.constant dense<0xFF800000> : vector<2x16xf32>
    %117 = vector.multi_reduction <maximumf>, %116, %cst_39 [2] : vector<2x16x16xf32> to vector<2x16xf32>
    %118 = vector.shape_cast %117 : vector<2x16xf32> to vector<2x16x1xf32>
    %119 = vector.broadcast %118 : vector<2x16x1xf32> to vector<2x16x16xf32>
    %120 = arith.subf %116, %119 : vector<2x16x16xf32>
    %121 = math.exp %120 : vector<2x16x16xf32>
    %cst_40 = arith.constant dense<0.000000e+00> : vector<2x16xf32>
    %122 = vector.multi_reduction <add>, %121, %cst_40 [2] : vector<2x16x16xf32> to vector<2x16xf32>
    %123 = vector.shape_cast %122 : vector<2x16xf32> to vector<2x16x1xf32>
    %124 = tpu.reciprocal %123 {approx = true} : vector<2x16x1xf32> -> vector<2x16x1xf32>
    %125 = vector.broadcast %124 : vector<2x16x1xf32> to vector<2x16x16xf32>
    %126 = arith.mulf %121, %125 : vector<2x16x16xf32>
    %127 = arith.truncf %126 : vector<2x16x16xf32> to vector<2x16x16xbf16>
    "tpu.trace_start"() <{level = 10 : i32, message = "bqk,bkd->bqd"}> : () -> ()
    %cst_41 = arith.constant dense<0.000000e+00> : vector<2x16x32xf32>
    %128 = tpu.matmul %127, %109, %cst_41 {dimension_numbers = #tpu.dot_dimension_numbers<[2], [1], [1], [2], [0, 0, 0, 1, 1, 2], [0], [0]>} : vector<2x16x16xbf16>, vector<2x16x32xbf16>, vector<2x16x32xf32> -> vector<2x16x32xf32>
    "tpu.trace_stop"() : () -> ()
    %129 = vector.shape_cast %128 : vector<2x16x32xf32> to vector<32x32xf32>
    %130 = arith.truncf %129 : vector<32x32xf32> to vector<32x32xbf16>
    %131 = tpu.concatenate %49, %76, %103, %130 in 1 : vector<32x32xbf16>, vector<32x32xbf16>, vector<32x32xbf16>, vector<32x32xbf16> -> vector<32x128xbf16>
    %c0_42 = arith.constant 0 : index
    %c0_43 = arith.constant 0 : index
    %132 = vector.load %arg8[%c0_42, %c0_43] : memref<128x128xbf16, #tpu.memory_space<vmem>>, vector<128x128xbf16>
    %cst_44 = arith.constant dense<0.000000e+00> : vector<32x128xf32>
    %133 = tpu.matmul %131, %132, %cst_44 {dimension_numbers = #tpu.dot_dimension_numbers<[1], [0], [0], [1], [0, 0, 1, 1], [], []>} : vector<32x128xbf16>, vector<128x128xbf16>, vector<32x128xf32> -> vector<32x128xf32>
    %c0_45 = arith.constant 0 : index
    %c0_46 = arith.constant 0 : index
    %134 = vector.load %arg9[%c0_45, %c0_46] : memref<1x128xf32, #tpu.memory_space<vmem>>, vector<1x128xf32>
    %135 = vector.broadcast %134 : vector<1x128xf32> to vector<32x128xf32>
    %136 = arith.addf %133, %135 : vector<32x128xf32>
    %137 = arith.extf %1 : vector<32x128xbf16> to vector<32x128xf32>
    %138 = arith.addf %137, %136 : vector<32x128xf32>
    %c0_47 = arith.constant 0 : index
    %c0_48 = arith.constant 0 : index
    %139 = vector.load %arg10[%c0_47, %c0_48] : memref<1x128xf32, #tpu.memory_space<vmem>>, vector<1x128xf32>
    %c0_49 = arith.constant 0 : index
    %c0_50 = arith.constant 0 : index
    %140 = vector.load %arg11[%c0_49, %c0_50] : memref<1x128xf32, #tpu.memory_space<vmem>>, vector<1x128xf32>
    %cst_51 = arith.constant dense<0.000000e+00> : vector<32xf32>
    %141 = vector.multi_reduction <add>, %138, %cst_51 [1] : vector<32x128xf32> to vector<32xf32>
    %142 = vector.shape_cast %141 : vector<32xf32> to vector<32x1xf32>
    %cst_52 = arith.constant 1.280000e+02 : f32
    %143 = vector.broadcast %cst_52 : f32 to vector<32x1xf32>
    %144 = arith.divf %142, %143 : vector<32x1xf32>
    %145 = vector.broadcast %144 : vector<32x1xf32> to vector<32x128xf32>
    %146 = arith.subf %138, %145 : vector<32x128xf32>
    %147 = arith.mulf %146, %146 : vector<32x128xf32>
    %cst_53 = arith.constant dense<0.000000e+00> : vector<32xf32>
    %148 = vector.multi_reduction <add>, %147, %cst_53 [1] : vector<32x128xf32> to vector<32xf32>
    %149 = vector.shape_cast %148 : vector<32xf32> to vector<32x1xf32>
    %cst_54 = arith.constant 1.280000e+02 : f32
    %150 = vector.broadcast %cst_54 : f32 to vector<32x1xf32>
    %151 = arith.divf %149, %150 : vector<32x1xf32>
    %152 = vector.broadcast %144 : vector<32x1xf32> to vector<32x128xf32>
    %153 = arith.subf %138, %152 : vector<32x128xf32>
    %cst_55 = arith.constant 9.99999974E-6 : f32
    %154 = vector.broadcast %cst_55 : f32 to vector<32x1xf32>
    %155 = arith.addf %151, %154 : vector<32x1xf32>
    %156 = math.rsqrt %155 : vector<32x1xf32>
    %157 = vector.broadcast %156 : vector<32x1xf32> to vector<32x128xf32>
    %158 = arith.mulf %153, %157 : vector<32x128xf32>
    %159 = vector.broadcast %139 : vector<1x128xf32> to vector<32x128xf32>
    %160 = arith.mulf %158, %159 : vector<32x128xf32>
    %161 = vector.broadcast %140 : vector<1x128xf32> to vector<32x128xf32>
    %162 = arith.addf %160, %161 : vector<32x128xf32>
    %163 = arith.truncf %162 : vector<32x128xf32> to vector<32x128xbf16>
    %c0_56 = arith.constant 0 : index
    %c0_57 = arith.constant 0 : index
    %164 = vector.load %arg12[%c0_56, %c0_57] : memref<128x128xbf16, #tpu.memory_space<vmem>>, vector<128x128xbf16>
    %cst_58 = arith.constant dense<0.000000e+00> : vector<32x128xf32>
    %165 = tpu.matmul %163, %164, %cst_58 {dimension_numbers = #tpu.dot_dimension_numbers<[1], [0], [0], [1], [0, 0, 1, 1], [], []>} : vector<32x128xbf16>, vector<128x128xbf16>, vector<32x128xf32> -> vector<32x128xf32>
    %c0_59 = arith.constant 0 : index
    %c0_60 = arith.constant 0 : index
    %166 = vector.load %arg13[%c0_59, %c0_60] : memref<1x128xf32, #tpu.memory_space<vmem>>, vector<1x128xf32>
    %167 = vector.broadcast %166 : vector<1x128xf32> to vector<32x128xf32>
    %168 = arith.addf %165, %167 : vector<32x128xf32>
    %169 = arith.truncf %168 : vector<32x128xf32> to vector<32x128xbf16>
    %c0_61 = arith.constant 0 : index
    %c0_62 = arith.constant 0 : index
    %170 = vector.load %arg14[%c0_61, %c0_62] : memref<128x256xbf16, #tpu.memory_space<vmem>>, vector<128x256xbf16>
    %cst_63 = arith.constant dense<0.000000e+00> : vector<32x256xf32>
    %171 = tpu.matmul %3, %170, %cst_63 {dimension_numbers = #tpu.dot_dimension_numbers<[1], [0], [0], [1], [0, 0, 1, 1], [], []>} : vector<32x128xbf16>, vector<128x256xbf16>, vector<32x256xf32> -> vector<32x256xf32>
    %c0_64 = arith.constant 0 : index
    %c0_65 = arith.constant 0 : index
    %172 = vector.load %arg15[%c0_64, %c0_65] : memref<1x256xf32, #tpu.memory_space<vmem>>, vector<1x256xf32>
    %173 = vector.broadcast %172 : vector<1x256xf32> to vector<32x256xf32>
    %174 = arith.addf %171, %173 : vector<32x256xf32>
    %175 = arith.truncf %174 : vector<32x256xf32> to vector<32x256xbf16>
    %176 = vector.extract_strided_slice %169 {offsets = [0, 0], sizes = [32, 32], strides = [1, 1]} : vector<32x128xbf16> to vector<32x32xbf16>
    %177 = vector.shape_cast %176 : vector<32x32xbf16> to vector<2x16x32xbf16>
    %178 = vector.extract_strided_slice %175 {offsets = [0, 0], sizes = [32, 32], strides = [1, 1]} : vector<32x256xbf16> to vector<32x32xbf16>
    %179 = vector.shape_cast %178 : vector<32x32xbf16> to vector<2x16x32xbf16>
    %180 = vector.extract_strided_slice %175 {offsets = [0, 128], sizes = [32, 32], strides = [1, 1]} : vector<32x256xbf16> to vector<32x32xbf16>
    %181 = vector.shape_cast %180 : vector<32x32xbf16> to vector<2x16x32xbf16>
    "tpu.trace_start"() <{level = 10 : i32, message = "bqd,bkd->bqk"}> : () -> ()
    %cst_66 = arith.constant dense<0.000000e+00> : vector<2x16x16xf32>
    %182 = tpu.matmul %177, %179, %cst_66 {dimension_numbers = #tpu.dot_dimension_numbers<[2], [2], [1], [1], [0, 0, 0, 1, 1, 1], [0], [0]>} : vector<2x16x32xbf16>, vector<2x16x32xbf16>, vector<2x16x16xf32> -> vector<2x16x16xf32>
    "tpu.trace_stop"() : () -> ()
    %cst_67 = arith.constant 0.176776692 : f32
    %183 = vector.broadcast %cst_67 : f32 to vector<2x16x16xf32>
    %184 = arith.mulf %182, %183 : vector<2x16x16xf32>
    %cst_68 = arith.constant -1.000000e+09 : f32
    %185 = vector.shape_cast %10 : vector<2x1x16xi1> to vector<2x1x16xi1>
    %186 = vector.broadcast %185 : vector<2x1x16xi1> to vector<2x16x16xi1>
    %187 = vector.broadcast %cst_68 : f32 to vector<2x16x16xf32>
    %188 = arith.select %186, %184, %187 : vector<2x16x16xi1>, vector<2x16x16xf32>
    %cst_69 = arith.constant dense<0xFF800000> : vector<2x16xf32>
    %189 = vector.multi_reduction <maximumf>, %188, %cst_69 [2] : vector<2x16x16xf32> to vector<2x16xf32>
    %190 = vector.shape_cast %189 : vector<2x16xf32> to vector<2x16x1xf32>
    %191 = vector.broadcast %190 : vector<2x16x1xf32> to vector<2x16x16xf32>
    %192 = arith.subf %188, %191 : vector<2x16x16xf32>
    %193 = math.exp %192 : vector<2x16x16xf32>
    %cst_70 = arith.constant dense<0.000000e+00> : vector<2x16xf32>
    %194 = vector.multi_reduction <add>, %193, %cst_70 [2] : vector<2x16x16xf32> to vector<2x16xf32>
    %195 = vector.shape_cast %194 : vector<2x16xf32> to vector<2x16x1xf32>
    %196 = tpu.reciprocal %195 {approx = true} : vector<2x16x1xf32> -> vector<2x16x1xf32>
    %197 = vector.broadcast %196 : vector<2x16x1xf32> to vector<2x16x16xf32>
    %198 = arith.mulf %193, %197 : vector<2x16x16xf32>
    %199 = arith.truncf %198 : vector<2x16x16xf32> to vector<2x16x16xbf16>
    "tpu.trace_start"() <{level = 10 : i32, message = "bqk,bkd->bqd"}> : () -> ()
    %cst_71 = arith.constant dense<0.000000e+00> : vector<2x16x32xf32>
    %200 = tpu.matmul %199, %181, %cst_71 {dimension_numbers = #tpu.dot_dimension_numbers<[2], [1], [1], [2], [0, 0, 0, 1, 1, 2], [0], [0]>} : vector<2x16x16xbf16>, vector<2x16x32xbf16>, vector<2x16x32xf32> -> vector<2x16x32xf32>
    "tpu.trace_stop"() : () -> ()
    %201 = vector.shape_cast %200 : vector<2x16x32xf32> to vector<32x32xf32>
    %202 = arith.truncf %201 : vector<32x32xf32> to vector<32x32xbf16>
    %203 = vector.extract_strided_slice %169 {offsets = [0, 32], sizes = [32, 32], strides = [1, 1]} : vector<32x128xbf16> to vector<32x32xbf16>
    %204 = vector.shape_cast %203 : vector<32x32xbf16> to vector<2x16x32xbf16>
    %205 = vector.extract_strided_slice %175 {offsets = [0, 32], sizes = [32, 32], strides = [1, 1]} : vector<32x256xbf16> to vector<32x32xbf16>
    %206 = vector.shape_cast %205 : vector<32x32xbf16> to vector<2x16x32xbf16>
    %207 = vector.extract_strided_slice %175 {offsets = [0, 160], sizes = [32, 32], strides = [1, 1]} : vector<32x256xbf16> to vector<32x32xbf16>
    %208 = vector.shape_cast %207 : vector<32x32xbf16> to vector<2x16x32xbf16>
    "tpu.trace_start"() <{level = 10 : i32, message = "bqd,bkd->bqk"}> : () -> ()
    %cst_72 = arith.constant dense<0.000000e+00> : vector<2x16x16xf32>
    %209 = tpu.matmul %204, %206, %cst_72 {dimension_numbers = #tpu.dot_dimension_numbers<[2], [2], [1], [1], [0, 0, 0, 1, 1, 1], [0], [0]>} : vector<2x16x32xbf16>, vector<2x16x32xbf16>, vector<2x16x16xf32> -> vector<2x16x16xf32>
    "tpu.trace_stop"() : () -> ()
    %cst_73 = arith.constant 0.176776692 : f32
    %210 = vector.broadcast %cst_73 : f32 to vector<2x16x16xf32>
    %211 = arith.mulf %209, %210 : vector<2x16x16xf32>
    %cst_74 = arith.constant -1.000000e+09 : f32
    %212 = vector.shape_cast %10 : vector<2x1x16xi1> to vector<2x1x16xi1>
    %213 = vector.broadcast %212 : vector<2x1x16xi1> to vector<2x16x16xi1>
    %214 = vector.broadcast %cst_74 : f32 to vector<2x16x16xf32>
    %215 = arith.select %213, %211, %214 : vector<2x16x16xi1>, vector<2x16x16xf32>
    %cst_75 = arith.constant dense<0xFF800000> : vector<2x16xf32>
    %216 = vector.multi_reduction <maximumf>, %215, %cst_75 [2] : vector<2x16x16xf32> to vector<2x16xf32>
    %217 = vector.shape_cast %216 : vector<2x16xf32> to vector<2x16x1xf32>
    %218 = vector.broadcast %217 : vector<2x16x1xf32> to vector<2x16x16xf32>
    %219 = arith.subf %215, %218 : vector<2x16x16xf32>
    %220 = math.exp %219 : vector<2x16x16xf32>
    %cst_76 = arith.constant dense<0.000000e+00> : vector<2x16xf32>
    %221 = vector.multi_reduction <add>, %220, %cst_76 [2] : vector<2x16x16xf32> to vector<2x16xf32>
    %222 = vector.shape_cast %221 : vector<2x16xf32> to vector<2x16x1xf32>
    %223 = tpu.reciprocal %222 {approx = true} : vector<2x16x1xf32> -> vector<2x16x1xf32>
    %224 = vector.broadcast %223 : vector<2x16x1xf32> to vector<2x16x16xf32>
    %225 = arith.mulf %220, %224 : vector<2x16x16xf32>
    %226 = arith.truncf %225 : vector<2x16x16xf32> to vector<2x16x16xbf16>
    "tpu.trace_start"() <{level = 10 : i32, message = "bqk,bkd->bqd"}> : () -> ()
    %cst_77 = arith.constant dense<0.000000e+00> : vector<2x16x32xf32>
    %227 = tpu.matmul %226, %208, %cst_77 {dimension_numbers = #tpu.dot_dimension_numbers<[2], [1], [1], [2], [0, 0, 0, 1, 1, 2], [0], [0]>} : vector<2x16x16xbf16>, vector<2x16x32xbf16>, vector<2x16x32xf32> -> vector<2x16x32xf32>
    "tpu.trace_stop"() : () -> ()
    %228 = vector.shape_cast %227 : vector<2x16x32xf32> to vector<32x32xf32>
    %229 = arith.truncf %228 : vector<32x32xf32> to vector<32x32xbf16>
    %230 = vector.extract_strided_slice %169 {offsets = [0, 64], sizes = [32, 32], strides = [1, 1]} : vector<32x128xbf16> to vector<32x32xbf16>
    %231 = vector.shape_cast %230 : vector<32x32xbf16> to vector<2x16x32xbf16>
    %232 = vector.extract_strided_slice %175 {offsets = [0, 64], sizes = [32, 32], strides = [1, 1]} : vector<32x256xbf16> to vector<32x32xbf16>
    %233 = vector.shape_cast %232 : vector<32x32xbf16> to vector<2x16x32xbf16>
    %234 = vector.extract_strided_slice %175 {offsets = [0, 192], sizes = [32, 32], strides = [1, 1]} : vector<32x256xbf16> to vector<32x32xbf16>
    %235 = vector.shape_cast %234 : vector<32x32xbf16> to vector<2x16x32xbf16>
    "tpu.trace_start"() <{level = 10 : i32, message = "bqd,bkd->bqk"}> : () -> ()
    %cst_78 = arith.constant dense<0.000000e+00> : vector<2x16x16xf32>
    %236 = tpu.matmul %231, %233, %cst_78 {dimension_numbers = #tpu.dot_dimension_numbers<[2], [2], [1], [1], [0, 0, 0, 1, 1, 1], [0], [0]>} : vector<2x16x32xbf16>, vector<2x16x32xbf16>, vector<2x16x16xf32> -> vector<2x16x16xf32>
    "tpu.trace_stop"() : () -> ()
    %cst_79 = arith.constant 0.176776692 : f32
    %237 = vector.broadcast %cst_79 : f32 to vector<2x16x16xf32>
    %238 = arith.mulf %236, %237 : vector<2x16x16xf32>
    %cst_80 = arith.constant -1.000000e+09 : f32
    %239 = vector.shape_cast %10 : vector<2x1x16xi1> to vector<2x1x16xi1>
    %240 = vector.broadcast %239 : vector<2x1x16xi1> to vector<2x16x16xi1>
    %241 = vector.broadcast %cst_80 : f32 to vector<2x16x16xf32>
    %242 = arith.select %240, %238, %241 : vector<2x16x16xi1>, vector<2x16x16xf32>
    %cst_81 = arith.constant dense<0xFF800000> : vector<2x16xf32>
    %243 = vector.multi_reduction <maximumf>, %242, %cst_81 [2] : vector<2x16x16xf32> to vector<2x16xf32>
    %244 = vector.shape_cast %243 : vector<2x16xf32> to vector<2x16x1xf32>
    %245 = vector.broadcast %244 : vector<2x16x1xf32> to vector<2x16x16xf32>
    %246 = arith.subf %242, %245 : vector<2x16x16xf32>
    %247 = math.exp %246 : vector<2x16x16xf32>
    %cst_82 = arith.constant dense<0.000000e+00> : vector<2x16xf32>
    %248 = vector.multi_reduction <add>, %247, %cst_82 [2] : vector<2x16x16xf32> to vector<2x16xf32>
    %249 = vector.shape_cast %248 : vector<2x16xf32> to vector<2x16x1xf32>
    %250 = tpu.reciprocal %249 {approx = true} : vector<2x16x1xf32> -> vector<2x16x1xf32>
    %251 = vector.broadcast %250 : vector<2x16x1xf32> to vector<2x16x16xf32>
    %252 = arith.mulf %247, %251 : vector<2x16x16xf32>
    %253 = arith.truncf %252 : vector<2x16x16xf32> to vector<2x16x16xbf16>
    "tpu.trace_start"() <{level = 10 : i32, message = "bqk,bkd->bqd"}> : () -> ()
    %cst_83 = arith.constant dense<0.000000e+00> : vector<2x16x32xf32>
    %254 = tpu.matmul %253, %235, %cst_83 {dimension_numbers = #tpu.dot_dimension_numbers<[2], [1], [1], [2], [0, 0, 0, 1, 1, 2], [0], [0]>} : vector<2x16x16xbf16>, vector<2x16x32xbf16>, vector<2x16x32xf32> -> vector<2x16x32xf32>
    "tpu.trace_stop"() : () -> ()
    %255 = vector.shape_cast %254 : vector<2x16x32xf32> to vector<32x32xf32>
    %256 = arith.truncf %255 : vector<32x32xf32> to vector<32x32xbf16>
    %257 = vector.extract_strided_slice %169 {offsets = [0, 96], sizes = [32, 32], strides = [1, 1]} : vector<32x128xbf16> to vector<32x32xbf16>
    %258 = vector.shape_cast %257 : vector<32x32xbf16> to vector<2x16x32xbf16>
    %259 = vector.extract_strided_slice %175 {offsets = [0, 96], sizes = [32, 32], strides = [1, 1]} : vector<32x256xbf16> to vector<32x32xbf16>
    %260 = vector.shape_cast %259 : vector<32x32xbf16> to vector<2x16x32xbf16>
    %261 = vector.extract_strided_slice %175 {offsets = [0, 224], sizes = [32, 32], strides = [1, 1]} : vector<32x256xbf16> to vector<32x32xbf16>
    %262 = vector.shape_cast %261 : vector<32x32xbf16> to vector<2x16x32xbf16>
    "tpu.trace_start"() <{level = 10 : i32, message = "bqd,bkd->bqk"}> : () -> ()
    %cst_84 = arith.constant dense<0.000000e+00> : vector<2x16x16xf32>
    %263 = tpu.matmul %258, %260, %cst_84 {dimension_numbers = #tpu.dot_dimension_numbers<[2], [2], [1], [1], [0, 0, 0, 1, 1, 1], [0], [0]>} : vector<2x16x32xbf16>, vector<2x16x32xbf16>, vector<2x16x16xf32> -> vector<2x16x16xf32>
    "tpu.trace_stop"() : () -> ()
    %cst_85 = arith.constant 0.176776692 : f32
    %264 = vector.broadcast %cst_85 : f32 to vector<2x16x16xf32>
    %265 = arith.mulf %263, %264 : vector<2x16x16xf32>
    %cst_86 = arith.constant -1.000000e+09 : f32
    %266 = vector.shape_cast %10 : vector<2x1x16xi1> to vector<2x1x16xi1>
    %267 = vector.broadcast %266 : vector<2x1x16xi1> to vector<2x16x16xi1>
    %268 = vector.broadcast %cst_86 : f32 to vector<2x16x16xf32>
    %269 = arith.select %267, %265, %268 : vector<2x16x16xi1>, vector<2x16x16xf32>
    %cst_87 = arith.constant dense<0xFF800000> : vector<2x16xf32>
    %270 = vector.multi_reduction <maximumf>, %269, %cst_87 [2] : vector<2x16x16xf32> to vector<2x16xf32>
    %271 = vector.shape_cast %270 : vector<2x16xf32> to vector<2x16x1xf32>
    %272 = vector.broadcast %271 : vector<2x16x1xf32> to vector<2x16x16xf32>
    %273 = arith.subf %269, %272 : vector<2x16x16xf32>
    %274 = math.exp %273 : vector<2x16x16xf32>
    %cst_88 = arith.constant dense<0.000000e+00> : vector<2x16xf32>
    %275 = vector.multi_reduction <add>, %274, %cst_88 [2] : vector<2x16x16xf32> to vector<2x16xf32>
    %276 = vector.shape_cast %275 : vector<2x16xf32> to vector<2x16x1xf32>
    %277 = tpu.reciprocal %276 {approx = true} : vector<2x16x1xf32> -> vector<2x16x1xf32>
    %278 = vector.broadcast %277 : vector<2x16x1xf32> to vector<2x16x16xf32>
    %279 = arith.mulf %274, %278 : vector<2x16x16xf32>
    %280 = arith.truncf %279 : vector<2x16x16xf32> to vector<2x16x16xbf16>
    "tpu.trace_start"() <{level = 10 : i32, message = "bqk,bkd->bqd"}> : () -> ()
    %cst_89 = arith.constant dense<0.000000e+00> : vector<2x16x32xf32>
    %281 = tpu.matmul %280, %262, %cst_89 {dimension_numbers = #tpu.dot_dimension_numbers<[2], [1], [1], [2], [0, 0, 0, 1, 1, 2], [0], [0]>} : vector<2x16x16xbf16>, vector<2x16x32xbf16>, vector<2x16x32xf32> -> vector<2x16x32xf32>
    "tpu.trace_stop"() : () -> ()
    %282 = vector.shape_cast %281 : vector<2x16x32xf32> to vector<32x32xf32>
    %283 = arith.truncf %282 : vector<32x32xf32> to vector<32x32xbf16>
    %284 = tpu.concatenate %202, %229, %256, %283 in 1 : vector<32x32xbf16>, vector<32x32xbf16>, vector<32x32xbf16>, vector<32x32xbf16> -> vector<32x128xbf16>
    %c0_90 = arith.constant 0 : index
    %c0_91 = arith.constant 0 : index
    %285 = vector.load %arg16[%c0_90, %c0_91] : memref<128x128xbf16, #tpu.memory_space<vmem>>, vector<128x128xbf16>
    %cst_92 = arith.constant dense<0.000000e+00> : vector<32x128xf32>
    %286 = tpu.matmul %284, %285, %cst_92 {dimension_numbers = #tpu.dot_dimension_numbers<[1], [0], [0], [1], [0, 0, 1, 1], [], []>} : vector<32x128xbf16>, vector<128x128xbf16>, vector<32x128xf32> -> vector<32x128xf32>
    %c0_93 = arith.constant 0 : index
    %c0_94 = arith.constant 0 : index
    %287 = vector.load %arg17[%c0_93, %c0_94] : memref<1x128xf32, #tpu.memory_space<vmem>>, vector<1x128xf32>
    %288 = vector.broadcast %287 : vector<1x128xf32> to vector<32x128xf32>
    %289 = arith.addf %286, %288 : vector<32x128xf32>
    %290 = arith.addf %162, %289 : vector<32x128xf32>
    %c0_95 = arith.constant 0 : index
    %c0_96 = arith.constant 0 : index
    %291 = vector.load %arg18[%c0_95, %c0_96] : memref<1x128xf32, #tpu.memory_space<vmem>>, vector<1x128xf32>
    %c0_97 = arith.constant 0 : index
    %c0_98 = arith.constant 0 : index
    %292 = vector.load %arg19[%c0_97, %c0_98] : memref<1x128xf32, #tpu.memory_space<vmem>>, vector<1x128xf32>
    %cst_99 = arith.constant dense<0.000000e+00> : vector<32xf32>
    %293 = vector.multi_reduction <add>, %290, %cst_99 [1] : vector<32x128xf32> to vector<32xf32>
    %294 = vector.shape_cast %293 : vector<32xf32> to vector<32x1xf32>
    %cst_100 = arith.constant 1.280000e+02 : f32
    %295 = vector.broadcast %cst_100 : f32 to vector<32x1xf32>
    %296 = arith.divf %294, %295 : vector<32x1xf32>
    %297 = vector.broadcast %296 : vector<32x1xf32> to vector<32x128xf32>
    %298 = arith.subf %290, %297 : vector<32x128xf32>
    %299 = arith.mulf %298, %298 : vector<32x128xf32>
    %cst_101 = arith.constant dense<0.000000e+00> : vector<32xf32>
    %300 = vector.multi_reduction <add>, %299, %cst_101 [1] : vector<32x128xf32> to vector<32xf32>
    %301 = vector.shape_cast %300 : vector<32xf32> to vector<32x1xf32>
    %cst_102 = arith.constant 1.280000e+02 : f32
    %302 = vector.broadcast %cst_102 : f32 to vector<32x1xf32>
    %303 = arith.divf %301, %302 : vector<32x1xf32>
    %304 = vector.broadcast %296 : vector<32x1xf32> to vector<32x128xf32>
    %305 = arith.subf %290, %304 : vector<32x128xf32>
    %cst_103 = arith.constant 9.99999974E-6 : f32
    %306 = vector.broadcast %cst_103 : f32 to vector<32x1xf32>
    %307 = arith.addf %303, %306 : vector<32x1xf32>
    %308 = math.rsqrt %307 : vector<32x1xf32>
    %309 = vector.broadcast %308 : vector<32x1xf32> to vector<32x128xf32>
    %310 = arith.mulf %305, %309 : vector<32x128xf32>
    %311 = vector.broadcast %291 : vector<1x128xf32> to vector<32x128xf32>
    %312 = arith.mulf %310, %311 : vector<32x128xf32>
    %313 = vector.broadcast %292 : vector<1x128xf32> to vector<32x128xf32>
    %314 = arith.addf %312, %313 : vector<32x128xf32>
    %315 = arith.truncf %314 : vector<32x128xf32> to vector<32x128xbf16>
    %c0_104 = arith.constant 0 : index
    %c0_105 = arith.constant 0 : index
    %316 = vector.load %arg20[%c0_104, %c0_105] : memref<128x256xbf16, #tpu.memory_space<vmem>>, vector<128x256xbf16>
    %cst_106 = arith.constant dense<0.000000e+00> : vector<32x256xf32>
    %317 = tpu.matmul %315, %316, %cst_106 {dimension_numbers = #tpu.dot_dimension_numbers<[1], [0], [0], [1], [0, 0, 1, 1], [], []>} : vector<32x128xbf16>, vector<128x256xbf16>, vector<32x256xf32> -> vector<32x256xf32>
    %c0_107 = arith.constant 0 : index
    %c0_108 = arith.constant 0 : index
    %318 = vector.load %arg21[%c0_107, %c0_108] : memref<1x256xf32, #tpu.memory_space<vmem>>, vector<1x256xf32>
    %319 = vector.broadcast %318 : vector<1x256xf32> to vector<32x256xf32>
    %320 = arith.addf %317, %319 : vector<32x256xf32>
    %cst_109 = arith.constant 0.000000e+00 : f32
    %321 = vector.broadcast %cst_109 : f32 to vector<32x256xf32>
    %322 = arith.maximumf %320, %321 : vector<32x256xf32>
    %323 = arith.truncf %322 : vector<32x256xf32> to vector<32x256xbf16>
    %c0_110 = arith.constant 0 : index
    %c0_111 = arith.constant 0 : index
    %324 = vector.load %arg22[%c0_110, %c0_111] : memref<256x128xbf16, #tpu.memory_space<vmem>>, vector<256x128xbf16>
    %cst_112 = arith.constant dense<0.000000e+00> : vector<32x128xf32>
    %325 = tpu.matmul %323, %324, %cst_112 {dimension_numbers = #tpu.dot_dimension_numbers<[1], [0], [0], [1], [0, 0, 1, 1], [], []>} : vector<32x256xbf16>, vector<256x128xbf16>, vector<32x128xf32> -> vector<32x128xf32>
    %c0_113 = arith.constant 0 : index
    %c0_114 = arith.constant 0 : index
    %326 = vector.load %arg23[%c0_113, %c0_114] : memref<1x128xf32, #tpu.memory_space<vmem>>, vector<1x128xf32>
    %327 = vector.broadcast %326 : vector<1x128xf32> to vector<32x128xf32>
    %328 = arith.addf %325, %327 : vector<32x128xf32>
    %329 = arith.addf %314, %328 : vector<32x128xf32>
    %c0_115 = arith.constant 0 : index
    %c0_116 = arith.constant 0 : index
    %330 = vector.load %arg24[%c0_115, %c0_116] : memref<1x128xf32, #tpu.memory_space<vmem>>, vector<1x128xf32>
    %c0_117 = arith.constant 0 : index
    %c0_118 = arith.constant 0 : index
    %331 = vector.load %arg25[%c0_117, %c0_118] : memref<1x128xf32, #tpu.memory_space<vmem>>, vector<1x128xf32>
    %cst_119 = arith.constant dense<0.000000e+00> : vector<32xf32>
    %332 = vector.multi_reduction <add>, %329, %cst_119 [1] : vector<32x128xf32> to vector<32xf32>
    %333 = vector.shape_cast %332 : vector<32xf32> to vector<32x1xf32>
    %cst_120 = arith.constant 1.280000e+02 : f32
    %334 = vector.broadcast %cst_120 : f32 to vector<32x1xf32>
    %335 = arith.divf %333, %334 : vector<32x1xf32>
    %336 = vector.broadcast %335 : vector<32x1xf32> to vector<32x128xf32>
    %337 = arith.subf %329, %336 : vector<32x128xf32>
    %338 = arith.mulf %337, %337 : vector<32x128xf32>
    %cst_121 = arith.constant dense<0.000000e+00> : vector<32xf32>
    %339 = vector.multi_reduction <add>, %338, %cst_121 [1] : vector<32x128xf32> to vector<32xf32>
    %340 = vector.shape_cast %339 : vector<32xf32> to vector<32x1xf32>
    %cst_122 = arith.constant 1.280000e+02 : f32
    %341 = vector.broadcast %cst_122 : f32 to vector<32x1xf32>
    %342 = arith.divf %340, %341 : vector<32x1xf32>
    %343 = vector.broadcast %335 : vector<32x1xf32> to vector<32x128xf32>
    %344 = arith.subf %329, %343 : vector<32x128xf32>
    %cst_123 = arith.constant 9.99999974E-6 : f32
    %345 = vector.broadcast %cst_123 : f32 to vector<32x1xf32>
    %346 = arith.addf %342, %345 : vector<32x1xf32>
    %347 = math.rsqrt %346 : vector<32x1xf32>
    %348 = vector.broadcast %347 : vector<32x1xf32> to vector<32x128xf32>
    %349 = arith.mulf %344, %348 : vector<32x128xf32>
    %350 = vector.broadcast %330 : vector<1x128xf32> to vector<32x128xf32>
    %351 = arith.mulf %349, %350 : vector<32x128xf32>
    %352 = vector.broadcast %331 : vector<1x128xf32> to vector<32x128xf32>
    %353 = arith.addf %351, %352 : vector<32x128xf32>
    %354 = arith.truncf %353 : vector<32x128xf32> to vector<32x128xbf16>
    %355 = vector.shape_cast %354 : vector<32x128xbf16> to vector<2x16x128xbf16>
    %c0_124 = arith.constant 0 : index
    %c0_125 = arith.constant 0 : index
    %c0_126 = arith.constant 0 : index
    %356 = vector.load %arg26[%c0_124, %c0_125, %c0_126] : memref<2x16x128xbf16, #tpu.memory_space<vmem>>, vector<2x16x128xbf16>
    tpu.vector_store %arg26[%c0_124, %c0_125, %c0_126], %355 {strides = array<i32>} : memref<2x16x128xbf16, #tpu.memory_space<vmem>>, vector<2x16x128xbf16>,
    return
  }
  func.func @transform_0(%arg0: i32) -> (i32, i32, i32) {
    %c0_i32 = arith.constant 0 : i32
    %c0_i32_0 = arith.constant 0 : i32
    %c0_i32_1 = arith.constant 0 : i32
    return %arg0, %c0_i32, %c0_i32_0 : i32, i32, i32
  }
  func.func @transform_1(%arg0: i32) -> (i32, i32, i32) {
    %c0_i32 = arith.constant 0 : i32
    %c0_i32_0 = arith.constant 0 : i32
    %c0_i32_1 = arith.constant 0 : i32
    return %arg0, %c0_i32, %c0_i32_0 : i32, i32, i32
  }
  func.func @transform_2(%arg0: i32) -> (i32, i32, i32) {
    %c0_i32 = arith.constant 0 : i32
    %c0_i32_0 = arith.constant 0 : i32
    %c0_i32_1 = arith.constant 0 : i32
    return %arg0, %c0_i32, %c0_i32_0 : i32, i32, i32
  }
  func.func @transform_3(%arg0: i32) -> (i32, i32) {
    %c0_i32 = arith.constant 0 : i32
    %c0_i32_0 = arith.constant 0 : i32
    %c0_i32_1 = arith.constant 0 : i32
    return %c0_i32, %c0_i32_0 : i32, i32
  }
  func.func @transform_4(%arg0: i32) -> (i32, i32) {
    %c0_i32 = arith.constant 0 : i32
    %c0_i32_0 = arith.constant 0 : i32
    %c0_i32_1 = arith.constant 0 : i32
    return %c0_i32, %c0_i32_0 : i32, i32
  }
  func.func @transform_5(%arg0: i32) -> (i32, i32) {
    %c0_i32 = arith.constant 0 : i32
    %c0_i32_0 = arith.constant 0 : i32
    %c0_i32_1 = arith.constant 0 : i32
    return %c0_i32, %c0_i32_0 : i32, i32
  }
  func.func @transform_6(%arg0: i32) -> (i32, i32) {
    %c0_i32 = arith.constant 0 : i32
    %c0_i32_0 = arith.constant 0 : i32
    %c0_i32_1 = arith.constant 0 : i32
    return %c0_i32, %c0_i32_0 : i32, i32
  }
  func.func @transform_7(%arg0: i32) -> (i32, i32) {
    %c0_i32 = arith.constant 0 : i32
    %c0_i32_0 = arith.constant 0 : i32
    %c0_i32_1 = arith.constant 0 : i32
    return %c0_i32, %c0_i32_0 : i32, i32
  }
  func.func @transform_8(%arg0: i32) -> (i32, i32) {
    %c0_i32 = arith.constant 0 : i32
    %c0_i32_0 = arith.constant 0 : i32
    %c0_i32_1 = arith.constant 0 : i32
    return %c0_i32, %c0_i32_0 : i32, i32
  }
  func.func @transform_9(%arg0: i32) -> (i32, i32) {
    %c0_i32 = arith.constant 0 : i32
    %c0_i32_0 = arith.constant 0 : i32
    %c0_i32_1 = arith.constant 0 : i32
    return %c0_i32, %c0_i32_0 : i32, i32
  }
  func.func @transform_10(%arg0: i32) -> (i32, i32) {
    %c0_i32 = arith.constant 0 : i32
    %c0_i32_0 = arith.constant 0 : i32
    %c0_i32_1 = arith.constant 0 : i32
    return %c0_i32, %c0_i32_0 : i32, i32
  }
  func.func @transform_11(%arg0: i32) -> (i32, i32) {
    %c0_i32 = arith.constant 0 : i32
    %c0_i32_0 = arith.constant 0 : i32
    %c0_i32_1 = arith.constant 0 : i32
    return %c0_i32, %c0_i32_0 : i32, i32
  }
  func.func @transform_12(%arg0: i32) -> (i32, i32) {
    %c0_i32 = arith.constant 0 : i32
    %c0_i32_0 = arith.constant 0 : i32
    %c0_i32_1 = arith.constant 0 : i32
    return %c0_i32, %c0_i32_0 : i32, i32
  }
  func.func @transform_13(%arg0: i32) -> (i32, i32) {
    %c0_i32 = arith.constant 0 : i32
    %c0_i32_0 = arith.constant 0 : i32
    %c0_i32_1 = arith.constant 0 : i32
    return %c0_i32, %c0_i32_0 : i32, i32
  }
  func.func @transform_14(%arg0: i32) -> (i32, i32) {
    %c0_i32 = arith.constant 0 : i32
    %c0_i32_0 = arith.constant 0 : i32
    %c0_i32_1 = arith.constant 0 : i32
    return %c0_i32, %c0_i32_0 : i32, i32
  }
  func.func @transform_15(%arg0: i32) -> (i32, i32) {
    %c0_i32 = arith.constant 0 : i32
    %c0_i32_0 = arith.constant 0 : i32
    %c0_i32_1 = arith.constant 0 : i32
    return %c0_i32, %c0_i32_0 : i32, i32
  }
  func.func @transform_16(%arg0: i32) -> (i32, i32) {
    %c0_i32 = arith.constant 0 : i32
    %c0_i32_0 = arith.constant 0 : i32
    %c0_i32_1 = arith.constant 0 : i32
    return %c0_i32, %c0_i32_0 : i32, i32
  }
  func.func @transform_17(%arg0: i32) -> (i32, i32) {
    %c0_i32 = arith.constant 0 : i32
    %c0_i32_0 = arith.constant 0 : i32
    %c0_i32_1 = arith.constant 0 : i32
    return %c0_i32, %c0_i32_0 : i32, i32
  }
  func.func @transform_18(%arg0: i32) -> (i32, i32) {
    %c0_i32 = arith.constant 0 : i32
    %c0_i32_0 = arith.constant 0 : i32
    %c0_i32_1 = arith.constant 0 : i32
    return %c0_i32, %c0_i32_0 : i32, i32
  }
  func.func @transform_19(%arg0: i32) -> (i32, i32) {
    %c0_i32 = arith.constant 0 : i32
    %c0_i32_0 = arith.constant 0 : i32
    %c0_i32_1 = arith.constant 0 : i32
    return %c0_i32, %c0_i32_0 : i32, i32
  }
  func.func @transform_20(%arg0: i32) -> (i32, i32) {
    %c0_i32 = arith.constant 0 : i32
    %c0_i32_0 = arith.constant 0 : i32
    %c0_i32_1 = arith.constant 0 : i32
    return %c0_i32, %c0_i32_0 : i32, i32
  }
  func.func @transform_21(%arg0: i32) -> (i32, i32) {
    %c0_i32 = arith.constant 0 : i32
    %c0_i32_0 = arith.constant 0 : i32
    %c0_i32_1 = arith.constant 0 : i32
    return %c0_i32, %c0_i32_0 : i32, i32
  }
  func.func @transform_22(%arg0: i32) -> (i32, i32) {
    %c0_i32 = arith.constant 0 : i32
    %c0_i32_0 = arith.constant 0 : i32
    %c0_i32_1 = arith.constant 0 : i32
    return %c0_i32, %c0_i32_0 : i32, i32
  }
  func.func @transform_23(%arg0: i32) -> (i32, i32) {
    %c0_i32 = arith.constant 0 : i32
    %c0_i32_0 = arith.constant 0 : i32
    %c0_i32_1 = arith.constant 0 : i32
    return %c0_i32, %c0_i32_0 : i32, i32
  }
  func.func @transform_24(%arg0: i32) -> (i32, i32) {
    %c0_i32 = arith.constant 0 : i32
    %c0_i32_0 = arith.constant 0 : i32
    %c0_i32_1 = arith.constant 0 : i32
    return %c0_i32, %c0_i32_0 : i32, i32
  }
  func.func @transform_25(%arg0: i32) -> (i32, i32, i32) {
    %c0_i32 = arith.constant 0 : i32
    %c0_i32_0 = arith.constant 0 : i32
    %c0_i32_1 = arith.constant 0 : i32
    return %arg0, %c0_i32, %c0_i32_0 : i32, i32, i32
  }
}

module attributes {stable_mosaic.version = 11 : i64} {
  func.func @_decoder_layer_kernel(%arg0: i32, %arg1: memref<2x16x128xbf16, #tpu.memory_space<vmem>>, %arg2: memref<2x16x128xbf16, #tpu.memory_space<vmem>>, %arg3: memref<2x1x16xf32, #tpu.memory_space<vmem>>, %arg4: memref<128x128xbf16, #tpu.memory_space<vmem>>, %arg5: memref<1x128xf32, #tpu.memory_space<vmem>>, %arg6: memref<128x256xbf16, #tpu.memory_space<vmem>>, %arg7: memref<1x256xf32, #tpu.memory_space<vmem>>, %arg8: memref<128x128xbf16, #tpu.memory_space<vmem>>, %arg9: memref<1x128xf32, #tpu.memory_space<vmem>>, %arg10: memref<1x128xf32, #tpu.memory_space<vmem>>, %arg11: memref<1x128xf32, #tpu.memory_space<vmem>>, %arg12: memref<128x128xbf16, #tpu.memory_space<vmem>>, %arg13: memref<1x128xf32, #tpu.memory_space<vmem>>, %arg14: memref<128x256xbf16, #tpu.memory_space<vmem>>, %arg15: memref<1x256xf32, #tpu.memory_space<vmem>>, %arg16: memref<128x128xbf16, #tpu.memory_space<vmem>>, %arg17: memref<1x128xf32, #tpu.memory_space<vmem>>, %arg18: memref<1x128xf32, #tpu.memory_space<vmem>>, %arg19: memref<1x128xf32, #tpu.memory_space<vmem>>, %arg20: memref<128x256xbf16, #tpu.memory_space<vmem>>, %arg21: memref<1x256xf32, #tpu.memory_space<vmem>>, %arg22: memref<256x128xbf16, #tpu.memory_space<vmem>>, %arg23: memref<1x128xf32, #tpu.memory_space<vmem>>, %arg24: memref<1x128xf32, #tpu.memory_space<vmem>>, %arg25: memref<1x128xf32, #tpu.memory_space<vmem>>, %arg26: memref<2x16x128xbf16, #tpu.memory_space<vmem>>) attributes {dimension_semantics = [#tpu.dimension_semantics<parallel>], iteration_bounds = array<i64: 2>, scalar_prefetch = 0 : i64, scratch_operands = 0 : i64, tpu.core_type = #tpu.core_type<tc>, window_params = [{transform_indices = @transform_0, window_bounds = array<i64: 2, 16, 128>}, {transform_indices = @transform_1, window_bounds = array<i64: 2, 16, 128>}, {transform_indices = @transform_2, window_bounds = array<i64: 2, 1, 16>}, {pipeline_mode = #tpu.pipeline_mode<synchronous>, transform_indices = @transform_3, window_bounds = array<i64: 128, 128>}, {pipeline_mode = #tpu.pipeline_mode<synchronous>, transform_indices = @transform_4, window_bounds = array<i64: 1, 128>}, {pipeline_mode = #tpu.pipeline_mode<synchronous>, transform_indices = @transform_5, window_bounds = array<i64: 128, 256>}, {pipeline_mode = #tpu.pipeline_mode<synchronous>, transform_indices = @transform_6, window_bounds = array<i64: 1, 256>}, {pipeline_mode = #tpu.pipeline_mode<synchronous>, transform_indices = @transform_7, window_bounds = array<i64: 128, 128>}, {pipeline_mode = #tpu.pipeline_mode<synchronous>, transform_indices = @transform_8, window_bounds = array<i64: 1, 128>}, {pipeline_mode = #tpu.pipeline_mode<synchronous>, transform_indices = @transform_9, window_bounds = array<i64: 1, 128>}, {pipeline_mode = #tpu.pipeline_mode<synchronous>, transform_indices = @transform_10, window_bounds = array<i64: 1, 128>}, {pipeline_mode = #tpu.pipeline_mode<synchronous>, transform_indices = @transform_11, window_bounds = array<i64: 128, 128>}, {pipeline_mode = #tpu.pipeline_mode<synchronous>, transform_indices = @transform_12, window_bounds = array<i64: 1, 128>}, {pipeline_mode = #tpu.pipeline_mode<synchronous>, transform_indices = @transform_13, window_bounds = array<i64: 128, 256>}, {pipeline_mode = #tpu.pipeline_mode<synchronous>, transform_indices = @transform_14, window_bounds = array<i64: 1, 256>}, {pipeline_mode = #tpu.pipeline_mode<synchronous>, transform_indices = @transform_15, window_bounds = array<i64: 128, 128>}, {pipeline_mode = #tpu.pipeline_mode<synchronous>, transform_indices = @transform_16, window_bounds = array<i64: 1, 128>}, {pipeline_mode = #tpu.pipeline_mode<synchronous>, transform_indices = @transform_17, window_bounds = array<i64: 1, 128>}, {pipeline_mode = #tpu.pipeline_mode<synchronous>, transform_indices = @transform_18, window_bounds = array<i64: 1, 128>}, {pipeline_mode = #tpu.pipeline_mode<synchronous>, transform_indices = @transform_19, window_bounds = array<i64: 128, 256>}, {pipeline_mode = #tpu.pipeline_mode<synchronous>, transform_indices = @transform_20, window_bounds = array<i64: 1, 256>}, {pipeline_mode = #tpu.pipeline_mode<synchronous>, transform_indices = @transform_21, window_bounds = array<i64: 256, 128>}, {pipeline_mode = #tpu.pipeline_mode<synchronous>, transform_indices = @transform_22, window_bounds = array<i64: 1, 128>}, {pipeline_mode = #tpu.pipeline_mode<synchronous>, transform_indices = @transform_23, window_bounds = array<i64: 1, 128>}, {pipeline_mode = #tpu.pipeline_mode<synchronous>, transform_indices = @transform_24, window_bounds = array<i64: 1, 128>}, {transform_indices = @transform_25, window_bounds = array<i64: 2, 16, 128>}]} {
    %c0 = arith.constant 0 : index
    %c0_0 = arith.constant 0 : index
    %c0_1 = arith.constant 0 : index
    %0 = vector.load %arg1[%c0, %c0_0, %c0_1] : memref<2x16x128xbf16, #tpu.memory_space<vmem>>, vector<2x16x128xbf16>
    %1 = vector.shape_cast %0 : vector<2x16x128xbf16> to vector<32x128xbf16>
    %c0_2 = arith.constant 0 : index
    %c0_3 = arith.constant 0 : index
    %c0_4 = arith.constant 0 : index
    %2 = vector.load %arg2[%c0_2, %c0_3, %c0_4] : memref<2x16x128xbf16, #tpu.memory_space<vmem>>, vector<2x16x128xbf16>
    %3 = vector.shape_cast %2 : vector<2x16x128xbf16> to vector<32x128xbf16>
    %4 = tpu.iota {dimensions = array<i32: 0>} : vector<16x16xi32>
    %5 = tpu.iota {dimensions = array<i32: 1>} : vector<16x16xi32>
    %6 = arith.cmpi sle, %5, %4 : vector<16x16xi32>
    %7 = vector.shape_cast %6 : vector<16x16xi1> to vector<1x16x16xi1>
    %c0_5 = arith.constant 0 : index
    %c0_6 = arith.constant 0 : index
    %c0_7 = arith.constant 0 : index
    %8 = vector.load %arg3[%c0_5, %c0_6, %c0_7] : memref<2x1x16xf32, #tpu.memory_space<vmem>>, vector<2x1x16xf32>
    %cst = arith.constant 0.000000e+00 : f32
    %9 = vector.broadcast %cst : f32 to vector<2x1x16xf32>
    %10 = arith.cmpf one, %8, %9 : vector<2x1x16xf32>
    %c0_8 = arith.constant 0 : index
    %c0_9 = arith.constant 0 : index
    %11 = vector.load %arg4[%c0_8, %c0_9] : memref<128x128xbf16, #tpu.memory_space<vmem>>, vector<128x128xbf16>
    %cst_10 = arith.constant dense<0.000000e+00> : vector<32x128xf32>
    %12 = tpu.matmul %1, %11, %cst_10 {dimension_numbers = #tpu.dot_dimension_numbers<[1], [0], [0], [1], [0, 0, 1, 1], [], []>} : vector<32x128xbf16>, vector<128x128xbf16>, vector<32x128xf32> -> vector<32x128xf32>
    %c0_11 = arith.constant 0 : index
    %c0_12 = arith.constant 0 : index
    %13 = vector.load %arg5[%c0_11, %c0_12] : memref<1x128xf32, #tpu.memory_space<vmem>>, vector<1x128xf32>
    %14 = vector.broadcast %13 : vector<1x128xf32> to vector<32x128xf32>
    %15 = arith.addf %12, %14 : vector<32x128xf32>
    %16 = arith.truncf %15 : vector<32x128xf32> to vector<32x128xbf16>
    %c0_13 = arith.constant 0 : index
    %c0_14 = arith.constant 0 : index
    %17 = vector.load %arg6[%c0_13, %c0_14] : memref<128x256xbf16, #tpu.memory_space<vmem>>, vector<128x256xbf16>
    %cst_15 = arith.constant dense<0.000000e+00> : vector<32x256xf32>
    %18 = tpu.matmul %1, %17, %cst_15 {dimension_numbers = #tpu.dot_dimension_numbers<[1], [0], [0], [1], [0, 0, 1, 1], [], []>} : vector<32x128xbf16>, vector<128x256xbf16>, vector<32x256xf32> -> vector<32x256xf32>
    %c0_16 = arith.constant 0 : index
    %c0_17 = arith.constant 0 : index
    %19 = vector.load %arg7[%c0_16, %c0_17] : memref<1x256xf32, #tpu.memory_space<vmem>>, vector<1x256xf32>
    %20 = vector.broadcast %19 : vector<1x256xf32> to vector<32x256xf32>
    %21 = arith.addf %18, %20 : vector<32x256xf32>
    %22 = arith.truncf %21 : vector<32x256xf32> to vector<32x256xbf16>
    %23 = vector.extract_strided_slice %16 {offsets = [0, 0], sizes = [32, 32], strides = [1, 1]} : vector<32x128xbf16> to vector<32x32xbf16>
    %24 = vector.shape_cast %23 : vector<32x32xbf16> to vector<2x16x32xbf16>
    %25 = vector.extract_strided_slice %22 {offsets = [0, 0], sizes = [32, 32], strides = [1, 1]} : vector<32x256xbf16> to vector<32x32xbf16>
    %26 = vector.shape_cast %25 : vector<32x32xbf16> to vector<2x16x32xbf16>
    %27 = vector.extract_strided_slice %22 {offsets = [0, 128], sizes = [32, 32], strides = [1, 1]} : vector<32x256xbf16> to vector<32x32xbf16>
    %28 = vector.shape_cast %27 : vector<32x32xbf16> to vector<2x16x32xbf16>
    "tpu.trace_start"() <{level = 10 : i32, message = "bqd,bkd->bqk"}> : () -> ()
    %cst_18 = arith.constant dense<0.000000e+00> : vector<2x16x16xf32>
    %29 = tpu.matmul %24, %26, %cst_18 {dimension_numbers = #tpu.dot_dimension_numbers<[2], [2], [1], [1], [0, 0, 0, 1, 1, 1], [0], [0]>} : vector<2x16x32xbf16>, vector<2x16x32xbf16>, vector<2x16x16xf32> -> vector<2x16x16xf32>
    "tpu.trace_stop"() : () -> ()
    %cst_19 = arith.constant 0.176776692 : f32
    %30 = vector.broadcast %cst_19 : f32 to vector<2x16x16xf32>
    %31 = arith.mulf %29, %30 : vector<2x16x16xf32>
    %cst_20 = arith.constant -1.000000e+09 : f32
    %32 = vector.shape_cast %7 : vector<1x16x16xi1> to vector<1x16x16xi1>
    %33 = vector.broadcast %32 : vector<1x16x16xi1> to vector<2x16x16xi1>
    %34 = vector.broadcast %cst_20 : f32 to vector<2x16x16xf32>
    %35 = arith.select %33, %31, %34 : vector<2x16x16xi1>, vector<2x16x16xf32>
    %cst_21 = arith.constant dense<0xFF800000> : vector<2x16xf32>
    %36 = vector.multi_reduction <maximumf>, %35, %cst_21 [2] : vector<2x16x16xf32> to vector<2x16xf32>
    %37 = vector.shape_cast %36 : vector<2x16xf32> to vector<2x16x1xf32>
    %38 = vector.broadcast %37 : vector<2x16x1xf32> to vector<2x16x16xf32>
    %39 = arith.subf %35, %38 : vector<2x16x16xf32>
    %40 = math.exp %39 : vector<2x16x16xf32>
    %cst_22 = arith.constant dense<0.000000e+00> : vector<2x16xf32>
    %41 = vector.multi_reduction <add>, %40, %cst_22 [2] : vector<2x16x16xf32> to vector<2x16xf32>
    %42 = vector.shape_cast %41 : vector<2x16xf32> to vector<2x16x1xf32>
    %43 = tpu.reciprocal %42 {approx = true} : vector<2x16x1xf32> -> vector<2x16x1xf32>
    %44 = vector.broadcast %43 : vector<2x16x1xf32> to vector<2x16x16xf32>
    %45 = arith.mulf %40, %44 : vector<2x16x16xf32>
    %46 = arith.truncf %45 : vector<2x16x16xf32> to vector<2x16x16xbf16>
    "tpu.trace_start"() <{level = 10 : i32, message = "bqk,bkd->bqd"}> : () -> ()
    %cst_23 = arith.constant dense<0.000000e+00> : vector<2x16x32xf32>
    %47 = tpu.matmul %46, %28, %cst_23 {dimension_numbers = #tpu.dot_dimension_numbers<[2], [1], [1], [2], [0, 0, 0, 1, 1, 2], [0], [0]>} : vector<2x16x16xbf16>, vector<2x16x32xbf16>, vector<2x16x32xf32> -> vector<2x16x32xf32>
    "tpu.trace_stop"() : () -> ()
    %48 = vector.shape_cast %47 : vector<2x16x32xf32> to vector<32x32xf32>
    %49 = arith.truncf %48 : vector<32x32xf32> to vector<32x32xbf16>
    %50 = vector.extract_strided_slice %16 {offsets = [0, 32], sizes = [32, 32], strides = [1, 1]} : vector<32x128xbf16> to vector<32x32xbf16>
    %51 = vector.shape_cast %50 : vector<32x32xbf16> to vector<2x16x32xbf16>
    %52 = vector.extract_strided_slice %22 {offsets = [0, 32], sizes = [32, 32], strides = [1, 1]} : vector<32x256xbf16> to vector<32x32xbf16>
    %53 = vector.shape_cast %52 : vector<32x32xbf16> to vector<2x16x32xbf16>
    %54 = vector.extract_strided_slice %22 {offsets = [0, 160], sizes = [32, 32], strides = [1, 1]} : vector<32x256xbf16> to vector<32x32xbf16>
    %55 = vector.shape_cast %54 : vector<32x32xbf16> to vector<2x16x32xbf16>
    "tpu.trace_start"() <{level = 10 : i32, message = "bqd,bkd->bqk"}> : () -> ()
    %cst_24 = arith.constant dense<0.000000e+00> : vector<2x16x16xf32>
    %56 = tpu.matmul %51, %53, %cst_24 {dimension_numbers = #tpu.dot_dimension_numbers<[2], [2], [1], [1], [0, 0, 0, 1, 1, 1], [0], [0]>} : vector<2x16x32xbf16>, vector<2x16x32xbf16>, vector<2x16x16xf32> -> vector<2x16x16xf32>
    "tpu.trace_stop"() : () -> ()
    %cst_25 = arith.constant 0.176776692 : f32
    %57 = vector.broadcast %cst_25 : f32 to vector<2x16x16xf32>
    %58 = arith.mulf %56, %57 : vector<2x16x16xf32>
    %cst_26 = arith.constant -1.000000e+09 : f32
    %59 = vector.shape_cast %7 : vector<1x16x16xi1> to vector<1x16x16xi1>
    %60 = vector.broadcast %59 : vector<1x16x16xi1> to vector<2x16x16xi1>
    %61 = vector.broadcast %cst_26 : f32 to vector<2x16x16xf32>
    %62 = arith.select %60, %58, %61 : vector<2x16x16xi1>, vector<2x16x16xf32>
    %cst_27 = arith.constant dense<0xFF800000> : vector<2x16xf32>
    %63 = vector.multi_reduction <maximumf>, %62, %cst_27 [2] : vector<2x16x16xf32> to vector<2x16xf32>
    %64 = vector.shape_cast %63 : vector<2x16xf32> to vector<2x16x1xf32>
    %65 = vector.broadcast %64 : vector<2x16x1xf32> to vector<2x16x16xf32>
    %66 = arith.subf %62, %65 : vector<2x16x16xf32>
    %67 = math.exp %66 : vector<2x16x16xf32>
    %cst_28 = arith.constant dense<0.000000e+00> : vector<2x16xf32>
    %68 = vector.multi_reduction <add>, %67, %cst_28 [2] : vector<2x16x16xf32> to vector<2x16xf32>
    %69 = vector.shape_cast %68 : vector<2x16xf32> to vector<2x16x1xf32>
    %70 = tpu.reciprocal %69 {approx = true} : vector<2x16x1xf32> -> vector<2x16x1xf32>
    %71 = vector.broadcast %70 : vector<2x16x1xf32> to vector<2x16x16xf32>
    %72 = arith.mulf %67, %71 : vector<2x16x16xf32>
    %73 = arith.truncf %72 : vector<2x16x16xf32> to vector<2x16x16xbf16>
    "tpu.trace_start"() <{level = 10 : i32, message = "bqk,bkd->bqd"}> : () -> ()
    %cst_29 = arith.constant dense<0.000000e+00> : vector<2x16x32xf32>
    %74 = tpu.matmul %73, %55, %cst_29 {dimension_numbers = #tpu.dot_dimension_numbers<[2], [1], [1], [2], [0, 0, 0, 1, 1, 2], [0], [0]>} : vector<2x16x16xbf16>, vector<2x16x32xbf16>, vector<2x16x32xf32> -> vector<2x16x32xf32>
    "tpu.trace_stop"() : () -> ()
    %75 = vector.shape_cast %74 : vector<2x16x32xf32> to vector<32x32xf32>
    %76 = arith.truncf %75 : vector<32x32xf32> to vector<32x32xbf16>
    %77 = vector.extract_strided_slice %16 {offsets = [0, 64], sizes = [32, 32], strides = [1, 1]} : vector<32x128xbf16> to vector<32x32xbf16>
    %78 = vector.shape_cast %77 : vector<32x32xbf16> to vector<2x16x32xbf16>
    %79 = vector.extract_strided_slice %22 {offsets = [0, 64], sizes = [32, 32], strides = [1, 1]} : vector<32x256xbf16> to vector<32x32xbf16>
    %80 = vector.shape_cast %79 : vector<32x32xbf16> to vector<2x16x32xbf16>
    %81 = vector.extract_strided_slice %22 {offsets = [0, 192], sizes = [32, 32], strides = [1, 1]} : vector<32x256xbf16> to vector<32x32xbf16>
    %82 = vector.shape_cast %81 : vector<32x32xbf16> to vector<2x16x32xbf16>
    "tpu.trace_start"() <{level = 10 : i32, message = "bqd,bkd->bqk"}> : () -> ()
    %cst_30 = arith.constant dense<0.000000e+00> : vector<2x16x16xf32>
    %83 = tpu.matmul %78, %80, %cst_30 {dimension_numbers = #tpu.dot_dimension_numbers<[2], [2], [1], [1], [0, 0, 0, 1, 1, 1], [0], [0]>} : vector<2x16x32xbf16>, vector<2x16x32xbf16>, vector<2x16x16xf32> -> vector<2x16x16xf32>
    "tpu.trace_stop"() : () -> ()
    %cst_31 = arith.constant 0.176776692 : f32
    %84 = vector.broadcast %cst_31 : f32 to vector<2x16x16xf32>
    %85 = arith.mulf %83, %84 : vector<2x16x16xf32>
    %cst_32 = arith.constant -1.000000e+09 : f32
    %86 = vector.shape_cast %7 : vector<1x16x16xi1> to vector<1x16x16xi1>
    %87 = vector.broadcast %86 : vector<1x16x16xi1> to vector<2x16x16xi1>
    %88 = vector.broadcast %cst_32 : f32 to vector<2x16x16xf32>
    %89 = arith.select %87, %85, %88 : vector<2x16x16xi1>, vector<2x16x16xf32>
    %cst_33 = arith.constant dense<0xFF800000> : vector<2x16xf32>
    %90 = vector.multi_reduction <maximumf>, %89, %cst_33 [2] : vector<2x16x16xf32> to vector<2x16xf32>
    %91 = vector.shape_cast %90 : vector<2x16xf32> to vector<2x16x1xf32>
    %92 = vector.broadcast %91 : vector<2x16x1xf32> to vector<2x16x16xf32>
    %93 = arith.subf %89, %92 : vector<2x16x16xf32>
    %94 = math.exp %93 : vector<2x16x16xf32>
    %cst_34 = arith.constant dense<0.000000e+00> : vector<2x16xf32>
    %95 = vector.multi_reduction <add>, %94, %cst_34 [2] : vector<2x16x16xf32> to vector<2x16xf32>
    %96 = vector.shape_cast %95 : vector<2x16xf32> to vector<2x16x1xf32>
    %97 = tpu.reciprocal %96 {approx = true} : vector<2x16x1xf32> -> vector<2x16x1xf32>
    %98 = vector.broadcast %97 : vector<2x16x1xf32> to vector<2x16x16xf32>
    %99 = arith.mulf %94, %98 : vector<2x16x16xf32>
    %100 = arith.truncf %99 : vector<2x16x16xf32> to vector<2x16x16xbf16>
    "tpu.trace_start"() <{level = 10 : i32, message = "bqk,bkd->bqd"}> : () -> ()
    %cst_35 = arith.constant dense<0.000000e+00> : vector<2x16x32xf32>
    %101 = tpu.matmul %100, %82, %cst_35 {dimension_numbers = #tpu.dot_dimension_numbers<[2], [1], [1], [2], [0, 0, 0, 1, 1, 2], [0], [0]>} : vector<2x16x16xbf16>, vector<2x16x32xbf16>, vector<2x16x32xf32> -> vector<2x16x32xf32>
    "tpu.trace_stop"() : () -> ()
    %102 = vector.shape_cast %101 : vector<2x16x32xf32> to vector<32x32xf32>
    %103 = arith.truncf %102 : vector<32x32xf32> to vector<32x32xbf16>
    %104 = vector.extract_strided_slice %16 {offsets = [0, 96], sizes = [32, 32], strides = [1, 1]} : vector<32x128xbf16> to vector<32x32xbf16>
    %105 = vector.shape_cast %104 : vector<32x32xbf16> to vector<2x16x32xbf16>
    %106 = vector.extract_strided_slice %22 {offsets = [0, 96], sizes = [32, 32], strides = [1, 1]} : vector<32x256xbf16> to vector<32x32xbf16>
    %107 = vector.shape_cast %106 : vector<32x32xbf16> to vector<2x16x32xbf16>
    %108 = vector.extract_strided_slice %22 {offsets = [0, 224], sizes = [32, 32], strides = [1, 1]} : vector<32x256xbf16> to vector<32x32xbf16>
    %109 = vector.shape_cast %108 : vector<32x32xbf16> to vector<2x16x32xbf16>
    "tpu.trace_start"() <{level = 10 : i32, message = "bqd,bkd->bqk"}> : () -> ()
    %cst_36 = arith.constant dense<0.000000e+00> : vector<2x16x16xf32>
    %110 = tpu.matmul %105, %107, %cst_36 {dimension_numbers = #tpu.dot_dimension_numbers<[2], [2], [1], [1], [0, 0, 0, 1, 1, 1], [0], [0]>} : vector<2x16x32xbf16>, vector<2x16x32xbf16>, vector<2x16x16xf32> -> vector<2x16x16xf32>
    "tpu.trace_stop"() : () -> ()
    %cst_37 = arith.constant 0.176776692 : f32
    %111 = vector.broadcast %cst_37 : f32 to vector<2x16x16xf32>
    %112 = arith.mulf %110, %111 : vector<2x16x16xf32>
    %cst_38 = arith.constant -1.000000e+09 : f32
    %113 = vector.shape_cast %7 : vector<1x16x16xi1> to vector<1x16x16xi1>
    %114 = vector.broadcast %113 : vector<1x16x16xi1> to vector<2x16x16xi1>
    %115 = vector.broadcast %cst_38 : f32 to vector<2x16x16xf32>
    %116 = arith.select %114, %112, %115 : vector<2x16x16xi1>, vector<2x16x16xf32>
    %cst_39 = arith.constant dense<0xFF800000> : vector<2x16xf32>
    %117 = vector.multi_reduction <maximumf>, %116, %cst_39 [2] : vector<2x16x16xf32> to vector<2x16xf32>
    %118 = vector.shape_cast %117 : vector<2x16xf32> to vector<2x16x1xf32>
    %119 = vector.broadcast %118 : vector<2x16x1xf32> to vector<2x16x16xf32>
    %120 = arith.subf %116, %119 : vector<2x16x16xf32>
    %121 = math.exp %120 : vector<2x16x16xf32>
    %cst_40 = arith.constant dense<0.000000e+00> : vector<2x16xf32>
    %122 = vector.multi_reduction <add>, %121, %cst_40 [2] : vector<2x16x16xf32> to vector<2x16xf32>
    %123 = vector.shape_cast %122 : vector<2x16xf32> to vector<2x16x1xf32>
    %124 = tpu.reciprocal %123 {approx = true} : vector<2x16x1xf32> -> vector<2x16x1xf32>
    %125 = vector.broadcast %124 : vector<2x16x1xf32> to vector<2x16x16xf32>
    %126 = arith.mulf %121, %125 : vector<2x16x16xf32>
    %127 = arith.truncf %126 : vector<2x16x16xf32> to vector<2x16x16xbf16>
    "tpu.trace_start"() <{level = 10 : i32, message = "bqk,bkd->bqd"}> : () -> ()
    %cst_41 = arith.constant dense<0.000000e+00> : vector<2x16x32xf32>
    %128 = tpu.matmul %127, %109, %cst_41 {dimension_numbers = #tpu.dot_dimension_numbers<[2], [1], [1], [2], [0, 0, 0, 1, 1, 2], [0], [0]>} : vector<2x16x16xbf16>, vector<2x16x32xbf16>, vector<2x16x32xf32> -> vector<2x16x32xf32>
    "tpu.trace_stop"() : () -> ()
    %129 = vector.shape_cast %128 : vector<2x16x32xf32> to vector<32x32xf32>
    %130 = arith.truncf %129 : vector<32x32xf32> to vector<32x32xbf16>
    %131 = tpu.concatenate %49, %76, %103, %130 in 1 : vector<32x32xbf16>, vector<32x32xbf16>, vector<32x32xbf16>, vector<32x32xbf16> -> vector<32x128xbf16>
    %c0_42 = arith.constant 0 : index
    %c0_43 = arith.constant 0 : index
    %132 = vector.load %arg8[%c0_42, %c0_43] : memref<128x128xbf16, #tpu.memory_space<vmem>>, vector<128x128xbf16>
    %cst_44 = arith.constant dense<0.000000e+00> : vector<32x128xf32>
    %133 = tpu.matmul %131, %132, %cst_44 {dimension_numbers = #tpu.dot_dimension_numbers<[1], [0], [0], [1], [0, 0, 1, 1], [], []>} : vector<32x128xbf16>, vector<128x128xbf16>, vector<32x128xf32> -> vector<32x128xf32>
    %c0_45 = arith.constant 0 : index
    %c0_46 = arith.constant 0 : index
    %134 = vector.load %arg9[%c0_45, %c0_46] : memref<1x128xf32, #tpu.memory_space<vmem>>, vector<1x128xf32>
    %135 = vector.broadcast %134 : vector<1x128xf32> to vector<32x128xf32>
    %136 = arith.addf %133, %135 : vector<32x128xf32>
    %137 = arith.extf %1 : vector<32x128xbf16> to vector<32x128xf32>
    %138 = arith.addf %137, %136 : vector<32x128xf32>
    %c0_47 = arith.constant 0 : index
    %c0_48 = arith.constant 0 : index
    %139 = vector.load %arg10[%c0_47, %c0_48] : memref<1x128xf32, #tpu.memory_space<vmem>>, vector<1x128xf32>
    %c0_49 = arith.constant 0 : index
    %c0_50 = arith.constant 0 : index
    %140 = vector.load %arg11[%c0_49, %c0_50] : memref<1x128xf32, #tpu.memory_space<vmem>>, vector<1x128xf32>
    %cst_51 = arith.constant dense<0.000000e+00> : vector<32xf32>
    %141 = vector.multi_reduction <add>, %138, %cst_51 [1] : vector<32x128xf32> to vector<32xf32>
    %142 = vector.shape_cast %141 : vector<32xf32> to vector<32x1xf32>
    %cst_52 = arith.constant 1.280000e+02 : f32
    %143 = vector.broadcast %cst_52 : f32 to vector<32x1xf32>
    %144 = arith.divf %142, %143 : vector<32x1xf32>
    %145 = vector.broadcast %144 : vector<32x1xf32> to vector<32x128xf32>
    %146 = arith.subf %138, %145 : vector<32x128xf32>
    %147 = arith.mulf %146, %146 : vector<32x128xf32>
    %cst_53 = arith.constant dense<0.000000e+00> : vector<32xf32>
    %148 = vector.multi_reduction <add>, %147, %cst_53 [1] : vector<32x128xf32> to vector<32xf32>
    %149 = vector.shape_cast %148 : vector<32xf32> to vector<32x1xf32>
    %cst_54 = arith.constant 1.280000e+02 : f32
    %150 = vector.broadcast %cst_54 : f32 to vector<32x1xf32>
    %151 = arith.divf %149, %150 : vector<32x1xf32>
    %152 = vector.broadcast %144 : vector<32x1xf32> to vector<32x128xf32>
    %153 = arith.subf %138, %152 : vector<32x128xf32>
    %cst_55 = arith.constant 9.99999974E-6 : f32
    %154 = vector.broadcast %cst_55 : f32 to vector<32x1xf32>
    %155 = arith.addf %151, %154 : vector<32x1xf32>
    %156 = math.rsqrt %155 : vector<32x1xf32>
    %157 = vector.broadcast %156 : vector<32x1xf32> to vector<32x128xf32>
    %158 = arith.mulf %153, %157 : vector<32x128xf32>
    %159 = vector.broadcast %139 : vector<1x128xf32> to vector<32x128xf32>
    %160 = arith.mulf %158, %159 : vector<32x128xf32>
    %161 = vector.broadcast %140 : vector<1x128xf32> to vector<32x128xf32>
    %162 = arith.addf %160, %161 : vector<32x128xf32>
    %163 = arith.truncf %162 : vector<32x128xf32> to vector<32x128xbf16>
    %c0_56 = arith.constant 0 : index
    %c0_57 = arith.constant 0 : index
    %164 = vector.load %arg12[%c0_56, %c0_57] : memref<128x128xbf16, #tpu.memory_space<vmem>>, vector<128x128xbf16>
    %cst_58 = arith.constant dense<0.000000e+00> : vector<32x128xf32>
    %165 = tpu.matmul %163, %164, %cst_58 {dimension_numbers = #tpu.dot_dimension_numbers<[1], [0], [0], [1], [0, 0, 1, 1], [], []>} : vector<32x128xbf16>, vector<128x128xbf16>, vector<32x128xf32> -> vector<32x128xf32>
    %c0_59 = arith.constant 0 : index
    %c0_60 = arith.constant 0 : index
    %166 = vector.load %arg13[%c0_59, %c0_60] : memref<1x128xf32, #tpu.memory_space<vmem>>, vector<1x128xf32>
    %167 = vector.broadcast %166 : vector<1x128xf32> to vector<32x128xf32>
    %168 = arith.addf %165, %167 : vector<32x128xf32>
    %169 = arith.truncf %168 : vector<32x128xf32> to vector<32x128xbf16>
    %c0_61 = arith.constant 0 : index
    %c0_62 = arith.constant 0 : index
    %170 = vector.load %arg14[%c0_61, %c0_62] : memref<128x256xbf16, #tpu.memory_space<vmem>>, vector<128x256xbf16>
    %cst_63 = arith.constant dense<0.000000e+00> : vector<32x256xf32>
    %171 = tpu.matmul %3, %170, %cst_63 {dimension_numbers = #tpu.dot_dimension_numbers<[1], [0], [0], [1], [0, 0, 1, 1], [], []>} : vector<32x128xbf16>, vector<128x256xbf16>, vector<32x256xf32> -> vector<32x256xf32>
    %c0_64 = arith.constant 0 : index
    %c0_65 = arith.constant 0 : index
    %172 = vector.load %arg15[%c0_64, %c0_65] : memref<1x256xf32, #tpu.memory_space<vmem>>, vector<1x256xf32>
    %173 = vector.broadcast %172 : vector<1x256xf32> to vector<32x256xf32>
    %174 = arith.addf %171, %173 : vector<32x256xf32>
    %175 = arith.truncf %174 : vector<32x256xf32> to vector<32x256xbf16>
    %176 = vector.extract_strided_slice %169 {offsets = [0, 0], sizes = [32, 32], strides = [1, 1]} : vector<32x128xbf16> to vector<32x32xbf16>
    %177 = vector.shape_cast %176 : vector<32x32xbf16> to vector<2x16x32xbf16>
    %178 = vector.extract_strided_slice %175 {offsets = [0, 0], sizes = [32, 32], strides = [1, 1]} : vector<32x256xbf16> to vector<32x32xbf16>
    %179 = vector.shape_cast %178 : vector<32x32xbf16> to vector<2x16x32xbf16>
    %180 = vector.extract_strided_slice %175 {offsets = [0, 128], sizes = [32, 32], strides = [1, 1]} : vector<32x256xbf16> to vector<32x32xbf16>
    %181 = vector.shape_cast %180 : vector<32x32xbf16> to vector<2x16x32xbf16>
    "tpu.trace_start"() <{level = 10 : i32, message = "bqd,bkd->bqk"}> : () -> ()
    %cst_66 = arith.constant dense<0.000000e+00> : vector<2x16x16xf32>
    %182 = tpu.matmul %177, %179, %cst_66 {dimension_numbers = #tpu.dot_dimension_numbers<[2], [2], [1], [1], [0, 0, 0, 1, 1, 1], [0], [0]>} : vector<2x16x32xbf16>, vector<2x16x32xbf16>, vector<2x16x16xf32> -> vector<2x16x16xf32>
    "tpu.trace_stop"() : () -> ()
    %cst_67 = arith.constant 0.176776692 : f32
    %183 = vector.broadcast %cst_67 : f32 to vector<2x16x16xf32>
    %184 = arith.mulf %182, %183 : vector<2x16x16xf32>
    %cst_68 = arith.constant -1.000000e+09 : f32
    %185 = vector.shape_cast %10 : vector<2x1x16xi1> to vector<2x1x16xi1>
    %186 = vector.broadcast %185 : vector<2x1x16xi1> to vector<2x16x16xi1>
    %187 = vector.broadcast %cst_68 : f32 to vector<2x16x16xf32>
    %188 = arith.select %186, %184, %187 : vector<2x16x16xi1>, vector<2x16x16xf32>
    %cst_69 = arith.constant dense<0xFF800000> : vector<2x16xf32>
    %189 = vector.multi_reduction <maximumf>, %188, %cst_69 [2] : vector<2x16x16xf32> to vector<2x16xf32>
    %190 = vector.shape_cast %189 : vector<2x16xf32> to vector<2x16x1xf32>
    %191 = vector.broadcast %190 : vector<2x16x1xf32> to vector<2x16x16xf32>
    %192 = arith.subf %188, %191 : vector<2x16x16xf32>
    %193 = math.exp %192 : vector<2x16x16xf32>
    %cst_70 = arith.constant dense<0.000000e+00> : vector<2x16xf32>
    %194 = vector.multi_reduction <add>, %193, %cst_70 [2] : vector<2x16x16xf32> to vector<2x16xf32>
    %195 = vector.shape_cast %194 : vector<2x16xf32> to vector<2x16x1xf32>
    %196 = tpu.reciprocal %195 {approx = true} : vector<2x16x1xf32> -> vector<2x16x1xf32>
    %197 = vector.broadcast %196 : vector<2x16x1xf32> to vector<2x16x16xf32>
    %198 = arith.mulf %193, %197 : vector<2x16x16xf32>
    %199 = arith.truncf %198 : vector<2x16x16xf32> to vector<2x16x16xbf16>
    "tpu.trace_start"() <{level = 10 : i32, message = "bqk,bkd->bqd"}> : () -> ()
    %cst_71 = arith.constant dense<0.000000e+00> : vector<2x16x32xf32>
    %200 = tpu.matmul %199, %181, %cst_71 {dimension_numbers = #tpu.dot_dimension_numbers<[2], [1], [1], [2], [0, 0, 0, 1, 1, 2], [0], [0]>} : vector<2x16x16xbf16>, vector<2x16x32xbf16>, vector<2x16x32xf32> -> vector<2x16x32xf32>
    "tpu.trace_stop"() : () -> ()
    %201 = vector.shape_cast %200 : vector<2x16x32xf32> to vector<32x32xf32>
    %202 = arith.truncf %201 : vector<32x32xf32> to vector<32x32xbf16>
    %203 = vector.extract_strided_slice %169 {offsets = [0, 32], sizes = [32, 32], strides = [1, 1]} : vector<32x128xbf16> to vector<32x32xbf16>
    %204 = vector.shape_cast %203 : vector<32x32xbf16> to vector<2x16x32xbf16>
    %205 = vector.extract_strided_slice %175 {offsets = [0, 32], sizes = [32, 32], strides = [1, 1]} : vector<32x256xbf16> to vector<32x32xbf16>
    %206 = vector.shape_cast %205 : vector<32x32xbf16> to vector<2x16x32xbf16>
    %207 = vector.extract_strided_slice %175 {offsets = [0, 160], sizes = [32, 32], strides = [1, 1]} : vector<32x256xbf16> to vector<32x32xbf16>
    %208 = vector.shape_cast %207 : vector<32x32xbf16> to vector<2x16x32xbf16>
    "tpu.trace_start"() <{level = 10 : i32, message = "bqd,bkd->bqk"}> : () -> ()
    %cst_72 = arith.constant dense<0.000000e+00> : vector<2x16x16xf32>
    %209 = tpu.matmul %204, %206, %cst_72 {dimension_numbers = #tpu.dot_dimension_numbers<[2], [2], [1], [1], [0, 0, 0, 1, 1, 1], [0], [0]>} : vector<2x16x32xbf16>, vector<2x16x32xbf16>, vector<2x16x16xf32> -> vector<2x16x16xf32>
    "tpu.trace_stop"() : () -> ()
    %cst_73 = arith.constant 0.176776692 : f32
    %210 = vector.broadcast %cst_73 : f32 to vector<2x16x16xf32>
    %211 = arith.mulf %209, %210 : vector<2x16x16xf32>
    %cst_74 = arith.constant -1.000000e+09 : f32
    %212 = vector.shape_cast %10 : vector<2x1x16xi1> to vector<2x1x16xi1>
    %213 = vector.broadcast %212 : vector<2x1x16xi1> to vector<2x16x16xi1>
    %214 = vector.broadcast %cst_74 : f32 to vector<2x16x16xf32>
    %215 = arith.select %213, %211, %214 : vector<2x16x16xi1>, vector<2x16x16xf32>
    %cst_75 = arith.constant dense<0xFF800000> : vector<2x16xf32>
    %216 = vector.multi_reduction <maximumf>, %215, %cst_75 [2] : vector<2x16x16xf32> to vector<2x16xf32>
    %217 = vector.shape_cast %216 : vector<2x16xf32> to vector<2x16x1xf32>
    %218 = vector.broadcast %217 : vector<2x16x1xf32> to vector<2x16x16xf32>
    %219 = arith.subf %215, %218 : vector<2x16x16xf32>
    %220 = math.exp %219 : vector<2x16x16xf32>
    %cst_76 = arith.constant dense<0.000000e+00> : vector<2x16xf32>
    %221 = vector.multi_reduction <add>, %220, %cst_76 [2] : vector<2x16x16xf32> to vector<2x16xf32>
    %222 = vector.shape_cast %221 : vector<2x16xf32> to vector<2x16x1xf32>
    %223 = tpu.reciprocal %222 {approx = true} : vector<2x16x1xf32> -> vector<2x16x1xf32>
    %224 = vector.broadcast %223 : vector<2x16x1xf32> to vector<2x16x16xf32>
    %225 = arith.mulf %220, %224 : vector<2x16x16xf32>
    %226 = arith.truncf %225 : vector<2x16x16xf32> to vector<2x16x16xbf16>
    "tpu.trace_start"() <{level = 10 : i32, message = "bqk,bkd->bqd"}> : () -> ()
    %cst_77 = arith.constant dense<0.000000e+00> : vector<2x16x32xf32>
    %227 = tpu.matmul %226, %208, %cst_77 {dimension_numbers = #tpu.dot_dimension_numbers<[2], [1], [1], [2], [0, 0, 0, 1, 1, 2], [0], [0]>} : vector<2x16x16xbf16>, vector<2x16x32xbf16>, vector<2x16x32xf32> -> vector<2x16x32xf32>
    "tpu.trace_stop"() : () -> ()
    %228 = vector.shape_cast %227 : vector<2x16x32xf32> to vector<32x32xf32>
    %229 = arith.truncf %228 : vector<32x32xf32> to vector<32x32xbf16>
    %230 = vector.extract_strided_slice %169 {offsets = [0, 64], sizes = [32, 32], strides = [1, 1]} : vector<32x128xbf16> to vector<32x32xbf16>
    %231 = vector.shape_cast %230 : vector<32x32xbf16> to vector<2x16x32xbf16>
    %232 = vector.extract_strided_slice %175 {offsets = [0, 64], sizes = [32, 32], strides = [1, 1]} : vector<32x256xbf16> to vector<32x32xbf16>
    %233 = vector.shape_cast %232 : vector<32x32xbf16> to vector<2x16x32xbf16>
    %234 = vector.extract_strided_slice %175 {offsets = [0, 192], sizes = [32, 32], strides = [1, 1]} : vector<32x256xbf16> to vector<32x32xbf16>
    %235 = vector.shape_cast %234 : vector<32x32xbf16> to vector<2x16x32xbf16>
    "tpu.trace_start"() <{level = 10 : i32, message = "bqd,bkd->bqk"}> : () -> ()
    %cst_78 = arith.constant dense<0.000000e+00> : vector<2x16x16xf32>
    %236 = tpu.matmul %231, %233, %cst_78 {dimension_numbers = #tpu.dot_dimension_numbers<[2], [2], [1], [1], [0, 0, 0, 1, 1, 1], [0], [0]>} : vector<2x16x32xbf16>, vector<2x16x32xbf16>, vector<2x16x16xf32> -> vector<2x16x16xf32>
    "tpu.trace_stop"() : () -> ()
    %cst_79 = arith.constant 0.176776692 : f32
    %237 = vector.broadcast %cst_79 : f32 to vector<2x16x16xf32>
    %238 = arith.mulf %236, %237 : vector<2x16x16xf32>
    %cst_80 = arith.constant -1.000000e+09 : f32
    %239 = vector.shape_cast %10 : vector<2x1x16xi1> to vector<2x1x16xi1>
    %240 = vector.broadcast %239 : vector<2x1x16xi1> to vector<2x16x16xi1>
    %241 = vector.broadcast %cst_80 : f32 to vector<2x16x16xf32>
    %242 = arith.select %240, %238, %241 : vector<2x16x16xi1>, vector<2x16x16xf32>
    %cst_81 = arith.constant dense<0xFF800000> : vector<2x16xf32>
    %243 = vector.multi_reduction <maximumf>, %242, %cst_81 [2] : vector<2x16x16xf32> to vector<2x16xf32>
    %244 = vector.shape_cast %243 : vector<2x16xf32> to vector<2x16x1xf32>
    %245 = vector.broadcast %244 : vector<2x16x1xf32> to vector<2x16x16xf32>
    %246 = arith.subf %242, %245 : vector<2x16x16xf32>
    %247 = math.exp %246 : vector<2x16x16xf32>
    %cst_82 = arith.constant dense<0.000000e+00> : vector<2x16xf32>
    %248 = vector.multi_reduction <add>, %247, %cst_82 [2] : vector<2x16x16xf32> to vector<2x16xf32>
    %249 = vector.shape_cast %248 : vector<2x16xf32> to vector<2x16x1xf32>
    %250 = tpu.reciprocal %249 {approx = true} : vector<2x16x1xf32> -> vector<2x16x1xf32>
    %251 = vector.broadcast %250 : vector<2x16x1xf32> to vector<2x16x16xf32>
    %252 = arith.mulf %247, %251 : vector<2x16x16xf32>
    %253 = arith.truncf %252 : vector<2x16x16xf32> to vector<2x16x16xbf16>
    "tpu.trace_start"() <{level = 10 : i32, message = "bqk,bkd->bqd"}> : () -> ()
    %cst_83 = arith.constant dense<0.000000e+00> : vector<2x16x32xf32>
    %254 = tpu.matmul %253, %235, %cst_83 {dimension_numbers = #tpu.dot_dimension_numbers<[2], [1], [1], [2], [0, 0, 0, 1, 1, 2], [0], [0]>} : vector<2x16x16xbf16>, vector<2x16x32xbf16>, vector<2x16x32xf32> -> vector<2x16x32xf32>
    "tpu.trace_stop"() : () -> ()
    %255 = vector.shape_cast %254 : vector<2x16x32xf32> to vector<32x32xf32>
    %256 = arith.truncf %255 : vector<32x32xf32> to vector<32x32xbf16>
    %257 = vector.extract_strided_slice %169 {offsets = [0, 96], sizes = [32, 32], strides = [1, 1]} : vector<32x128xbf16> to vector<32x32xbf16>
    %258 = vector.shape_cast %257 : vector<32x32xbf16> to vector<2x16x32xbf16>
    %259 = vector.extract_strided_slice %175 {offsets = [0, 96], sizes = [32, 32], strides = [1, 1]} : vector<32x256xbf16> to vector<32x32xbf16>
    %260 = vector.shape_cast %259 : vector<32x32xbf16> to vector<2x16x32xbf16>
    %261 = vector.extract_strided_slice %175 {offsets = [0, 224], sizes = [32, 32], strides = [1, 1]} : vector<32x256xbf16> to vector<32x32xbf16>
    %262 = vector.shape_cast %261 : vector<32x32xbf16> to vector<2x16x32xbf16>
    "tpu.trace_start"() <{level = 10 : i32, message = "bqd,bkd->bqk"}> : () -> ()
    %cst_84 = arith.constant dense<0.000000e+00> : vector<2x16x16xf32>
    %263 = tpu.matmul %258, %260, %cst_84 {dimension_numbers = #tpu.dot_dimension_numbers<[2], [2], [1], [1], [0, 0, 0, 1, 1, 1], [0], [0]>} : vector<2x16x32xbf16>, vector<2x16x32xbf16>, vector<2x16x16xf32> -> vector<2x16x16xf32>
    "tpu.trace_stop"() : () -> ()
    %cst_85 = arith.constant 0.176776692 : f32
    %264 = vector.broadcast %cst_85 : f32 to vector<2x16x16xf32>
    %265 = arith.mulf %263, %264 : vector<2x16x16xf32>
    %cst_86 = arith.constant -1.000000e+09 : f32
    %266 = vector.shape_cast %10 : vector<2x1x16xi1> to vector<2x1x16xi1>
    %267 = vector.broadcast %266 : vector<2x1x16xi1> to vector<2x16x16xi1>
    %268 = vector.broadcast %cst_86 : f32 to vector<2x16x16xf32>
    %269 = arith.select %267, %265, %268 : vector<2x16x16xi1>, vector<2x16x16xf32>
    %cst_87 = arith.constant dense<0xFF800000> : vector<2x16xf32>
    %270 = vector.multi_reduction <maximumf>, %269, %cst_87 [2] : vector<2x16x16xf32> to vector<2x16xf32>
    %271 = vector.shape_cast %270 : vector<2x16xf32> to vector<2x16x1xf32>
    %272 = vector.broadcast %271 : vector<2x16x1xf32> to vector<2x16x16xf32>
    %273 = arith.subf %269, %272 : vector<2x16x16xf32>
    %274 = math.exp %273 : vector<2x16x16xf32>
    %cst_88 = arith.constant dense<0.000000e+00> : vector<2x16xf32>
    %275 = vector.multi_reduction <add>, %274, %cst_88 [2] : vector<2x16x16xf32> to vector<2x16xf32>
    %276 = vector.shape_cast %275 : vector<2x16xf32> to vector<2x16x1xf32>
    %277 = tpu.reciprocal %276 {approx = true} : vector<2x16x1xf32> -> vector<2x16x1xf32>
    %278 = vector.broadcast %277 : vector<2x16x1xf32> to vector<2x16x16xf32>
    %279 = arith.mulf %274, %278 : vector<2x16x16xf32>
    %280 = arith.truncf %279 : vector<2x16x16xf32> to vector<2x16x16xbf16>
    "tpu.trace_start"() <{level = 10 : i32, message = "bqk,bkd->bqd"}> : () -> ()
    %cst_89 = arith.constant dense<0.000000e+00> : vector<2x16x32xf32>
    %281 = tpu.matmul %280, %262, %cst_89 {dimension_numbers = #tpu.dot_dimension_numbers<[2], [1], [1], [2], [0, 0, 0, 1, 1, 2], [0], [0]>} : vector<2x16x16xbf16>, vector<2x16x32xbf16>, vector<2x16x32xf32> -> vector<2x16x32xf32>
    "tpu.trace_stop"() : () -> ()
    %282 = vector.shape_cast %281 : vector<2x16x32xf32> to vector<32x32xf32>
    %283 = arith.truncf %282 : vector<32x32xf32> to vector<32x32xbf16>
    %284 = tpu.concatenate %202, %229, %256, %283 in 1 : vector<32x32xbf16>, vector<32x32xbf16>, vector<32x32xbf16>, vector<32x32xbf16> -> vector<32x128xbf16>
    %c0_90 = arith.constant 0 : index
    %c0_91 = arith.constant 0 : index
    %285 = vector.load %arg16[%c0_90, %c0_91] : memref<128x128xbf16, #tpu.memory_space<vmem>>, vector<128x128xbf16>
    %cst_92 = arith.constant dense<0.000000e+00> : vector<32x128xf32>
    %286 = tpu.matmul %284, %285, %cst_92 {dimension_numbers = #tpu.dot_dimension_numbers<[1], [0], [0], [1], [0, 0, 1, 1], [], []>} : vector<32x128xbf16>, vector<128x128xbf16>, vector<32x128xf32> -> vector<32x128xf32>
    %c0_93 = arith.constant 0 : index
    %c0_94 = arith.constant 0 : index
    %287 = vector.load %arg17[%c0_93, %c0_94] : memref<1x128xf32, #tpu.memory_space<vmem>>, vector<1x128xf32>
    %288 = vector.broadcast %287 : vector<1x128xf32> to vector<32x128xf32>
    %289 = arith.addf %286, %288 : vector<32x128xf32>
    %290 = arith.addf %162, %289 : vector<32x128xf32>
    %c0_95 = arith.constant 0 : index
    %c0_96 = arith.constant 0 : index
    %291 = vector.load %arg18[%c0_95, %c0_96] : memref<1x128xf32, #tpu.memory_space<vmem>>, vector<1x128xf32>
    %c0_97 = arith.constant 0 : index
    %c0_98 = arith.constant 0 : index
    %292 = vector.load %arg19[%c0_97, %c0_98] : memref<1x128xf32, #tpu.memory_space<vmem>>, vector<1x128xf32>
    %cst_99 = arith.constant dense<0.000000e+00> : vector<32xf32>
    %293 = vector.multi_reduction <add>, %290, %cst_99 [1] : vector<32x128xf32> to vector<32xf32>
    %294 = vector.shape_cast %293 : vector<32xf32> to vector<32x1xf32>
    %cst_100 = arith.constant 1.280000e+02 : f32
    %295 = vector.broadcast %cst_100 : f32 to vector<32x1xf32>
    %296 = arith.divf %294, %295 : vector<32x1xf32>
    %297 = vector.broadcast %296 : vector<32x1xf32> to vector<32x128xf32>
    %298 = arith.subf %290, %297 : vector<32x128xf32>
    %299 = arith.mulf %298, %298 : vector<32x128xf32>
    %cst_101 = arith.constant dense<0.000000e+00> : vector<32xf32>
    %300 = vector.multi_reduction <add>, %299, %cst_101 [1] : vector<32x128xf32> to vector<32xf32>
    %301 = vector.shape_cast %300 : vector<32xf32> to vector<32x1xf32>
    %cst_102 = arith.constant 1.280000e+02 : f32
    %302 = vector.broadcast %cst_102 : f32 to vector<32x1xf32>
    %303 = arith.divf %301, %302 : vector<32x1xf32>
    %304 = vector.broadcast %296 : vector<32x1xf32> to vector<32x128xf32>
    %305 = arith.subf %290, %304 : vector<32x128xf32>
    %cst_103 = arith.constant 9.99999974E-6 : f32
    %306 = vector.broadcast %cst_103 : f32 to vector<32x1xf32>
    %307 = arith.addf %303, %306 : vector<32x1xf32>
    %308 = math.rsqrt %307 : vector<32x1xf32>
    %309 = vector.broadcast %308 : vector<32x1xf32> to vector<32x128xf32>
    %310 = arith.mulf %305, %309 : vector<32x128xf32>
    %311 = vector.broadcast %291 : vector<1x128xf32> to vector<32x128xf32>
    %312 = arith.mulf %310, %311 : vector<32x128xf32>
    %313 = vector.broadcast %292 : vector<1x128xf32> to vector<32x128xf32>
    %314 = arith.addf %312, %313 : vector<32x128xf32>
    %315 = arith.truncf %314 : vector<32x128xf32> to vector<32x128xbf16>
    %c0_104 = arith.constant 0 : index
    %c0_105 = arith.constant 0 : index
    %316 = vector.load %arg20[%c0_104, %c0_105] : memref<128x256xbf16, #tpu.memory_space<vmem>>, vector<128x256xbf16>
    %cst_106 = arith.constant dense<0.000000e+00> : vector<32x256xf32>
    %317 = tpu.matmul %315, %316, %cst_106 {dimension_numbers = #tpu.dot_dimension_numbers<[1], [0], [0], [1], [0, 0, 1, 1], [], []>} : vector<32x128xbf16>, vector<128x256xbf16>, vector<32x256xf32> -> vector<32x256xf32>
    %c0_107 = arith.constant 0 : index
    %c0_108 = arith.constant 0 : index
    %318 = vector.load %arg21[%c0_107, %c0_108] : memref<1x256xf32, #tpu.memory_space<vmem>>, vector<1x256xf32>
    %319 = vector.broadcast %318 : vector<1x256xf32> to vector<32x256xf32>
    %320 = arith.addf %317, %319 : vector<32x256xf32>
    %cst_109 = arith.constant 0.000000e+00 : f32
    %321 = vector.broadcast %cst_109 : f32 to vector<32x256xf32>
    %322 = arith.maximumf %320, %321 : vector<32x256xf32>
    %323 = arith.truncf %322 : vector<32x256xf32> to vector<32x256xbf16>
    %c0_110 = arith.constant 0 : index
    %c0_111 = arith.constant 0 : index
    %324 = vector.load %arg22[%c0_110, %c0_111] : memref<256x128xbf16, #tpu.memory_space<vmem>>, vector<256x128xbf16>
    %cst_112 = arith.constant dense<0.000000e+00> : vector<32x128xf32>
    %325 = tpu.matmul %323, %324, %cst_112 {dimension_numbers = #tpu.dot_dimension_numbers<[1], [0], [0], [1], [0, 0, 1, 1], [], []>} : vector<32x256xbf16>, vector<256x128xbf16>, vector<32x128xf32> -> vector<32x128xf32>
    %c0_113 = arith.constant 0 : index
    %c0_114 = arith.constant 0 : index
    %326 = vector.load %arg23[%c0_113, %c0_114] : memref<1x128xf32, #tpu.memory_space<vmem>>, vector<1x128xf32>
    %327 = vector.broadcast %326 : vector<1x128xf32> to vector<32x128xf32>
    %328 = arith.addf %325, %327 : vector<32x128xf32>
    %329 = arith.addf %314, %328 : vector<32x128xf32>
    %c0_115 = arith.constant 0 : index
    %c0_116 = arith.constant 0 : index
    %330 = vector.load %arg24[%c0_115, %c0_116] : memref<1x128xf32, #tpu.memory_space<vmem>>, vector<1x128xf32>
    %c0_117 = arith.constant 0 : index
    %c0_118 = arith.constant 0 : index
    %331 = vector.load %arg25[%c0_117, %c0_118] : memref<1x128xf32, #tpu.memory_space<vmem>>, vector<1x128xf32>
    %cst_119 = arith.constant dense<0.000000e+00> : vector<32xf32>
    %332 = vector.multi_reduction <add>, %329, %cst_119 [1] : vector<32x128xf32> to vector<32xf32>
    %333 = vector.shape_cast %332 : vector<32xf32> to vector<32x1xf32>
    %cst_120 = arith.constant 1.280000e+02 : f32
    %334 = vector.broadcast %cst_120 : f32 to vector<32x1xf32>
    %335 = arith.divf %333, %334 : vector<32x1xf32>
    %336 = vector.broadcast %335 : vector<32x1xf32> to vector<32x128xf32>
    %337 = arith.subf %329, %336 : vector<32x128xf32>
    %338 = arith.mulf %337, %337 : vector<32x128xf32>
    %cst_121 = arith.constant dense<0.000000e+00> : vector<32xf32>
    %339 = vector.multi_reduction <add>, %338, %cst_121 [1] : vector<32x128xf32> to vector<32xf32>
    %340 = vector.shape_cast %339 : vector<32xf32> to vector<32x1xf32>
    %cst_122 = arith.constant 1.280000e+02 : f32
    %341 = vector.broadcast %cst_122 : f32 to vector<32x1xf32>
    %342 = arith.divf %340, %341 : vector<32x1xf32>
    %343 = vector.broadcast %335 : vector<32x1xf32> to vector<32x128xf32>
    %344 = arith.subf %329, %343 : vector<32x128xf32>
    %cst_123 = arith.constant 9.99999974E-6 : f32
    %345 = vector.broadcast %cst_123 : f32 to vector<32x1xf32>
    %346 = arith.addf %342, %345 : vector<32x1xf32>
    %347 = math.rsqrt %346 : vector<32x1xf32>
    %348 = vector.broadcast %347 : vector<32x1xf32> to vector<32x128xf32>
    %349 = arith.mulf %344, %348 : vector<32x128xf32>
    %350 = vector.broadcast %330 : vector<1x128xf32> to vector<32x128xf32>
    %351 = arith.mulf %349, %350 : vector<32x128xf32>
    %352 = vector.broadcast %331 : vector<1x128xf32> to vector<32x128xf32>
    %353 = arith.addf %351, %352 : vector<32x128xf32>
    %354 = arith.truncf %353 : vector<32x128xf32> to vector<32x128xbf16>
    %355 = vector.shape_cast %354 : vector<32x128xbf16> to vector<2x16x128xbf16>
    %c0_124 = arith.constant 0 : index
    %c0_125 = arith.constant 0 : index
    %c0_126 = arith.constant 0 : index
    %356 = vector.load %arg26[%c0_124, %c0_125, %c0_126] : memref<2x16x128xbf16, #tpu.memory_space<vmem>>, vector<2x16x128xbf16>
    tpu.vector_store %arg26[%c0_124, %c0_125, %c0_126], %355 {strides = array<i32>} : memref<2x16x128xbf16, #tpu.memory_space<vmem>>, vector<2x16x128xbf16>,
    return
  }
  func.func @transform_0(%arg0: i32) -> (i32, i32, i32) {
    %c0_i32 = arith.constant 0 : i32
    %c0_i32_0 = arith.constant 0 : i32
    %c0_i32_1 = arith.constant 0 : i32
    return %arg0, %c0_i32, %c0_i32_0 : i32, i32, i32
  }
  func.func @transform_1(%arg0: i32) -> (i32, i32, i32) {
    %c0_i32 = arith.constant 0 : i32
    %c0_i32_0 = arith.constant 0 : i32
    %c0_i32_1 = arith.constant 0 : i32
    return %arg0, %c0_i32, %c0_i32_0 : i32, i32, i32
  }
  func.func @transform_2(%arg0: i32) -> (i32, i32, i32) {
    %c0_i32 = arith.constant 0 : i32
    %c0_i32_0 = arith.constant 0 : i32
    %c0_i32_1 = arith.constant 0 : i32
    return %arg0, %c0_i32, %c0_i32_0 : i32, i32, i32
  }
  func.func @transform_3(%arg0: i32) -> (i32, i32) {
    %c0_i32 = arith.constant 0 : i32
    %c0_i32_0 = arith.constant 0 : i32
    %c0_i32_1 = arith.constant 0 : i32
    return %c0_i32, %c0_i32_0 : i32, i32
  }
  func.func @transform_4(%arg0: i32) -> (i32, i32) {
    %c0_i32 = arith.constant 0 : i32
    %c0_i32_0 = arith.constant 0 : i32
    %c0_i32_1 = arith.constant 0 : i32
    return %c0_i32, %c0_i32_0 : i32, i32
  }
  func.func @transform_5(%arg0: i32) -> (i32, i32) {
    %c0_i32 = arith.constant 0 : i32
    %c0_i32_0 = arith.constant 0 : i32
    %c0_i32_1 = arith.constant 0 : i32
    return %c0_i32, %c0_i32_0 : i32, i32
  }
  func.func @transform_6(%arg0: i32) -> (i32, i32) {
    %c0_i32 = arith.constant 0 : i32
    %c0_i32_0 = arith.constant 0 : i32
    %c0_i32_1 = arith.constant 0 : i32
    return %c0_i32, %c0_i32_0 : i32, i32
  }
  func.func @transform_7(%arg0: i32) -> (i32, i32) {
    %c0_i32 = arith.constant 0 : i32
    %c0_i32_0 = arith.constant 0 : i32
    %c0_i32_1 = arith.constant 0 : i32
    return %c0_i32, %c0_i32_0 : i32, i32
  }
  func.func @transform_8(%arg0: i32) -> (i32, i32) {
    %c0_i32 = arith.constant 0 : i32
    %c0_i32_0 = arith.constant 0 : i32
    %c0_i32_1 = arith.constant 0 : i32
    return %c0_i32, %c0_i32_0 : i32, i32
  }
  func.func @transform_9(%arg0: i32) -> (i32, i32) {
    %c0_i32 = arith.constant 0 : i32
    %c0_i32_0 = arith.constant 0 : i32
    %c0_i32_1 = arith.constant 0 : i32
    return %c0_i32, %c0_i32_0 : i32, i32
  }
  func.func @transform_10(%arg0: i32) -> (i32, i32) {
    %c0_i32 = arith.constant 0 : i32
    %c0_i32_0 = arith.constant 0 : i32
    %c0_i32_1 = arith.constant 0 : i32
    return %c0_i32, %c0_i32_0 : i32, i32
  }
  func.func @transform_11(%arg0: i32) -> (i32, i32) {
    %c0_i32 = arith.constant 0 : i32
    %c0_i32_0 = arith.constant 0 : i32
    %c0_i32_1 = arith.constant 0 : i32
    return %c0_i32, %c0_i32_0 : i32, i32
  }
  func.func @transform_12(%arg0: i32) -> (i32, i32) {
    %c0_i32 = arith.constant 0 : i32
    %c0_i32_0 = arith.constant 0 : i32
    %c0_i32_1 = arith.constant 0 : i32
    return %c0_i32, %c0_i32_0 : i32, i32
  }
  func.func @transform_13(%arg0: i32) -> (i32, i32) {
    %c0_i32 = arith.constant 0 : i32
    %c0_i32_0 = arith.constant 0 : i32
    %c0_i32_1 = arith.constant 0 : i32
    return %c0_i32, %c0_i32_0 : i32, i32
  }
  func.func @transform_14(%arg0: i32) -> (i32, i32) {
    %c0_i32 = arith.constant 0 : i32
    %c0_i32_0 = arith.constant 0 : i32
    %c0_i32_1 = arith.constant 0 : i32
    return %c0_i32, %c0_i32_0 : i32, i32
  }
  func.func @transform_15(%arg0: i32) -> (i32, i32) {
    %c0_i32 = arith.constant 0 : i32
    %c0_i32_0 = arith.constant 0 : i32
    %c0_i32_1 = arith.constant 0 : i32
    return %c0_i32, %c0_i32_0 : i32, i32
  }
  func.func @transform_16(%arg0: i32) -> (i32, i32) {
    %c0_i32 = arith.constant 0 : i32
    %c0_i32_0 = arith.constant 0 : i32
    %c0_i32_1 = arith.constant 0 : i32
    return %c0_i32, %c0_i32_0 : i32, i32
  }
  func.func @transform_17(%arg0: i32) -> (i32, i32) {
    %c0_i32 = arith.constant 0 : i32
    %c0_i32_0 = arith.constant 0 : i32
    %c0_i32_1 = arith.constant 0 : i32
    return %c0_i32, %c0_i32_0 : i32, i32
  }
  func.func @transform_18(%arg0: i32) -> (i32, i32) {
    %c0_i32 = arith.constant 0 : i32
    %c0_i32_0 = arith.constant 0 : i32
    %c0_i32_1 = arith.constant 0 : i32
    return %c0_i32, %c0_i32_0 : i32, i32
  }
  func.func @transform_19(%arg0: i32) -> (i32, i32) {
    %c0_i32 = arith.constant 0 : i32
    %c0_i32_0 = arith.constant 0 : i32
    %c0_i32_1 = arith.constant 0 : i32
    return %c0_i32, %c0_i32_0 : i32, i32
  }
  func.func @transform_20(%arg0: i32) -> (i32, i32) {
    %c0_i32 = arith.constant 0 : i32
    %c0_i32_0 = arith.constant 0 : i32
    %c0_i32_1 = arith.constant 0 : i32
    return %c0_i32, %c0_i32_0 : i32, i32
  }
  func.func @transform_21(%arg0: i32) -> (i32, i32) {
    %c0_i32 = arith.constant 0 : i32
    %c0_i32_0 = arith.constant 0 : i32
    %c0_i32_1 = arith.constant 0 : i32
    return %c0_i32, %c0_i32_0 : i32, i32
  }
  func.func @transform_22(%arg0: i32) -> (i32, i32) {
    %c0_i32 = arith.constant 0 : i32
    %c0_i32_0 = arith.constant 0 : i32
    %c0_i32_1 = arith.constant 0 : i32
    return %c0_i32, %c0_i32_0 : i32, i32
  }
  func.func @transform_23(%arg0: i32) -> (i32, i32) {
    %c0_i32 = arith.constant 0 : i32
    %c0_i32_0 = arith.constant 0 : i32
    %c0_i32_1 = arith.constant 0 : i32
    return %c0_i32, %c0_i32_0 : i32, i32
  }
  func.func @transform_24(%arg0: i32) -> (i32, i32) {
    %c0_i32 = arith.constant 0 : i32
    %c0_i32_0 = arith.constant 0 : i32
    %c0_i32_1 = arith.constant 0 : i32
    return %c0_i32, %c0_i32_0 : i32, i32
  }
  func.func @transform_25(%arg0: i32) -> (i32, i32, i32) {
    %c0_i32 = arith.constant 0 : i32
    %c0_i32_0 = arith.constant 0 : i32
    %c0_i32_1 = arith.constant 0 : i32
    return %arg0, %c0_i32, %c0_i32_0 : i32, i32, i32
  }
}

</mosaic_0001>

<llo_original>
// kernel: tpu_custom_call.1
$region0: #{tpu_custom_call.1}
  #allocation0 [shape = 'u32[]', space=smem, size = 0x4, offset = 0x4, fixed_abs, tag = 'smem constant byte address 0x4 - core index']
  #allocation1 [shape = 'u32[72,128]{1,0:T(1,128)}', space=vmem, size = 0x9000, scoped, tag = 'internal scratch']
  %s0 = inlined_call_operand.hbm [shape: bf16[4,16,128], index: 0, kind: input, shape index: {}]
  %s1 = inlined_call_operand.hbm [shape: bf16[4,16,128], index: 1, kind: input, shape index: {}]
  %s2 = inlined_call_operand.hbm [shape: f32[4,1,16], index: 2, kind: input, shape index: {}]
  %s3 = inlined_call_operand.hbm [shape: bf16[128,128], index: 3, kind: input, shape index: {}]
  %s4 = inlined_call_operand.hbm [shape: f32[1,128], index: 4, kind: input, shape index: {}]
  %s5 = inlined_call_operand.hbm [shape: bf16[128,256], index: 5, kind: input, shape index: {}]
  %s6 = inlined_call_operand.vmem [shape: f32[1,256], index: 6, kind: input, shape index: {}]
  %s7 = inlined_call_operand.hbm [shape: bf16[128,128], index: 7, kind: input, shape index: {}]
  %s8 = inlined_call_operand.vmem [shape: f32[1,128], index: 8, kind: input, shape index: {}]
  %s9 = inlined_call_operand.vmem [shape: f32[1,128], index: 9, kind: input, shape index: {}]
  %s10 = inlined_call_operand.vmem [shape: f32[1,128], index: 10, kind: input, shape index: {}]
  %s11 = inlined_call_operand.hbm [shape: bf16[128,128], index: 11, kind: input, shape index: {}]
  %s12 = inlined_call_operand.vmem [shape: f32[1,128], index: 12, kind: input, shape index: {}]
  %s13 = inlined_call_operand.hbm [shape: bf16[128,256], index: 13, kind: input, shape index: {}]
  %s14 = inlined_call_operand.vmem [shape: f32[1,256], index: 14, kind: input, shape index: {}]
  %s15 = inlined_call_operand.hbm [shape: bf16[128,128], index: 15, kind: input, shape index: {}]
  %s16 = inlined_call_operand.vmem [shape: f32[1,128], index: 16, kind: input, shape index: {}]
  %s17 = inlined_call_operand.vmem [shape: f32[1,128], index: 17, kind: input, shape index: {}]
  %s18 = inlined_call_operand.vmem [shape: f32[1,128], index: 18, kind: input, shape index: {}]
  %s19 = inlined_call_operand.hbm [shape: bf16[128,256], index: 19, kind: input, shape index: {}]
  %s20 = inlined_call_operand.vmem [shape: f32[1,256], index: 20, kind: input, shape index: {}]
  %s21 = inlined_call_operand.hbm [shape: bf16[256,128], index: 21, kind: input, shape index: {}]
  %s22 = inlined_call_operand.vmem [shape: f32[1,128], index: 22, kind: input, shape index: {}]
  %s23 = inlined_call_operand.vmem [shape: f32[1,128], index: 23, kind: input, shape index: {}]
  %s24 = inlined_call_operand.vmem [shape: f32[1,128], index: 24, kind: input, shape index: {}]
  %s25 = inlined_call_operand.hbm [shape: bf16[4,16,128], index: 25, kind: output, shape index: {}]
  %s26 = sld [smem:[#allocation0]]
  $region181: #{tpu_custom_call.1} parent=0
    _
  %s28 = ssub.s32 1, %s26
  %s29 = scalar_select 0, %s28, %s26
  $region1: #{tpu_custom_call.1} parent=0
    #allocation2 [shape = 'u8[16384]{0}', space=vmem, size = 0x4000, scoped, tag = 'input window, operand 0']
    #allocation3 [shape = 's32[2]{0}', space=sflag, size = 0x8, scoped, tag = 'scoped memory for tpu_custom_call.1']
    #allocation4 [shape = 's32[2]{0}', space=sflag, size = 0x8, scoped, tag = 'scoped memory for tpu_custom_call.1']
    #allocation5 [shape = 'u8[16384]{0}', space=vmem, size = 0x4000, scoped, tag = 'input window, operand 1']
    #allocation6 [shape = 's32[2]{0}', space=sflag, size = 0x8, scoped, tag = 'scoped memory for tpu_custom_call.1']
    #allocation7 [shape = 'u8[2048]{0}', space=vmem, size = 0x800, scoped, tag = 'input window, operand 2']
    #allocation8 [shape = 'u8[32768]{0}', space=vmem, size = 0x8000, scoped, tag = 'input window, operand 3, single buffered']
    #allocation9 [shape = 's32[1]{0}', space=sflag, size = 0x4, scoped, tag = 'scoped memory for tpu_custom_call.1']
    #allocation10 [shape = 'u8[512]{0}', space=vmem, size = 0x400, scoped, tag = 'input window, operand 4, single buffered']
    #allocation11 [shape = 'u8[65536]{0}', space=vmem, size = 0x10000, scoped, tag = 'input window, operand 5, single buffered']
    #allocation12 [shape = 's32[1]{0}', space=sflag, size = 0x4, scoped, tag = 'scoped memory for tpu_custom_call.1']
    #allocation13 [shape = 'u8[32768]{0}', space=vmem, size = 0x8000, scoped, tag = 'input window, operand 7, single buffered']
    #allocation14 [shape = 'u8[32768]{0}', space=vmem, size = 0x8000, scoped, tag = 'input window, operand 11, single buffered']
    #allocation15 [shape = 's32[1]{0}', space=sflag, size = 0x4, scoped, tag = 'scoped memory for tpu_custom_call.1']
    #allocation16 [shape = 'u8[65536]{0}', space=vmem, size = 0x10000, scoped, tag = 'input window, operand 13, single buffered']
    #allocation17 [shape = 'u8[32768]{0}', space=vmem, size = 0x8000, scoped, tag = 'input window, operand 15, single buffered']
    #allocation18 [shape = 's32[1]{0}', space=sflag, size = 0x4, scoped, tag = 'scoped memory for tpu_custom_call.1']
    #allocation19 [shape = 'u8[65536]{0}', space=vmem, size = 0x10000, scoped, tag = 'input window, operand 19, single buffered']
    #allocation20 [shape = 'u8[65536]{0}', space=vmem, size = 0x10000, scoped, tag = 'input window, operand 21, single buffered']
    #allocation21 [shape = 's32[1]{0}', space=sflag, size = 0x4, scoped, tag = 'scoped memory for tpu_custom_call.1']
    #allocation22 [shape = 'u8[16384]{0}', space=vmem, size = 0x4000, scoped, tag = 'output window, operand 0']
    %30 = vsyncpa [#allocation3], 0
    %s31 = scalar_lea.sflag [#allocation3], 1
    %32 = vsyncpa %s31, 0
    %33 = vsyncpa [#allocation6], 0
    %s34 = scalar_lea.sflag [#allocation6], 1
    %35 = vsyncpa %s34, 0
    %36 = vsyncpa [#allocation9], 0
    %37 = vsyncpa [#allocation12], 0
    %38 = vsyncpa [#allocation15], 0
    %39 = vsyncpa [#allocation18], 0
    %40 = vsyncpa [#allocation21], 0
    %41 = vsyncpa [#allocation4], 0
    %s42 = scalar_lea.sflag [#allocation4], 1
    %43 = vsyncpa %s42, 0
    loop: start=0, step=1, limit=4
    $region2: #{tpu_custom_call.1} parent=1 // loop_pre_header
      _
    $region3: #{tpu_custom_call.1} parent=1 // loop_header
      %s45 = sphi 0, %s49
      %p46 = scmp.ge.s32.totalorder %s45, 4
      %s55 = sphi 0, %s57
      %s58 = sphi 0, %s55
      %s59 = sphi 0, %s58
      %s75 = sphi 0, %s59
      %s81 = sphi 0, %s83
      %s84 = sphi 0, %s81
      %s85 = sphi 0, %s84
      %s101 = sphi 0, %s85
      %s107 = sphi 0, %s109
      %s110 = sphi 0, %s107
      %s111 = sphi 0, %s110
      %s127 = sphi 0, %s111
      %s131 = sphi 0, %s131
      %s133 = sphi 0, %s131
      %s134 = sphi 0, %s133
      %s148 = sphi 0, %s134
      %s152 = sphi 0, %s152
      %s154 = sphi 0, %s152
      %s155 = sphi 0, %s154
      %s169 = sphi 0, %s155
      %s173 = sphi 0, %s173
      %s175 = sphi 0, %s173
      %s176 = sphi 0, %s175
      %s190 = sphi 0, %s176
      %s194 = sphi 0, %s194
      %s196 = sphi 0, %s194
      %s197 = sphi 0, %s196
      %s211 = sphi 0, %s197
      %s215 = sphi 0, %s215
      %s217 = sphi 0, %s215
      %s218 = sphi 0, %s217
      %s232 = sphi 0, %s218
      %s236 = sphi 0, %s236
      %s238 = sphi 0, %s236
      %s239 = sphi 0, %s238
      %s253 = sphi 0, %s239
      %s257 = sphi 0, %s257
      %s259 = sphi 0, %s257
      %s260 = sphi 0, %s259
      %s274 = sphi 0, %s260
      %s278 = sphi 0, %s278
      %s280 = sphi 0, %s278
      %s281 = sphi 0, %s280
      %s295 = sphi 0, %s281
      %s299 = sphi 0, %s299
      %s301 = sphi 0, %s299
      %s302 = sphi 0, %s301
      %s316 = sphi 0, %s302
      %s320 = sphi 0, %s320
      %s322 = sphi 0, %s320
      %s323 = sphi 0, %s322
      %s337 = sphi 0, %s323
      %s341 = sphi 0, %s341
      %s343 = sphi 0, %s341
      %s344 = sphi 0, %s343
      %s358 = sphi 0, %s344
      %s362 = sphi 0, %s362
      %s364 = sphi 0, %s362
      %s365 = sphi 0, %s364
      %s379 = sphi 0, %s365
      %s383 = sphi 0, %s383
      %s385 = sphi 0, %s383
      %s386 = sphi 0, %s385
      %s400 = sphi 0, %s386
      %s404 = sphi 0, %s404
      %s406 = sphi 0, %s404
      %s407 = sphi 0, %s406
      %s421 = sphi 0, %s407
      %s425 = sphi 0, %s425
      %s427 = sphi 0, %s425
      %s428 = sphi 0, %s427
      %s442 = sphi 0, %s428
      %s446 = sphi 0, %s446
      %s448 = sphi 0, %s446
      %s449 = sphi 0, %s448
      %s463 = sphi 0, %s449
      %s467 = sphi 0, %s467
      %s469 = sphi 0, %s467
      %s470 = sphi 0, %s469
      %s484 = sphi 0, %s470
      %s488 = sphi 0, %s488
      %s490 = sphi 0, %s488
      %s491 = sphi 0, %s490
      %s505 = sphi 0, %s491
      %s509 = sphi 0, %s509
      %s511 = sphi 0, %s509
      %s512 = sphi 0, %s511
      %s526 = sphi 0, %s512
      %s530 = sphi 0, %s530
      %s532 = sphi 0, %s530
      %s533 = sphi 0, %s532
      %s547 = sphi 0, %s533
      %s551 = sphi 0, %s551
      %s553 = sphi 0, %s551
      %s554 = sphi 0, %s553
      %s568 = sphi 0, %s554
      %s572 = sphi 0, %s572
      %s574 = sphi 0, %s572
      %s575 = sphi 0, %s574
      %s589 = sphi 0, %s575
      %s595 = sphi 0, %s597
      %s598 = sphi 0, %s595
      %s599 = sphi 0, %s598
      %s615 = sphi 0, %s599
    $region4: #{tpu_custom_call.1} parent=1 // loop_header_branch
      %48 = sbr.rel (%p46) target = $region8
    $region5: #{tpu_custom_call.1} parent=1 // loop_body
      %s50 = ssub.s32 %s45, 1
      %s51 = ssub.s32 %s45, 2
      %s52 = sadd.s32 %s45, 1
      %s53 = ssub.s32 %s45, %s52
      %p54 = scmp.eq.s32.totalorder %s53, 0
      %s56 = sadd.s32 %s55, 1
      %s57 = scalar_select %p54, %s55, %s56
      %p60 = pneg %p54
      %p61 = scmp.eq.s32.totalorder %s45, 1
      %p62 = por %p60, %p61
      %p63 = scmp.ne.s32.totalorder %s55, %s58
      %p64 = scmp.eq.s32.totalorder %s45, 0
      %p65 = por %p63, %p64
      %p66 = scmp.ne.s32.totalorder %s55, %s58
      %p67 = scmp.eq.s32.totalorder %s50, 1
      %p68 = por %p66, %p67
      %p69 = scmp.ne.s32.totalorder %s58, %s59
      %p70 = scmp.eq.s32.totalorder %s50, 0
      %p71 = por %p69, %p70
      %p72 = scmp.ne.s32.totalorder %s58, %s59
      %p73 = scmp.eq.s32.totalorder %s51, 1
      %p74 = por %p72, %p73
      %p76 = scmp.ne.s32.totalorder %s59, %s75
      %p77 = scmp.eq.s32.totalorder %s51, 0
      %p78 = por %p76, %p77
      %s79 = ssub.s32 %s45, %s52
      %p80 = scmp.eq.s32.totalorder %s79, 0
      %s82 = sadd.s32 %s81, 1
      %s83 = scalar_select %p80, %s81, %s82
      %p86 = pneg %p80
      %p87 = scmp.eq.s32.totalorder %s45, 1
      %p88 = por %p86, %p87
      %p89 = scmp.ne.s32.totalorder %s81, %s84
      %p90 = scmp.eq.s32.totalorder %s45, 0
      %p91 = por %p89, %p90
      %p92 = scmp.ne.s32.totalorder %s81, %s84
      %p93 = scmp.eq.s32.totalorder %s50, 1
      %p94 = por %p92, %p93
      %p95 = scmp.ne.s32.totalorder %s84, %s85
      %p96 = scmp.eq.s32.totalorder %s50, 0
      %p97 = por %p95, %p96
      %p98 = scmp.ne.s32.totalorder %s84, %s85
      %p99 = scmp.eq.s32.totalorder %s51, 1
      %p100 = por %p98, %p99
      %p102 = scmp.ne.s32.totalorder %s85, %s101
      %p103 = scmp.eq.s32.totalorder %s51, 0
      %p104 = por %p102, %p103
      %s105 = ssub.s32 %s45, %s52
      %p106 = scmp.eq.s32.totalorder %s105, 0
      %s108 = sadd.s32 %s107, 1
      %s109 = scalar_select %p106, %s107, %s108
      %p112 = pneg %p106
      %p113 = scmp.eq.s32.totalorder %s45, 1
      %p114 = por %p112, %p113
      %p115 = scmp.ne.s32.totalorder %s107, %s110
      %p116 = scmp.eq.s32.totalorder %s45, 0
      %p117 = por %p115, %p116
      %p118 = scmp.ne.s32.totalorder %s107, %s110
      %p119 = scmp.eq.s32.totalorder %s50, 1
      %p120 = por %p118, %p119
      %p121 = scmp.ne.s32.totalorder %s110, %s111
      %p122 = scmp.eq.s32.totalorder %s50, 0
      %p123 = por %p121, %p122
      %p124 = scmp.ne.s32.totalorder %s110, %s111
      %p125 = scmp.eq.s32.totalorder %s51, 1
      %p126 = por %p124, %p125
      %p128 = scmp.ne.s32.totalorder %s111, %s127
      %p129 = scmp.eq.s32.totalorder %s51, 0
      %p130 = por %p128, %p129
      %s132 = sadd.s32 %s131, 1
      %p135 = scmp.eq.s32.totalorder %s45, 1
      %p136 = scmp.ne.s32.totalorder %s131, %s133
      %p137 = scmp.eq.s32.totalorder %s45, 0
      %p138 = por %p136, %p137
      %p139 = scmp.ne.s32.totalorder %s131, %s133
      %p140 = scmp.eq.s32.totalorder %s50, 1
      %p141 = por %p139, %p140
      %p142 = scmp.ne.s32.totalorder %s133, %s134
      %p143 = scmp.eq.s32.totalorder %s50, 0
      %p144 = por %p142, %p143
      %p145 = scmp.ne.s32.totalorder %s133, %s134
      %p146 = scmp.eq.s32.totalorder %s51, 1
      %p147 = por %p145, %p146
      %p149 = scmp.ne.s32.totalorder %s134, %s148
      %p150 = scmp.eq.s32.totalorder %s51, 0
      %p151 = por %p149, %p150
      %s153 = sadd.s32 %s152, 1
      %p156 = scmp.eq.s32.totalorder %s45, 1
      %p157 = scmp.ne.s32.totalorder %s152, %s154
      %p158 = scmp.eq.s32.totalorder %s45, 0
      %p159 = por %p157, %p158
      %p160 = scmp.ne.s32.totalorder %s152, %s154
      %p161 = scmp.eq.s32.totalorder %s50, 1
      %p162 = por %p160, %p161
      %p163 = scmp.ne.s32.totalorder %s154, %s155
      %p164 = scmp.eq.s32.totalorder %s50, 0
      %p165 = por %p163, %p164
      %p166 = scmp.ne.s32.totalorder %s154, %s155
      %p167 = scmp.eq.s32.totalorder %s51, 1
      %p168 = por %p166, %p167
      %p170 = scmp.ne.s32.totalorder %s155, %s169
      %p171 = scmp.eq.s32.totalorder %s51, 0
      %p172 = por %p170, %p171
      %s174 = sadd.s32 %s173, 1
      %p177 = scmp.eq.s32.totalorder %s45, 1
      %p178 = scmp.ne.s32.totalorder %s173, %s175
      %p179 = scmp.eq.s32.totalorder %s45, 0
      %p180 = por %p178, %p179
      %p181 = scmp.ne.s32.totalorder %s173, %s175
      %p182 = scmp.eq.s32.totalorder %s50, 1
      %p183 = por %p181, %p182
      %p184 = scmp.ne.s32.totalorder %s175, %s176
      %p185 = scmp.eq.s32.totalorder %s50, 0
      %p186 = por %p184, %p185
      %p187 = scmp.ne.s32.totalorder %s175, %s176
      %p188 = scmp.eq.s32.totalorder %s51, 1
      %p189 = por %p187, %p188
      %p191 = scmp.ne.s32.totalorder %s176, %s190
      %p192 = scmp.eq.s32.totalorder %s51, 0
      %p193 = por %p191, %p192
      %s195 = sadd.s32 %s194, 1
      %p198 = scmp.eq.s32.totalorder %s45, 1
      %p199 = scmp.ne.s32.totalorder %s194, %s196
      %p200 = scmp.eq.s32.totalorder %s45, 0
      %p201 = por %p199, %p200
      %p202 = scmp.ne.s32.totalorder %s194, %s196
      %p203 = scmp.eq.s32.totalorder %s50, 1
      %p204 = por %p202, %p203
      %p205 = scmp.ne.s32.totalorder %s196, %s197
      %p206 = scmp.eq.s32.totalorder %s50, 0
      %p207 = por %p205, %p206
      %p208 = scmp.ne.s32.totalorder %s196, %s197
      %p209 = scmp.eq.s32.totalorder %s51, 1
      %p210 = por %p208, %p209
      %p212 = scmp.ne.s32.totalorder %s197, %s211
      %p213 = scmp.eq.s32.totalorder %s51, 0
      %p214 = por %p212, %p213
      %s216 = sadd.s32 %s215, 1
      %p219 = scmp.eq.s32.totalorder %s45, 1
      %p220 = scmp.ne.s32.totalorder %s215, %s217
      %p221 = scmp.eq.s32.totalorder %s45, 0
      %p222 = por %p220, %p221
      %p223 = scmp.ne.s32.totalorder %s215, %s217
      %p224 = scmp.eq.s32.totalorder %s50, 1
      %p225 = por %p223, %p224
      %p226 = scmp.ne.s32.totalorder %s217, %s218
      %p227 = scmp.eq.s32.totalorder %s50, 0
      %p228 = por %p226, %p227
      %p229 = scmp.ne.s32.totalorder %s217, %s218
      %p230 = scmp.eq.s32.totalorder %s51, 1
      %p231 = por %p229, %p230
      %p233 = scmp.ne.s32.totalorder %s218, %s232
      %p234 = scmp.eq.s32.totalorder %s51, 0
      %p235 = por %p233, %p234
      %s237 = sadd.s32 %s236, 1
      %p240 = scmp.eq.s32.totalorder %s45, 1
      %p241 = scmp.ne.s32.totalorder %s236, %s238
      %p242 = scmp.eq.s32.totalorder %s45, 0
      %p243 = por %p241, %p242
      %p244 = scmp.ne.s32.totalorder %s236, %s238
      %p245 = scmp.eq.s32.totalorder %s50, 1
      %p246 = por %p244, %p245
      %p247 = scmp.ne.s32.totalorder %s238, %s239
      %p248 = scmp.eq.s32.totalorder %s50, 0
      %p249 = por %p247, %p248
      %p250 = scmp.ne.s32.totalorder %s238, %s239
      %p251 = scmp.eq.s32.totalorder %s51, 1
      %p252 = por %p250, %p251
      %p254 = scmp.ne.s32.totalorder %s239, %s253
      %p255 = scmp.eq.s32.totalorder %s51, 0
      %p256 = por %p254, %p255
      %s258 = sadd.s32 %s257, 1
      %p261 = scmp.eq.s32.totalorder %s45, 1
      %p262 = scmp.ne.s32.totalorder %s257, %s259
      %p263 = scmp.eq.s32.totalorder %s45, 0
      %p264 = por %p262, %p263
      %p265 = scmp.ne.s32.totalorder %s257, %s259
      %p266 = scmp.eq.s32.totalorder %s50, 1
      %p267 = por %p265, %p266
      %p268 = scmp.ne.s32.totalorder %s259, %s260
      %p269 = scmp.eq.s32.totalorder %s50, 0
      %p270 = por %p268, %p269
      %p271 = scmp.ne.s32.totalorder %s259, %s260
      %p272 = scmp.eq.s32.totalorder %s51, 1
      %p273 = por %p271, %p272
      %p275 = scmp.ne.s32.totalorder %s260, %s274
      %p276 = scmp.eq.s32.totalorder %s51, 0
      %p277 = por %p275, %p276
      %s279 = sadd.s32 %s278, 1
      %p282 = scmp.eq.s32.totalorder %s45, 1
      %p283 = scmp.ne.s32.totalorder %s278, %s280
      %p284 = scmp.eq.s32.totalorder %s45, 0
      %p285 = por %p283, %p284
      %p286 = scmp.ne.s32.totalorder %s278, %s280
      %p287 = scmp.eq.s32.totalorder %s50, 1
      %p288 = por %p286, %p287
      %p289 = scmp.ne.s32.totalorder %s280, %s281
      %p290 = scmp.eq.s32.totalorder %s50, 0
      %p291 = por %p289, %p290
      %p292 = scmp.ne.s32.totalorder %s280, %s281
      %p293 = scmp.eq.s32.totalorder %s51, 1
      %p294 = por %p292, %p293
      %p296 = scmp.ne.s32.totalorder %s281, %s295
      %p297 = scmp.eq.s32.totalorder %s51, 0
      %p298 = por %p296, %p297
      %s300 = sadd.s32 %s299, 1
      %p303 = scmp.eq.s32.totalorder %s45, 1
      %p304 = scmp.ne.s32.totalorder %s299, %s301
      %p305 = scmp.eq.s32.totalorder %s45, 0
      %p306 = por %p304, %p305
      %p307 = scmp.ne.s32.totalorder %s299, %s301
      %p308 = scmp.eq.s32.totalorder %s50, 1
      %p309 = por %p307, %p308
      %p310 = scmp.ne.s32.totalorder %s301, %s302
      %p311 = scmp.eq.s32.totalorder %s50, 0
      %p312 = por %p310, %p311
      %p313 = scmp.ne.s32.totalorder %s301, %s302
      %p314 = scmp.eq.s32.totalorder %s51, 1
      %p315 = por %p313, %p314
      %p317 = scmp.ne.s32.totalorder %s302, %s316
      %p318 = scmp.eq.s32.totalorder %s51, 0
      %p319 = por %p317, %p318
      %s321 = sadd.s32 %s320, 1
      %p324 = scmp.eq.s32.totalorder %s45, 1
      %p325 = scmp.ne.s32.totalorder %s320, %s322
      %p326 = scmp.eq.s32.totalorder %s45, 0
      %p327 = por %p325, %p326
      %p328 = scmp.ne.s32.totalorder %s320, %s322
      %p329 = scmp.eq.s32.totalorder %s50, 1
      %p330 = por %p328, %p329
      %p331 = scmp.ne.s32.totalorder %s322, %s323
      %p332 = scmp.eq.s32.totalorder %s50, 0
      %p333 = por %p331, %p332
      %p334 = scmp.ne.s32.totalorder %s322, %s323
      %p335 = scmp.eq.s32.totalorder %s51, 1
      %p336 = por %p334, %p335
      %p338 = scmp.ne.s32.totalorder %s323, %s337
      %p339 = scmp.eq.s32.totalorder %s51, 0
      %p340 = por %p338, %p339
      %s342 = sadd.s32 %s341, 1
      %p345 = scmp.eq.s32.totalorder %s45, 1
      %p346 = scmp.ne.s32.totalorder %s341, %s343
      %p347 = scmp.eq.s32.totalorder %s45, 0
      %p348 = por %p346, %p347
      %p349 = scmp.ne.s32.totalorder %s341, %s343
      %p350 = scmp.eq.s32.totalorder %s50, 1
      %p351 = por %p349, %p350
      %p352 = scmp.ne.s32.totalorder %s343, %s344
      %p353 = scmp.eq.s32.totalorder %s50, 0
      %p354 = por %p352, %p353
      %p355 = scmp.ne.s32.totalorder %s343, %s344
      %p356 = scmp.eq.s32.totalorder %s51, 1
      %p357 = por %p355, %p356
      %p359 = scmp.ne.s32.totalorder %s344, %s358
      %p360 = scmp.eq.s32.totalorder %s51, 0
      %p361 = por %p359, %p360
      %s363 = sadd.s32 %s362, 1
      %p366 = scmp.eq.s32.totalorder %s45, 1
      %p367 = scmp.ne.s32.totalorder %s362, %s364
      %p368 = scmp.eq.s32.totalorder %s45, 0
      %p369 = por %p367, %p368
      %p370 = scmp.ne.s32.totalorder %s362, %s364
      %p371 = scmp.eq.s32.totalorder %s50, 1
      %p372 = por %p370, %p371
      %p373 = scmp.ne.s32.totalorder %s364, %s365
      %p374 = scmp.eq.s32.totalorder %s50, 0
      %p375 = por %p373, %p374
      %p376 = scmp.ne.s32.totalorder %s364, %s365
      %p377 = scmp.eq.s32.totalorder %s51, 1
      %p378 = por %p376, %p377
      %p380 = scmp.ne.s32.totalorder %s365, %s379
      %p381 = scmp.eq.s32.totalorder %s51, 0
      %p382 = por %p380, %p381
      %s384 = sadd.s32 %s383, 1
      %p387 = scmp.eq.s32.totalorder %s45, 1
      %p388 = scmp.ne.s32.totalorder %s383, %s385
      %p389 = scmp.eq.s32.totalorder %s45, 0
      %p390 = por %p388, %p389
      %p391 = scmp.ne.s32.totalorder %s383, %s385
      %p392 = scmp.eq.s32.totalorder %s50, 1
      %p393 = por %p391, %p392
      %p394 = scmp.ne.s32.totalorder %s385, %s386
      %p395 = scmp.eq.s32.totalorder %s50, 0
      %p396 = por %p394, %p395
      %p397 = scmp.ne.s32.totalorder %s385, %s386
      %p398 = scmp.eq.s32.totalorder %s51, 1
      %p399 = por %p397, %p398
      %p401 = scmp.ne.s32.totalorder %s386, %s400
      %p402 = scmp.eq.s32.totalorder %s51, 0
      %p403 = por %p401, %p402
      %s405 = sadd.s32 %s404, 1
      %p408 = scmp.eq.s32.totalorder %s45, 1
      %p409 = scmp.ne.s32.totalorder %s404, %s406
      %p410 = scmp.eq.s32.totalorder %s45, 0
      %p411 = por %p409, %p410
      %p412 = scmp.ne.s32.totalorder %s404, %s406
      %p413 = scmp.eq.s32.totalorder %s50, 1
      %p414 = por %p412, %p413
      %p415 = scmp.ne.s32.totalorder %s406, %s407
      %p416 = scmp.eq.s32.totalorder %s50, 0
      %p417 = por %p415, %p416
      %p418 = scmp.ne.s32.totalorder %s406, %s407
      %p419 = scmp.eq.s32.totalorder %s51, 1
      %p420 = por %p418, %p419
      %p422 = scmp.ne.s32.totalorder %s407, %s421
      %p423 = scmp.eq.s32.totalorder %s51, 0
      %p424 = por %p422, %p423
      %s426 = sadd.s32 %s425, 1
      %p429 = scmp.eq.s32.totalorder %s45, 1
      %p430 = scmp.ne.s32.totalorder %s425, %s427
      %p431 = scmp.eq.s32.totalorder %s45, 0
      %p432 = por %p430, %p431
      %p433 = scmp.ne.s32.totalorder %s425, %s427
      %p434 = scmp.eq.s32.totalorder %s50, 1
      %p435 = por %p433, %p434
      %p436 = scmp.ne.s32.totalorder %s427, %s428
      %p437 = scmp.eq.s32.totalorder %s50, 0
      %p438 = por %p436, %p437
      %p439 = scmp.ne.s32.totalorder %s427, %s428
      %p440 = scmp.eq.s32.totalorder %s51, 1
      %p441 = por %p439, %p440
      %p443 = scmp.ne.s32.totalorder %s428, %s442
      %p444 = scmp.eq.s32.totalorder %s51, 0
      %p445 = por %p443, %p444
      %s447 = sadd.s32 %s446, 1
      %p450 = scmp.eq.s32.totalorder %s45, 1
      %p451 = scmp.ne.s32.totalorder %s446, %s448
      %p452 = scmp.eq.s32.totalorder %s45, 0
      %p453 = por %p451, %p452
      %p454 = scmp.ne.s32.totalorder %s446, %s448
      %p455 = scmp.eq.s32.totalorder %s50, 1
      %p456 = por %p454, %p455
      %p457 = scmp.ne.s32.totalorder %s448, %s449
      %p458 = scmp.eq.s32.totalorder %s50, 0
      %p459 = por %p457, %p458
      %p460 = scmp.ne.s32.totalorder %s448, %s449
      %p461 = scmp.eq.s32.totalorder %s51, 1
      %p462 = por %p460, %p461
      %p464 = scmp.ne.s32.totalorder %s449, %s463
      %p465 = scmp.eq.s32.totalorder %s51, 0
      %p466 = por %p464, %p465
      %s468 = sadd.s32 %s467, 1
      %p471 = scmp.eq.s32.totalorder %s45, 1
      %p472 = scmp.ne.s32.totalorder %s467, %s469
      %p473 = scmp.eq.s32.totalorder %s45, 0
      %p474 = por %p472, %p473
      %p475 = scmp.ne.s32.totalorder %s467, %s469
      %p476 = scmp.eq.s32.totalorder %s50, 1
      %p477 = por %p475, %p476
      %p478 = scmp.ne.s32.totalorder %s469, %s470
      %p479 = scmp.eq.s32.totalorder %s50, 0
      %p480 = por %p478, %p479
      %p481 = scmp.ne.s32.totalorder %s469, %s470
      %p482 = scmp.eq.s32.totalorder %s51, 1
      %p483 = por %p481, %p482
      %p485 = scmp.ne.s32.totalorder %s470, %s484
      %p486 = scmp.eq.s32.totalorder %s51, 0
      %p487 = por %p485, %p486
      %s489 = sadd.s32 %s488, 1
      %p492 = scmp.eq.s32.totalorder %s45, 1
      %p493 = scmp.ne.s32.totalorder %s488, %s490
      %p494 = scmp.eq.s32.totalorder %s45, 0
      %p495 = por %p493, %p494
      %p496 = scmp.ne.s32.totalorder %s488, %s490
      %p497 = scmp.eq.s32.totalorder %s50, 1
      %p498 = por %p496, %p497
      %p499 = scmp.ne.s32.totalorder %s490, %s491
      %p500 = scmp.eq.s32.totalorder %s50, 0
      %p501 = por %p499, %p500
      %p502 = scmp.ne.s32.totalorder %s490, %s491
      %p503 = scmp.eq.s32.totalorder %s51, 1
      %p504 = por %p502, %p503
      %p506 = scmp.ne.s32.totalorder %s491, %s505
      %p507 = scmp.eq.s32.totalorder %s51, 0
      %p508 = por %p506, %p507
      %s510 = sadd.s32 %s509, 1
      %p513 = scmp.eq.s32.totalorder %s45, 1
      %p514 = scmp.ne.s32.totalorder %s509, %s511
      %p515 = scmp.eq.s32.totalorder %s45, 0
      %p516 = por %p514, %p515
      %p517 = scmp.ne.s32.totalorder %s509, %s511
      %p518 = scmp.eq.s32.totalorder %s50, 1
      %p519 = por %p517, %p518
      %p520 = scmp.ne.s32.totalorder %s511, %s512
      %p521 = scmp.eq.s32.totalorder %s50, 0
      %p522 = por %p520, %p521
      %p523 = scmp.ne.s32.totalorder %s511, %s512
      %p524 = scmp.eq.s32.totalorder %s51, 1
      %p525 = por %p523, %p524
      %p527 = scmp.ne.s32.totalorder %s512, %s526
      %p528 = scmp.eq.s32.totalorder %s51, 0
      %p529 = por %p527, %p528
      %s531 = sadd.s32 %s530, 1
      %p534 = scmp.eq.s32.totalorder %s45, 1
      %p535 = scmp.ne.s32.totalorder %s530, %s532
      %p536 = scmp.eq.s32.totalorder %s45, 0
      %p537 = por %p535, %p536
      %p538 = scmp.ne.s32.totalorder %s530, %s532
      %p539 = scmp.eq.s32.totalorder %s50, 1
      %p540 = por %p538, %p539
      %p541 = scmp.ne.s32.totalorder %s532, %s533
      %p542 = scmp.eq.s32.totalorder %s50, 0
      %p543 = por %p541, %p542
      %p544 = scmp.ne.s32.totalorder %s532, %s533
      %p545 = scmp.eq.s32.totalorder %s51, 1
      %p546 = por %p544, %p545
      %p548 = scmp.ne.s32.totalorder %s533, %s547
      %p549 = scmp.eq.s32.totalorder %s51, 0
      %p550 = por %p548, %p549
      %s552 = sadd.s32 %s551, 1
      %p555 = scmp.eq.s32.totalorder %s45, 1
      %p556 = scmp.ne.s32.totalorder %s551, %s553
      %p557 = scmp.eq.s32.totalorder %s45, 0
      %p558 = por %p556, %p557
      %p559 = scmp.ne.s32.totalorder %s551, %s553
      %p560 = scmp.eq.s32.totalorder %s50, 1
      %p561 = por %p559, %p560
      %p562 = scmp.ne.s32.totalorder %s553, %s554
      %p563 = scmp.eq.s32.totalorder %s50, 0
      %p564 = por %p562, %p563
      %p565 = scmp.ne.s32.totalorder %s553, %s554
      %p566 = scmp.eq.s32.totalorder %s51, 1
      %p567 = por %p565, %p566
      %p569 = scmp.ne.s32.totalorder %s554, %s568
      %p570 = scmp.eq.s32.totalorder %s51, 0
      %p571 = por %p569, %p570
      %s573 = sadd.s32 %s572, 1
      %p576 = scmp.eq.s32.totalorder %s45, 1
      %p577 = scmp.ne.s32.totalorder %s572, %s574
      %p578 = scmp.eq.s32.totalorder %s45, 0
      %p579 = por %p577, %p578
      %p580 = scmp.ne.s32.totalorder %s572, %s574
      %p581 = scmp.eq.s32.totalorder %s50, 1
      %p582 = por %p580, %p581
      %p583 = scmp.ne.s32.totalorder %s574, %s575
      %p584 = scmp.eq.s32.totalorder %s50, 0
      %p585 = por %p583, %p584
      %p586 = scmp.ne.s32.totalorder %s574, %s575
      %p587 = scmp.eq.s32.totalorder %s51, 1
      %p588 = por %p586, %p587
      %p590 = scmp.ne.s32.totalorder %s575, %s589
      %p591 = scmp.eq.s32.totalorder %s51, 0
      %p592 = por %p590, %p591
      %s593 = ssub.s32 %s45, %s52
      %p594 = scmp.eq.s32.totalorder %s593, 0
      %s596 = sadd.s32 %s595, 1
      %s597 = scalar_select %p594, %s595, %s596
      %p600 = pneg %p594
      %p601 = scmp.eq.s32.totalorder %s45, 1
      %p602 = por %p600, %p601
      %p603 = scmp.ne.s32.totalorder %s595, %s598
      %p604 = scmp.eq.s32.totalorder %s45, 0
      %p605 = por %p603, %p604
      %p606 = scmp.ne.s32.totalorder %s595, %s598
      %p607 = scmp.eq.s32.totalorder %s50, 1
      %p608 = por %p606, %p607
      %p609 = scmp.ne.s32.totalorder %s598, %s599
      %p610 = scmp.eq.s32.totalorder %s50, 0
      %p611 = por %p609, %p610
      %p612 = scmp.ne.s32.totalorder %s598, %s599
      %p613 = scmp.eq.s32.totalorder %s51, 1
      %p614 = por %p612, %p613
      %p616 = scmp.ne.s32.totalorder %s599, %s615
      %p617 = scmp.eq.s32.totalorder %s51, 0
      %p618 = por %p616, %p617
      %p619 = scmp.le.s32.totalorder 1, %s45
      %p620 = scmp.lt.s32.totalorder %s45, 3
      %p621 = pnand %p619, %p620
      %p622 = pneg %p621
      // Predicated region
      $region9: #{tpu_custom_call.1} parent=5 // pred_check
        _
      $region10: #{tpu_custom_call.1} parent=5 // pred_check_branch
        %624 = sbr.rel (%p621) target = $region12
      $region11: #{tpu_custom_call.1} parent=5 // pred_region
        %s625 = ssub.s32 %s45, 1
        // Predicated region
        $region13: #{tpu_custom_call.1} parent=11 // pred_check
          %p626 = pneg %p144
        $region14: #{tpu_custom_call.1} parent=11 // pred_check_branch
          %628 = sbr.rel (%p626) target = $region16
        $region15: #{tpu_custom_call.1} parent=11 // pred_region
          %630 = vsyncadd [#allocation9], 0
          %s631 = sshll.u32 %s3, 4
          %s632 = int_to_ptr.hbm [resolvable:$true] %s631
          %s633 = sshll.u32 [#allocation8], 4
          %s634 = int_to_ptr.vmem [resolvable:$true] %s633
          %639 = dma.hbm_to_vmem [thread:$0]  %s632, 1024, %s634, [#allocation9], 64, 64, 4
        $region16: #{tpu_custom_call.1} parent=11 // pred_fallthru
          _
        // Predicated region
        $region17: #{tpu_custom_call.1} parent=11 // pred_check
          %p640 = pneg %p165
        $region18: #{tpu_custom_call.1} parent=11 // pred_check_branch
          %642 = sbr.rel (%p640) target = $region20
        $region19: #{tpu_custom_call.1} parent=11 // pred_region
          %644 = vsyncadd [#allocation9], 0
          %s646 = sshll.u32 %s4, 4
          %s647 = int_to_ptr.hbm [resolvable:$true] %s646
          %s648 = sshll.u32 [#allocation10], 4
          %s649 = int_to_ptr.vmem [resolvable:$true] %s648
          %651 = dma.hbm_to_vmem [thread:$0]  %s647, 16, %s649, [#allocation9]
        $region20: #{tpu_custom_call.1} parent=11 // pred_fallthru
          _
        // Predicated region
        $region21: #{tpu_custom_call.1} parent=11 // pred_check
          %p652 = pneg %p186
        $region22: #{tpu_custom_call.1} parent=11 // pred_check_branch
          %654 = sbr.rel (%p652) target = $region24
        $region23: #{tpu_custom_call.1} parent=11 // pred_region
          %656 = vsyncadd [#allocation12], 0
          %s657 = sshll.u32 %s5, 4
          %s658 = int_to_ptr.hbm [resolvable:$true] %s657
          %s659 = sshll.u32 [#allocation11], 4
          %s660 = int_to_ptr.vmem [resolvable:$true] %s659
          %665 = dma.hbm_to_vmem [thread:$0]  %s658, 2048, %s660, [#allocation12], 128, 128, 8
        $region24: #{tpu_custom_call.1} parent=11 // pred_fallthru
          _
        // Predicated region
        $region25: #{tpu_custom_call.1} parent=11 // pred_check
          %p666 = pneg %p207
        $region26: #{tpu_custom_call.1} parent=11 // pred_check_branch
          %668 = sbr.rel (%p666) target = $region28
        $region27: #{tpu_custom_call.1} parent=11 // pred_region
          _
        $region28: #{tpu_custom_call.1} parent=11 // pred_fallthru
          _
        // Predicated region
        $region29: #{tpu_custom_call.1} parent=11 // pred_check
          %p669 = pneg %p228
        $region30: #{tpu_custom_call.1} parent=11 // pred_check_branch
          %671 = sbr.rel (%p669) target = $region32
        $region31: #{tpu_custom_call.1} parent=11 // pred_region
          %673 = vsyncadd [#allocation12], 0
          %s674 = sshll.u32 %s7, 4
          %s675 = int_to_ptr.hbm [resolvable:$true] %s674
          %s676 = sshll.u32 [#allocation13], 4
          %s677 = int_to_ptr.vmem [resolvable:$true] %s676
          %682 = dma.hbm_to_vmem [thread:$0]  %s675, 1024, %s677, [#allocation12], 64, 64, 4
        $region32: #{tpu_custom_call.1} parent=11 // pred_fallthru
          _
        // Predicated region
        $region33: #{tpu_custom_call.1} parent=11 // pred_check
          %p683 = pneg %p249
        $region34: #{tpu_custom_call.1} parent=11 // pred_check_branch
          %685 = sbr.rel (%p683) target = $region36
        $region35: #{tpu_custom_call.1} parent=11 // pred_region
          _
        $region36: #{tpu_custom_call.1} parent=11 // pred_fallthru
          _
        // Predicated region
        $region37: #{tpu_custom_call.1} parent=11 // pred_check
          %p686 = pneg %p270
        $region38: #{tpu_custom_call.1} parent=11 // pred_check_branch
          %688 = sbr.rel (%p686) target = $region40
        $region39: #{tpu_custom_call.1} parent=11 // pred_region
          _
        $region40: #{tpu_custom_call.1} parent=11 // pred_fallthru
          _
        // Predicated region
        $region41: #{tpu_custom_call.1} parent=11 // pred_check
          %p689 = pneg %p291
        $region42: #{tpu_custom_call.1} parent=11 // pred_check_branch
          %691 = sbr.rel (%p689) target = $region44
        $region43: #{tpu_custom_call.1} parent=11 // pred_region
          _
        $region44: #{tpu_custom_call.1} parent=11 // pred_fallthru
          _
        // Predicated region
        $region45: #{tpu_custom_call.1} parent=11 // pred_check
          %p692 = pneg %p312
        $region46: #{tpu_custom_call.1} parent=11 // pred_check_branch
          %694 = sbr.rel (%p692) target = $region48
        $region47: #{tpu_custom_call.1} parent=11 // pred_region
          %696 = vsyncadd [#allocation15], 0
          %s697 = sshll.u32 %s11, 4
          %s698 = int_to_ptr.hbm [resolvable:$true] %s697
          %s699 = sshll.u32 [#allocation14], 4
          %s700 = int_to_ptr.vmem [resolvable:$true] %s699
          %705 = dma.hbm_to_vmem [thread:$0]  %s698, 1024, %s700, [#allocation15], 64, 64, 4
        $region48: #{tpu_custom_call.1} parent=11 // pred_fallthru
          _
        // Predicated region
        $region49: #{tpu_custom_call.1} parent=11 // pred_check
          %p706 = pneg %p333
        $region50: #{tpu_custom_call.1} parent=11 // pred_check_branch
          %708 = sbr.rel (%p706) target = $region52
        $region51: #{tpu_custom_call.1} parent=11 // pred_region
          _
        $region52: #{tpu_custom_call.1} parent=11 // pred_fallthru
          _
        // Predicated region
        $region53: #{tpu_custom_call.1} parent=11 // pred_check
          %p709 = pneg %p354
        $region54: #{tpu_custom_call.1} parent=11 // pred_check_branch
          %711 = sbr.rel (%p709) target = $region56
        $region55: #{tpu_custom_call.1} parent=11 // pred_region
          %713 = vsyncadd [#allocation15], 0
          %s714 = sshll.u32 %s13, 4
          %s715 = int_to_ptr.hbm [resolvable:$true] %s714
          %s716 = sshll.u32 [#allocation16], 4
          %s717 = int_to_ptr.vmem [resolvable:$true] %s716
          %722 = dma.hbm_to_vmem [thread:$0]  %s715, 2048, %s717, [#allocation15], 128, 128, 8
        $region56: #{tpu_custom_call.1} parent=11 // pred_fallthru
          _
        // Predicated region
        $region57: #{tpu_custom_call.1} parent=11 // pred_check
          %p723 = pneg %p375
        $region58: #{tpu_custom_call.1} parent=11 // pred_check_branch
          %725 = sbr.rel (%p723) target = $region60
        $region59: #{tpu_custom_call.1} parent=11 // pred_region
          _
        $region60: #{tpu_custom_call.1} parent=11 // pred_fallthru
          _
        // Predicated region
        $region61: #{tpu_custom_call.1} parent=11 // pred_check
          %p726 = pneg %p396
        $region62: #{tpu_custom_call.1} parent=11 // pred_check_branch
          %728 = sbr.rel (%p726) target = $region64
        $region63: #{tpu_custom_call.1} parent=11 // pred_region
          %730 = vsyncadd [#allocation18], 0
          %s731 = sshll.u32 %s15, 4
          %s732 = int_to_ptr.hbm [resolvable:$true] %s731
          %s733 = sshll.u32 [#allocation17], 4
          %s734 = int_to_ptr.vmem [resolvable:$true] %s733
          %739 = dma.hbm_to_vmem [thread:$0]  %s732, 1024, %s734, [#allocation18], 64, 64, 4
        $region64: #{tpu_custom_call.1} parent=11 // pred_fallthru
          _
        // Predicated region
        $region65: #{tpu_custom_call.1} parent=11 // pred_check
          %p740 = pneg %p417
        $region66: #{tpu_custom_call.1} parent=11 // pred_check_branch
          %742 = sbr.rel (%p740) target = $region68
        $region67: #{tpu_custom_call.1} parent=11 // pred_region
          _
        $region68: #{tpu_custom_call.1} parent=11 // pred_fallthru
          _
        // Predicated region
        $region69: #{tpu_custom_call.1} parent=11 // pred_check
          %p743 = pneg %p438
        $region70: #{tpu_custom_call.1} parent=11 // pred_check_branch
          %745 = sbr.rel (%p743) target = $region72
        $region71: #{tpu_custom_call.1} parent=11 // pred_region
          _
        $region72: #{tpu_custom_call.1} parent=11 // pred_fallthru
          _
        // Predicated region
        $region73: #{tpu_custom_call.1} parent=11 // pred_check
          %p746 = pneg %p459
        $region74: #{tpu_custom_call.1} parent=11 // pred_check_branch
          %748 = sbr.rel (%p746) target = $region76
        $region75: #{tpu_custom_call.1} parent=11 // pred_region
          _
        $region76: #{tpu_custom_call.1} parent=11 // pred_fallthru
          _
        // Predicated region
        $region77: #{tpu_custom_call.1} parent=11 // pred_check
          %p749 = pneg %p480
        $region78: #{tpu_custom_call.1} parent=11 // pred_check_branch
          %751 = sbr.rel (%p749) target = $region80
        $region79: #{tpu_custom_call.1} parent=11 // pred_region
          %753 = vsyncadd [#allocation18], 0
          %s754 = sshll.u32 %s19, 4
          %s755 = int_to_ptr.hbm [resolvable:$true] %s754
          %s756 = sshll.u32 [#allocation19], 4
          %s757 = int_to_ptr.vmem [resolvable:$true] %s756
          %762 = dma.hbm_to_vmem [thread:$0]  %s755, 2048, %s757, [#allocation18], 128, 128, 8
        $region80: #{tpu_custom_call.1} parent=11 // pred_fallthru
          _
        // Predicated region
        $region81: #{tpu_custom_call.1} parent=11 // pred_check
          %p763 = pneg %p501
        $region82: #{tpu_custom_call.1} parent=11 // pred_check_branch
          %765 = sbr.rel (%p763) target = $region84
        $region83: #{tpu_custom_call.1} parent=11 // pred_region
          _
        $region84: #{tpu_custom_call.1} parent=11 // pred_fallthru
          _
        // Predicated region
        $region85: #{tpu_custom_call.1} parent=11 // pred_check
          %p766 = pneg %p522
        $region86: #{tpu_custom_call.1} parent=11 // pred_check_branch
          %768 = sbr.rel (%p766) target = $region88
        $region87: #{tpu_custom_call.1} parent=11 // pred_region
          %770 = vsyncadd [#allocation21], 0
          %s771 = sshll.u32 %s21, 4
          %s772 = int_to_ptr.hbm [resolvable:$true] %s771
          %s773 = sshll.u32 [#allocation20], 4
          %s774 = int_to_ptr.vmem [resolvable:$true] %s773
          %779 = dma.hbm_to_vmem [thread:$0]  %s772, 2048, %s774, [#allocation21], 64, 64, 4
        $region88: #{tpu_custom_call.1} parent=11 // pred_fallthru
          _
        // Predicated region
        $region89: #{tpu_custom_call.1} parent=11 // pred_check
          %p780 = pneg %p543
        $region90: #{tpu_custom_call.1} parent=11 // pred_check_branch
          %782 = sbr.rel (%p780) target = $region92
        $region91: #{tpu_custom_call.1} parent=11 // pred_region
          _
        $region92: #{tpu_custom_call.1} parent=11 // pred_fallthru
          _
        // Predicated region
        $region93: #{tpu_custom_call.1} parent=11 // pred_check
          %p783 = pneg %p564
        $region94: #{tpu_custom_call.1} parent=11 // pred_check_branch
          %785 = sbr.rel (%p783) target = $region96
        $region95: #{tpu_custom_call.1} parent=11 // pred_region
          _
        $region96: #{tpu_custom_call.1} parent=11 // pred_fallthru
          _
        // Predicated region
        $region97: #{tpu_custom_call.1} parent=11 // pred_check
          %p786 = pneg %p585
        $region98: #{tpu_custom_call.1} parent=11 // pred_check_branch
          %788 = sbr.rel (%p786) target = $region100
        $region99: #{tpu_custom_call.1} parent=11 // pred_region
          _
        $region100: #{tpu_custom_call.1} parent=11 // pred_fallthru
          _
      $region12: #{tpu_custom_call.1} parent=5 // pred_fallthru
        _
      %p789 = scmp.lt.s32.totalorder %s45, 2
      // Predicated region
      $region101: #{tpu_custom_call.1} parent=5 // pred_check
        %p790 = pneg %p789
      $region102: #{tpu_custom_call.1} parent=5 // pred_check_branch
        %792 = sbr.rel (%p790) target = $region104
      $region103: #{tpu_custom_call.1} parent=5 // pred_region
        // Predicated region
        $region105: #{tpu_custom_call.1} parent=103 // pred_check
          %p793 = pneg %p65
        $region106: #{tpu_custom_call.1} parent=103 // pred_check_branch
          %795 = sbr.rel (%p793) target = $region108
        $region107: #{tpu_custom_call.1} parent=103 // pred_region
          %s796 = sand.u32 %s55, 1
          %s797 = scalar_lea.sflag [#allocation3], %s796
          %s798 = sand.u32 %s55, 1
          %s799 = smul.addr %s798, 16
          %s800 = scalar_lea.vmem [#allocation2], %s799
          %s801 = smul.u32 2, %s45
          %803 = vsyncadd %s797, 0
          %s804 = smul.addr %s801, 2
          %s805 = smul.addr %s804, 4
          %s806 = scalar_lea.hbm %s0, %s805
          %s807 = sshll.u32 %s806, 4
          %s808 = int_to_ptr.hbm [resolvable:$true] %s807
          %s809 = sshll.u32 %s800, 4
          %s810 = int_to_ptr.vmem [resolvable:$true] %s809
          %815 = dma.hbm_to_vmem [thread:$0]  %s808, 256, %s810, %s797, 64, 64, 4
        $region108: #{tpu_custom_call.1} parent=103 // pred_fallthru
          _
        // Predicated region
        $region109: #{tpu_custom_call.1} parent=103 // pred_check
          %p816 = pneg %p91
        $region110: #{tpu_custom_call.1} parent=103 // pred_check_branch
          %818 = sbr.rel (%p816) target = $region112
        $region111: #{tpu_custom_call.1} parent=103 // pred_region
          %s819 = sand.u32 %s45, 1
          %s820 = scalar_lea.sflag [#allocation6], %s819
          %s821 = sand.u32 %s81, 1
          %s822 = smul.addr %s821, 16
          %s823 = scalar_lea.vmem [#allocation5], %s822
          %s824 = smul.u32 2, %s45
          %826 = vsyncadd %s820, 0
          %s827 = smul.addr %s824, 2
          %s828 = smul.addr %s827, 4
          %s829 = scalar_lea.hbm %s1, %s828
          %s830 = sshll.u32 %s829, 4
          %s831 = int_to_ptr.hbm [resolvable:$true] %s830
          %s832 = sshll.u32 %s823, 4
          %s833 = int_to_ptr.vmem [resolvable:$true] %s832
          %838 = dma.hbm_to_vmem [thread:$0]  %s831, 256, %s833, %s820, 64, 64, 4
        $region112: #{tpu_custom_call.1} parent=103 // pred_fallthru
          _
        // Predicated region
        $region113: #{tpu_custom_call.1} parent=103 // pred_check
          %p839 = pneg %p117
        $region114: #{tpu_custom_call.1} parent=103 // pred_check_branch
          %841 = sbr.rel (%p839) target = $region116
        $region115: #{tpu_custom_call.1} parent=103 // pred_region
          %s842 = sand.u32 %s45, 1
          %s843 = scalar_lea.sflag [#allocation6], %s842
          %s844 = sand.u32 %s107, 1
          %s845 = smul.addr %s844, 2
          %s846 = scalar_lea.vmem [#allocation7], %s845
          %s847 = smul.u32 2, %s45
          %849 = vsyncadd %s843, 0
          %s850 = scalar_lea.hbm %s2, %s847
          %s851 = sshll.u32 %s850, 4
          %s852 = int_to_ptr.hbm [resolvable:$true] %s851
          %s853 = sshll.u32 %s846, 4
          %s854 = int_to_ptr.vmem [resolvable:$true] %s853
          %859 = dma.hbm_to_vmem [thread:$0]  %s852, 32, %s854, %s843, 16, 16, 1
        $region116: #{tpu_custom_call.1} parent=103 // pred_fallthru
          _
      $region104: #{tpu_custom_call.1} parent=5 // pred_fallthru
        _
      %p860 = scmp.le.s32.totalorder 1, %s45
      %p861 = scmp.lt.s32.totalorder %s45, 3
      %p862 = pnand %p860, %p861
      %p863 = pneg %p862
      // Predicated region
      $region117: #{tpu_custom_call.1} parent=5 // pred_check
        _
      $region118: #{tpu_custom_call.1} parent=5 // pred_check_branch
        %865 = sbr.rel (%p862) target = $region120
      $region119: #{tpu_custom_call.1} parent=5 // pred_region
        %s866 = ssub.s32 %s45, 1
        %s867 = sand.u32 %s58, 1
        %s868 = scalar_lea.sflag [#allocation3], %s867
        %s869 = sand.u32 %s58, 1
        %s870 = smul.addr %s869, 16
        %s871 = scalar_lea.vmem [#allocation2], %s870
        // Predicated region
        $region121: #{tpu_custom_call.1} parent=119 // pred_check
          %p872 = pneg %p71
        $region122: #{tpu_custom_call.1} parent=119 // pred_check_branch
          %874 = sbr.rel (%p872) target = $region124
        $region123: #{tpu_custom_call.1} parent=119 // pred_region
          %876 = dma.done %s868, 256
        $region124: #{tpu_custom_call.1} parent=119 // pred_fallthru
          _
        %s877 = sand.u32 %s50, 1
        %s878 = scalar_lea.sflag [#allocation6], %s877
        %s879 = sand.u32 %s84, 1
        %s880 = smul.addr %s879, 16
        %s881 = scalar_lea.vmem [#allocation5], %s880
        // Predicated region
        $region125: #{tpu_custom_call.1} parent=119 // pred_check
          %p882 = pneg %p97
        $region126: #{tpu_custom_call.1} parent=119 // pred_check_branch
          %884 = sbr.rel (%p882) target = $region128
        $region127: #{tpu_custom_call.1} parent=119 // pred_region
          %886 = dma.done %s878, 256
        $region128: #{tpu_custom_call.1} parent=119 // pred_fallthru
          _
        %s887 = sand.u32 %s50, 1
        %s888 = scalar_lea.sflag [#allocation6], %s887
        %s889 = sand.u32 %s110, 1
        %s890 = smul.addr %s889, 2
        %s891 = scalar_lea.vmem [#allocation7], %s890
        // Predicated region
        $region129: #{tpu_custom_call.1} parent=119 // pred_check
          %p892 = pneg %p123
        $region130: #{tpu_custom_call.1} parent=119 // pred_check_branch
          %894 = sbr.rel (%p892) target = $region132
        $region131: #{tpu_custom_call.1} parent=119 // pred_region
          %896 = dma.done %s888, 32
        $region132: #{tpu_custom_call.1} parent=119 // pred_fallthru
          _
        // Predicated region
        $region133: #{tpu_custom_call.1} parent=119 // pred_check
          %p897 = pneg %p144
        $region134: #{tpu_custom_call.1} parent=119 // pred_check_branch
          %899 = sbr.rel (%p897) target = $region136
        $region135: #{tpu_custom_call.1} parent=119 // pred_region
          %901 = dma.done [#allocation9], 1024
        $region136: #{tpu_custom_call.1} parent=119 // pred_fallthru
          _
        // Predicated region
        $region137: #{tpu_custom_call.1} parent=119 // pred_check
          %p902 = pneg %p165
        $region138: #{tpu_custom_call.1} parent=119 // pred_check_branch
          %904 = sbr.rel (%p902) target = $region140
        $region139: #{tpu_custom_call.1} parent=119 // pred_region
          %906 = dma.done [#allocation9], 16
        $region140: #{tpu_custom_call.1} parent=119 // pred_fallthru
          _
        // Predicated region
        $region141: #{tpu_custom_call.1} parent=119 // pred_check
          %p907 = pneg %p186
        $region142: #{tpu_custom_call.1} parent=119 // pred_check_branch
          %909 = sbr.rel (%p907) target = $region144
        $region143: #{tpu_custom_call.1} parent=119 // pred_region
          %911 = dma.done [#allocation12], 2048
        $region144: #{tpu_custom_call.1} parent=119 // pred_fallthru
          _
        // Predicated region
        $region145: #{tpu_custom_call.1} parent=119 // pred_check
          %p912 = pneg %p228
        $region146: #{tpu_custom_call.1} parent=119 // pred_check_branch
          %914 = sbr.rel (%p912) target = $region148
        $region147: #{tpu_custom_call.1} parent=119 // pred_region
          %916 = dma.done [#allocation12], 1024
        $region148: #{tpu_custom_call.1} parent=119 // pred_fallthru
          _
        // Predicated region
        $region149: #{tpu_custom_call.1} parent=119 // pred_check
          %p917 = pneg %p312
        $region150: #{tpu_custom_call.1} parent=119 // pred_check_branch
          %919 = sbr.rel (%p917) target = $region152
        $region151: #{tpu_custom_call.1} parent=119 // pred_region
          %921 = dma.done [#allocation15], 1024
        $region152: #{tpu_custom_call.1} parent=119 // pred_fallthru
          _
        // Predicated region
        $region153: #{tpu_custom_call.1} parent=119 // pred_check
          %p922 = pneg %p354
        $region154: #{tpu_custom_call.1} parent=119 // pred_check_branch
          %924 = sbr.rel (%p922) target = $region156
        $region155: #{tpu_custom_call.1} parent=119 // pred_region
          %926 = dma.done [#allocation15], 2048
        $region156: #{tpu_custom_call.1} parent=119 // pred_fallthru
          _
        // Predicated region
        $region157: #{tpu_custom_call.1} parent=119 // pred_check
          %p927 = pneg %p396
        $region158: #{tpu_custom_call.1} parent=119 // pred_check_branch
          %929 = sbr.rel (%p927) target = $region160
        $region159: #{tpu_custom_call.1} parent=119 // pred_region
          %931 = dma.done [#allocation18], 1024
        $region160: #{tpu_custom_call.1} parent=119 // pred_fallthru
          _
        // Predicated region
        $region161: #{tpu_custom_call.1} parent=119 // pred_check
          %p932 = pneg %p480
        $region162: #{tpu_custom_call.1} parent=119 // pred_check_branch
          %934 = sbr.rel (%p932) target = $region164
        $region163: #{tpu_custom_call.1} parent=119 // pred_region
          %936 = dma.done [#allocation18], 2048
        $region164: #{tpu_custom_call.1} parent=119 // pred_fallthru
          _
        // Predicated region
        $region165: #{tpu_custom_call.1} parent=119 // pred_check
          %p937 = pneg %p522
        $region166: #{tpu_custom_call.1} parent=119 // pred_check_branch
          %939 = sbr.rel (%p937) target = $region168
        $region167: #{tpu_custom_call.1} parent=119 // pred_region
          %941 = dma.done [#allocation21], 2048
        $region168: #{tpu_custom_call.1} parent=119 // pred_fallthru
          _
        %s942 = sand.u32 %s58, 1
        %s943 = scalar_lea.sflag [#allocation3], %s942
        %s944 = sand.u32 %s58, 1
        %s945 = smul.addr %s944, 16
        %s946 = scalar_lea.vmem [#allocation2], %s945
        %p947 = pneg %p71
        %p948 = pneg %p68
        %s949 = sand.u32 %s50, 1
        %s950 = scalar_lea.sflag [#allocation6], %s949
        %s951 = sand.u32 %s84, 1
        %s952 = smul.addr %s951, 16
        %s953 = scalar_lea.vmem [#allocation5], %s952
        %p954 = pneg %p97
        %p955 = pneg %p94
        %s956 = sand.u32 %s50, 1
        %s957 = scalar_lea.sflag [#allocation6], %s956
        %s958 = sand.u32 %s110, 1
        %s959 = smul.addr %s958, 2
        %s960 = scalar_lea.vmem [#allocation7], %s959
        %p961 = pneg %p123
        %p962 = pneg %p120
        %p963 = pneg %p144
        %p964 = pneg %p141
        %p965 = pneg %p165
        %p966 = pneg %p162
        %p967 = pneg %p186
        %p968 = pneg %p183
        %p969 = pneg %p207
        %p970 = pneg %p204
        %p971 = pneg %p228
        %p972 = pneg %p225
        %p973 = pneg %p249
        %p974 = pneg %p246
        %p975 = pneg %p270
        %p976 = pneg %p267
        %p977 = pneg %p291
        %p978 = pneg %p288
        %p979 = pneg %p312
        %p980 = pneg %p309
        %p981 = pneg %p333
        %p982 = pneg %p330
        %p983 = pneg %p354
        %p984 = pneg %p351
        %p985 = pneg %p375
        %p986 = pneg %p372
        %p987 = pneg %p396
        %p988 = pneg %p393
        %p989 = pneg %p417
        %p990 = pneg %p414
        %p991 = pneg %p438
        %p992 = pneg %p435
        %p993 = pneg %p459
        %p994 = pneg %p456
        %p995 = pneg %p480
        %p996 = pneg %p477
        %p997 = pneg %p501
        %p998 = pneg %p498
        %p999 = pneg %p522
        %p1000 = pneg %p519
        %p1001 = pneg %p543
        %p1002 = pneg %p540
        %p1003 = pneg %p564
        %p1004 = pneg %p561
        %p1005 = pneg %p585
        %p1006 = pneg %p582
        %p1007 = pneg %p611
        %p1008 = pneg %p608
        %s1009 = sand.u32 %s598, 1
        %s1010 = scalar_lea.sflag [#allocation4], %s1009
        %s1011 = sand.u32 %s598, 1
        %s1012 = smul.addr %s1011, 16
        %s1013 = scalar_lea.vmem [#allocation22], %s1012
        %s1014 = smul.u32 2, %s50
        %s1015 = smul.u32 2, %s50
        %s1016 = smul.u32 2, %s50
        %s1017 = smul.u32 2, %s50
        %v1019 = vld [vmem:[%s871] sm:$0xf]
        %v1020 = vld [vmem:[%s871 + $0x4] sm:$0xf]
        %v1021 = vld [vmem:[%s871 + $0x8] sm:$0xf]
        %v1022 = vld [vmem:[%s871 + $0xc] sm:$0xf]
        %v1023 = vld [vmem:[%s881] sm:$0xf]
        %v1024 = vld [vmem:[%s881 + $0x4] sm:$0xf]
        %v1025 = vld [vmem:[%s881 + $0x8] sm:$0xf]
        %v1026 = vld [vmem:[%s881 + $0xc] sm:$0xf]
        %v1027 = vlaneseq
        %v1028 = vshrl.u32 %v1027, 7
        %v1029 = vadd.s32 %v1028, 8
        %v1030 = vlaneseq
        %v1031 = vand.u32 %v1030, 127
        %vm1032 = vcmp.le.s32.totalorder %v1031, %v1028
        %vm1033 = vcmp.le.s32.totalorder %v1031, %v1029
        %v1034 = vld [vmem:[%s891] sm:$0x1]
        %v1035 = vld [vmem:[%s891 + $0x1] sm:$0x1]
        %vm1036 = vcmp.ne.f32.partialorder %v1034, 0.0
        %vm1037 = vcmp.ne.f32.partialorder %v1035, 0.0
        %v1038 = vld [vmem:[#allocation8] sm:$0xf]
        %v1039 = vld [vmem:[#allocation8 + $0x4] sm:$0xf]
        %v1040 = vld [vmem:[#allocation8 + $0x8] sm:$0xf]
        %v1041 = vld [vmem:[#allocation8 + $0xc] sm:$0xf]
        %v1042 = vld [vmem:[#allocation8 + $0x10] sm:$0xf]
        %v1043 = vld [vmem:[#allocation8 + $0x14] sm:$0xf]
        %v1044 = vld [vmem:[#allocation8 + $0x18] sm:$0xf]
        %v1045 = vld [vmem:[#allocation8 + $0x1c] sm:$0xf]
        %v1046 = vld [vmem:[#allocation8 + $0x20] sm:$0xf]
        %v1047 = vld [vmem:[#allocation8 + $0x24] sm:$0xf]
        %v1048 = vld [vmem:[#allocation8 + $0x28] sm:$0xf]
        %v1049 = vld [vmem:[#allocation8 + $0x2c] sm:$0xf]
        %v1050 = vld [vmem:[#allocation8 + $0x30] sm:$0xf]
        %v1051 = vld [vmem:[#allocation8 + $0x34] sm:$0xf]
        %v1052 = vld [vmem:[#allocation8 + $0x38] sm:$0xf]
        %v1053 = vld [vmem:[#allocation8 + $0x3c] sm:$0xf]
        %v1054 = vld [vmem:[#allocation10] sm:$0x1]
        %v1056 = vperm.slane %v1054, 0
        %v1062 = vunpack.c.l.b16 %v1019
        %v1063 = vunpack.c.l.b16 %v1020
        %v1064 = vunpack.c.l.b16 %v1021
        %v1065 = vunpack.c.l.b16 %v1022
        %v1066 = vpack.c.b16 %v1063, %v1062
        %v1067 = vpack.c.b16 %v1065, %v1064
        %v1086 = vunpack.c.l.b16 %v1038
        %v1087 = vunpack.c.l.b16 %v1039
        %v1088 = vunpack.c.l.b16 %v1040
        %v1089 = vunpack.c.l.b16 %v1041
        %v1090 = vunpack.c.l.b16 %v1042
        %v1091 = vunpack.c.l.b16 %v1043
        %v1092 = vunpack.c.l.b16 %v1044
        %v1093 = vunpack.c.l.b16 %v1045
        %v1094 = vunpack.c.l.b16 %v1046
        %v1095 = vunpack.c.l.b16 %v1047
        %v1096 = vunpack.c.l.b16 %v1048
        %v1097 = vunpack.c.l.b16 %v1049
        %v1098 = vunpack.c.l.b16 %v1050
        %v1099 = vunpack.c.l.b16 %v1051
        %v1100 = vunpack.c.l.b16 %v1052
        %v1101 = vunpack.c.l.b16 %v1053
        %v1102 = vpack.c.b16 %v1087, %v1086
        %v1103 = vpack.c.b16 %v1089, %v1088
        %v1104 = vpack.c.b16 %v1091, %v1090
        %v1105 = vpack.c.b16 %v1093, %v1092
        %v1106 = vpack.c.b16 %v1095, %v1094
        %v1107 = vpack.c.b16 %v1097, %v1096
        %v1108 = vpack.c.b16 %v1099, %v1098
        %v1109 = vpack.c.b16 %v1101, %v1100
        %1118 = vmatpush.bf16.msra.mxu0 %v1109
        %1119 = vmatpush.bf16.msra.mxu0 %v1108
        %1120 = vmatpush.bf16.msra.mxu0 %v1107
        %1121 = vmatpush.bf16.msra.mxu0 %v1106
        %1122 = vmatpush.bf16.msra.mxu0 %v1105
        %1123 = vmatpush.bf16.msra.mxu0 %v1104
        %1124 = vmatpush.bf16.msra.mxu0 %v1103
        %1125 = vmatpush.bf16.msra.mxu0 %v1102
        %1126 = vmatmul.bf16.gmra.mxu0 %v1066
        %v1127 = vpop.f32.mrf.mxu0
        %v1128 = vadd.f32 %v1056, %v1127
        %v1129 = vpop.f32.mrf.mxu0
        %v1130 = vadd.f32 %v1056, %v1129
        %1131 = vmatmul.bf16.gmra.mxu0 %v1067
        %v1132 = vpop.f32.mrf.mxu0
        %v1133 = vadd.f32 %v1056, %v1132
        %v1134 = vpop.f32.mrf.mxu0
        %v1135 = vadd.f32 %v1056, %v1134
        %1136 = vdwg.mxu0
        %v1137 = vpack.c.bf16 %v1128, %v1128
        %v1138 = vpack.c.bf16 %v1130, %v1130
        %v1139 = vpack.c.bf16 %v1133, %v1133
        %v1140 = vpack.c.bf16 %v1135, %v1135
        %v1141 = vld [vmem:[#allocation11] sm:$0xff]
        %v1142 = vld [vmem:[#allocation11 + $0x8] sm:$0xff]
        %v1143 = vld [vmem:[#allocation11 + $0x10] sm:$0xff]
        %v1144 = vld [vmem:[#allocation11 + $0x18] sm:$0xff]
        %v1145 = vld [vmem:[#allocation11 + $0x20] sm:$0xff]
        %v1146 = vld [vmem:[#allocation11 + $0x28] sm:$0xff]
        %v1147 = vld [vmem:[#allocation11 + $0x30] sm:$0xff]
        %v1148 = vld [vmem:[#allocation11 + $0x38] sm:$0xff]
        %v1149 = vld [vmem:[#allocation11 + $0x40] sm:$0xff]
        %v1150 = vld [vmem:[#allocation11 + $0x48] sm:$0xff]
        %v1151 = vld [vmem:[#allocation11 + $0x50] sm:$0xff]
        %v1152 = vld [vmem:[#allocation11 + $0x58] sm:$0xff]
        %v1153 = vld [vmem:[#allocation11 + $0x60] sm:$0xff]
        %v1154 = vld [vmem:[#allocation11 + $0x68] sm:$0xff]
        %v1155 = vld [vmem:[#allocation11 + $0x70] sm:$0xff]
        %v1156 = vld [vmem:[#allocation11 + $0x78] sm:$0xff]
        %v1157 = vld [vmem:[%s6] sm:$0x3]
        %v1159 = vperm.slane %v1157, 0
        %v1160 = vperm.slane %v1157, 1
        %v1179 = vunpack.c.l.b16 %v1141
        %v1180 = vunpack.c.h.b16 %v1141
        %v1181 = vunpack.c.l.b16 %v1142
        %v1182 = vunpack.c.h.b16 %v1142
        %v1183 = vunpack.c.l.b16 %v1143
        %v1184 = vunpack.c.h.b16 %v1143
        %v1185 = vunpack.c.l.b16 %v1144
        %v1186 = vunpack.c.h.b16 %v1144
        %v1187 = vunpack.c.l.b16 %v1145
        %v1188 = vunpack.c.h.b16 %v1145
        %v1189 = vunpack.c.l.b16 %v1146
        %v1190 = vunpack.c.h.b16 %v1146
        %v1191 = vunpack.c.l.b16 %v1147
        %v1192 = vunpack.c.h.b16 %v1147
        %v1193 = vunpack.c.l.b16 %v1148
        %v1194 = vunpack.c.h.b16 %v1148
        %v1195 = vunpack.c.l.b16 %v1149
        %v1196 = vunpack.c.h.b16 %v1149
        %v1197 = vunpack.c.l.b16 %v1150
        %v1198 = vunpack.c.h.b16 %v1150
        %v1199 = vunpack.c.l.b16 %v1151
        %v1200 = vunpack.c.h.b16 %v1151
        %v1201 = vunpack.c.l.b16 %v1152
        %v1202 = vunpack.c.h.b16 %v1152
        %v1203 = vunpack.c.l.b16 %v1153
        %v1204 = vunpack.c.h.b16 %v1153
        %v1205 = vunpack.c.l.b16 %v1154
        %v1206 = vunpack.c.h.b16 %v1154
        %v1207 = vunpack.c.l.b16 %v1155
        %v1208 = vunpack.c.h.b16 %v1155
        %v1209 = vunpack.c.l.b16 %v1156
        %v1210 = vunpack.c.h.b16 %v1156
        %v1211 = vpack.c.b16 %v1181, %v1179
        %v1212 = vpack.c.b16 %v1182, %v1180
        %v1213 = vpack.c.b16 %v1185, %v1183
        %v1214 = vpack.c.b16 %v1186, %v1184
        %v1215 = vpack.c.b16 %v1189, %v1187
        %v1216 = vpack.c.b16 %v1190, %v1188
        %v1217 = vpack.c.b16 %v1193, %v1191
        %v1218 = vpack.c.b16 %v1194, %v1192
        %v1219 = vpack.c.b16 %v1197, %v1195
        %v1220 = vpack.c.b16 %v1198, %v1196
        %v1221 = vpack.c.b16 %v1201, %v1199
        %v1222 = vpack.c.b16 %v1202, %v1200
        %v1223 = vpack.c.b16 %v1205, %v1203
        %v1224 = vpack.c.b16 %v1206, %v1204
        %v1225 = vpack.c.b16 %v1209, %v1207
        %v1226 = vpack.c.b16 %v1210, %v1208
        %1243 = vmatpush.bf16.msra.mxu0 %v1225
        %1244 = vmatpush.bf16.msra.mxu0 %v1223
        %1245 = vmatpush.bf16.msra.mxu0 %v1221
        %1246 = vmatpush.bf16.msra.mxu0 %v1219
        %1247 = vmatpush.bf16.msra.mxu0 %v1217
        %1248 = vmatpush.bf16.msra.mxu0 %v1215
        %1249 = vmatpush.bf16.msra.mxu0 %v1213
        %1250 = vmatpush.bf16.msra.mxu0 %v1211
        %1251 = vmatmul.bf16.gmra.mxu0 %v1066
        %v1252 = vpop.f32.mrf.mxu0
        %v1253 = vadd.f32 %v1159, %v1252
        %v1254 = vpop.f32.mrf.mxu0
        %v1255 = vadd.f32 %v1159, %v1254
        %1256 = vmatmul.bf16.gmra.mxu0 %v1067
        %v1257 = vpop.f32.mrf.mxu0
        %v1258 = vadd.f32 %v1159, %v1257
        %v1259 = vpop.f32.mrf.mxu0
        %v1260 = vadd.f32 %v1159, %v1259
        %1261 = vdwg.mxu0
        %1262 = vmatpush.bf16.msra.mxu0 %v1226
        %1263 = vmatpush.bf16.msra.mxu0 %v1224
        %1264 = vmatpush.bf16.msra.mxu0 %v1222
        %1265 = vmatpush.bf16.msra.mxu0 %v1220
        %1266 = vmatpush.bf16.msra.mxu0 %v1218
        %1267 = vmatpush.bf16.msra.mxu0 %v1216
        %1268 = vmatpush.bf16.msra.mxu0 %v1214
        %1269 = vmatpush.bf16.msra.mxu0 %v1212
        %1270 = vmatmul.bf16.gmra.mxu0 %v1066
        %v1271 = vpop.f32.mrf.mxu0
        %v1272 = vadd.f32 %v1160, %v1271
        %v1273 = vpop.f32.mrf.mxu0
        %v1274 = vadd.f32 %v1160, %v1273
        %1275 = vmatmul.bf16.gmra.mxu0 %v1067
        %v1276 = vpop.f32.mrf.mxu0
        %v1277 = vadd.f32 %v1160, %v1276
        %v1278 = vpop.f32.mrf.mxu0
        %v1279 = vadd.f32 %v1160, %v1278
        %1280 = vdwg.mxu0
        %v1281 = vpack.c.bf16 %v1272, %v1253
        %v1282 = vpack.c.bf16 %v1274, %v1255
        %v1283 = vpack.c.bf16 %v1277, %v1258
        %v1284 = vpack.c.bf16 %v1279, %v1260
        %v1289 = vrot.slane %v1281, 4
        %v1290 = vrot.slane %v1282, 4
        %v1291 = vrot.slane %v1283, 4
        %v1292 = vrot.slane %v1284, 4
        %v1295 = vunpack.c.l.b16 %v1137
        %v1296 = vunpack.c.l.b16 %v1138
        %v1297 = vpack.c.b16 %v1296, %v1295
        %v1298 = vunpack.c.l.b16 %v1281
        %v1299 = vunpack.c.l.b16 %v1282
        %v1300 = vpack.c.b16 %v1299, %v1298
        %vm1301 = vcmask 261120
        %v1303 = vsel %vm1301, %v1297, 0
        %v1306 = vsel %vm1301, %v1300, 0
        %1308 = vmatpush.bf16.xpose.msra.mxu0 0
        %1309 = vmatpush.bf16.xpose.msra.mxu0 0
        %1310 = vmatpush.bf16.xpose.msra.mxu0 0
        %1311 = vmatpush.bf16.xpose.msra.mxu0 0
        %1312 = vmatpush.bf16.xpose.msra.mxu0 0
        %1313 = vmatpush.bf16.xpose.msra.mxu0 0
        %1314 = vmatpush.bf16.xpose.msra.mxu0 0
        %1315 = vmatpush.bf16.xpose.msra.mxu0 %v1306
        %1316 = vmatmul.bf16.gmra.mxu0 %v1303
        %v1317 = vpop.f32.mrf.mxu0
        %v1318 = vadd.f32 0.0, %v1317
        %v1319 = vpop.f32.mrf.mxu0
        %v1320 = vadd.f32 0.0, %v1319
        %1321 = vdwg.mxu0
        %v1324 = vunpack.c.l.b16 %v1139
        %v1325 = vunpack.c.l.b16 %v1140
        %v1326 = vpack.c.b16 %v1325, %v1324
        %v1327 = vunpack.c.l.b16 %v1283
        %v1328 = vunpack.c.l.b16 %v1284
        %v1329 = vpack.c.b16 %v1328, %v1327
        %v1331 = vsel %vm1301, %v1326, 0
        %v1334 = vsel %vm1301, %v1329, 0
        %1336 = vmatpush.bf16.xpose.msra.mxu0 0
        %1337 = vmatpush.bf16.xpose.msra.mxu0 0
        %1338 = vmatpush.bf16.xpose.msra.mxu0 0
        %1339 = vmatpush.bf16.xpose.msra.mxu0 0
        %1340 = vmatpush.bf16.xpose.msra.mxu0 0
        %1341 = vmatpush.bf16.xpose.msra.mxu0 0
        %1342 = vmatpush.bf16.xpose.msra.mxu0 0
        %1343 = vmatpush.bf16.xpose.msra.mxu0 %v1334
        %1344 = vmatmul.bf16.gmra.mxu0 %v1331
        %v1345 = vpop.f32.mrf.mxu0
        %v1346 = vadd.f32 0.0, %v1345
        %v1347 = vpop.f32.mrf.mxu0
        %v1348 = vadd.f32 0.0, %v1347
        %1349 = vdwg.mxu0
        %v1350 = vmul.f32 %v1318, 0.17677669
        %v1351 = vmul.f32 %v1320, 0.17677669
        %v1352 = vmul.f32 %v1346, 0.17677669
        %v1353 = vmul.f32 %v1348, 0.17677669
        %v1354 = vsel %vm1032, 1, 0
        %v1355 = vsel %vm1033, 1, 0
        %vm1356 = vcmp.eq.s32.totalorder %v1354, 1
        %vm1357 = vcmp.eq.s32.totalorder %v1355, 1
        %v1358 = vsel %vm1356, %v1350, -1e+09
        %v1359 = vsel %vm1357, %v1351, -1e+09
        %v1360 = vsel %vm1356, %v1352, -1e+09
        %v1361 = vsel %vm1357, %v1353, -1e+09
        %vm1362 = vcmask 130048
        %v1363 = vsel %vm1362, %v1358, -inf
        %1364 = vmax.xlane.f32.xlu0 %v1363
        %v1365 = vpop.xlane.xlu0 %1364
        %v1366 = vsel %vm1362, %v1359, -inf
        %1367 = vmax.xlane.f32.xlu0 %v1366
        %v1368 = vpop.xlane.xlu0 %1367
        %v1369 = vsel %vm1362, %v1360, -inf
        %1370 = vmax.xlane.f32.xlu0 %v1369
        %v1371 = vpop.xlane.xlu0 %1370
        %v1372 = vsel %vm1362, %v1361, -inf
        %1373 = vmax.xlane.f32.xlu0 %v1372
        %v1374 = vpop.xlane.xlu0 %1373
        %v1375 = vsub.f32 %v1358, %v1365
        %v1376 = vsub.f32 %v1359, %v1368
        %v1377 = vsub.f32 %v1360, %v1371
        %v1378 = vsub.f32 %v1361, %v1374
        %v1379 = vmul.f32 %v1375, 1.442695
        %v1380 = vpow.pop %v1379
        %v1381 = vmul.f32 %v1376, 1.442695
        %v1382 = vpow.pop %v1381
        %v1383 = vmul.f32 %v1377, 1.442695
        %v1384 = vpow.pop %v1383
        %v1385 = vmul.f32 %v1378, 1.442695
        %v1386 = vpow.pop %v1385
        %v1387 = vsel %vm1362, %v1380, 0.0
        %1388 = vadd.xlane.f32.xlu0 %v1387
        %v1389 = vpop.xlane.xlu0 %1388
        %v1390 = vsel %vm1362, %v1382, 0.0
        %1391 = vadd.xlane.f32.xlu0 %v1390
        %v1392 = vpop.xlane.xlu0 %1391
        %v1393 = vsel %vm1362, %v1384, 0.0
        %1394 = vadd.xlane.f32.xlu0 %v1393
        %v1395 = vpop.xlane.xlu0 %1394
        %v1396 = vsel %vm1362, %v1386, 0.0
        %1397 = vadd.xlane.f32.xlu0 %v1396
        %v1398 = vpop.xlane.xlu0 %1397
        %v1399 = vrcp.pop %v1389
        %v1400 = vrcp.pop %v1392
        %v1401 = vrcp.pop %v1395
        %v1402 = vrcp.pop %v1398
        %v1403 = vmul.f32 %v1380, %v1399
        %v1404 = vmul.f32 %v1382, %v1400
        %v1405 = vmul.f32 %v1384, %v1401
        %v1406 = vmul.f32 %v1386, %v1402
        %v1407 = vpack.c.bf16 %v1403, %v1403
        %v1408 = vpack.c.bf16 %v1404, %v1404
        %v1409 = vpack.c.bf16 %v1405, %v1405
        %v1410 = vpack.c.bf16 %v1406, %v1406
        %v1413 = vunpack.c.l.b16 %v1407
        %v1414 = vunpack.c.l.b16 %v1408
        %v1415 = vpack.c.b16 %v1414, %v1413
        %v1416 = vunpack.c.l.b16 %v1289
        %v1417 = vunpack.c.l.b16 %v1290
        %v1418 = vpack.c.b16 %v1417, %v1416
        %v1421 = vsel %vm1362, %v1415, 0
        %1423 = vmatpush.bf16.msra.mxu0 0
        %1424 = vmatpush.bf16.msra.mxu0 0
        %1425 = vmatpush.bf16.msra.mxu0 0
        %1426 = vmatpush.bf16.msra.mxu0 0
        %1427 = vmatpush.bf16.msra.mxu0 0
        %1428 = vmatpush.bf16.msra.mxu0 0
        %1429 = vmatpush.bf16.msra.mxu0 0
        %1430 = vmatpush.bf16.msra.mxu0 %v1418
        %1431 = vmatmul.bf16.gmra.mxu0 %v1421
        %v1432 = vpop.f32.mrf.mxu0
        %v1433 = vadd.f32 0.0, %v1432
        %v1434 = vpop.f32.mrf.mxu0
        %v1435 = vadd.f32 0.0, %v1434
        %1436 = vdwg.mxu0
        %v1439 = vunpack.c.l.b16 %v1409
        %v1440 = vunpack.c.l.b16 %v1410
        %v1441 = vpack.c.b16 %v1440, %v1439
        %v1442 = vunpack.c.l.b16 %v1291
        %v1443 = vunpack.c.l.b16 %v1292
        %v1444 = vpack.c.b16 %v1443, %v1442
        %v1447 = vsel %vm1362, %v1441, 0
        %1449 = vmatpush.bf16.msra.mxu0 0
        %1450 = vmatpush.bf16.msra.mxu0 0
        %1451 = vmatpush.bf16.msra.mxu0 0
        %1452 = vmatpush.bf16.msra.mxu0 0
        %1453 = vmatpush.bf16.msra.mxu0 0
        %1454 = vmatpush.bf16.msra.mxu0 0
        %1455 = vmatpush.bf16.msra.mxu0 0
        %1456 = vmatpush.bf16.msra.mxu0 %v1444
        %1457 = vmatmul.bf16.gmra.mxu0 %v1447
        %v1458 = vpop.f32.mrf.mxu0
        %v1459 = vadd.f32 0.0, %v1458
        %v1460 = vpop.f32.mrf.mxu0
        %v1461 = vadd.f32 0.0, %v1460
        %1462 = vdwg.mxu0
        %v1463 = vpack.c.bf16 %v1433, %v1433
        %v1464 = vpack.c.bf16 %v1435, %v1435
        %v1465 = vpack.c.bf16 %v1459, %v1459
        %v1466 = vpack.c.bf16 %v1461, %v1461
        %1467 = vrot.lane.b32.xlu0 %v1281, 96
        %v1468 = vpop.permute.xlu0 %1467
        %1469 = vrot.lane.b32.xlu0 %v1282, 96
        %v1470 = vpop.permute.xlu0 %1469
        %1471 = vrot.lane.b32.xlu0 %v1283, 96
        %v1472 = vpop.permute.xlu0 %1471
        %1473 = vrot.lane.b32.xlu0 %v1284, 96
        %v1474 = vpop.permute.xlu0 %1473
        %v1475 = vrot.slane %v1468, 4
        %v1476 = vrot.slane %v1470, 4
        %v1477 = vrot.slane %v1472, 4
        %v1478 = vrot.slane %v1474, 4
        %1479 = vrot.lane.b32.xlu0 %v1297, 96
        %v1480 = vpop.permute.xlu0 %1479
        %1481 = vrot.lane.b32.xlu0 %v1300, 96
        %v1482 = vpop.permute.xlu0 %1481
        %v1484 = vsel %vm1301, %v1480, 0
        %v1487 = vsel %vm1301, %v1482, 0
        %1489 = vmatpush.bf16.xpose.msra.mxu0 0
        %1490 = vmatpush.bf16.xpose.msra.mxu0 0
        %1491 = vmatpush.bf16.xpose.msra.mxu0 0
        %1492 = vmatpush.bf16.xpose.msra.mxu0 0
        %1493 = vmatpush.bf16.xpose.msra.mxu0 0
        %1494 = vmatpush.bf16.xpose.msra.mxu0 0
        %1495 = vmatpush.bf16.xpose.msra.mxu0 0
        %1496 = vmatpush.bf16.xpose.msra.mxu0 %v1487
        %1497 = vmatmul.bf16.gmra.mxu0 %v1484
        %v1498 = vpop.f32.mrf.mxu0
        %v1499 = vadd.f32 0.0, %v1498
        %v1500 = vpop.f32.mrf.mxu0
        %v1501 = vadd.f32 0.0, %v1500
        %1502 = vdwg.mxu0
        %1503 = vrot.lane.b32.xlu0 %v1326, 96
        %v1504 = vpop.permute.xlu0 %1503
        %1505 = vrot.lane.b32.xlu0 %v1329, 96
        %v1506 = vpop.permute.xlu0 %1505
        %v1508 = vsel %vm1301, %v1504, 0
        %v1511 = vsel %vm1301, %v1506, 0
        %1513 = vmatpush.bf16.xpose.msra.mxu0 0
        %1514 = vmatpush.bf16.xpose.msra.mxu0 0
        %1515 = vmatpush.bf16.xpose.msra.mxu0 0
        %1516 = vmatpush.bf16.xpose.msra.mxu0 0
        %1517 = vmatpush.bf16.xpose.msra.mxu0 0
        %1518 = vmatpush.bf16.xpose.msra.mxu0 0
        %1519 = vmatpush.bf16.xpose.msra.mxu0 0
        %1520 = vmatpush.bf16.xpose.msra.mxu0 %v1511
        %1521 = vmatmul.bf16.gmra.mxu0 %v1508
        %v1522 = vpop.f32.mrf.mxu0
        %v1523 = vadd.f32 0.0, %v1522
        %v1524 = vpop.f32.mrf.mxu0
        %v1525 = vadd.f32 0.0, %v1524
        %1526 = vdwg.mxu0
        %v1527 = vmul.f32 %v1499, 0.17677669
        %v1528 = vmul.f32 %v1501, 0.17677669
        %v1529 = vmul.f32 %v1523, 0.17677669
        %v1530 = vmul.f32 %v1525, 0.17677669
        %v1531 = vsel %vm1356, %v1527, -1e+09
        %v1532 = vsel %vm1357, %v1528, -1e+09
        %v1533 = vsel %vm1356, %v1529, -1e+09
        %v1534 = vsel %vm1357, %v1530, -1e+09
        %v1535 = vsel %vm1362, %v1531, -inf
        %1536 = vmax.xlane.f32.xlu0 %v1535
        %v1537 = vpop.xlane.xlu0 %1536
        %v1538 = vsel %vm1362, %v1532, -inf
        %1539 = vmax.xlane.f32.xlu0 %v1538
        %v1540 = vpop.xlane.xlu0 %1539
        %v1541 = vsel %vm1362, %v1533, -inf
        %1542 = vmax.xlane.f32.xlu0 %v1541
        %v1543 = vpop.xlane.xlu0 %1542
        %v1544 = vsel %vm1362, %v1534, -inf
        %1545 = vmax.xlane.f32.xlu0 %v1544
        %v1546 = vpop.xlane.xlu0 %1545
        %v1547 = vsub.f32 %v1531, %v1537
        %v1548 = vsub.f32 %v1532, %v1540
        %v1549 = vsub.f32 %v1533, %v1543
        %v1550 = vsub.f32 %v1534, %v1546
        %v1551 = vmul.f32 %v1547, 1.442695
        %v1552 = vpow.pop %v1551
        %v1553 = vmul.f32 %v1548, 1.442695
        %v1554 = vpow.pop %v1553
        %v1555 = vmul.f32 %v1549, 1.442695
        %v1556 = vpow.pop %v1555
        %v1557 = vmul.f32 %v1550, 1.442695
        %v1558 = vpow.pop %v1557
        %v1559 = vsel %vm1362, %v1552, 0.0
        %1560 = vadd.xlane.f32.xlu0 %v1559
        %v1561 = vpop.xlane.xlu0 %1560
        %v1562 = vsel %vm1362, %v1554, 0.0
        %1563 = vadd.xlane.f32.xlu0 %v1562
        %v1564 = vpop.xlane.xlu0 %1563
        %v1565 = vsel %vm1362, %v1556, 0.0
        %1566 = vadd.xlane.f32.xlu0 %v1565
        %v1567 = vpop.xlane.xlu0 %1566
        %v1568 = vsel %vm1362, %v1558, 0.0
        %1569 = vadd.xlane.f32.xlu0 %v1568
        %v1570 = vpop.xlane.xlu0 %1569
        %v1571 = vrcp.pop %v1561
        %v1572 = vrcp.pop %v1564
        %v1573 = vrcp.pop %v1567
        %v1574 = vrcp.pop %v1570
        %v1575 = vmul.f32 %v1552, %v1571
        %v1576 = vmul.f32 %v1554, %v1572
        %v1577 = vmul.f32 %v1556, %v1573
        %v1578 = vmul.f32 %v1558, %v1574
        %v1579 = vpack.c.bf16 %v1575, %v1575
        %v1580 = vpack.c.bf16 %v1576, %v1576
        %v1581 = vpack.c.bf16 %v1577, %v1577
        %v1582 = vpack.c.bf16 %v1578, %v1578
        %v1585 = vunpack.c.l.b16 %v1579
        %v1586 = vunpack.c.l.b16 %v1580
        %v1587 = vpack.c.b16 %v1586, %v1585
        %v1588 = vunpack.c.l.b16 %v1475
        %v1589 = vunpack.c.l.b16 %v1476
        %v1590 = vpack.c.b16 %v1589, %v1588
        %v1593 = vsel %vm1362, %v1587, 0
        %1595 = vmatpush.bf16.msra.mxu0 0
        %1596 = vmatpush.bf16.msra.mxu0 0
        %1597 = vmatpush.bf16.msra.mxu0 0
        %1598 = vmatpush.bf16.msra.mxu0 0
        %1599 = vmatpush.bf16.msra.mxu0 0
        %1600 = vmatpush.bf16.msra.mxu0 0
        %1601 = vmatpush.bf16.msra.mxu0 0
        %1602 = vmatpush.bf16.msra.mxu0 %v1590
        %1603 = vmatmul.bf16.gmra.mxu0 %v1593
        %v1604 = vpop.f32.mrf.mxu0
        %v1605 = vadd.f32 0.0, %v1604
        %v1606 = vpop.f32.mrf.mxu0
        %v1607 = vadd.f32 0.0, %v1606
        %1608 = vdwg.mxu0
        %v1611 = vunpack.c.l.b16 %v1581
        %v1612 = vunpack.c.l.b16 %v1582
        %v1613 = vpack.c.b16 %v1612, %v1611
        %v1614 = vunpack.c.l.b16 %v1477
        %v1615 = vunpack.c.l.b16 %v1478
        %v1616 = vpack.c.b16 %v1615, %v1614
        %v1619 = vsel %vm1362, %v1613, 0
        %1621 = vmatpush.bf16.msra.mxu0 0
        %1622 = vmatpush.bf16.msra.mxu0 0
        %1623 = vmatpush.bf16.msra.mxu0 0
        %1624 = vmatpush.bf16.msra.mxu0 0
        %1625 = vmatpush.bf16.msra.mxu0 0
        %1626 = vmatpush.bf16.msra.mxu0 0
        %1627 = vmatpush.bf16.msra.mxu0 0
        %1628 = vmatpush.bf16.msra.mxu0 %v1616
        %1629 = vmatmul.bf16.gmra.mxu0 %v1619
        %v1630 = vpop.f32.mrf.mxu0
        %v1631 = vadd.f32 0.0, %v1630
        %v1632 = vpop.f32.mrf.mxu0
        %v1633 = vadd.f32 0.0, %v1632
        %1634 = vdwg.mxu0
        %v1635 = vpack.c.bf16 %v1605, %v1605
        %v1636 = vpack.c.bf16 %v1607, %v1607
        %v1637 = vpack.c.bf16 %v1631, %v1631
        %v1638 = vpack.c.bf16 %v1633, %v1633
        %1639 = vrot.lane.b32.xlu0 %v1281, 64
        %v1640 = vpop.permute.xlu0 %1639
        %1641 = vrot.lane.b32.xlu0 %v1282, 64
        %v1642 = vpop.permute.xlu0 %1641
        %1643 = vrot.lane.b32.xlu0 %v1283, 64
        %v1644 = vpop.permute.xlu0 %1643
        %1645 = vrot.lane.b32.xlu0 %v1284, 64
        %v1646 = vpop.permute.xlu0 %1645
        %v1647 = vrot.slane %v1640, 4
        %v1648 = vrot.slane %v1642, 4
        %v1649 = vrot.slane %v1644, 4
        %v1650 = vrot.slane %v1646, 4
        %1651 = vrot.lane.b32.xlu0 %v1297, 64
        %v1652 = vpop.permute.xlu0 %1651
        %1653 = vrot.lane.b32.xlu0 %v1300, 64
        %v1654 = vpop.permute.xlu0 %1653
        %v1656 = vsel %vm1301, %v1652, 0
        %v1659 = vsel %vm1301, %v1654, 0
        %1661 = vmatpush.bf16.xpose.msra.mxu0 0
        %1662 = vmatpush.bf16.xpose.msra.mxu0 0
        %1663 = vmatpush.bf16.xpose.msra.mxu0 0
        %1664 = vmatpush.bf16.xpose.msra.mxu0 0
        %1665 = vmatpush.bf16.xpose.msra.mxu0 0
        %1666 = vmatpush.bf16.xpose.msra.mxu0 0
        %1667 = vmatpush.bf16.xpose.msra.mxu0 0
        %1668 = vmatpush.bf16.xpose.msra.mxu0 %v1659
        %1669 = vmatmul.bf16.gmra.mxu0 %v1656
        %v1670 = vpop.f32.mrf.mxu0
        %v1671 = vadd.f32 0.0, %v1670
        %v1672 = vpop.f32.mrf.mxu0
        %v1673 = vadd.f32 0.0, %v1672
        %1674 = vdwg.mxu0
        %1675 = vrot.lane.b32.xlu0 %v1326, 64
        %v1676 = vpop.permute.xlu0 %1675
        %1677 = vrot.lane.b32.xlu0 %v1329, 64
        %v1678 = vpop.permute.xlu0 %1677
        %v1680 = vsel %vm1301, %v1676, 0
        %v1683 = vsel %vm1301, %v1678, 0
        %1685 = vmatpush.bf16.xpose.msra.mxu0 0
        %1686 = vmatpush.bf16.xpose.msra.mxu0 0
        %1687 = vmatpush.bf16.xpose.msra.mxu0 0
        %1688 = vmatpush.bf16.xpose.msra.mxu0 0
        %1689 = vmatpush.bf16.xpose.msra.mxu0 0
        %1690 = vmatpush.bf16.xpose.msra.mxu0 0
        %1691 = vmatpush.bf16.xpose.msra.mxu0 0
        %1692 = vmatpush.bf16.xpose.msra.mxu0 %v1683
        %1693 = vmatmul.bf16.gmra.mxu0 %v1680
        %v1694 = vpop.f32.mrf.mxu0
        %v1695 = vadd.f32 0.0, %v1694
        %v1696 = vpop.f32.mrf.mxu0
        %v1697 = vadd.f32 0.0, %v1696
        %1698 = vdwg.mxu0
        %v1699 = vmul.f32 %v1671, 0.17677669
        %v1700 = vmul.f32 %v1673, 0.17677669
        %v1701 = vmul.f32 %v1695, 0.17677669
        %v1702 = vmul.f32 %v1697, 0.17677669
        %v1703 = vsel %vm1356, %v1699, -1e+09
        %v1704 = vsel %vm1357, %v1700, -1e+09
        %v1705 = vsel %vm1356, %v1701, -1e+09
        %v1706 = vsel %vm1357, %v1702, -1e+09
        %v1707 = vsel %vm1362, %v1703, -inf
        %1708 = vmax.xlane.f32.xlu0 %v1707
        %v1709 = vpop.xlane.xlu0 %1708
        %v1710 = vsel %vm1362, %v1704, -inf
        %1711 = vmax.xlane.f32.xlu0 %v1710
        %v1712 = vpop.xlane.xlu0 %1711
        %v1713 = vsel %vm1362, %v1705, -inf
        %1714 = vmax.xlane.f32.xlu0 %v1713
        %v1715 = vpop.xlane.xlu0 %1714
        %v1716 = vsel %vm1362, %v1706, -inf
        %1717 = vmax.xlane.f32.xlu0 %v1716
        %v1718 = vpop.xlane.xlu0 %1717
        %v1719 = vsub.f32 %v1703, %v1709
        %v1720 = vsub.f32 %v1704, %v1712
        %v1721 = vsub.f32 %v1705, %v1715
        %v1722 = vsub.f32 %v1706, %v1718
        %v1723 = vmul.f32 %v1719, 1.442695
        %v1724 = vpow.pop %v1723
        %v1725 = vmul.f32 %v1720, 1.442695
        %v1726 = vpow.pop %v1725
        %v1727 = vmul.f32 %v1721, 1.442695
        %v1728 = vpow.pop %v1727
        %v1729 = vmul.f32 %v1722, 1.442695
        %v1730 = vpow.pop %v1729
        %v1731 = vsel %vm1362, %v1724, 0.0
        %1732 = vadd.xlane.f32.xlu0 %v1731
        %v1733 = vpop.xlane.xlu0 %1732
        %v1734 = vsel %vm1362, %v1726, 0.0
        %1735 = vadd.xlane.f32.xlu0 %v1734
        %v1736 = vpop.xlane.xlu0 %1735
        %v1737 = vsel %vm1362, %v1728, 0.0
        %1738 = vadd.xlane.f32.xlu0 %v1737
        %v1739 = vpop.xlane.xlu0 %1738
        %v1740 = vsel %vm1362, %v1730, 0.0
        %1741 = vadd.xlane.f32.xlu0 %v1740
        %v1742 = vpop.xlane.xlu0 %1741
        %v1743 = vrcp.pop %v1733
        %v1744 = vrcp.pop %v1736
        %v1745 = vrcp.pop %v1739
        %v1746 = vrcp.pop %v1742
        %v1747 = vmul.f32 %v1724, %v1743
        %v1748 = vmul.f32 %v1726, %v1744
        %v1749 = vmul.f32 %v1728, %v1745
        %v1750 = vmul.f32 %v1730, %v1746
        %v1751 = vpack.c.bf16 %v1747, %v1747
        %v1752 = vpack.c.bf16 %v1748, %v1748
        %v1753 = vpack.c.bf16 %v1749, %v1749
        %v1754 = vpack.c.bf16 %v1750, %v1750
        %v1757 = vunpack.c.l.b16 %v1751
        %v1758 = vunpack.c.l.b16 %v1752
        %v1759 = vpack.c.b16 %v1758, %v1757
        %v1760 = vunpack.c.l.b16 %v1647
        %v1761 = vunpack.c.l.b16 %v1648
        %v1762 = vpack.c.b16 %v1761, %v1760
        %v1765 = vsel %vm1362, %v1759, 0
        %1767 = vmatpush.bf16.msra.mxu0 0
        %1768 = vmatpush.bf16.msra.mxu0 0
        %1769 = vmatpush.bf16.msra.mxu0 0
        %1770 = vmatpush.bf16.msra.mxu0 0
        %1771 = vmatpush.bf16.msra.mxu0 0
        %1772 = vmatpush.bf16.msra.mxu0 0
        %1773 = vmatpush.bf16.msra.mxu0 0
        %1774 = vmatpush.bf16.msra.mxu0 %v1762
        %1775 = vmatmul.bf16.gmra.mxu0 %v1765
        %v1776 = vpop.f32.mrf.mxu0
        %v1777 = vadd.f32 0.0, %v1776
        %v1778 = vpop.f32.mrf.mxu0
        %v1779 = vadd.f32 0.0, %v1778
        %1780 = vdwg.mxu0
        %v1783 = vunpack.c.l.b16 %v1753
        %v1784 = vunpack.c.l.b16 %v1754
        %v1785 = vpack.c.b16 %v1784, %v1783
        %v1786 = vunpack.c.l.b16 %v1649
        %v1787 = vunpack.c.l.b16 %v1650
        %v1788 = vpack.c.b16 %v1787, %v1786
        %v1791 = vsel %vm1362, %v1785, 0
        %1793 = vmatpush.bf16.msra.mxu0 0
        %1794 = vmatpush.bf16.msra.mxu0 0
        %1795 = vmatpush.bf16.msra.mxu0 0
        %1796 = vmatpush.bf16.msra.mxu0 0
        %1797 = vmatpush.bf16.msra.mxu0 0
        %1798 = vmatpush.bf16.msra.mxu0 0
        %1799 = vmatpush.bf16.msra.mxu0 0
        %1800 = vmatpush.bf16.msra.mxu0 %v1788
        %1801 = vmatmul.bf16.gmra.mxu0 %v1791
        %v1802 = vpop.f32.mrf.mxu0
        %v1803 = vadd.f32 0.0, %v1802
        %v1804 = vpop.f32.mrf.mxu0
        %v1805 = vadd.f32 0.0, %v1804
        %1806 = vdwg.mxu0
        %v1807 = vpack.c.bf16 %v1777, %v1777
        %v1808 = vpack.c.bf16 %v1779, %v1779
        %v1809 = vpack.c.bf16 %v1803, %v1803
        %v1810 = vpack.c.bf16 %v1805, %v1805
        %1811 = vrot.lane.b32.xlu0 %v1281, 32
        %v1812 = vpop.permute.xlu0 %1811
        %1813 = vrot.lane.b32.xlu0 %v1282, 32
        %v1814 = vpop.permute.xlu0 %1813
        %1815 = vrot.lane.b32.xlu0 %v1283, 32
        %v1816 = vpop.permute.xlu0 %1815
        %1817 = vrot.lane.b32.xlu0 %v1284, 32
        %v1818 = vpop.permute.xlu0 %1817
        %v1819 = vrot.slane %v1812, 4
        %v1820 = vrot.slane %v1814, 4
        %v1821 = vrot.slane %v1816, 4
        %v1822 = vrot.slane %v1818, 4
        %1823 = vrot.lane.b32.xlu0 %v1297, 32
        %v1824 = vpop.permute.xlu0 %1823
        %1825 = vrot.lane.b32.xlu0 %v1300, 32
        %v1826 = vpop.permute.xlu0 %1825
        %v1828 = vsel %vm1301, %v1824, 0
        %v1831 = vsel %vm1301, %v1826, 0
        %1833 = vmatpush.bf16.xpose.msra.mxu0 0
        %1834 = vmatpush.bf16.xpose.msra.mxu0 0
        %1835 = vmatpush.bf16.xpose.msra.mxu0 0
        %1836 = vmatpush.bf16.xpose.msra.mxu0 0
        %1837 = vmatpush.bf16.xpose.msra.mxu0 0
        %1838 = vmatpush.bf16.xpose.msra.mxu0 0
        %1839 = vmatpush.bf16.xpose.msra.mxu0 0
        %1840 = vmatpush.bf16.xpose.msra.mxu0 %v1831
        %1841 = vmatmul.bf16.gmra.mxu0 %v1828
        %v1842 = vpop.f32.mrf.mxu0
        %v1843 = vadd.f32 0.0, %v1842
        %v1844 = vpop.f32.mrf.mxu0
        %v1845 = vadd.f32 0.0, %v1844
        %1846 = vdwg.mxu0
        %1847 = vrot.lane.b32.xlu0 %v1326, 32
        %v1848 = vpop.permute.xlu0 %1847
        %1849 = vrot.lane.b32.xlu0 %v1329, 32
        %v1850 = vpop.permute.xlu0 %1849
        %v1852 = vsel %vm1301, %v1848, 0
        %v1855 = vsel %vm1301, %v1850, 0
        %1857 = vmatpush.bf16.xpose.msra.mxu0 0
        %1858 = vmatpush.bf16.xpose.msra.mxu0 0
        %1859 = vmatpush.bf16.xpose.msra.mxu0 0
        %1860 = vmatpush.bf16.xpose.msra.mxu0 0
        %1861 = vmatpush.bf16.xpose.msra.mxu0 0
        %1862 = vmatpush.bf16.xpose.msra.mxu0 0
        %1863 = vmatpush.bf16.xpose.msra.mxu0 0
        %1864 = vmatpush.bf16.xpose.msra.mxu0 %v1855
        %1865 = vmatmul.bf16.gmra.mxu0 %v1852
        %v1866 = vpop.f32.mrf.mxu0
        %v1867 = vadd.f32 0.0, %v1866
        %v1868 = vpop.f32.mrf.mxu0
        %v1869 = vadd.f32 0.0, %v1868
        %1870 = vdwg.mxu0
        %v1871 = vmul.f32 %v1843, 0.17677669
        %v1872 = vmul.f32 %v1845, 0.17677669
        %v1873 = vmul.f32 %v1867, 0.17677669
        %v1874 = vmul.f32 %v1869, 0.17677669
        %v1875 = vsel %vm1356, %v1871, -1e+09
        %v1876 = vsel %vm1357, %v1872, -1e+09
        %v1877 = vsel %vm1356, %v1873, -1e+09
        %v1878 = vsel %vm1357, %v1874, -1e+09
        %v1879 = vsel %vm1362, %v1875, -inf
        %1880 = vmax.xlane.f32.xlu0 %v1879
        %v1881 = vpop.xlane.xlu0 %1880
        %v1882 = vsel %vm1362, %v1876, -inf
        %1883 = vmax.xlane.f32.xlu0 %v1882
        %v1884 = vpop.xlane.xlu0 %1883
        %v1885 = vsel %vm1362, %v1877, -inf
        %1886 = vmax.xlane.f32.xlu0 %v1885
        %v1887 = vpop.xlane.xlu0 %1886
        %v1888 = vsel %vm1362, %v1878, -inf
        %1889 = vmax.xlane.f32.xlu0 %v1888
        %v1890 = vpop.xlane.xlu0 %1889
        %v1891 = vsub.f32 %v1875, %v1881
        %v1892 = vsub.f32 %v1876, %v1884
        %v1893 = vsub.f32 %v1877, %v1887
        %v1894 = vsub.f32 %v1878, %v1890
        %v1895 = vmul.f32 %v1891, 1.442695
        %v1896 = vpow.pop %v1895
        %v1897 = vmul.f32 %v1892, 1.442695
        %v1898 = vpow.pop %v1897
        %v1899 = vmul.f32 %v1893, 1.442695
        %v1900 = vpow.pop %v1899
        %v1901 = vmul.f32 %v1894, 1.442695
        %v1902 = vpow.pop %v1901
        %v1903 = vsel %vm1362, %v1896, 0.0
        %1904 = vadd.xlane.f32.xlu0 %v1903
        %v1905 = vpop.xlane.xlu0 %1904
        %v1906 = vsel %vm1362, %v1898, 0.0
        %1907 = vadd.xlane.f32.xlu0 %v1906
        %v1908 = vpop.xlane.xlu0 %1907
        %v1909 = vsel %vm1362, %v1900, 0.0
        %1910 = vadd.xlane.f32.xlu0 %v1909
        %v1911 = vpop.xlane.xlu0 %1910
        %v1912 = vsel %vm1362, %v1902, 0.0
        %1913 = vadd.xlane.f32.xlu0 %v1912
        %v1914 = vpop.xlane.xlu0 %1913
        %v1915 = vrcp.pop %v1905
        %v1916 = vrcp.pop %v1908
        %v1917 = vrcp.pop %v1911
        %v1918 = vrcp.pop %v1914
        %v1919 = vmul.f32 %v1896, %v1915
        %v1920 = vmul.f32 %v1898, %v1916
        %v1921 = vmul.f32 %v1900, %v1917
        %v1922 = vmul.f32 %v1902, %v1918
        %v1923 = vpack.c.bf16 %v1919, %v1919
        %v1924 = vpack.c.bf16 %v1920, %v1920
        %v1925 = vpack.c.bf16 %v1921, %v1921
        %v1926 = vpack.c.bf16 %v1922, %v1922
        %v1929 = vunpack.c.l.b16 %v1923
        %v1930 = vunpack.c.l.b16 %v1924
        %v1931 = vpack.c.b16 %v1930, %v1929
        %v1932 = vunpack.c.l.b16 %v1819
        %v1933 = vunpack.c.l.b16 %v1820
        %v1934 = vpack.c.b16 %v1933, %v1932
        %v1937 = vsel %vm1362, %v1931, 0
        %1939 = vmatpush.bf16.msra.mxu0 0
        %1940 = vmatpush.bf16.msra.mxu0 0
        %1941 = vmatpush.bf16.msra.mxu0 0
        %1942 = vmatpush.bf16.msra.mxu0 0
        %1943 = vmatpush.bf16.msra.mxu0 0
        %1944 = vmatpush.bf16.msra.mxu0 0
        %1945 = vmatpush.bf16.msra.mxu0 0
        %1946 = vmatpush.bf16.msra.mxu0 %v1934
        %1947 = vmatmul.bf16.gmra.mxu0 %v1937
        %v1948 = vpop.f32.mrf.mxu0
        %v1949 = vadd.f32 0.0, %v1948
        %v1950 = vpop.f32.mrf.mxu0
        %v1951 = vadd.f32 0.0, %v1950
        %1952 = vdwg.mxu0
        %v1955 = vunpack.c.l.b16 %v1925
        %v1956 = vunpack.c.l.b16 %v1926
        %v1957 = vpack.c.b16 %v1956, %v1955
        %v1958 = vunpack.c.l.b16 %v1821
        %v1959 = vunpack.c.l.b16 %v1822
        %v1960 = vpack.c.b16 %v1959, %v1958
        %v1963 = vsel %vm1362, %v1957, 0
        %1965 = vmatpush.bf16.msra.mxu0 0
        %1966 = vmatpush.bf16.msra.mxu0 0
        %1967 = vmatpush.bf16.msra.mxu0 0
        %1968 = vmatpush.bf16.msra.mxu0 0
        %1969 = vmatpush.bf16.msra.mxu0 0
        %1970 = vmatpush.bf16.msra.mxu0 0
        %1971 = vmatpush.bf16.msra.mxu0 0
        %1972 = vmatpush.bf16.msra.mxu0 %v1960
        %1973 = vmatmul.bf16.gmra.mxu0 %v1963
        %v1974 = vpop.f32.mrf.mxu0
        %v1975 = vadd.f32 0.0, %v1974
        %v1976 = vpop.f32.mrf.mxu0
        %v1977 = vadd.f32 0.0, %v1976
        %1978 = vdwg.mxu0
        %v1979 = vpack.c.bf16 %v1949, %v1949
        %v1980 = vpack.c.bf16 %v1951, %v1951
        %v1981 = vpack.c.bf16 %v1975, %v1975
        %v1982 = vpack.c.bf16 %v1977, %v1977
        %v1987 = vunpack.c.l.b16 %v1463
        %v1988 = vunpack.c.l.b16 %v1464
        %v1989 = vunpack.c.l.b16 %v1465
        %v1990 = vunpack.c.l.b16 %v1466
        %v1991 = vpack.c.b16 %v1988, %v1987
        %v1992 = vpack.c.b16 %v1990, %v1989
        %v1997 = vunpack.c.l.b16 %v1635
        %v1998 = vunpack.c.l.b16 %v1636
        %v1999 = vunpack.c.l.b16 %v1637
        %v2000 = vunpack.c.l.b16 %v1638
        %v2001 = vpack.c.b16 %v1998, %v1997
        %v2002 = vpack.c.b16 %v2000, %v1999
        %2003 = vrot.lane.b32.xlu0 %v2001, 32
        %v2004 = vpop.permute.xlu0 %2003
        %2005 = vrot.lane.b32.xlu0 %v2002, 32
        %v2006 = vpop.permute.xlu0 %2005
        %v2011 = vunpack.c.l.b16 %v1807
        %v2012 = vunpack.c.l.b16 %v1808
        %v2013 = vunpack.c.l.b16 %v1809
        %v2014 = vunpack.c.l.b16 %v1810
        %v2015 = vpack.c.b16 %v2012, %v2011
        %v2016 = vpack.c.b16 %v2014, %v2013
        %2017 = vrot.lane.b32.xlu0 %v2015, 64
        %v2018 = vpop.permute.xlu0 %2017
        %2019 = vrot.lane.b32.xlu0 %v2016, 64
        %v2020 = vpop.permute.xlu0 %2019
        %v2025 = vunpack.c.l.b16 %v1979
        %v2026 = vunpack.c.l.b16 %v1980
        %v2027 = vunpack.c.l.b16 %v1981
        %v2028 = vunpack.c.l.b16 %v1982
        %v2029 = vpack.c.b16 %v2026, %v2025
        %v2030 = vpack.c.b16 %v2028, %v2027
        %2031 = vrot.lane.b32.xlu0 %v2029, 96
        %v2032 = vpop.permute.xlu0 %2031
        %2033 = vrot.lane.b32.xlu0 %v2030, 96
        %v2034 = vpop.permute.xlu0 %2033
        %v2037 = vsel %vm1301, %v1991, %v2004
        %v2040 = vsel %vm1301, %v1992, %v2006
        %vm2041 = vcmask 523264
        %v2043 = vsel %vm2041, %v2037, %v2018
        %v2045 = vsel %vm2041, %v2040, %v2020
        %vm2046 = vcmask 785408
        %v2048 = vsel %vm2046, %v2043, %v2032
        %v2051 = vsel %vm2046, %v2045, %v2034
        %v2053 = vld [vmem:[#allocation13] sm:$0xf]
        %v2054 = vld [vmem:[#allocation13 + $0x4] sm:$0xf]
        %v2055 = vld [vmem:[#allocation13 + $0x8] sm:$0xf]
        %v2056 = vld [vmem:[#allocation13 + $0xc] sm:$0xf]
        %v2057 = vld [vmem:[#allocation13 + $0x10] sm:$0xf]
        %v2058 = vld [vmem:[#allocation13 + $0x14] sm:$0xf]
        %v2059 = vld [vmem:[#allocation13 + $0x18] sm:$0xf]
        %v2060 = vld [vmem:[#allocation13 + $0x1c] sm:$0xf]
        %v2061 = vld [vmem:[#allocation13 + $0x20] sm:$0xf]
        %v2062 = vld [vmem:[#allocation13 + $0x24] sm:$0xf]
        %v2063 = vld [vmem:[#allocation13 + $0x28] sm:$0xf]
        %v2064 = vld [vmem:[#allocation13 + $0x2c] sm:$0xf]
        %v2065 = vld [vmem:[#allocation13 + $0x30] sm:$0xf]
        %v2066 = vld [vmem:[#allocation13 + $0x34] sm:$0xf]
        %v2067 = vld [vmem:[#allocation13 + $0x38] sm:$0xf]
        %v2068 = vld [vmem:[#allocation13 + $0x3c] sm:$0xf]
        %v2069 = vld [vmem:[%s8] sm:$0x1]
        %v2071 = vperm.slane %v2069, 0
        %v2089 = vunpack.c.l.b16 %v2053
        %v2090 = vunpack.c.l.b16 %v2054
        %v2091 = vunpack.c.l.b16 %v2055
        %v2092 = vunpack.c.l.b16 %v2056
        %v2093 = vunpack.c.l.b16 %v2057
        %v2094 = vunpack.c.l.b16 %v2058
        %v2095 = vunpack.c.l.b16 %v2059
        %v2096 = vunpack.c.l.b16 %v2060
        %v2097 = vunpack.c.l.b16 %v2061
        %v2098 = vunpack.c.l.b16 %v2062
        %v2099 = vunpack.c.l.b16 %v2063
        %v2100 = vunpack.c.l.b16 %v2064
        %v2101 = vunpack.c.l.b16 %v2065
        %v2102 = vunpack.c.l.b16 %v2066
        %v2103 = vunpack.c.l.b16 %v2067
        %v2104 = vunpack.c.l.b16 %v2068
        %v2105 = vpack.c.b16 %v2090, %v2089
        %v2106 = vpack.c.b16 %v2092, %v2091
        %v2107 = vpack.c.b16 %v2094, %v2093
        %v2108 = vpack.c.b16 %v2096, %v2095
        %v2109 = vpack.c.b16 %v2098, %v2097
        %v2110 = vpack.c.b16 %v2100, %v2099
        %v2111 = vpack.c.b16 %v2102, %v2101
        %v2112 = vpack.c.b16 %v2104, %v2103
        %2121 = vmatpush.bf16.msra.mxu0 %v2112
        %2122 = vmatpush.bf16.msra.mxu0 %v2111
        %2123 = vmatpush.bf16.msra.mxu0 %v2110
        %2124 = vmatpush.bf16.msra.mxu0 %v2109
        %2125 = vmatpush.bf16.msra.mxu0 %v2108
        %2126 = vmatpush.bf16.msra.mxu0 %v2107
        %2127 = vmatpush.bf16.msra.mxu0 %v2106
        %2128 = vmatpush.bf16.msra.mxu0 %v2105
        %2129 = vmatmul.bf16.gmra.mxu0 %v2048
        %v2130 = vpop.f32.mrf.mxu0
        %v2131 = vadd.f32 %v2071, %v2130
        %v2132 = vpop.f32.mrf.mxu0
        %v2133 = vadd.f32 %v2071, %v2132
        %2134 = vmatmul.bf16.gmra.mxu0 %v2051
        %v2135 = vpop.f32.mrf.mxu0
        %v2136 = vadd.f32 %v2071, %v2135
        %v2137 = vpop.f32.mrf.mxu0
        %v2138 = vadd.f32 %v2071, %v2137
        %2139 = vdwg.mxu0
        %v2140 = vunpack.c.l.bf16 %v1019
        %v2141 = vunpack.c.l.bf16 %v1020
        %v2142 = vunpack.c.l.bf16 %v1021
        %v2143 = vunpack.c.l.bf16 %v1022
        %v2144 = vadd.f32 %v2140, %v2131
        %v2145 = vadd.f32 %v2141, %v2133
        %v2146 = vadd.f32 %v2142, %v2136
        %v2147 = vadd.f32 %v2143, %v2138
        %v2148 = vld [vmem:[%s9] sm:$0x1]
        %v2149 = vld [vmem:[%s10] sm:$0x1]
        %2150 = vadd.xlane.f32.xlu0 %v2144
        %v2151 = vpop.xlane.xlu0 %2150
        %2152 = vadd.xlane.f32.xlu0 %v2145
        %v2153 = vpop.xlane.xlu0 %2152
        %2154 = vadd.xlane.f32.xlu0 %v2146
        %v2155 = vpop.xlane.xlu0 %2154
        %2156 = vadd.xlane.f32.xlu0 %v2147
        %v2157 = vpop.xlane.xlu0 %2156
        %v2158 = vrcp.pop 128.0
        %v2159 = vmul.f32 128.0, %v2158
        %v2160 = vsub.f32 1.0, %v2159
        %v2161 = vmul.f32 %v2158, %v2160
        %v2162 = vadd.f32 %v2158, %v2161
        %vm2163 = vweird.f32 %v2158
        %v2164 = vsel %vm2163, %v2158, %v2162
        %v2165 = vmul.f32 %v2151, %v2164
        %v2166 = vmul.f32 %v2153, %v2164
        %v2167 = vmul.f32 %v2155, %v2164
        %v2168 = vmul.f32 %v2157, %v2164
        %v2169 = vsub.f32 %v2144, %v2165
        %v2170 = vsub.f32 %v2145, %v2166
        %v2171 = vsub.f32 %v2146, %v2167
        %v2172 = vsub.f32 %v2147, %v2168
        %v2173 = vmul.f32 %v2169, %v2169
        %v2174 = vmul.f32 %v2170, %v2170
        %v2175 = vmul.f32 %v2171, %v2171
        %v2176 = vmul.f32 %v2172, %v2172
        %2177 = vadd.xlane.f32.xlu0 %v2173
        %v2178 = vpop.xlane.xlu0 %2177
        %2179 = vadd.xlane.f32.xlu0 %v2174
        %v2180 = vpop.xlane.xlu0 %2179
        %2181 = vadd.xlane.f32.xlu0 %v2175
        %v2182 = vpop.xlane.xlu0 %2181
        %2183 = vadd.xlane.f32.xlu0 %v2176
        %v2184 = vpop.xlane.xlu0 %2183
        %v2185 = vmul.f32 %v2178, %v2164
        %v2186 = vmul.f32 %v2180, %v2164
        %v2187 = vmul.f32 %v2182, %v2164
        %v2188 = vmul.f32 %v2184, %v2164
        %v2189 = vadd.f32 %v2185, 1e-05
        %v2190 = vadd.f32 %v2186, 1e-05
        %v2191 = vadd.f32 %v2187, 1e-05
        %v2192 = vadd.f32 %v2188, 1e-05
        %v2193 = vrsqrt.pop %v2189
        %v2194 = vmul.f32 %v2193, %v2189
        %v2195 = vmul.f32 %v2194, %v2193
        %v2196 = vmul.f32 0.5, %v2195
        %v2197 = vsub.f32 1.5, %v2196
        %v2198 = vmul.f32 %v2193, %v2197
        %vm2199 = vweird.f32 %v2189
        %vm2200 = vweird.f32 %v2193
        %vm2201 = vmor %vm2199, %vm2200
        %v2202 = vsel %vm2201, %v2193, %v2198
        %v2203 = vrsqrt.pop %v2190
        %v2204 = vmul.f32 %v2203, %v2190
        %v2205 = vmul.f32 %v2204, %v2203
        %v2206 = vmul.f32 0.5, %v2205
        %v2207 = vsub.f32 1.5, %v2206
        %v2208 = vmul.f32 %v2203, %v2207
        %vm2209 = vweird.f32 %v2190
        %vm2210 = vweird.f32 %v2203
        %vm2211 = vmor %vm2209, %vm2210
        %v2212 = vsel %vm2211, %v2203, %v2208
        %v2213 = vrsqrt.pop %v2191
        %v2214 = vmul.f32 %v2213, %v2191
        %v2215 = vmul.f32 %v2214, %v2213
        %v2216 = vmul.f32 0.5, %v2215
        %v2217 = vsub.f32 1.5, %v2216
        %v2218 = vmul.f32 %v2213, %v2217
        %vm2219 = vweird.f32 %v2191
        %vm2220 = vweird.f32 %v2213
        %vm2221 = vmor %vm2219, %vm2220
        %v2222 = vsel %vm2221, %v2213, %v2218
        %v2223 = vrsqrt.pop %v2192
        %v2224 = vmul.f32 %v2223, %v2192
        %v2225 = vmul.f32 %v2224, %v2223
        %v2226 = vmul.f32 0.5, %v2225
        %v2227 = vsub.f32 1.5, %v2226
        %v2228 = vmul.f32 %v2223, %v2227
        %vm2229 = vweird.f32 %v2192
        %vm2230 = vweird.f32 %v2223
        %vm2231 = vmor %vm2229, %vm2230
        %v2232 = vsel %vm2231, %v2223, %v2228
        %v2233 = vmul.f32 %v2169, %v2202
        %v2234 = vmul.f32 %v2170, %v2212
        %v2235 = vmul.f32 %v2171, %v2222
        %v2236 = vmul.f32 %v2172, %v2232
        %v2238 = vperm.slane %v2148, 0
        %v2240 = vmul.f32 %v2233, %v2238
        %v2241 = vmul.f32 %v2234, %v2238
        %v2242 = vmul.f32 %v2235, %v2238
        %v2243 = vmul.f32 %v2236, %v2238
        %v2245 = vperm.slane %v2149, 0
        %v2247 = vadd.f32 %v2240, %v2245
        %v2248 = vadd.f32 %v2241, %v2245
        %v2249 = vadd.f32 %v2242, %v2245
        %v2250 = vadd.f32 %v2243, %v2245
        %v2251 = vpack.c.bf16 %v2248, %v2247
        %v2252 = vpack.c.bf16 %v2250, %v2249
        %v2253 = vld [vmem:[#allocation14] sm:$0xf]
        %v2254 = vld [vmem:[#allocation14 + $0x4] sm:$0xf]
        %v2255 = vld [vmem:[#allocation14 + $0x8] sm:$0xf]
        %v2256 = vld [vmem:[#allocation14 + $0xc] sm:$0xf]
        %v2257 = vld [vmem:[#allocation14 + $0x10] sm:$0xf]
        %v2258 = vld [vmem:[#allocation14 + $0x14] sm:$0xf]
        %v2259 = vld [vmem:[#allocation14 + $0x18] sm:$0xf]
        %v2260 = vld [vmem:[#allocation14 + $0x1c] sm:$0xf]
        %v2261 = vld [vmem:[#allocation14 + $0x20] sm:$0xf]
        %v2262 = vld [vmem:[#allocation14 + $0x24] sm:$0xf]
        %v2263 = vld [vmem:[#allocation14 + $0x28] sm:$0xf]
        %v2264 = vld [vmem:[#allocation14 + $0x2c] sm:$0xf]
        %v2265 = vld [vmem:[#allocation14 + $0x30] sm:$0xf]
        %v2266 = vld [vmem:[#allocation14 + $0x34] sm:$0xf]
        %v2267 = vld [vmem:[#allocation14 + $0x38] sm:$0xf]
        %v2268 = vld [vmem:[#allocation14 + $0x3c] sm:$0xf]
        %v2269 = vld [vmem:[%s12] sm:$0x1]
        %v2271 = vperm.slane %v2269, 0
        %v2289 = vunpack.c.l.b16 %v2253
        %v2290 = vunpack.c.l.b16 %v2254
        %v2291 = vunpack.c.l.b16 %v2255
        %v2292 = vunpack.c.l.b16 %v2256
        %v2293 = vunpack.c.l.b16 %v2257
        %v2294 = vunpack.c.l.b16 %v2258
        %v2295 = vunpack.c.l.b16 %v2259
        %v2296 = vunpack.c.l.b16 %v2260
        %v2297 = vunpack.c.l.b16 %v2261
        %v2298 = vunpack.c.l.b16 %v2262
        %v2299 = vunpack.c.l.b16 %v2263
        %v2300 = vunpack.c.l.b16 %v2264
        %v2301 = vunpack.c.l.b16 %v2265
        %v2302 = vunpack.c.l.b16 %v2266
        %v2303 = vunpack.c.l.b16 %v2267
        %v2304 = vunpack.c.l.b16 %v2268
        %v2305 = vpack.c.b16 %v2290, %v2289
        %v2306 = vpack.c.b16 %v2292, %v2291
        %v2307 = vpack.c.b16 %v2294, %v2293
        %v2308 = vpack.c.b16 %v2296, %v2295
        %v2309 = vpack.c.b16 %v2298, %v2297
        %v2310 = vpack.c.b16 %v2300, %v2299
        %v2311 = vpack.c.b16 %v2302, %v2301
        %v2312 = vpack.c.b16 %v2304, %v2303
        %2321 = vmatpush.bf16.msra.mxu0 %v2312
        %2322 = vmatpush.bf16.msra.mxu0 %v2311
        %2323 = vmatpush.bf16.msra.mxu0 %v2310
        %2324 = vmatpush.bf16.msra.mxu0 %v2309
        %2325 = vmatpush.bf16.msra.mxu0 %v2308
        %2326 = vmatpush.bf16.msra.mxu0 %v2307
        %2327 = vmatpush.bf16.msra.mxu0 %v2306
        %2328 = vmatpush.bf16.msra.mxu0 %v2305
        %2329 = vmatmul.bf16.gmra.mxu0 %v2251
        %v2330 = vpop.f32.mrf.mxu0
        %v2331 = vadd.f32 %v2271, %v2330
        %v2332 = vpop.f32.mrf.mxu0
        %v2333 = vadd.f32 %v2271, %v2332
        %2334 = vmatmul.bf16.gmra.mxu0 %v2252
        %v2335 = vpop.f32.mrf.mxu0
        %v2336 = vadd.f32 %v2271, %v2335
        %v2337 = vpop.f32.mrf.mxu0
        %v2338 = vadd.f32 %v2271, %v2337
        %2339 = vdwg.mxu0
        %v2340 = vpack.c.bf16 %v2331, %v2331
        %v2341 = vpack.c.bf16 %v2333, %v2333
        %v2342 = vpack.c.bf16 %v2336, %v2336
        %v2343 = vpack.c.bf16 %v2338, %v2338
        %v2344 = vld [vmem:[#allocation16] sm:$0xff]
        %v2345 = vld [vmem:[#allocation16 + $0x8] sm:$0xff]
        %v2346 = vld [vmem:[#allocation16 + $0x10] sm:$0xff]
        %v2347 = vld [vmem:[#allocation16 + $0x18] sm:$0xff]
        %v2348 = vld [vmem:[#allocation16 + $0x20] sm:$0xff]
        %v2349 = vld [vmem:[#allocation16 + $0x28] sm:$0xff]
        %v2350 = vld [vmem:[#allocation16 + $0x30] sm:$0xff]
        %v2351 = vld [vmem:[#allocation16 + $0x38] sm:$0xff]
        %v2352 = vld [vmem:[#allocation16 + $0x40] sm:$0xff]
        %v2353 = vld [vmem:[#allocation16 + $0x48] sm:$0xff]
        %v2354 = vld [vmem:[#allocation16 + $0x50] sm:$0xff]
        %v2355 = vld [vmem:[#allocation16 + $0x58] sm:$0xff]
        %v2356 = vld [vmem:[#allocation16 + $0x60] sm:$0xff]
        %v2357 = vld [vmem:[#allocation16 + $0x68] sm:$0xff]
        %v2358 = vld [vmem:[#allocation16 + $0x70] sm:$0xff]
        %v2359 = vld [vmem:[#allocation16 + $0x78] sm:$0xff]
        %v2360 = vld [vmem:[%s14] sm:$0x3]
        %v2362 = vperm.slane %v2360, 0
        %v2363 = vperm.slane %v2360, 1
        %v2370 = vunpack.c.l.b16 %v1023
        %v2371 = vunpack.c.l.b16 %v1024
        %v2372 = vunpack.c.l.b16 %v1025
        %v2373 = vunpack.c.l.b16 %v1026
        %v2374 = vpack.c.b16 %v2371, %v2370
        %v2375 = vpack.c.b16 %v2373, %v2372
        %v2394 = vunpack.c.l.b16 %v2344
        %v2395 = vunpack.c.h.b16 %v2344
        %v2396 = vunpack.c.l.b16 %v2345
        %v2397 = vunpack.c.h.b16 %v2345
        %v2398 = vunpack.c.l.b16 %v2346
        %v2399 = vunpack.c.h.b16 %v2346
        %v2400 = vunpack.c.l.b16 %v2347
        %v2401 = vunpack.c.h.b16 %v2347
        %v2402 = vunpack.c.l.b16 %v2348
        %v2403 = vunpack.c.h.b16 %v2348
        %v2404 = vunpack.c.l.b16 %v2349
        %v2405 = vunpack.c.h.b16 %v2349
        %v2406 = vunpack.c.l.b16 %v2350
        %v2407 = vunpack.c.h.b16 %v2350
        %v2408 = vunpack.c.l.b16 %v2351
        %v2409 = vunpack.c.h.b16 %v2351
        %v2410 = vunpack.c.l.b16 %v2352
        %v2411 = vunpack.c.h.b16 %v2352
        %v2412 = vunpack.c.l.b16 %v2353
        %v2413 = vunpack.c.h.b16 %v2353
        %v2414 = vunpack.c.l.b16 %v2354
        %v2415 = vunpack.c.h.b16 %v2354
        %v2416 = vunpack.c.l.b16 %v2355
        %v2417 = vunpack.c.h.b16 %v2355
        %v2418 = vunpack.c.l.b16 %v2356
        %v2419 = vunpack.c.h.b16 %v2356
        %v2420 = vunpack.c.l.b16 %v2357
        %v2421 = vunpack.c.h.b16 %v2357
        %v2422 = vunpack.c.l.b16 %v2358
        %v2423 = vunpack.c.h.b16 %v2358
        %v2424 = vunpack.c.l.b16 %v2359
        %v2425 = vunpack.c.h.b16 %v2359
        %v2426 = vpack.c.b16 %v2396, %v2394
        %v2427 = vpack.c.b16 %v2397, %v2395
        %v2428 = vpack.c.b16 %v2400, %v2398
        %v2429 = vpack.c.b16 %v2401, %v2399
        %v2430 = vpack.c.b16 %v2404, %v2402
        %v2431 = vpack.c.b16 %v2405, %v2403
        %v2432 = vpack.c.b16 %v2408, %v2406
        %v2433 = vpack.c.b16 %v2409, %v2407
        %v2434 = vpack.c.b16 %v2412, %v2410
        %v2435 = vpack.c.b16 %v2413, %v2411
        %v2436 = vpack.c.b16 %v2416, %v2414
        %v2437 = vpack.c.b16 %v2417, %v2415
        %v2438 = vpack.c.b16 %v2420, %v2418
        %v2439 = vpack.c.b16 %v2421, %v2419
        %v2440 = vpack.c.b16 %v2424, %v2422
        %v2441 = vpack.c.b16 %v2425, %v2423
        %2458 = vmatpush.bf16.msra.mxu0 %v2440
        %2459 = vmatpush.bf16.msra.mxu0 %v2438
        %2460 = vmatpush.bf16.msra.mxu0 %v2436
        %2461 = vmatpush.bf16.msra.mxu0 %v2434
        %2462 = vmatpush.bf16.msra.mxu0 %v2432
        %2463 = vmatpush.bf16.msra.mxu0 %v2430
        %2464 = vmatpush.bf16.msra.mxu0 %v2428
        %2465 = vmatpush.bf16.msra.mxu0 %v2426
        %2466 = vmatmul.bf16.gmra.mxu0 %v2374
        %v2467 = vpop.f32.mrf.mxu0
        %v2468 = vadd.f32 %v2362, %v2467
        %v2469 = vpop.f32.mrf.mxu0
        %v2470 = vadd.f32 %v2362, %v2469
        %2471 = vmatmul.bf16.gmra.mxu0 %v2375
        %v2472 = vpop.f32.mrf.mxu0
        %v2473 = vadd.f32 %v2362, %v2472
        %v2474 = vpop.f32.mrf.mxu0
        %v2475 = vadd.f32 %v2362, %v2474
        %2476 = vdwg.mxu0
        %2477 = vmatpush.bf16.msra.mxu0 %v2441
        %2478 = vmatpush.bf16.msra.mxu0 %v2439
        %2479 = vmatpush.bf16.msra.mxu0 %v2437
        %2480 = vmatpush.bf16.msra.mxu0 %v2435
        %2481 = vmatpush.bf16.msra.mxu0 %v2433
        %2482 = vmatpush.bf16.msra.mxu0 %v2431
        %2483 = vmatpush.bf16.msra.mxu0 %v2429
        %2484 = vmatpush.bf16.msra.mxu0 %v2427
        %2485 = vmatmul.bf16.gmra.mxu0 %v2374
        %v2486 = vpop.f32.mrf.mxu0
        %v2487 = vadd.f32 %v2363, %v2486
        %v2488 = vpop.f32.mrf.mxu0
        %v2489 = vadd.f32 %v2363, %v2488
        %2490 = vmatmul.bf16.gmra.mxu0 %v2375
        %v2491 = vpop.f32.mrf.mxu0
        %v2492 = vadd.f32 %v2363, %v2491
        %v2493 = vpop.f32.mrf.mxu0
        %v2494 = vadd.f32 %v2363, %v2493
        %2495 = vdwg.mxu0
        %v2496 = vpack.c.bf16 %v2487, %v2468
        %v2497 = vpack.c.bf16 %v2489, %v2470
        %v2498 = vpack.c.bf16 %v2492, %v2473
        %v2499 = vpack.c.bf16 %v2494, %v2475
        %v2504 = vrot.slane %v2496, 4
        %v2505 = vrot.slane %v2497, 4
        %v2506 = vrot.slane %v2498, 4
        %v2507 = vrot.slane %v2499, 4
        %v2510 = vunpack.c.l.b16 %v2340
        %v2511 = vunpack.c.l.b16 %v2341
        %v2512 = vpack.c.b16 %v2511, %v2510
        %v2513 = vunpack.c.l.b16 %v2496
        %v2514 = vunpack.c.l.b16 %v2497
        %v2515 = vpack.c.b16 %v2514, %v2513
        %v2517 = vsel %vm1301, %v2512, 0
        %v2520 = vsel %vm1301, %v2515, 0
        %2522 = vmatpush.bf16.xpose.msra.mxu0 0
        %2523 = vmatpush.bf16.xpose.msra.mxu0 0
        %2524 = vmatpush.bf16.xpose.msra.mxu0 0
        %2525 = vmatpush.bf16.xpose.msra.mxu0 0
        %2526 = vmatpush.bf16.xpose.msra.mxu0 0
        %2527 = vmatpush.bf16.xpose.msra.mxu0 0
        %2528 = vmatpush.bf16.xpose.msra.mxu0 0
        %2529 = vmatpush.bf16.xpose.msra.mxu0 %v2520
        %2530 = vmatmul.bf16.gmra.mxu0 %v2517
        %v2531 = vpop.f32.mrf.mxu0
        %v2532 = vadd.f32 0.0, %v2531
        %v2533 = vpop.f32.mrf.mxu0
        %v2534 = vadd.f32 0.0, %v2533
        %2535 = vdwg.mxu0
        %v2538 = vunpack.c.l.b16 %v2342
        %v2539 = vunpack.c.l.b16 %v2343
        %v2540 = vpack.c.b16 %v2539, %v2538
        %v2541 = vunpack.c.l.b16 %v2498
        %v2542 = vunpack.c.l.b16 %v2499
        %v2543 = vpack.c.b16 %v2542, %v2541
        %v2545 = vsel %vm1301, %v2540, 0
        %v2548 = vsel %vm1301, %v2543, 0
        %2550 = vmatpush.bf16.xpose.msra.mxu0 0
        %2551 = vmatpush.bf16.xpose.msra.mxu0 0
        %2552 = vmatpush.bf16.xpose.msra.mxu0 0
        %2553 = vmatpush.bf16.xpose.msra.mxu0 0
        %2554 = vmatpush.bf16.xpose.msra.mxu0 0
        %2555 = vmatpush.bf16.xpose.msra.mxu0 0
        %2556 = vmatpush.bf16.xpose.msra.mxu0 0
        %2557 = vmatpush.bf16.xpose.msra.mxu0 %v2548
        %2558 = vmatmul.bf16.gmra.mxu0 %v2545
        %v2559 = vpop.f32.mrf.mxu0
        %v2560 = vadd.f32 0.0, %v2559
        %v2561 = vpop.f32.mrf.mxu0
        %v2562 = vadd.f32 0.0, %v2561
        %2563 = vdwg.mxu0
        %v2564 = vmul.f32 %v2532, 0.17677669
        %v2565 = vmul.f32 %v2534, 0.17677669
        %v2566 = vmul.f32 %v2560, 0.17677669
        %v2567 = vmul.f32 %v2562, 0.17677669
        %v2568 = vsel %vm1036, 1, 0
        %v2569 = vsel %vm1037, 1, 0
        %v2570 = vperm.slane %v2568, 0
        %v2571 = vperm.slane %v2569, 0
        %vm2572 = vcmp.eq.s32.totalorder %v2570, 1
        %vm2573 = vcmp.eq.s32.totalorder %v2571, 1
        %v2574 = vsel %vm2572, %v2564, -1e+09
        %v2575 = vsel %vm2572, %v2565, -1e+09
        %v2576 = vsel %vm2573, %v2566, -1e+09
        %v2577 = vsel %vm2573, %v2567, -1e+09
        %v2578 = vsel %vm1362, %v2574, -inf
        %2579 = vmax.xlane.f32.xlu0 %v2578
        %v2580 = vpop.xlane.xlu0 %2579
        %v2581 = vsel %vm1362, %v2575, -inf
        %2582 = vmax.xlane.f32.xlu0 %v2581
        %v2583 = vpop.xlane.xlu0 %2582
        %v2584 = vsel %vm1362, %v2576, -inf
        %2585 = vmax.xlane.f32.xlu0 %v2584
        %v2586 = vpop.xlane.xlu0 %2585
        %v2587 = vsel %vm1362, %v2577, -inf
        %2588 = vmax.xlane.f32.xlu0 %v2587
        %v2589 = vpop.xlane.xlu0 %2588
        %v2590 = vsub.f32 %v2574, %v2580
        %v2591 = vsub.f32 %v2575, %v2583
        %v2592 = vsub.f32 %v2576, %v2586
        %v2593 = vsub.f32 %v2577, %v2589
        %v2594 = vmul.f32 %v2590, 1.442695
        %v2595 = vpow.pop %v2594
        %v2596 = vmul.f32 %v2591, 1.442695
        %v2597 = vpow.pop %v2596
        %v2598 = vmul.f32 %v2592, 1.442695
        %v2599 = vpow.pop %v2598
        %v2600 = vmul.f32 %v2593, 1.442695
        %v2601 = vpow.pop %v2600
        %v2602 = vsel %vm1362, %v2595, 0.0
        %2603 = vadd.xlane.f32.xlu0 %v2602
        %v2604 = vpop.xlane.xlu0 %2603
        %v2605 = vsel %vm1362, %v2597, 0.0
        %2606 = vadd.xlane.f32.xlu0 %v2605
        %v2607 = vpop.xlane.xlu0 %2606
        %v2608 = vsel %vm1362, %v2599, 0.0
        %2609 = vadd.xlane.f32.xlu0 %v2608
        %v2610 = vpop.xlane.xlu0 %2609
        %v2611 = vsel %vm1362, %v2601, 0.0
        %2612 = vadd.xlane.f32.xlu0 %v2611
        %v2613 = vpop.xlane.xlu0 %2612
        %v2614 = vrcp.pop %v2604
        %v2615 = vrcp.pop %v2607
        %v2616 = vrcp.pop %v2610
        %v2617 = vrcp.pop %v2613
        %v2618 = vmul.f32 %v2595, %v2614
        %v2619 = vmul.f32 %v2597, %v2615
        %v2620 = vmul.f32 %v2599, %v2616
        %v2621 = vmul.f32 %v2601, %v2617
        %v2622 = vpack.c.bf16 %v2618, %v2618
        %v2623 = vpack.c.bf16 %v2619, %v2619
        %v2624 = vpack.c.bf16 %v2620, %v2620
        %v2625 = vpack.c.bf16 %v2621, %v2621
        %v2628 = vunpack.c.l.b16 %v2622
        %v2629 = vunpack.c.l.b16 %v2623
        %v2630 = vpack.c.b16 %v2629, %v2628
        %v2631 = vunpack.c.l.b16 %v2504
        %v2632 = vunpack.c.l.b16 %v2505
        %v2633 = vpack.c.b16 %v2632, %v2631
        %v2636 = vsel %vm1362, %v2630, 0
        %2638 = vmatpush.bf16.msra.mxu0 0
        %2639 = vmatpush.bf16.msra.mxu0 0
        %2640 = vmatpush.bf16.msra.mxu0 0
        %2641 = vmatpush.bf16.msra.mxu0 0
        %2642 = vmatpush.bf16.msra.mxu0 0
        %2643 = vmatpush.bf16.msra.mxu0 0
        %2644 = vmatpush.bf16.msra.mxu0 0
        %2645 = vmatpush.bf16.msra.mxu0 %v2633
        %2646 = vmatmul.bf16.gmra.mxu0 %v2636
        %v2647 = vpop.f32.mrf.mxu0
        %v2648 = vadd.f32 0.0, %v2647
        %v2649 = vpop.f32.mrf.mxu0
        %v2650 = vadd.f32 0.0, %v2649
        %2651 = vdwg.mxu0
        %v2654 = vunpack.c.l.b16 %v2624
        %v2655 = vunpack.c.l.b16 %v2625
        %v2656 = vpack.c.b16 %v2655, %v2654
        %v2657 = vunpack.c.l.b16 %v2506
        %v2658 = vunpack.c.l.b16 %v2507
        %v2659 = vpack.c.b16 %v2658, %v2657
        %v2662 = vsel %vm1362, %v2656, 0
        %2664 = vmatpush.bf16.msra.mxu0 0
        %2665 = vmatpush.bf16.msra.mxu0 0
        %2666 = vmatpush.bf16.msra.mxu0 0
        %2667 = vmatpush.bf16.msra.mxu0 0
        %2668 = vmatpush.bf16.msra.mxu0 0
        %2669 = vmatpush.bf16.msra.mxu0 0
        %2670 = vmatpush.bf16.msra.mxu0 0
        %2671 = vmatpush.bf16.msra.mxu0 %v2659
        %2672 = vmatmul.bf16.gmra.mxu0 %v2662
        %v2673 = vpop.f32.mrf.mxu0
        %v2674 = vadd.f32 0.0, %v2673
        %v2675 = vpop.f32.mrf.mxu0
        %v2676 = vadd.f32 0.0, %v2675
        %2677 = vdwg.mxu0
        %v2678 = vpack.c.bf16 %v2648, %v2648
        %v2679 = vpack.c.bf16 %v2650, %v2650
        %v2680 = vpack.c.bf16 %v2674, %v2674
        %v2681 = vpack.c.bf16 %v2676, %v2676
        %2682 = vrot.lane.b32.xlu0 %v2496, 96
        %v2683 = vpop.permute.xlu0 %2682
        %2684 = vrot.lane.b32.xlu0 %v2497, 96
        %v2685 = vpop.permute.xlu0 %2684
        %2686 = vrot.lane.b32.xlu0 %v2498, 96
        %v2687 = vpop.permute.xlu0 %2686
        %2688 = vrot.lane.b32.xlu0 %v2499, 96
        %v2689 = vpop.permute.xlu0 %2688
        %v2690 = vrot.slane %v2683, 4
        %v2691 = vrot.slane %v2685, 4
        %v2692 = vrot.slane %v2687, 4
        %v2693 = vrot.slane %v2689, 4
        %2694 = vrot.lane.b32.xlu0 %v2512, 96
        %v2695 = vpop.permute.xlu0 %2694
        %2696 = vrot.lane.b32.xlu0 %v2515, 96
        %v2697 = vpop.permute.xlu0 %2696
        %v2699 = vsel %vm1301, %v2695, 0
        %v2702 = vsel %vm1301, %v2697, 0
        %2704 = vmatpush.bf16.xpose.msra.mxu0 0
        %2705 = vmatpush.bf16.xpose.msra.mxu0 0
        %2706 = vmatpush.bf16.xpose.msra.mxu0 0
        %2707 = vmatpush.bf16.xpose.msra.mxu0 0
        %2708 = vmatpush.bf16.xpose.msra.mxu0 0
        %2709 = vmatpush.bf16.xpose.msra.mxu0 0
        %2710 = vmatpush.bf16.xpose.msra.mxu0 0
        %2711 = vmatpush.bf16.xpose.msra.mxu0 %v2702
        %2712 = vmatmul.bf16.gmra.mxu0 %v2699
        %v2713 = vpop.f32.mrf.mxu0
        %v2714 = vadd.f32 0.0, %v2713
        %v2715 = vpop.f32.mrf.mxu0
        %v2716 = vadd.f32 0.0, %v2715
        %2717 = vdwg.mxu0
        %2718 = vrot.lane.b32.xlu0 %v2540, 96
        %v2719 = vpop.permute.xlu0 %2718
        %2720 = vrot.lane.b32.xlu0 %v2543, 96
        %v2721 = vpop.permute.xlu0 %2720
        %v2723 = vsel %vm1301, %v2719, 0
        %v2726 = vsel %vm1301, %v2721, 0
        %2728 = vmatpush.bf16.xpose.msra.mxu0 0
        %2729 = vmatpush.bf16.xpose.msra.mxu0 0
        %2730 = vmatpush.bf16.xpose.msra.mxu0 0
        %2731 = vmatpush.bf16.xpose.msra.mxu0 0
        %2732 = vmatpush.bf16.xpose.msra.mxu0 0
        %2733 = vmatpush.bf16.xpose.msra.mxu0 0
        %2734 = vmatpush.bf16.xpose.msra.mxu0 0
        %2735 = vmatpush.bf16.xpose.msra.mxu0 %v2726
        %2736 = vmatmul.bf16.gmra.mxu0 %v2723
        %v2737 = vpop.f32.mrf.mxu0
        %v2738 = vadd.f32 0.0, %v2737
        %v2739 = vpop.f32.mrf.mxu0
        %v2740 = vadd.f32 0.0, %v2739
        %2741 = vdwg.mxu0
        %v2742 = vmul.f32 %v2714, 0.17677669
        %v2743 = vmul.f32 %v2716, 0.17677669
        %v2744 = vmul.f32 %v2738, 0.17677669
        %v2745 = vmul.f32 %v2740, 0.17677669
        %v2746 = vsel %vm2572, %v2742, -1e+09
        %v2747 = vsel %vm2572, %v2743, -1e+09
        %v2748 = vsel %vm2573, %v2744, -1e+09
        %v2749 = vsel %vm2573, %v2745, -1e+09
        %v2750 = vsel %vm1362, %v2746, -inf
        %2751 = vmax.xlane.f32.xlu0 %v2750
        %v2752 = vpop.xlane.xlu0 %2751
        %v2753 = vsel %vm1362, %v2747, -inf
        %2754 = vmax.xlane.f32.xlu0 %v2753
        %v2755 = vpop.xlane.xlu0 %2754
        %v2756 = vsel %vm1362, %v2748, -inf
        %2757 = vmax.xlane.f32.xlu0 %v2756
        %v2758 = vpop.xlane.xlu0 %2757
        %v2759 = vsel %vm1362, %v2749, -inf
        %2760 = vmax.xlane.f32.xlu0 %v2759
        %v2761 = vpop.xlane.xlu0 %2760
        %v2762 = vsub.f32 %v2746, %v2752
        %v2763 = vsub.f32 %v2747, %v2755
        %v2764 = vsub.f32 %v2748, %v2758
        %v2765 = vsub.f32 %v2749, %v2761
        %v2766 = vmul.f32 %v2762, 1.442695
        %v2767 = vpow.pop %v2766
        %v2768 = vmul.f32 %v2763, 1.442695
        %v2769 = vpow.pop %v2768
        %v2770 = vmul.f32 %v2764, 1.442695
        %v2771 = vpow.pop %v2770
        %v2772 = vmul.f32 %v2765, 1.442695
        %v2773 = vpow.pop %v2772
        %v2774 = vsel %vm1362, %v2767, 0.0
        %2775 = vadd.xlane.f32.xlu0 %v2774
        %v2776 = vpop.xlane.xlu0 %2775
        %v2777 = vsel %vm1362, %v2769, 0.0
        %2778 = vadd.xlane.f32.xlu0 %v2777
        %v2779 = vpop.xlane.xlu0 %2778
        %v2780 = vsel %vm1362, %v2771, 0.0
        %2781 = vadd.xlane.f32.xlu0 %v2780
        %v2782 = vpop.xlane.xlu0 %2781
        %v2783 = vsel %vm1362, %v2773, 0.0
        %2784 = vadd.xlane.f32.xlu0 %v2783
        %v2785 = vpop.xlane.xlu0 %2784
        %v2786 = vrcp.pop %v2776
        %v2787 = vrcp.pop %v2779
        %v2788 = vrcp.pop %v2782
        %v2789 = vrcp.pop %v2785
        %v2790 = vmul.f32 %v2767, %v2786
        %v2791 = vmul.f32 %v2769, %v2787
        %v2792 = vmul.f32 %v2771, %v2788
        %v2793 = vmul.f32 %v2773, %v2789
        %v2794 = vpack.c.bf16 %v2790, %v2790
        %v2795 = vpack.c.bf16 %v2791, %v2791
        %v2796 = vpack.c.bf16 %v2792, %v2792
        %v2797 = vpack.c.bf16 %v2793, %v2793
        %v2800 = vunpack.c.l.b16 %v2794
        %v2801 = vunpack.c.l.b16 %v2795
        %v2802 = vpack.c.b16 %v2801, %v2800
        %v2803 = vunpack.c.l.b16 %v2690
        %v2804 = vunpack.c.l.b16 %v2691
        %v2805 = vpack.c.b16 %v2804, %v2803
        %v2808 = vsel %vm1362, %v2802, 0
        %2810 = vmatpush.bf16.msra.mxu0 0
        %2811 = vmatpush.bf16.msra.mxu0 0
        %2812 = vmatpush.bf16.msra.mxu0 0
        %2813 = vmatpush.bf16.msra.mxu0 0
        %2814 = vmatpush.bf16.msra.mxu0 0
        %2815 = vmatpush.bf16.msra.mxu0 0
        %2816 = vmatpush.bf16.msra.mxu0 0
        %2817 = vmatpush.bf16.msra.mxu0 %v2805
        %2818 = vmatmul.bf16.gmra.mxu0 %v2808
        %v2819 = vpop.f32.mrf.mxu0
        %v2820 = vadd.f32 0.0, %v2819
        %v2821 = vpop.f32.mrf.mxu0
        %v2822 = vadd.f32 0.0, %v2821
        %2823 = vdwg.mxu0
        %v2826 = vunpack.c.l.b16 %v2796
        %v2827 = vunpack.c.l.b16 %v2797
        %v2828 = vpack.c.b16 %v2827, %v2826
        %v2829 = vunpack.c.l.b16 %v2692
        %v2830 = vunpack.c.l.b16 %v2693
        %v2831 = vpack.c.b16 %v2830, %v2829
        %v2834 = vsel %vm1362, %v2828, 0
        %2836 = vmatpush.bf16.msra.mxu0 0
        %2837 = vmatpush.bf16.msra.mxu0 0
        %2838 = vmatpush.bf16.msra.mxu0 0
        %2839 = vmatpush.bf16.msra.mxu0 0
        %2840 = vmatpush.bf16.msra.mxu0 0
        %2841 = vmatpush.bf16.msra.mxu0 0
        %2842 = vmatpush.bf16.msra.mxu0 0
        %2843 = vmatpush.bf16.msra.mxu0 %v2831
        %2844 = vmatmul.bf16.gmra.mxu0 %v2834
        %v2845 = vpop.f32.mrf.mxu0
        %v2846 = vadd.f32 0.0, %v2845
        %v2847 = vpop.f32.mrf.mxu0
        %v2848 = vadd.f32 0.0, %v2847
        %2849 = vdwg.mxu0
        %v2850 = vpack.c.bf16 %v2820, %v2820
        %v2851 = vpack.c.bf16 %v2822, %v2822
        %v2852 = vpack.c.bf16 %v2846, %v2846
        %v2853 = vpack.c.bf16 %v2848, %v2848
        %2854 = vrot.lane.b32.xlu0 %v2496, 64
        %v2855 = vpop.permute.xlu0 %2854
        %2856 = vrot.lane.b32.xlu0 %v2497, 64
        %v2857 = vpop.permute.xlu0 %2856
        %2858 = vrot.lane.b32.xlu0 %v2498, 64
        %v2859 = vpop.permute.xlu0 %2858
        %2860 = vrot.lane.b32.xlu0 %v2499, 64
        %v2861 = vpop.permute.xlu0 %2860
        %v2862 = vrot.slane %v2855, 4
        %v2863 = vrot.slane %v2857, 4
        %v2864 = vrot.slane %v2859, 4
        %v2865 = vrot.slane %v2861, 4
        %2866 = vrot.lane.b32.xlu0 %v2512, 64
        %v2867 = vpop.permute.xlu0 %2866
        %2868 = vrot.lane.b32.xlu0 %v2515, 64
        %v2869 = vpop.permute.xlu0 %2868
        %v2871 = vsel %vm1301, %v2867, 0
        %v2874 = vsel %vm1301, %v2869, 0
        %2876 = vmatpush.bf16.xpose.msra.mxu0 0
        %2877 = vmatpush.bf16.xpose.msra.mxu0 0
        %2878 = vmatpush.bf16.xpose.msra.mxu0 0
        %2879 = vmatpush.bf16.xpose.msra.mxu0 0
        %2880 = vmatpush.bf16.xpose.msra.mxu0 0
        %2881 = vmatpush.bf16.xpose.msra.mxu0 0
        %2882 = vmatpush.bf16.xpose.msra.mxu0 0
        %2883 = vmatpush.bf16.xpose.msra.mxu0 %v2874
        %2884 = vmatmul.bf16.gmra.mxu0 %v2871
        %v2885 = vpop.f32.mrf.mxu0
        %v2886 = vadd.f32 0.0, %v2885
        %v2887 = vpop.f32.mrf.mxu0
        %v2888 = vadd.f32 0.0, %v2887
        %2889 = vdwg.mxu0
        %2890 = vrot.lane.b32.xlu0 %v2540, 64
        %v2891 = vpop.permute.xlu0 %2890
        %2892 = vrot.lane.b32.xlu0 %v2543, 64
        %v2893 = vpop.permute.xlu0 %2892
        %v2895 = vsel %vm1301, %v2891, 0
        %v2898 = vsel %vm1301, %v2893, 0
        %2900 = vmatpush.bf16.xpose.msra.mxu0 0
        %2901 = vmatpush.bf16.xpose.msra.mxu0 0
        %2902 = vmatpush.bf16.xpose.msra.mxu0 0
        %2903 = vmatpush.bf16.xpose.msra.mxu0 0
        %2904 = vmatpush.bf16.xpose.msra.mxu0 0
        %2905 = vmatpush.bf16.xpose.msra.mxu0 0
        %2906 = vmatpush.bf16.xpose.msra.mxu0 0
        %2907 = vmatpush.bf16.xpose.msra.mxu0 %v2898
        %2908 = vmatmul.bf16.gmra.mxu0 %v2895
        %v2909 = vpop.f32.mrf.mxu0
        %v2910 = vadd.f32 0.0, %v2909
        %v2911 = vpop.f32.mrf.mxu0
        %v2912 = vadd.f32 0.0, %v2911
        %2913 = vdwg.mxu0
        %v2914 = vmul.f32 %v2886, 0.17677669
        %v2915 = vmul.f32 %v2888, 0.17677669
        %v2916 = vmul.f32 %v2910, 0.17677669
        %v2917 = vmul.f32 %v2912, 0.17677669
        %v2918 = vsel %vm2572, %v2914, -1e+09
        %v2919 = vsel %vm2572, %v2915, -1e+09
        %v2920 = vsel %vm2573, %v2916, -1e+09
        %v2921 = vsel %vm2573, %v2917, -1e+09
        %v2922 = vsel %vm1362, %v2918, -inf
        %2923 = vmax.xlane.f32.xlu0 %v2922
        %v2924 = vpop.xlane.xlu0 %2923
        %v2925 = vsel %vm1362, %v2919, -inf
        %2926 = vmax.xlane.f32.xlu0 %v2925
        %v2927 = vpop.xlane.xlu0 %2926
        %v2928 = vsel %vm1362, %v2920, -inf
        %2929 = vmax.xlane.f32.xlu0 %v2928
        %v2930 = vpop.xlane.xlu0 %2929
        %v2931 = vsel %vm1362, %v2921, -inf
        %2932 = vmax.xlane.f32.xlu0 %v2931
        %v2933 = vpop.xlane.xlu0 %2932
        %v2934 = vsub.f32 %v2918, %v2924
        %v2935 = vsub.f32 %v2919, %v2927
        %v2936 = vsub.f32 %v2920, %v2930
        %v2937 = vsub.f32 %v2921, %v2933
        %v2938 = vmul.f32 %v2934, 1.442695
        %v2939 = vpow.pop %v2938
        %v2940 = vmul.f32 %v2935, 1.442695
        %v2941 = vpow.pop %v2940
        %v2942 = vmul.f32 %v2936, 1.442695
        %v2943 = vpow.pop %v2942
        %v2944 = vmul.f32 %v2937, 1.442695
        %v2945 = vpow.pop %v2944
        %v2946 = vsel %vm1362, %v2939, 0.0
        %2947 = vadd.xlane.f32.xlu0 %v2946
        %v2948 = vpop.xlane.xlu0 %2947
        %v2949 = vsel %vm1362, %v2941, 0.0
        %2950 = vadd.xlane.f32.xlu0 %v2949
        %v2951 = vpop.xlane.xlu0 %2950
        %v2952 = vsel %vm1362, %v2943, 0.0
        %2953 = vadd.xlane.f32.xlu0 %v2952
        %v2954 = vpop.xlane.xlu0 %2953
        %v2955 = vsel %vm1362, %v2945, 0.0
        %2956 = vadd.xlane.f32.xlu0 %v2955
        %v2957 = vpop.xlane.xlu0 %2956
        %v2958 = vrcp.pop %v2948
        %v2959 = vrcp.pop %v2951
        %v2960 = vrcp.pop %v2954
        %v2961 = vrcp.pop %v2957
        %v2962 = vmul.f32 %v2939, %v2958
        %v2963 = vmul.f32 %v2941, %v2959
        %v2964 = vmul.f32 %v2943, %v2960
        %v2965 = vmul.f32 %v2945, %v2961
        %v2966 = vpack.c.bf16 %v2962, %v2962
        %v2967 = vpack.c.bf16 %v2963, %v2963
        %v2968 = vpack.c.bf16 %v2964, %v2964
        %v2969 = vpack.c.bf16 %v2965, %v2965
        %v2972 = vunpack.c.l.b16 %v2966
        %v2973 = vunpack.c.l.b16 %v2967
        %v2974 = vpack.c.b16 %v2973, %v2972
        %v2975 = vunpack.c.l.b16 %v2862
        %v2976 = vunpack.c.l.b16 %v2863
        %v2977 = vpack.c.b16 %v2976, %v2975
        %v2980 = vsel %vm1362, %v2974, 0
        %2982 = vmatpush.bf16.msra.mxu0 0
        %2983 = vmatpush.bf16.msra.mxu0 0
        %2984 = vmatpush.bf16.msra.mxu0 0
        %2985 = vmatpush.bf16.msra.mxu0 0
        %2986 = vmatpush.bf16.msra.mxu0 0
        %2987 = vmatpush.bf16.msra.mxu0 0
        %2988 = vmatpush.bf16.msra.mxu0 0
        %2989 = vmatpush.bf16.msra.mxu0 %v2977
        %2990 = vmatmul.bf16.gmra.mxu0 %v2980
        %v2991 = vpop.f32.mrf.mxu0
        %v2992 = vadd.f32 0.0, %v2991
        %v2993 = vpop.f32.mrf.mxu0
        %v2994 = vadd.f32 0.0, %v2993
        %2995 = vdwg.mxu0
        %v2998 = vunpack.c.l.b16 %v2968
        %v2999 = vunpack.c.l.b16 %v2969
        %v3000 = vpack.c.b16 %v2999, %v2998
        %v3001 = vunpack.c.l.b16 %v2864
        %v3002 = vunpack.c.l.b16 %v2865
        %v3003 = vpack.c.b16 %v3002, %v3001
        %v3006 = vsel %vm1362, %v3000, 0
        %3008 = vmatpush.bf16.msra.mxu0 0
        %3009 = vmatpush.bf16.msra.mxu0 0
        %3010 = vmatpush.bf16.msra.mxu0 0
        %3011 = vmatpush.bf16.msra.mxu0 0
        %3012 = vmatpush.bf16.msra.mxu0 0
        %3013 = vmatpush.bf16.msra.mxu0 0
        %3014 = vmatpush.bf16.msra.mxu0 0
        %3015 = vmatpush.bf16.msra.mxu0 %v3003
        %3016 = vmatmul.bf16.gmra.mxu0 %v3006
        %v3017 = vpop.f32.mrf.mxu0
        %v3018 = vadd.f32 0.0, %v3017
        %v3019 = vpop.f32.mrf.mxu0
        %v3020 = vadd.f32 0.0, %v3019
        %3021 = vdwg.mxu0
        %v3022 = vpack.c.bf16 %v2992, %v2992
        %v3023 = vpack.c.bf16 %v2994, %v2994
        %v3024 = vpack.c.bf16 %v3018, %v3018
        %v3025 = vpack.c.bf16 %v3020, %v3020
        %3026 = vrot.lane.b32.xlu0 %v2496, 32
        %v3027 = vpop.permute.xlu0 %3026
        %3028 = vrot.lane.b32.xlu0 %v2497, 32
        %v3029 = vpop.permute.xlu0 %3028
        %3030 = vrot.lane.b32.xlu0 %v2498, 32
        %v3031 = vpop.permute.xlu0 %3030
        %3032 = vrot.lane.b32.xlu0 %v2499, 32
        %v3033 = vpop.permute.xlu0 %3032
        %v3034 = vrot.slane %v3027, 4
        %v3035 = vrot.slane %v3029, 4
        %v3036 = vrot.slane %v3031, 4
        %v3037 = vrot.slane %v3033, 4
        %3038 = vrot.lane.b32.xlu0 %v2512, 32
        %v3039 = vpop.permute.xlu0 %3038
        %3040 = vrot.lane.b32.xlu0 %v2515, 32
        %v3041 = vpop.permute.xlu0 %3040
        %v3043 = vsel %vm1301, %v3039, 0
        %v3046 = vsel %vm1301, %v3041, 0
        %3048 = vmatpush.bf16.xpose.msra.mxu0 0
        %3049 = vmatpush.bf16.xpose.msra.mxu0 0
        %3050 = vmatpush.bf16.xpose.msra.mxu0 0
        %3051 = vmatpush.bf16.xpose.msra.mxu0 0
        %3052 = vmatpush.bf16.xpose.msra.mxu0 0
        %3053 = vmatpush.bf16.xpose.msra.mxu0 0
        %3054 = vmatpush.bf16.xpose.msra.mxu0 0
        %3055 = vmatpush.bf16.xpose.msra.mxu0 %v3046
        %3056 = vmatmul.bf16.gmra.mxu0 %v3043
        %v3057 = vpop.f32.mrf.mxu0
        %v3058 = vadd.f32 0.0, %v3057
        %v3059 = vpop.f32.mrf.mxu0
        %v3060 = vadd.f32 0.0, %v3059
        %3061 = vdwg.mxu0
        %3062 = vrot.lane.b32.xlu0 %v2540, 32
        %v3063 = vpop.permute.xlu0 %3062
        %3064 = vrot.lane.b32.xlu0 %v2543, 32
        %v3065 = vpop.permute.xlu0 %3064
        %v3067 = vsel %vm1301, %v3063, 0
        %v3070 = vsel %vm1301, %v3065, 0
        %3072 = vmatpush.bf16.xpose.msra.mxu0 0
        %3073 = vmatpush.bf16.xpose.msra.mxu0 0
        %3074 = vmatpush.bf16.xpose.msra.mxu0 0
        %3075 = vmatpush.bf16.xpose.msra.mxu0 0
        %3076 = vmatpush.bf16.xpose.msra.mxu0 0
        %3077 = vmatpush.bf16.xpose.msra.mxu0 0
        %3078 = vmatpush.bf16.xpose.msra.mxu0 0
        %3079 = vmatpush.bf16.xpose.msra.mxu0 %v3070
        %3080 = vmatmul.bf16.gmra.mxu0 %v3067
        %v3081 = vpop.f32.mrf.mxu0
        %v3082 = vadd.f32 0.0, %v3081
        %v3083 = vpop.f32.mrf.mxu0
        %v3084 = vadd.f32 0.0, %v3083
        %3085 = vdwg.mxu0
        %v3086 = vmul.f32 %v3058, 0.17677669
        %v3087 = vmul.f32 %v3060, 0.17677669
        %v3088 = vmul.f32 %v3082, 0.17677669
        %v3089 = vmul.f32 %v3084, 0.17677669
        %v3090 = vsel %vm2572, %v3086, -1e+09
        %v3091 = vsel %vm2572, %v3087, -1e+09
        %v3092 = vsel %vm2573, %v3088, -1e+09
        %v3093 = vsel %vm2573, %v3089, -1e+09
        %v3094 = vsel %vm1362, %v3090, -inf
        %3095 = vmax.xlane.f32.xlu0 %v3094
        %v3096 = vpop.xlane.xlu0 %3095
        %v3097 = vsel %vm1362, %v3091, -inf
        %3098 = vmax.xlane.f32.xlu0 %v3097
        %v3099 = vpop.xlane.xlu0 %3098
        %v3100 = vsel %vm1362, %v3092, -inf
        %3101 = vmax.xlane.f32.xlu0 %v3100
        %v3102 = vpop.xlane.xlu0 %3101
        %v3103 = vsel %vm1362, %v3093, -inf
        %3104 = vmax.xlane.f32.xlu0 %v3103
        %v3105 = vpop.xlane.xlu0 %3104
        %v3106 = vsub.f32 %v3090, %v3096
        %v3107 = vsub.f32 %v3091, %v3099
        %v3108 = vsub.f32 %v3092, %v3102
        %v3109 = vsub.f32 %v3093, %v3105
        %v3110 = vmul.f32 %v3106, 1.442695
        %v3111 = vpow.pop %v3110
        %v3112 = vmul.f32 %v3107, 1.442695
        %v3113 = vpow.pop %v3112
        %v3114 = vmul.f32 %v3108, 1.442695
        %v3115 = vpow.pop %v3114
        %v3116 = vmul.f32 %v3109, 1.442695
        %v3117 = vpow.pop %v3116
        %v3118 = vsel %vm1362, %v3111, 0.0
        %3119 = vadd.xlane.f32.xlu0 %v3118
        %v3120 = vpop.xlane.xlu0 %3119
        %v3121 = vsel %vm1362, %v3113, 0.0
        %3122 = vadd.xlane.f32.xlu0 %v3121
        %v3123 = vpop.xlane.xlu0 %3122
        %v3124 = vsel %vm1362, %v3115, 0.0
        %3125 = vadd.xlane.f32.xlu0 %v3124
        %v3126 = vpop.xlane.xlu0 %3125
        %v3127 = vsel %vm1362, %v3117, 0.0
        %3128 = vadd.xlane.f32.xlu0 %v3127
        %v3129 = vpop.xlane.xlu0 %3128
        %v3130 = vrcp.pop %v3120
        %v3131 = vrcp.pop %v3123
        %v3132 = vrcp.pop %v3126
        %v3133 = vrcp.pop %v3129
        %v3134 = vmul.f32 %v3111, %v3130
        %v3135 = vmul.f32 %v3113, %v3131
        %v3136 = vmul.f32 %v3115, %v3132
        %v3137 = vmul.f32 %v3117, %v3133
        %v3138 = vpack.c.bf16 %v3134, %v3134
        %v3139 = vpack.c.bf16 %v3135, %v3135
        %v3140 = vpack.c.bf16 %v3136, %v3136
        %v3141 = vpack.c.bf16 %v3137, %v3137
        %v3144 = vunpack.c.l.b16 %v3138
        %v3145 = vunpack.c.l.b16 %v3139
        %v3146 = vpack.c.b16 %v3145, %v3144
        %v3147 = vunpack.c.l.b16 %v3034
        %v3148 = vunpack.c.l.b16 %v3035
        %v3149 = vpack.c.b16 %v3148, %v3147
        %v3152 = vsel %vm1362, %v3146, 0
        %3154 = vmatpush.bf16.msra.mxu0 0
        %3155 = vmatpush.bf16.msra.mxu0 0
        %3156 = vmatpush.bf16.msra.mxu0 0
        %3157 = vmatpush.bf16.msra.mxu0 0
        %3158 = vmatpush.bf16.msra.mxu0 0
        %3159 = vmatpush.bf16.msra.mxu0 0
        %3160 = vmatpush.bf16.msra.mxu0 0
        %3161 = vmatpush.bf16.msra.mxu0 %v3149
        %3162 = vmatmul.bf16.gmra.mxu0 %v3152
        %v3163 = vpop.f32.mrf.mxu0
        %v3164 = vadd.f32 0.0, %v3163
        %v3165 = vpop.f32.mrf.mxu0
        %v3166 = vadd.f32 0.0, %v3165
        %3167 = vdwg.mxu0
        %v3170 = vunpack.c.l.b16 %v3140
        %v3171 = vunpack.c.l.b16 %v3141
        %v3172 = vpack.c.b16 %v3171, %v3170
        %v3173 = vunpack.c.l.b16 %v3036
        %v3174 = vunpack.c.l.b16 %v3037
        %v3175 = vpack.c.b16 %v3174, %v3173
        %v3178 = vsel %vm1362, %v3172, 0
        %3180 = vmatpush.bf16.msra.mxu0 0
        %3181 = vmatpush.bf16.msra.mxu0 0
        %3182 = vmatpush.bf16.msra.mxu0 0
        %3183 = vmatpush.bf16.msra.mxu0 0
        %3184 = vmatpush.bf16.msra.mxu0 0
        %3185 = vmatpush.bf16.msra.mxu0 0
        %3186 = vmatpush.bf16.msra.mxu0 0
        %3187 = vmatpush.bf16.msra.mxu0 %v3175
        %3188 = vmatmul.bf16.gmra.mxu0 %v3178
        %v3189 = vpop.f32.mrf.mxu0
        %v3190 = vadd.f32 0.0, %v3189
        %v3191 = vpop.f32.mrf.mxu0
        %v3192 = vadd.f32 0.0, %v3191
        %3193 = vdwg.mxu0
        %v3194 = vpack.c.bf16 %v3164, %v3164
        %v3195 = vpack.c.bf16 %v3166, %v3166
        %v3196 = vpack.c.bf16 %v3190, %v3190
        %v3197 = vpack.c.bf16 %v3192, %v3192
        %v3202 = vunpack.c.l.b16 %v2678
        %v3203 = vunpack.c.l.b16 %v2679
        %v3204 = vunpack.c.l.b16 %v2680
        %v3205 = vunpack.c.l.b16 %v2681
        %v3206 = vpack.c.b16 %v3203, %v3202
        %v3207 = vpack.c.b16 %v3205, %v3204
        %v3212 = vunpack.c.l.b16 %v2850
        %v3213 = vunpack.c.l.b16 %v2851
        %v3214 = vunpack.c.l.b16 %v2852
        %v3215 = vunpack.c.l.b16 %v2853
        %v3216 = vpack.c.b16 %v3213, %v3212
        %v3217 = vpack.c.b16 %v3215, %v3214
        %3218 = vrot.lane.b32.xlu0 %v3216, 32
        %v3219 = vpop.permute.xlu0 %3218
        %3220 = vrot.lane.b32.xlu0 %v3217, 32
        %v3221 = vpop.permute.xlu0 %3220
        %v3226 = vunpack.c.l.b16 %v3022
        %v3227 = vunpack.c.l.b16 %v3023
        %v3228 = vunpack.c.l.b16 %v3024
        %v3229 = vunpack.c.l.b16 %v3025
        %v3230 = vpack.c.b16 %v3227, %v3226
        %v3231 = vpack.c.b16 %v3229, %v3228
        %3232 = vrot.lane.b32.xlu0 %v3230, 64
        %v3233 = vpop.permute.xlu0 %3232
        %3234 = vrot.lane.b32.xlu0 %v3231, 64
        %v3235 = vpop.permute.xlu0 %3234
        %v3240 = vunpack.c.l.b16 %v3194
        %v3241 = vunpack.c.l.b16 %v3195
        %v3242 = vunpack.c.l.b16 %v3196
        %v3243 = vunpack.c.l.b16 %v3197
        %v3244 = vpack.c.b16 %v3241, %v3240
        %v3245 = vpack.c.b16 %v3243, %v3242
        %3246 = vrot.lane.b32.xlu0 %v3244, 96
        %v3247 = vpop.permute.xlu0 %3246
        %3248 = vrot.lane.b32.xlu0 %v3245, 96
        %v3249 = vpop.permute.xlu0 %3248
        %v3252 = vsel %vm1301, %v3206, %v3219
        %v3255 = vsel %vm1301, %v3207, %v3221
        %v3257 = vsel %vm2041, %v3252, %v3233
        %v3259 = vsel %vm2041, %v3255, %v3235
        %v3261 = vsel %vm2046, %v3257, %v3247
        %v3264 = vsel %vm2046, %v3259, %v3249
        %v3266 = vld [vmem:[#allocation17] sm:$0xf]
        %v3267 = vld [vmem:[#allocation17 + $0x4] sm:$0xf]
        %v3268 = vld [vmem:[#allocation17 + $0x8] sm:$0xf]
        %v3269 = vld [vmem:[#allocation17 + $0xc] sm:$0xf]
        %v3270 = vld [vmem:[#allocation17 + $0x10] sm:$0xf]
        %v3271 = vld [vmem:[#allocation17 + $0x14] sm:$0xf]
        %v3272 = vld [vmem:[#allocation17 + $0x18] sm:$0xf]
        %v3273 = vld [vmem:[#allocation17 + $0x1c] sm:$0xf]
        %v3274 = vld [vmem:[#allocation17 + $0x20] sm:$0xf]
        %v3275 = vld [vmem:[#allocation17 + $0x24] sm:$0xf]
        %v3276 = vld [vmem:[#allocation17 + $0x28] sm:$0xf]
        %v3277 = vld [vmem:[#allocation17 + $0x2c] sm:$0xf]
        %v3278 = vld [vmem:[#allocation17 + $0x30] sm:$0xf]
        %v3279 = vld [vmem:[#allocation17 + $0x34] sm:$0xf]
        %v3280 = vld [vmem:[#allocation17 + $0x38] sm:$0xf]
        %v3281 = vld [vmem:[#allocation17 + $0x3c] sm:$0xf]
        %v3282 = vld [vmem:[%s16] sm:$0x1]
        %v3284 = vperm.slane %v3282, 0
        %v3302 = vunpack.c.l.b16 %v3266
        %v3303 = vunpack.c.l.b16 %v3267
        %v3304 = vunpack.c.l.b16 %v3268
        %v3305 = vunpack.c.l.b16 %v3269
        %v3306 = vunpack.c.l.b16 %v3270
        %v3307 = vunpack.c.l.b16 %v3271
        %v3308 = vunpack.c.l.b16 %v3272
        %v3309 = vunpack.c.l.b16 %v3273
        %v3310 = vunpack.c.l.b16 %v3274
        %v3311 = vunpack.c.l.b16 %v3275
        %v3312 = vunpack.c.l.b16 %v3276
        %v3313 = vunpack.c.l.b16 %v3277
        %v3314 = vunpack.c.l.b16 %v3278
        %v3315 = vunpack.c.l.b16 %v3279
        %v3316 = vunpack.c.l.b16 %v3280
        %v3317 = vunpack.c.l.b16 %v3281
        %v3318 = vpack.c.b16 %v3303, %v3302
        %v3319 = vpack.c.b16 %v3305, %v3304
        %v3320 = vpack.c.b16 %v3307, %v3306
        %v3321 = vpack.c.b16 %v3309, %v3308
        %v3322 = vpack.c.b16 %v3311, %v3310
        %v3323 = vpack.c.b16 %v3313, %v3312
        %v3324 = vpack.c.b16 %v3315, %v3314
        %v3325 = vpack.c.b16 %v3317, %v3316
        %3334 = vmatpush.bf16.msra.mxu0 %v3325
        %3335 = vmatpush.bf16.msra.mxu0 %v3324
        %3336 = vmatpush.bf16.msra.mxu0 %v3323
        %3337 = vmatpush.bf16.msra.mxu0 %v3322
        %3338 = vmatpush.bf16.msra.mxu0 %v3321
        %3339 = vmatpush.bf16.msra.mxu0 %v3320
        %3340 = vmatpush.bf16.msra.mxu0 %v3319
        %3341 = vmatpush.bf16.msra.mxu0 %v3318
        %3342 = vmatmul.bf16.gmra.mxu0 %v3261
        %v3343 = vpop.f32.mrf.mxu0
        %v3344 = vadd.f32 %v3284, %v3343
        %v3345 = vpop.f32.mrf.mxu0
        %v3346 = vadd.f32 %v3284, %v3345
        %3347 = vmatmul.bf16.gmra.mxu0 %v3264
        %v3348 = vpop.f32.mrf.mxu0
        %v3349 = vadd.f32 %v3284, %v3348
        %v3350 = vpop.f32.mrf.mxu0
        %v3351 = vadd.f32 %v3284, %v3350
        %3352 = vdwg.mxu0
        %v3353 = vadd.f32 %v2247, %v3344
        %v3354 = vadd.f32 %v2248, %v3346
        %v3355 = vadd.f32 %v2249, %v3349
        %v3356 = vadd.f32 %v2250, %v3351
        %v3357 = vld [vmem:[%s17] sm:$0x1]
        %v3358 = vld [vmem:[%s18] sm:$0x1]
        %3359 = vadd.xlane.f32.xlu0 %v3353
        %v3360 = vpop.xlane.xlu0 %3359
        %3361 = vadd.xlane.f32.xlu0 %v3354
        %v3362 = vpop.xlane.xlu0 %3361
        %3363 = vadd.xlane.f32.xlu0 %v3355
        %v3364 = vpop.xlane.xlu0 %3363
        %3365 = vadd.xlane.f32.xlu0 %v3356
        %v3366 = vpop.xlane.xlu0 %3365
        %v3367 = vmul.f32 %v3360, %v2164
        %v3368 = vmul.f32 %v3362, %v2164
        %v3369 = vmul.f32 %v3364, %v2164
        %v3370 = vmul.f32 %v3366, %v2164
        %v3371 = vsub.f32 %v3353, %v3367
        %v3372 = vsub.f32 %v3354, %v3368
        %v3373 = vsub.f32 %v3355, %v3369
        %v3374 = vsub.f32 %v3356, %v3370
        %v3375 = vmul.f32 %v3371, %v3371
        %v3376 = vmul.f32 %v3372, %v3372
        %v3377 = vmul.f32 %v3373, %v3373
        %v3378 = vmul.f32 %v3374, %v3374
        %3379 = vadd.xlane.f32.xlu0 %v3375
        %v3380 = vpop.xlane.xlu0 %3379
        %3381 = vadd.xlane.f32.xlu0 %v3376
        %v3382 = vpop.xlane.xlu0 %3381
        %3383 = vadd.xlane.f32.xlu0 %v3377
        %v3384 = vpop.xlane.xlu0 %3383
        %3385 = vadd.xlane.f32.xlu0 %v3378
        %v3386 = vpop.xlane.xlu0 %3385
        %v3387 = vmul.f32 %v3380, %v2164
        %v3388 = vmul.f32 %v3382, %v2164
        %v3389 = vmul.f32 %v3384, %v2164
        %v3390 = vmul.f32 %v3386, %v2164
        %v3391 = vadd.f32 %v3387, 1e-05
        %v3392 = vadd.f32 %v3388, 1e-05
        %v3393 = vadd.f32 %v3389, 1e-05
        %v3394 = vadd.f32 %v3390, 1e-05
        %v3395 = vrsqrt.pop %v3391
        %v3396 = vmul.f32 %v3395, %v3391
        %v3397 = vmul.f32 %v3396, %v3395
        %v3398 = vmul.f32 0.5, %v3397
        %v3399 = vsub.f32 1.5, %v3398
        %v3400 = vmul.f32 %v3395, %v3399
        %vm3401 = vweird.f32 %v3391
        %vm3402 = vweird.f32 %v3395
        %vm3403 = vmor %vm3401, %vm3402
        %v3404 = vsel %vm3403, %v3395, %v3400
        %v3405 = vrsqrt.pop %v3392
        %v3406 = vmul.f32 %v3405, %v3392
        %v3407 = vmul.f32 %v3406, %v3405
        %v3408 = vmul.f32 0.5, %v3407
        %v3409 = vsub.f32 1.5, %v3408
        %v3410 = vmul.f32 %v3405, %v3409
        %vm3411 = vweird.f32 %v3392
        %vm3412 = vweird.f32 %v3405
        %vm3413 = vmor %vm3411, %vm3412
        %v3414 = vsel %vm3413, %v3405, %v3410
        %v3415 = vrsqrt.pop %v3393
        %v3416 = vmul.f32 %v3415, %v3393
        %v3417 = vmul.f32 %v3416, %v3415
        %v3418 = vmul.f32 0.5, %v3417
        %v3419 = vsub.f32 1.5, %v3418
        %v3420 = vmul.f32 %v3415, %v3419
        %vm3421 = vweird.f32 %v3393
        %vm3422 = vweird.f32 %v3415
        %vm3423 = vmor %vm3421, %vm3422
        %v3424 = vsel %vm3423, %v3415, %v3420
        %v3425 = vrsqrt.pop %v3394
        %v3426 = vmul.f32 %v3425, %v3394
        %v3427 = vmul.f32 %v3426, %v3425
        %v3428 = vmul.f32 0.5, %v3427
        %v3429 = vsub.f32 1.5, %v3428
        %v3430 = vmul.f32 %v3425, %v3429
        %vm3431 = vweird.f32 %v3394
        %vm3432 = vweird.f32 %v3425
        %vm3433 = vmor %vm3431, %vm3432
        %v3434 = vsel %vm3433, %v3425, %v3430
        %v3435 = vmul.f32 %v3371, %v3404
        %v3436 = vmul.f32 %v3372, %v3414
        %v3437 = vmul.f32 %v3373, %v3424
        %v3438 = vmul.f32 %v3374, %v3434
        %v3440 = vperm.slane %v3357, 0
        %v3442 = vmul.f32 %v3435, %v3440
        %v3443 = vmul.f32 %v3436, %v3440
        %v3444 = vmul.f32 %v3437, %v3440
        %v3445 = vmul.f32 %v3438, %v3440
        %v3447 = vperm.slane %v3358, 0
        %v3449 = vadd.f32 %v3442, %v3447
        %v3450 = vadd.f32 %v3443, %v3447
        %v3451 = vadd.f32 %v3444, %v3447
        %v3452 = vadd.f32 %v3445, %v3447
        %v3453 = vpack.c.bf16 %v3450, %v3449
        %v3454 = vpack.c.bf16 %v3452, %v3451
        %v3455 = vld [vmem:[#allocation19] sm:$0xff]
        %v3456 = vld [vmem:[#allocation19 + $0x8] sm:$0xff]
        %v3457 = vld [vmem:[#allocation19 + $0x10] sm:$0xff]
        %v3458 = vld [vmem:[#allocation19 + $0x18] sm:$0xff]
        %v3459 = vld [vmem:[#allocation19 + $0x20] sm:$0xff]
        %v3460 = vld [vmem:[#allocation19 + $0x28] sm:$0xff]
        %v3461 = vld [vmem:[#allocation19 + $0x30] sm:$0xff]
        %v3462 = vld [vmem:[#allocation19 + $0x38] sm:$0xff]
        %v3463 = vld [vmem:[#allocation19 + $0x40] sm:$0xff]
        %v3464 = vld [vmem:[#allocation19 + $0x48] sm:$0xff]
        %v3465 = vld [vmem:[#allocation19 + $0x50] sm:$0xff]
        %v3466 = vld [vmem:[#allocation19 + $0x58] sm:$0xff]
        %v3467 = vld [vmem:[#allocation19 + $0x60] sm:$0xff]
        %v3468 = vld [vmem:[#allocation19 + $0x68] sm:$0xff]
        %v3469 = vld [vmem:[#allocation19 + $0x70] sm:$0xff]
        %v3470 = vld [vmem:[#allocation19 + $0x78] sm:$0xff]
        %v3471 = vld [vmem:[%s20] sm:$0x3]
        %v3473 = vperm.slane %v3471, 0
        %v3474 = vperm.slane %v3471, 1
        %v3493 = vunpack.c.l.b16 %v3455
        %v3494 = vunpack.c.h.b16 %v3455
        %v3495 = vunpack.c.l.b16 %v3456
        %v3496 = vunpack.c.h.b16 %v3456
        %v3497 = vunpack.c.l.b16 %v3457
        %v3498 = vunpack.c.h.b16 %v3457
        %v3499 = vunpack.c.l.b16 %v3458
        %v3500 = vunpack.c.h.b16 %v3458
        %v3501 = vunpack.c.l.b16 %v3459
        %v3502 = vunpack.c.h.b16 %v3459
        %v3503 = vunpack.c.l.b16 %v3460
        %v3504 = vunpack.c.h.b16 %v3460
        %v3505 = vunpack.c.l.b16 %v3461
        %v3506 = vunpack.c.h.b16 %v3461
        %v3507 = vunpack.c.l.b16 %v3462
        %v3508 = vunpack.c.h.b16 %v3462
        %v3509 = vunpack.c.l.b16 %v3463
        %v3510 = vunpack.c.h.b16 %v3463
        %v3511 = vunpack.c.l.b16 %v3464
        %v3512 = vunpack.c.h.b16 %v3464
        %v3513 = vunpack.c.l.b16 %v3465
        %v3514 = vunpack.c.h.b16 %v3465
        %v3515 = vunpack.c.l.b16 %v3466
        %v3516 = vunpack.c.h.b16 %v3466
        %v3517 = vunpack.c.l.b16 %v3467
        %v3518 = vunpack.c.h.b16 %v3467
        %v3519 = vunpack.c.l.b16 %v3468
        %v3520 = vunpack.c.h.b16 %v3468
        %v3521 = vunpack.c.l.b16 %v3469
        %v3522 = vunpack.c.h.b16 %v3469
        %v3523 = vunpack.c.l.b16 %v3470
        %v3524 = vunpack.c.h.b16 %v3470
        %v3525 = vpack.c.b16 %v3495, %v3493
        %v3526 = vpack.c.b16 %v3496, %v3494
        %v3527 = vpack.c.b16 %v3499, %v3497
        %v3528 = vpack.c.b16 %v3500, %v3498
        %v3529 = vpack.c.b16 %v3503, %v3501
        %v3530 = vpack.c.b16 %v3504, %v3502
        %v3531 = vpack.c.b16 %v3507, %v3505
        %v3532 = vpack.c.b16 %v3508, %v3506
        %v3533 = vpack.c.b16 %v3511, %v3509
        %v3534 = vpack.c.b16 %v3512, %v3510
        %v3535 = vpack.c.b16 %v3515, %v3513
        %v3536 = vpack.c.b16 %v3516, %v3514
        %v3537 = vpack.c.b16 %v3519, %v3517
        %v3538 = vpack.c.b16 %v3520, %v3518
        %v3539 = vpack.c.b16 %v3523, %v3521
        %v3540 = vpack.c.b16 %v3524, %v3522
        %3557 = vmatpush.bf16.msra.mxu0 %v3539
        %3558 = vmatpush.bf16.msra.mxu0 %v3537
        %3559 = vmatpush.bf16.msra.mxu0 %v3535
        %3560 = vmatpush.bf16.msra.mxu0 %v3533
        %3561 = vmatpush.bf16.msra.mxu0 %v3531
        %3562 = vmatpush.bf16.msra.mxu0 %v3529
        %3563 = vmatpush.bf16.msra.mxu0 %v3527
        %3564 = vmatpush.bf16.msra.mxu0 %v3525
        %3565 = vmatmul.bf16.gmra.mxu0 %v3453
        %v3566 = vpop.f32.mrf.mxu0
        %v3567 = vadd.f32 %v3473, %v3566
        %v3568 = vpop.f32.mrf.mxu0
        %v3569 = vadd.f32 %v3473, %v3568
        %3570 = vmatmul.bf16.gmra.mxu0 %v3454
        %v3571 = vpop.f32.mrf.mxu0
        %v3572 = vadd.f32 %v3473, %v3571
        %v3573 = vpop.f32.mrf.mxu0
        %v3574 = vadd.f32 %v3473, %v3573
        %3575 = vdwg.mxu0
        %3576 = vmatpush.bf16.msra.mxu0 %v3540
        %3577 = vmatpush.bf16.msra.mxu0 %v3538
        %3578 = vmatpush.bf16.msra.mxu0 %v3536
        %3579 = vmatpush.bf16.msra.mxu0 %v3534
        %3580 = vmatpush.bf16.msra.mxu0 %v3532
        %3581 = vmatpush.bf16.msra.mxu0 %v3530
        %3582 = vmatpush.bf16.msra.mxu0 %v3528
        %3583 = vmatpush.bf16.msra.mxu0 %v3526
        %3584 = vmatmul.bf16.gmra.mxu0 %v3453
        %v3585 = vpop.f32.mrf.mxu0
        %v3586 = vadd.f32 %v3474, %v3585
        %v3587 = vpop.f32.mrf.mxu0
        %v3588 = vadd.f32 %v3474, %v3587
        %3589 = vmatmul.bf16.gmra.mxu0 %v3454
        %v3590 = vpop.f32.mrf.mxu0
        %v3591 = vadd.f32 %v3474, %v3590
        %v3592 = vpop.f32.mrf.mxu0
        %v3593 = vadd.f32 %v3474, %v3592
        %3594 = vdwg.mxu0
        %v3595 = vmax.f32 %v3567, 0.0
        %v3596 = vmax.f32 %v3586, 0.0
        %v3597 = vmax.f32 %v3569, 0.0
        %v3598 = vmax.f32 %v3588, 0.0
        %v3599 = vmax.f32 %v3572, 0.0
        %v3600 = vmax.f32 %v3591, 0.0
        %v3601 = vmax.f32 %v3574, 0.0
        %v3602 = vmax.f32 %v3593, 0.0
        %v3603 = vpack.c.bf16 %v3597, %v3595
        %v3604 = vpack.c.bf16 %v3598, %v3596
        %v3605 = vpack.c.bf16 %v3601, %v3599
        %v3606 = vpack.c.bf16 %v3602, %v3600
        %v3607 = vld [vmem:[#allocation20] sm:$0xf]
        %v3608 = vld [vmem:[#allocation20 + $0x4] sm:$0xf]
        %v3609 = vld [vmem:[#allocation20 + $0x8] sm:$0xf]
        %v3610 = vld [vmem:[#allocation20 + $0xc] sm:$0xf]
        %v3611 = vld [vmem:[#allocation20 + $0x10] sm:$0xf]
        %v3612 = vld [vmem:[#allocation20 + $0x14] sm:$0xf]
        %v3613 = vld [vmem:[#allocation20 + $0x18] sm:$0xf]
        %v3614 = vld [vmem:[#allocation20 + $0x1c] sm:$0xf]
        %v3615 = vld [vmem:[#allocation20 + $0x20] sm:$0xf]
        %v3616 = vld [vmem:[#allocation20 + $0x24] sm:$0xf]
        %v3617 = vld [vmem:[#allocation20 + $0x28] sm:$0xf]
        %v3618 = vld [vmem:[#allocation20 + $0x2c] sm:$0xf]
        %v3619 = vld [vmem:[#allocation20 + $0x30] sm:$0xf]
        %v3620 = vld [vmem:[#allocation20 + $0x34] sm:$0xf]
        %v3621 = vld [vmem:[#allocation20 + $0x38] sm:$0xf]
        %v3622 = vld [vmem:[#allocation20 + $0x3c] sm:$0xf]
        %v3623 = vld [vmem:[#allocation20 + $0x40] sm:$0xf]
        %v3624 = vld [vmem:[#allocation20 + $0x44] sm:$0xf]
        %v3625 = vld [vmem:[#allocation20 + $0x48] sm:$0xf]
        %v3626 = vld [vmem:[#allocation20 + $0x4c] sm:$0xf]
        %v3627 = vld [vmem:[#allocation20 + $0x50] sm:$0xf]
        %v3628 = vld [vmem:[#allocation20 + $0x54] sm:$0xf]
        %v3629 = vld [vmem:[#allocation20 + $0x58] sm:$0xf]
        %v3630 = vld [vmem:[#allocation20 + $0x5c] sm:$0xf]
        %v3631 = vld [vmem:[#allocation20 + $0x60] sm:$0xf]
        %v3632 = vld [vmem:[#allocation20 + $0x64] sm:$0xf]
        %v3633 = vld [vmem:[#allocation20 + $0x68] sm:$0xf]
        %v3634 = vld [vmem:[#allocation20 + $0x6c] sm:$0xf]
        %v3635 = vld [vmem:[#allocation20 + $0x70] sm:$0xf]
        %v3636 = vld [vmem:[#allocation20 + $0x74] sm:$0xf]
        %v3637 = vld [vmem:[#allocation20 + $0x78] sm:$0xf]
        %v3638 = vld [vmem:[#allocation20 + $0x7c] sm:$0xf]
        %v3639 = vld [vmem:[%s22] sm:$0x1]
        %v3641 = vperm.slane %v3639, 0
        %v3675 = vunpack.c.l.b16 %v3607
        %v3676 = vunpack.c.l.b16 %v3608
        %v3677 = vunpack.c.l.b16 %v3609
        %v3678 = vunpack.c.l.b16 %v3610
        %v3679 = vunpack.c.l.b16 %v3611
        %v3680 = vunpack.c.l.b16 %v3612
        %v3681 = vunpack.c.l.b16 %v3613
        %v3682 = vunpack.c.l.b16 %v3614
        %v3683 = vunpack.c.l.b16 %v3615
        %v3684 = vunpack.c.l.b16 %v3616
        %v3685 = vunpack.c.l.b16 %v3617
        %v3686 = vunpack.c.l.b16 %v3618
        %v3687 = vunpack.c.l.b16 %v3619
        %v3688 = vunpack.c.l.b16 %v3620
        %v3689 = vunpack.c.l.b16 %v3621
        %v3690 = vunpack.c.l.b16 %v3622
        %v3691 = vunpack.c.l.b16 %v3623
        %v3692 = vunpack.c.l.b16 %v3624
        %v3693 = vunpack.c.l.b16 %v3625
        %v3694 = vunpack.c.l.b16 %v3626
        %v3695 = vunpack.c.l.b16 %v3627
        %v3696 = vunpack.c.l.b16 %v3628
        %v3697 = vunpack.c.l.b16 %v3629
        %v3698 = vunpack.c.l.b16 %v3630
        %v3699 = vunpack.c.l.b16 %v3631
        %v3700 = vunpack.c.l.b16 %v3632
        %v3701 = vunpack.c.l.b16 %v3633
        %v3702 = vunpack.c.l.b16 %v3634
        %v3703 = vunpack.c.l.b16 %v3635
        %v3704 = vunpack.c.l.b16 %v3636
        %v3705 = vunpack.c.l.b16 %v3637
        %v3706 = vunpack.c.l.b16 %v3638
        %v3707 = vpack.c.b16 %v3676, %v3675
        %v3708 = vpack.c.b16 %v3678, %v3677
        %v3709 = vpack.c.b16 %v3680, %v3679
        %v3710 = vpack.c.b16 %v3682, %v3681
        %v3711 = vpack.c.b16 %v3684, %v3683
        %v3712 = vpack.c.b16 %v3686, %v3685
        %v3713 = vpack.c.b16 %v3688, %v3687
        %v3714 = vpack.c.b16 %v3690, %v3689
        %v3715 = vpack.c.b16 %v3692, %v3691
        %v3716 = vpack.c.b16 %v3694, %v3693
        %v3717 = vpack.c.b16 %v3696, %v3695
        %v3718 = vpack.c.b16 %v3698, %v3697
        %v3719 = vpack.c.b16 %v3700, %v3699
        %v3720 = vpack.c.b16 %v3702, %v3701
        %v3721 = vpack.c.b16 %v3704, %v3703
        %v3722 = vpack.c.b16 %v3706, %v3705
        %3739 = vmatpush.bf16.msra.mxu0 %v3714
        %3740 = vmatpush.bf16.msra.mxu0 %v3713
        %3741 = vmatpush.bf16.msra.mxu0 %v3712
        %3742 = vmatpush.bf16.msra.mxu0 %v3711
        %3743 = vmatpush.bf16.msra.mxu0 %v3710
        %3744 = vmatpush.bf16.msra.mxu0 %v3709
        %3745 = vmatpush.bf16.msra.mxu0 %v3708
        %3746 = vmatpush.bf16.msra.mxu0 %v3707
        %3747 = vmatmul.bf16.gmra.mxu0 %v3603
        %v3748 = vpop.f32.mrf.mxu0
        %v3749 = vadd.f32 %v3641, %v3748
        %v3750 = vpop.f32.mrf.mxu0
        %v3751 = vadd.f32 %v3641, %v3750
        %3752 = vmatmul.bf16.gmra.mxu0 %v3605
        %v3753 = vpop.f32.mrf.mxu0
        %v3754 = vadd.f32 %v3641, %v3753
        %v3755 = vpop.f32.mrf.mxu0
        %v3756 = vadd.f32 %v3641, %v3755
        %3757 = vdwg.mxu0
        %3758 = vmatpush.bf16.msra.mxu0 %v3722
        %3759 = vmatpush.bf16.msra.mxu0 %v3721
        %3760 = vmatpush.bf16.msra.mxu0 %v3720
        %3761 = vmatpush.bf16.msra.mxu0 %v3719
        %3762 = vmatpush.bf16.msra.mxu0 %v3718
        %3763 = vmatpush.bf16.msra.mxu0 %v3717
        %3764 = vmatpush.bf16.msra.mxu0 %v3716
        %3765 = vmatpush.bf16.msra.mxu0 %v3715
        %3766 = vmatmul.bf16.gmra.mxu0 %v3604
        %v3767 = vpop.f32.mrf.mxu0
        %v3768 = vadd.f32 %v3749, %v3767
        %v3769 = vpop.f32.mrf.mxu0
        %v3770 = vadd.f32 %v3751, %v3769
        %3771 = vmatmul.bf16.gmra.mxu0 %v3606
        %v3772 = vpop.f32.mrf.mxu0
        %v3773 = vadd.f32 %v3754, %v3772
        %v3774 = vpop.f32.mrf.mxu0
        %v3775 = vadd.f32 %v3756, %v3774
        %3776 = vdwg.mxu0
        %v3777 = vadd.f32 %v3449, %v3768
        %v3778 = vadd.f32 %v3450, %v3770
        %v3779 = vadd.f32 %v3451, %v3773
        %v3780 = vadd.f32 %v3452, %v3775
        %v3781 = vld [vmem:[%s23] sm:$0x1]
        %v3782 = vld [vmem:[%s24] sm:$0x1]
        %3783 = vadd.xlane.f32.xlu0 %v3777
        %v3784 = vpop.xlane.xlu0 %3783
        %3785 = vadd.xlane.f32.xlu0 %v3778
        %v3786 = vpop.xlane.xlu0 %3785
        %3787 = vadd.xlane.f32.xlu0 %v3779
        %v3788 = vpop.xlane.xlu0 %3787
        %3789 = vadd.xlane.f32.xlu0 %v3780
        %v3790 = vpop.xlane.xlu0 %3789
        %v3791 = vmul.f32 %v3784, %v2164
        %v3792 = vmul.f32 %v3786, %v2164
        %v3793 = vmul.f32 %v3788, %v2164
        %v3794 = vmul.f32 %v3790, %v2164
        %v3795 = vsub.f32 %v3777, %v3791
        %v3796 = vsub.f32 %v3778, %v3792
        %v3797 = vsub.f32 %v3779, %v3793
        %v3798 = vsub.f32 %v3780, %v3794
        %v3799 = vmul.f32 %v3795, %v3795
        %v3800 = vmul.f32 %v3796, %v3796
        %v3801 = vmul.f32 %v3797, %v3797
        %v3802 = vmul.f32 %v3798, %v3798
        %3803 = vadd.xlane.f32.xlu0 %v3799
        %v3804 = vpop.xlane.xlu0 %3803
        %3805 = vadd.xlane.f32.xlu0 %v3800
        %v3806 = vpop.xlane.xlu0 %3805
        %3807 = vadd.xlane.f32.xlu0 %v3801
        %v3808 = vpop.xlane.xlu0 %3807
        %3809 = vadd.xlane.f32.xlu0 %v3802
        %v3810 = vpop.xlane.xlu0 %3809
        %v3811 = vmul.f32 %v3804, %v2164
        %v3812 = vmul.f32 %v3806, %v2164
        %v3813 = vmul.f32 %v3808, %v2164
        %v3814 = vmul.f32 %v3810, %v2164
        %v3815 = vadd.f32 %v3811, 1e-05
        %v3816 = vadd.f32 %v3812, 1e-05
        %v3817 = vadd.f32 %v3813, 1e-05
        %v3818 = vadd.f32 %v3814, 1e-05
        %v3819 = vrsqrt.pop %v3815
        %v3820 = vmul.f32 %v3819, %v3815
        %v3821 = vmul.f32 %v3820, %v3819
        %v3822 = vmul.f32 0.5, %v3821
        %v3823 = vsub.f32 1.5, %v3822
        %v3824 = vmul.f32 %v3819, %v3823
        %vm3825 = vweird.f32 %v3815
        %vm3826 = vweird.f32 %v3819
        %vm3827 = vmor %vm3825, %vm3826
        %v3828 = vsel %vm3827, %v3819, %v3824
        %v3829 = vrsqrt.pop %v3816
        %v3830 = vmul.f32 %v3829, %v3816
        %v3831 = vmul.f32 %v3830, %v3829
        %v3832 = vmul.f32 0.5, %v3831
        %v3833 = vsub.f32 1.5, %v3832
        %v3834 = vmul.f32 %v3829, %v3833
        %vm3835 = vweird.f32 %v3816
        %vm3836 = vweird.f32 %v3829
        %vm3837 = vmor %vm3835, %vm3836
        %v3838 = vsel %vm3837, %v3829, %v3834
        %v3839 = vrsqrt.pop %v3817
        %v3840 = vmul.f32 %v3839, %v3817
        %v3841 = vmul.f32 %v3840, %v3839
        %v3842 = vmul.f32 0.5, %v3841
        %v3843 = vsub.f32 1.5, %v3842
        %v3844 = vmul.f32 %v3839, %v3843
        %vm3845 = vweird.f32 %v3817
        %vm3846 = vweird.f32 %v3839
        %vm3847 = vmor %vm3845, %vm3846
        %v3848 = vsel %vm3847, %v3839, %v3844
        %v3849 = vrsqrt.pop %v3818
        %v3850 = vmul.f32 %v3849, %v3818
        %v3851 = vmul.f32 %v3850, %v3849
        %v3852 = vmul.f32 0.5, %v3851
        %v3853 = vsub.f32 1.5, %v3852
        %v3854 = vmul.f32 %v3849, %v3853
        %vm3855 = vweird.f32 %v3818
        %vm3856 = vweird.f32 %v3849
        %vm3857 = vmor %vm3855, %vm3856
        %v3858 = vsel %vm3857, %v3849, %v3854
        %v3859 = vmul.f32 %v3795, %v3828
        %v3860 = vmul.f32 %v3796, %v3838
        %v3861 = vmul.f32 %v3797, %v3848
        %v3862 = vmul.f32 %v3798, %v3858
        %v3864 = vperm.slane %v3781, 0
        %v3866 = vmul.f32 %v3859, %v3864
        %v3867 = vmul.f32 %v3860, %v3864
        %v3868 = vmul.f32 %v3861, %v3864
        %v3869 = vmul.f32 %v3862, %v3864
        %v3871 = vperm.slane %v3782, 0
        %v3873 = vadd.f32 %v3866, %v3871
        %v3874 = vadd.f32 %v3867, %v3871
        %v3875 = vadd.f32 %v3868, %v3871
        %v3876 = vadd.f32 %v3869, %v3871
        %v3877 = vpack.c.bf16 %v3873, %v3873
        %v3878 = vpack.c.bf16 %v3874, %v3874
        %v3879 = vpack.c.bf16 %v3875, %v3875
        %v3880 = vpack.c.bf16 %v3876, %v3876
        %3881 = vst [vmem:[%s1013] sm:$0xf] %v3877
        %3882 = vst [vmem:[%s1013 + $0x4] sm:$0xf] %v3878
        %3883 = vst [vmem:[%s1013 + $0x8] sm:$0xf] %v3879
        %3884 = vst [vmem:[%s1013 + $0xc] sm:$0xf] %v3880
        %s3885 = sand.u32 %s598, 1
        %s3886 = scalar_lea.sflag [#allocation4], %s3885
        %s3887 = sand.u32 %s598, 1
        %s3888 = smul.addr %s3887, 16
        %s3889 = scalar_lea.vmem [#allocation22], %s3888
        // Predicated region
        $region169: #{tpu_custom_call.1} parent=119 // pred_check
          %p3890 = pneg %p608
        $region170: #{tpu_custom_call.1} parent=119 // pred_check_branch
          %3892 = sbr.rel (%p3890) target = $region172
        $region171: #{tpu_custom_call.1} parent=119 // pred_region
          %s3893 = smul.u32 2, %s50
          %3895 = vsyncadd %s3886, 0
          %s3896 = smul.addr %s3893, 2
          %s3897 = smul.addr %s3896, 4
          %s3898 = scalar_lea.hbm %s25, %s3897
          %s3899 = sshll.u32 %s3889, 4
          %s3900 = int_to_ptr.vmem [resolvable:$true] %s3899
          %s3901 = sshll.u32 %s3898, 4
          %s3902 = int_to_ptr.hbm [resolvable:$true] %s3901
          %3907 = dma.vmem_to_hbm [thread:$0]  %s3900, 256, %s3902, %s3886, 64, 64, 4
        $region172: #{tpu_custom_call.1} parent=119 // pred_fallthru
          _
      $region120: #{tpu_custom_call.1} parent=5 // pred_fallthru
        _
      %p3908 = scmp.le.s32.totalorder 2, %s45
      // Predicated region
      $region173: #{tpu_custom_call.1} parent=5 // pred_check
        %p3909 = pneg %p3908
      $region174: #{tpu_custom_call.1} parent=5 // pred_check_branch
        %3911 = sbr.rel (%p3909) target = $region176
      $region175: #{tpu_custom_call.1} parent=5 // pred_region
        %s3912 = ssub.s32 %s45, 2
        // Predicated region
        $region177: #{tpu_custom_call.1} parent=175 // pred_check
          %p3913 = pneg %p614
        $region178: #{tpu_custom_call.1} parent=175 // pred_check_branch
          %3915 = sbr.rel (%p3913) target = $region180
        $region179: #{tpu_custom_call.1} parent=175 // pred_region
          %s3916 = sand.u32 %s599, 1
          %s3917 = scalar_lea.sflag [#allocation4], %s3916
          %s3918 = sand.u32 %s599, 1
          %s3919 = smul.addr %s3918, 16
          %s3920 = scalar_lea.vmem [#allocation22], %s3919
          %3922 = dma.done %s3917, 256
        $region180: #{tpu_custom_call.1} parent=175 // pred_fallthru
          _
      $region176: #{tpu_custom_call.1} parent=5 // pred_fallthru
        _
    $region6: #{tpu_custom_call.1} parent=1 // loop_footer
      %s49 = sadd.s32 1, %s45
    $region7: #{tpu_custom_call.1} parent=1 // loop_footer_branch
      %44 = sbr.rel target = $region3
    $region8: #{tpu_custom_call.1} parent=1 // loop_exit
      _
    %3923 = vsyncpa [#allocation3], 1
    %s3924 = scalar_lea.sflag [#allocation3], 1
    %3925 = vsyncpa %s3924, 1
    %3926 = vsyncpa [#allocation6], 1
    %s3927 = scalar_lea.sflag [#allocation6], 1
    %3928 = vsyncpa %s3927, 1
    %3929 = vsyncpa [#allocation9], 1
    %3930 = vsyncpa [#allocation12], 1
    %3931 = vsyncpa [#allocation15], 1
    %3932 = vsyncpa [#allocation18], 1
    %3933 = vsyncpa [#allocation21], 1
    %3934 = vsyncpa [#allocation4], 1
    %s3935 = scalar_lea.sflag [#allocation4], 1
    %3936 = vsyncpa %s3935, 1

// kernel: tpu_custom_call.1
$region0: #{tpu_custom_call.1}
  #allocation0 [shape = 'u32[]', space=smem, size = 0x4, offset = 0x4, fixed_abs, tag = 'smem constant byte address 0x4 - core index']
  #allocation1 [shape = 'u32[72,128]{1,0:T(1,128)}', space=vmem, size = 0x9000, scoped, tag = 'internal scratch']
  %s0 = inlined_call_operand.hbm [shape: bf16[4,16,128], index: 0, kind: input, shape index: {}]
  %s1 = inlined_call_operand.hbm [shape: bf16[4,16,128], index: 1, kind: input, shape index: {}]
  %s2 = inlined_call_operand.hbm [shape: f32[4,1,16], index: 2, kind: input, shape index: {}]
  %s3 = inlined_call_operand.hbm [shape: bf16[128,128], index: 3, kind: input, shape index: {}]
  %s4 = inlined_call_operand.hbm [shape: f32[1,128], index: 4, kind: input, shape index: {}]
  %s5 = inlined_call_operand.hbm [shape: bf16[128,256], index: 5, kind: input, shape index: {}]
  %s6 = inlined_call_operand.vmem [shape: f32[1,256], index: 6, kind: input, shape index: {}]
  %s7 = inlined_call_operand.hbm [shape: bf16[128,128], index: 7, kind: input, shape index: {}]
  %s8 = inlined_call_operand.vmem [shape: f32[1,128], index: 8, kind: input, shape index: {}]
  %s9 = inlined_call_operand.vmem [shape: f32[1,128], index: 9, kind: input, shape index: {}]
  %s10 = inlined_call_operand.vmem [shape: f32[1,128], index: 10, kind: input, shape index: {}]
  %s11 = inlined_call_operand.hbm [shape: bf16[128,128], index: 11, kind: input, shape index: {}]
  %s12 = inlined_call_operand.vmem [shape: f32[1,128], index: 12, kind: input, shape index: {}]
  %s13 = inlined_call_operand.hbm [shape: bf16[128,256], index: 13, kind: input, shape index: {}]
  %s14 = inlined_call_operand.vmem [shape: f32[1,256], index: 14, kind: input, shape index: {}]
  %s15 = inlined_call_operand.hbm [shape: bf16[128,128], index: 15, kind: input, shape index: {}]
  %s16 = inlined_call_operand.vmem [shape: f32[1,128], index: 16, kind: input, shape index: {}]
  %s17 = inlined_call_operand.vmem [shape: f32[1,128], index: 17, kind: input, shape index: {}]
  %s18 = inlined_call_operand.vmem [shape: f32[1,128], index: 18, kind: input, shape index: {}]
  %s19 = inlined_call_operand.hbm [shape: bf16[128,256], index: 19, kind: input, shape index: {}]
  %s20 = inlined_call_operand.vmem [shape: f32[1,256], index: 20, kind: input, shape index: {}]
  %s21 = inlined_call_operand.hbm [shape: bf16[256,128], index: 21, kind: input, shape index: {}]
  %s22 = inlined_call_operand.vmem [shape: f32[1,128], index: 22, kind: input, shape index: {}]
  %s23 = inlined_call_operand.vmem [shape: f32[1,128], index: 23, kind: input, shape index: {}]
  %s24 = inlined_call_operand.vmem [shape: f32[1,128], index: 24, kind: input, shape index: {}]
  %s25 = inlined_call_operand.hbm [shape: bf16[4,16,128], index: 25, kind: output, shape index: {}]
  %s26 = sld [smem:[#allocation0]]
  $region181: #{tpu_custom_call.1} parent=0
    _
  %s28 = ssub.s32 1, %s26
  %s29 = scalar_select 0, %s28, %s26
  $region1: #{tpu_custom_call.1} parent=0
    #allocation2 [shape = 'u8[16384]{0}', space=vmem, size = 0x4000, scoped, tag = 'input window, operand 0']
    #allocation3 [shape = 's32[2]{0}', space=sflag, size = 0x8, scoped, tag = 'scoped memory for tpu_custom_call.1']
    #allocation4 [shape = 's32[2]{0}', space=sflag, size = 0x8, scoped, tag = 'scoped memory for tpu_custom_call.1']
    #allocation5 [shape = 'u8[16384]{0}', space=vmem, size = 0x4000, scoped, tag = 'input window, operand 1']
    #allocation6 [shape = 's32[2]{0}', space=sflag, size = 0x8, scoped, tag = 'scoped memory for tpu_custom_call.1']
    #allocation7 [shape = 'u8[2048]{0}', space=vmem, size = 0x800, scoped, tag = 'input window, operand 2']
    #allocation8 [shape = 'u8[32768]{0}', space=vmem, size = 0x8000, scoped, tag = 'input window, operand 3, single buffered']
    #allocation9 [shape = 's32[1]{0}', space=sflag, size = 0x4, scoped, tag = 'scoped memory for tpu_custom_call.1']
    #allocation10 [shape = 'u8[512]{0}', space=vmem, size = 0x400, scoped, tag = 'input window, operand 4, single buffered']
    #allocation11 [shape = 'u8[65536]{0}', space=vmem, size = 0x10000, scoped, tag = 'input window, operand 5, single buffered']
    #allocation12 [shape = 's32[1]{0}', space=sflag, size = 0x4, scoped, tag = 'scoped memory for tpu_custom_call.1']
    #allocation13 [shape = 'u8[32768]{0}', space=vmem, size = 0x8000, scoped, tag = 'input window, operand 7, single buffered']
    #allocation14 [shape = 'u8[32768]{0}', space=vmem, size = 0x8000, scoped, tag = 'input window, operand 11, single buffered']
    #allocation15 [shape = 's32[1]{0}', space=sflag, size = 0x4, scoped, tag = 'scoped memory for tpu_custom_call.1']
    #allocation16 [shape = 'u8[65536]{0}', space=vmem, size = 0x10000, scoped, tag = 'input window, operand 13, single buffered']
    #allocation17 [shape = 'u8[32768]{0}', space=vmem, size = 0x8000, scoped, tag = 'input window, operand 15, single buffered']
    #allocation18 [shape = 's32[1]{0}', space=sflag, size = 0x4, scoped, tag = 'scoped memory for tpu_custom_call.1']
    #allocation19 [shape = 'u8[65536]{0}', space=vmem, size = 0x10000, scoped, tag = 'input window, operand 19, single buffered']
    #allocation20 [shape = 'u8[65536]{0}', space=vmem, size = 0x10000, scoped, tag = 'input window, operand 21, single buffered']
    #allocation21 [shape = 's32[1]{0}', space=sflag, size = 0x4, scoped, tag = 'scoped memory for tpu_custom_call.1']
    #allocation22 [shape = 'u8[16384]{0}', space=vmem, size = 0x4000, scoped, tag = 'output window, operand 0']
    %30 = vsyncpa [#allocation3], 0
    %s31 = scalar_lea.sflag [#allocation3], 1
    %32 = vsyncpa %s31, 0
    %33 = vsyncpa [#allocation6], 0
    %s34 = scalar_lea.sflag [#allocation6], 1
    %35 = vsyncpa %s34, 0
    %36 = vsyncpa [#allocation9], 0
    %37 = vsyncpa [#allocation12], 0
    %38 = vsyncpa [#allocation15], 0
    %39 = vsyncpa [#allocation18], 0
    %40 = vsyncpa [#allocation21], 0
    %41 = vsyncpa [#allocation4], 0
    %s42 = scalar_lea.sflag [#allocation4], 1
    %43 = vsyncpa %s42, 0
    loop: start=0, step=1, limit=4
    $region2: #{tpu_custom_call.1} parent=1 // loop_pre_header
      _
    $region3: #{tpu_custom_call.1} parent=1 // loop_header
      %s45 = sphi 0, %s49
      %p46 = scmp.ge.s32.totalorder %s45, 4
      %s55 = sphi 0, %s57
      %s58 = sphi 0, %s55
      %s59 = sphi 0, %s58
      %s75 = sphi 0, %s59
      %s81 = sphi 0, %s83
      %s84 = sphi 0, %s81
      %s85 = sphi 0, %s84
      %s101 = sphi 0, %s85
      %s107 = sphi 0, %s109
      %s110 = sphi 0, %s107
      %s111 = sphi 0, %s110
      %s127 = sphi 0, %s111
      %s131 = sphi 0, %s131
      %s133 = sphi 0, %s131
      %s134 = sphi 0, %s133
      %s148 = sphi 0, %s134
      %s152 = sphi 0, %s152
      %s154 = sphi 0, %s152
      %s155 = sphi 0, %s154
      %s169 = sphi 0, %s155
      %s173 = sphi 0, %s173
      %s175 = sphi 0, %s173
      %s176 = sphi 0, %s175
      %s190 = sphi 0, %s176
      %s194 = sphi 0, %s194
      %s196 = sphi 0, %s194
      %s197 = sphi 0, %s196
      %s211 = sphi 0, %s197
      %s215 = sphi 0, %s215
      %s217 = sphi 0, %s215
      %s218 = sphi 0, %s217
      %s232 = sphi 0, %s218
      %s236 = sphi 0, %s236
      %s238 = sphi 0, %s236
      %s239 = sphi 0, %s238
      %s253 = sphi 0, %s239
      %s257 = sphi 0, %s257
      %s259 = sphi 0, %s257
      %s260 = sphi 0, %s259
      %s274 = sphi 0, %s260
      %s278 = sphi 0, %s278
      %s280 = sphi 0, %s278
      %s281 = sphi 0, %s280
      %s295 = sphi 0, %s281
      %s299 = sphi 0, %s299
      %s301 = sphi 0, %s299
      %s302 = sphi 0, %s301
      %s316 = sphi 0, %s302
      %s320 = sphi 0, %s320
      %s322 = sphi 0, %s320
      %s323 = sphi 0, %s322
      %s337 = sphi 0, %s323
      %s341 = sphi 0, %s341
      %s343 = sphi 0, %s341
      %s344 = sphi 0, %s343
      %s358 = sphi 0, %s344
      %s362 = sphi 0, %s362
      %s364 = sphi 0, %s362
      %s365 = sphi 0, %s364
      %s379 = sphi 0, %s365
      %s383 = sphi 0, %s383
      %s385 = sphi 0, %s383
      %s386 = sphi 0, %s385
      %s400 = sphi 0, %s386
      %s404 = sphi 0, %s404
      %s406 = sphi 0, %s404
      %s407 = sphi 0, %s406
      %s421 = sphi 0, %s407
      %s425 = sphi 0, %s425
      %s427 = sphi 0, %s425
      %s428 = sphi 0, %s427
      %s442 = sphi 0, %s428
      %s446 = sphi 0, %s446
      %s448 = sphi 0, %s446
      %s449 = sphi 0, %s448
      %s463 = sphi 0, %s449
      %s467 = sphi 0, %s467
      %s469 = sphi 0, %s467
      %s470 = sphi 0, %s469
      %s484 = sphi 0, %s470
      %s488 = sphi 0, %s488
      %s490 = sphi 0, %s488
      %s491 = sphi 0, %s490
      %s505 = sphi 0, %s491
      %s509 = sphi 0, %s509
      %s511 = sphi 0, %s509
      %s512 = sphi 0, %s511
      %s526 = sphi 0, %s512
      %s530 = sphi 0, %s530
      %s532 = sphi 0, %s530
      %s533 = sphi 0, %s532
      %s547 = sphi 0, %s533
      %s551 = sphi 0, %s551
      %s553 = sphi 0, %s551
      %s554 = sphi 0, %s553
      %s568 = sphi 0, %s554
      %s572 = sphi 0, %s572
      %s574 = sphi 0, %s572
      %s575 = sphi 0, %s574
      %s589 = sphi 0, %s575
      %s595 = sphi 0, %s597
      %s598 = sphi 0, %s595
      %s599 = sphi 0, %s598
      %s615 = sphi 0, %s599
    $region4: #{tpu_custom_call.1} parent=1 // loop_header_branch
      %48 = sbr.rel (%p46) target = $region8
    $region5: #{tpu_custom_call.1} parent=1 // loop_body
      %s50 = ssub.s32 %s45, 1
      %s51 = ssub.s32 %s45, 2
      %s52 = sadd.s32 %s45, 1
      %s53 = ssub.s32 %s45, %s52
      %p54 = scmp.eq.s32.totalorder %s53, 0
      %s56 = sadd.s32 %s55, 1
      %s57 = scalar_select %p54, %s55, %s56
      %p60 = pneg %p54
      %p61 = scmp.eq.s32.totalorder %s45, 1
      %p62 = por %p60, %p61
      %p63 = scmp.ne.s32.totalorder %s55, %s58
      %p64 = scmp.eq.s32.totalorder %s45, 0
      %p65 = por %p63, %p64
      %p66 = scmp.ne.s32.totalorder %s55, %s58
      %p67 = scmp.eq.s32.totalorder %s50, 1
      %p68 = por %p66, %p67
      %p69 = scmp.ne.s32.totalorder %s58, %s59
      %p70 = scmp.eq.s32.totalorder %s50, 0
      %p71 = por %p69, %p70
      %p72 = scmp.ne.s32.totalorder %s58, %s59
      %p73 = scmp.eq.s32.totalorder %s51, 1
      %p74 = por %p72, %p73
      %p76 = scmp.ne.s32.totalorder %s59, %s75
      %p77 = scmp.eq.s32.totalorder %s51, 0
      %p78 = por %p76, %p77
      %s79 = ssub.s32 %s45, %s52
      %p80 = scmp.eq.s32.totalorder %s79, 0
      %s82 = sadd.s32 %s81, 1
      %s83 = scalar_select %p80, %s81, %s82
      %p86 = pneg %p80
      %p87 = scmp.eq.s32.totalorder %s45, 1
      %p88 = por %p86, %p87
      %p89 = scmp.ne.s32.totalorder %s81, %s84
      %p90 = scmp.eq.s32.totalorder %s45, 0
      %p91 = por %p89, %p90
      %p92 = scmp.ne.s32.totalorder %s81, %s84
      %p93 = scmp.eq.s32.totalorder %s50, 1
      %p94 = por %p92, %p93
      %p95 = scmp.ne.s32.totalorder %s84, %s85
      %p96 = scmp.eq.s32.totalorder %s50, 0
      %p97 = por %p95, %p96
      %p98 = scmp.ne.s32.totalorder %s84, %s85
      %p99 = scmp.eq.s32.totalorder %s51, 1
      %p100 = por %p98, %p99
      %p102 = scmp.ne.s32.totalorder %s85, %s101
      %p103 = scmp.eq.s32.totalorder %s51, 0
      %p104 = por %p102, %p103
      %s105 = ssub.s32 %s45, %s52
      %p106 = scmp.eq.s32.totalorder %s105, 0
      %s108 = sadd.s32 %s107, 1
      %s109 = scalar_select %p106, %s107, %s108
      %p112 = pneg %p106
      %p113 = scmp.eq.s32.totalorder %s45, 1
      %p114 = por %p112, %p113
      %p115 = scmp.ne.s32.totalorder %s107, %s110
      %p116 = scmp.eq.s32.totalorder %s45, 0
      %p117 = por %p115, %p116
      %p118 = scmp.ne.s32.totalorder %s107, %s110
      %p119 = scmp.eq.s32.totalorder %s50, 1
      %p120 = por %p118, %p119
      %p121 = scmp.ne.s32.totalorder %s110, %s111
      %p122 = scmp.eq.s32.totalorder %s50, 0
      %p123 = por %p121, %p122
      %p124 = scmp.ne.s32.totalorder %s110, %s111
      %p125 = scmp.eq.s32.totalorder %s51, 1
      %p126 = por %p124, %p125
      %p128 = scmp.ne.s32.totalorder %s111, %s127
      %p129 = scmp.eq.s32.totalorder %s51, 0
      %p130 = por %p128, %p129
      %s132 = sadd.s32 %s131, 1
      %p135 = scmp.eq.s32.totalorder %s45, 1
      %p136 = scmp.ne.s32.totalorder %s131, %s133
      %p137 = scmp.eq.s32.totalorder %s45, 0
      %p138 = por %p136, %p137
      %p139 = scmp.ne.s32.totalorder %s131, %s133
      %p140 = scmp.eq.s32.totalorder %s50, 1
      %p141 = por %p139, %p140
      %p142 = scmp.ne.s32.totalorder %s133, %s134
      %p143 = scmp.eq.s32.totalorder %s50, 0
      %p144 = por %p142, %p143
      %p145 = scmp.ne.s32.totalorder %s133, %s134
      %p146 = scmp.eq.s32.totalorder %s51, 1
      %p147 = por %p145, %p146
      %p149 = scmp.ne.s32.totalorder %s134, %s148
      %p150 = scmp.eq.s32.totalorder %s51, 0
      %p151 = por %p149, %p150
      %s153 = sadd.s32 %s152, 1
      %p156 = scmp.eq.s32.totalorder %s45, 1
      %p157 = scmp.ne.s32.totalorder %s152, %s154
      %p158 = scmp.eq.s32.totalorder %s45, 0
      %p159 = por %p157, %p158
      %p160 = scmp.ne.s32.totalorder %s152, %s154
      %p161 = scmp.eq.s32.totalorder %s50, 1
      %p162 = por %p160, %p161
      %p163 = scmp.ne.s32.totalorder %s154, %s155
      %p164 = scmp.eq.s32.totalorder %s50, 0
      %p165 = por %p163, %p164
      %p166 = scmp.ne.s32.totalorder %s154, %s155
      %p167 = scmp.eq.s32.totalorder %s51, 1
      %p168 = por %p166, %p167
      %p170 = scmp.ne.s32.totalorder %s155, %s169
      %p171 = scmp.eq.s32.totalorder %s51, 0
      %p172 = por %p170, %p171
      %s174 = sadd.s32 %s173, 1
      %p177 = scmp.eq.s32.totalorder %s45, 1
      %p178 = scmp.ne.s32.totalorder %s173, %s175
      %p179 = scmp.eq.s32.totalorder %s45, 0
      %p180 = por %p178, %p179
      %p181 = scmp.ne.s32.totalorder %s173, %s175
      %p182 = scmp.eq.s32.totalorder %s50, 1
      %p183 = por %p181, %p182
      %p184 = scmp.ne.s32.totalorder %s175, %s176
      %p185 = scmp.eq.s32.totalorder %s50, 0
      %p186 = por %p184, %p185
      %p187 = scmp.ne.s32.totalorder %s175, %s176
      %p188 = scmp.eq.s32.totalorder %s51, 1
      %p189 = por %p187, %p188
      %p191 = scmp.ne.s32.totalorder %s176, %s190
      %p192 = scmp.eq.s32.totalorder %s51, 0
      %p193 = por %p191, %p192
      %s195 = sadd.s32 %s194, 1
      %p198 = scmp.eq.s32.totalorder %s45, 1
      %p199 = scmp.ne.s32.totalorder %s194, %s196
      %p200 = scmp.eq.s32.totalorder %s45, 0
      %p201 = por %p199, %p200
      %p202 = scmp.ne.s32.totalorder %s194, %s196
      %p203 = scmp.eq.s32.totalorder %s50, 1
      %p204 = por %p202, %p203
      %p205 = scmp.ne.s32.totalorder %s196, %s197
      %p206 = scmp.eq.s32.totalorder %s50, 0
      %p207 = por %p205, %p206
      %p208 = scmp.ne.s32.totalorder %s196, %s197
      %p209 = scmp.eq.s32.totalorder %s51, 1
      %p210 = por %p208, %p209
      %p212 = scmp.ne.s32.totalorder %s197, %s211
      %p213 = scmp.eq.s32.totalorder %s51, 0
      %p214 = por %p212, %p213
      %s216 = sadd.s32 %s215, 1
      %p219 = scmp.eq.s32.totalorder %s45, 1
      %p220 = scmp.ne.s32.totalorder %s215, %s217
      %p221 = scmp.eq.s32.totalorder %s45, 0
      %p222 = por %p220, %p221
      %p223 = scmp.ne.s32.totalorder %s215, %s217
      %p224 = scmp.eq.s32.totalorder %s50, 1
      %p225 = por %p223, %p224
      %p226 = scmp.ne.s32.totalorder %s217, %s218
      %p227 = scmp.eq.s32.totalorder %s50, 0
      %p228 = por %p226, %p227
      %p229 = scmp.ne.s32.totalorder %s217, %s218
      %p230 = scmp.eq.s32.totalorder %s51, 1
      %p231 = por %p229, %p230
      %p233 = scmp.ne.s32.totalorder %s218, %s232
      %p234 = scmp.eq.s32.totalorder %s51, 0
      %p235 = por %p233, %p234
      %s237 = sadd.s32 %s236, 1
      %p240 = scmp.eq.s32.totalorder %s45, 1
      %p241 = scmp.ne.s32.totalorder %s236, %s238
      %p242 = scmp.eq.s32.totalorder %s45, 0
      %p243 = por %p241, %p242
      %p244 = scmp.ne.s32.totalorder %s236, %s238
      %p245 = scmp.eq.s32.totalorder %s50, 1
      %p246 = por %p244, %p245
      %p247 = scmp.ne.s32.totalorder %s238, %s239
      %p248 = scmp.eq.s32.totalorder %s50, 0
      %p249 = por %p247, %p248
      %p250 = scmp.ne.s32.totalorder %s238, %s239
      %p251 = scmp.eq.s32.totalorder %s51, 1
      %p252 = por %p250, %p251
      %p254 = scmp.ne.s32.totalorder %s239, %s253
      %p255 = scmp.eq.s32.totalorder %s51, 0
      %p256 = por %p254, %p255
      %s258 = sadd.s32 %s257, 1
      %p261 = scmp.eq.s32.totalorder %s45, 1
      %p262 = scmp.ne.s32.totalorder %s257, %s259
      %p263 = scmp.eq.s32.totalorder %s45, 0
      %p264 = por %p262, %p263
      %p265 = scmp.ne.s32.totalorder %s257, %s259
      %p266 = scmp.eq.s32.totalorder %s50, 1
      %p267 = por %p265, %p266
      %p268 = scmp.ne.s32.totalorder %s259, %s260
      %p269 = scmp.eq.s32.totalorder %s50, 0
      %p270 = por %p268, %p269
      %p271 = scmp.ne.s32.totalorder %s259, %s260
      %p272 = scmp.eq.s32.totalorder %s51, 1
      %p273 = por %p271, %p272
      %p275 = scmp.ne.s32.totalorder %s260, %s274
      %p276 = scmp.eq.s32.totalorder %s51, 0
      %p277 = por %p275, %p276
      %s279 = sadd.s32 %s278, 1
      %p282 = scmp.eq.s32.totalorder %s45, 1
      %p283 = scmp.ne.s32.totalorder %s278, %s280
      %p284 = scmp.eq.s32.totalorder %s45, 0
      %p285 = por %p283, %p284
      %p286 = scmp.ne.s32.totalorder %s278, %s280
      %p287 = scmp.eq.s32.totalorder %s50, 1
      %p288 = por %p286, %p287
      %p289 = scmp.ne.s32.totalorder %s280, %s281
      %p290 = scmp.eq.s32.totalorder %s50, 0
      %p291 = por %p289, %p290
      %p292 = scmp.ne.s32.totalorder %s280, %s281
      %p293 = scmp.eq.s32.totalorder %s51, 1
      %p294 = por %p292, %p293
      %p296 = scmp.ne.s32.totalorder %s281, %s295
      %p297 = scmp.eq.s32.totalorder %s51, 0
      %p298 = por %p296, %p297
      %s300 = sadd.s32 %s299, 1
      %p303 = scmp.eq.s32.totalorder %s45, 1
      %p304 = scmp.ne.s32.totalorder %s299, %s301
      %p305 = scmp.eq.s32.totalorder %s45, 0
      %p306 = por %p304, %p305
      %p307 = scmp.ne.s32.totalorder %s299, %s301
      %p308 = scmp.eq.s32.totalorder %s50, 1
      %p309 = por %p307, %p308
      %p310 = scmp.ne.s32.totalorder %s301, %s302
      %p311 = scmp.eq.s32.totalorder %s50, 0
      %p312 = por %p310, %p311
      %p313 = scmp.ne.s32.totalorder %s301, %s302
      %p314 = scmp.eq.s32.totalorder %s51, 1
      %p315 = por %p313, %p314
      %p317 = scmp.ne.s32.totalorder %s302, %s316
      %p318 = scmp.eq.s32.totalorder %s51, 0
      %p319 = por %p317, %p318
      %s321 = sadd.s32 %s320, 1
      %p324 = scmp.eq.s32.totalorder %s45, 1
      %p325 = scmp.ne.s32.totalorder %s320, %s322
      %p326 = scmp.eq.s32.totalorder %s45, 0
      %p327 = por %p325, %p326
      %p328 = scmp.ne.s32.totalorder %s320, %s322
      %p329 = scmp.eq.s32.totalorder %s50, 1
      %p330 = por %p328, %p329
      %p331 = scmp.ne.s32.totalorder %s322, %s323
      %p332 = scmp.eq.s32.totalorder %s50, 0
      %p333 = por %p331, %p332
      %p334 = scmp.ne.s32.totalorder %s322, %s323
      %p335 = scmp.eq.s32.totalorder %s51, 1
      %p336 = por %p334, %p335
      %p338 = scmp.ne.s32.totalorder %s323, %s337
      %p339 = scmp.eq.s32.totalorder %s51, 0
      %p340 = por %p338, %p339
      %s342 = sadd.s32 %s341, 1
      %p345 = scmp.eq.s32.totalorder %s45, 1
      %p346 = scmp.ne.s32.totalorder %s341, %s343
      %p347 = scmp.eq.s32.totalorder %s45, 0
      %p348 = por %p346, %p347
      %p349 = scmp.ne.s32.totalorder %s341, %s343
      %p350 = scmp.eq.s32.totalorder %s50, 1
      %p351 = por %p349, %p350
      %p352 = scmp.ne.s32.totalorder %s343, %s344
      %p353 = scmp.eq.s32.totalorder %s50, 0
      %p354 = por %p352, %p353
      %p355 = scmp.ne.s32.totalorder %s343, %s344
      %p356 = scmp.eq.s32.totalorder %s51, 1
      %p357 = por %p355, %p356
      %p359 = scmp.ne.s32.totalorder %s344, %s358
      %p360 = scmp.eq.s32.totalorder %s51, 0
      %p361 = por %p359, %p360
      %s363 = sadd.s32 %s362, 1
      %p366 = scmp.eq.s32.totalorder %s45, 1
      %p367 = scmp.ne.s32.totalorder %s362, %s364
      %p368 = scmp.eq.s32.totalorder %s45, 0
      %p369 = por %p367, %p368
      %p370 = scmp.ne.s32.totalorder %s362, %s364
      %p371 = scmp.eq.s32.totalorder %s50, 1
      %p372 = por %p370, %p371
      %p373 = scmp.ne.s32.totalorder %s364, %s365
      %p374 = scmp.eq.s32.totalorder %s50, 0
      %p375 = por %p373, %p374
      %p376 = scmp.ne.s32.totalorder %s364, %s365
      %p377 = scmp.eq.s32.totalorder %s51, 1
      %p378 = por %p376, %p377
      %p380 = scmp.ne.s32.totalorder %s365, %s379
      %p381 = scmp.eq.s32.totalorder %s51, 0
      %p382 = por %p380, %p381
      %s384 = sadd.s32 %s383, 1
      %p387 = scmp.eq.s32.totalorder %s45, 1
      %p388 = scmp.ne.s32.totalorder %s383, %s385
      %p389 = scmp.eq.s32.totalorder %s45, 0
      %p390 = por %p388, %p389
      %p391 = scmp.ne.s32.totalorder %s383, %s385
      %p392 = scmp.eq.s32.totalorder %s50, 1
      %p393 = por %p391, %p392
      %p394 = scmp.ne.s32.totalorder %s385, %s386
      %p395 = scmp.eq.s32.totalorder %s50, 0
      %p396 = por %p394, %p395
      %p397 = scmp.ne.s32.totalorder %s385, %s386
      %p398 = scmp.eq.s32.totalorder %s51, 1
      %p399 = por %p397, %p398
      %p401 = scmp.ne.s32.totalorder %s386, %s400
      %p402 = scmp.eq.s32.totalorder %s51, 0
      %p403 = por %p401, %p402
      %s405 = sadd.s32 %s404, 1
      %p408 = scmp.eq.s32.totalorder %s45, 1
      %p409 = scmp.ne.s32.totalorder %s404, %s406
      %p410 = scmp.eq.s32.totalorder %s45, 0
      %p411 = por %p409, %p410
      %p412 = scmp.ne.s32.totalorder %s404, %s406
      %p413 = scmp.eq.s32.totalorder %s50, 1
      %p414 = por %p412, %p413
      %p415 = scmp.ne.s32.totalorder %s406, %s407
      %p416 = scmp.eq.s32.totalorder %s50, 0
      %p417 = por %p415, %p416
      %p418 = scmp.ne.s32.totalorder %s406, %s407
      %p419 = scmp.eq.s32.totalorder %s51, 1
      %p420 = por %p418, %p419
      %p422 = scmp.ne.s32.totalorder %s407, %s421
      %p423 = scmp.eq.s32.totalorder %s51, 0
      %p424 = por %p422, %p423
      %s426 = sadd.s32 %s425, 1
      %p429 = scmp.eq.s32.totalorder %s45, 1
      %p430 = scmp.ne.s32.totalorder %s425, %s427
      %p431 = scmp.eq.s32.totalorder %s45, 0
      %p432 = por %p430, %p431
      %p433 = scmp.ne.s32.totalorder %s425, %s427
      %p434 = scmp.eq.s32.totalorder %s50, 1
      %p435 = por %p433, %p434
      %p436 = scmp.ne.s32.totalorder %s427, %s428
      %p437 = scmp.eq.s32.totalorder %s50, 0
      %p438 = por %p436, %p437
      %p439 = scmp.ne.s32.totalorder %s427, %s428
      %p440 = scmp.eq.s32.totalorder %s51, 1
      %p441 = por %p439, %p440
      %p443 = scmp.ne.s32.totalorder %s428, %s442
      %p444 = scmp.eq.s32.totalorder %s51, 0
      %p445 = por %p443, %p444
      %s447 = sadd.s32 %s446, 1
      %p450 = scmp.eq.s32.totalorder %s45, 1
      %p451 = scmp.ne.s32.totalorder %s446, %s448
      %p452 = scmp.eq.s32.totalorder %s45, 0
      %p453 = por %p451, %p452
      %p454 = scmp.ne.s32.totalorder %s446, %s448
      %p455 = scmp.eq.s32.totalorder %s50, 1
      %p456 = por %p454, %p455
      %p457 = scmp.ne.s32.totalorder %s448, %s449
      %p458 = scmp.eq.s32.totalorder %s50, 0
      %p459 = por %p457, %p458
      %p460 = scmp.ne.s32.totalorder %s448, %s449
      %p461 = scmp.eq.s32.totalorder %s51, 1
      %p462 = por %p460, %p461
      %p464 = scmp.ne.s32.totalorder %s449, %s463
      %p465 = scmp.eq.s32.totalorder %s51, 0
      %p466 = por %p464, %p465
      %s468 = sadd.s32 %s467, 1
      %p471 = scmp.eq.s32.totalorder %s45, 1
      %p472 = scmp.ne.s32.totalorder %s467, %s469
      %p473 = scmp.eq.s32.totalorder %s45, 0
      %p474 = por %p472, %p473
      %p475 = scmp.ne.s32.totalorder %s467, %s469
      %p476 = scmp.eq.s32.totalorder %s50, 1
      %p477 = por %p475, %p476
      %p478 = scmp.ne.s32.totalorder %s469, %s470
      %p479 = scmp.eq.s32.totalorder %s50, 0
      %p480 = por %p478, %p479
      %p481 = scmp.ne.s32.totalorder %s469, %s470
      %p482 = scmp.eq.s32.totalorder %s51, 1
      %p483 = por %p481, %p482
      %p485 = scmp.ne.s32.totalorder %s470, %s484
      %p486 = scmp.eq.s32.totalorder %s51, 0
      %p487 = por %p485, %p486
      %s489 = sadd.s32 %s488, 1
      %p492 = scmp.eq.s32.totalorder %s45, 1
      %p493 = scmp.ne.s32.totalorder %s488, %s490
      %p494 = scmp.eq.s32.totalorder %s45, 0
      %p495 = por %p493, %p494
      %p496 = scmp.ne.s32.totalorder %s488, %s490
      %p497 = scmp.eq.s32.totalorder %s50, 1
      %p498 = por %p496, %p497
      %p499 = scmp.ne.s32.totalorder %s490, %s491
      %p500 = scmp.eq.s32.totalorder %s50, 0
      %p501 = por %p499, %p500
      %p502 = scmp.ne.s32.totalorder %s490, %s491
      %p503 = scmp.eq.s32.totalorder %s51, 1
      %p504 = por %p502, %p503
      %p506 = scmp.ne.s32.totalorder %s491, %s505
      %p507 = scmp.eq.s32.totalorder %s51, 0
      %p508 = por %p506, %p507
      %s510 = sadd.s32 %s509, 1
      %p513 = scmp.eq.s32.totalorder %s45, 1
      %p514 = scmp.ne.s32.totalorder %s509, %s511
      %p515 = scmp.eq.s32.totalorder %s45, 0
      %p516 = por %p514, %p515
      %p517 = scmp.ne.s32.totalorder %s509, %s511
      %p518 = scmp.eq.s32.totalorder %s50, 1
      %p519 = por %p517, %p518
      %p520 = scmp.ne.s32.totalorder %s511, %s512
      %p521 = scmp.eq.s32.totalorder %s50, 0
      %p522 = por %p520, %p521
      %p523 = scmp.ne.s32.totalorder %s511, %s512
      %p524 = scmp.eq.s32.totalorder %s51, 1
      %p525 = por %p523, %p524
      %p527 = scmp.ne.s32.totalorder %s512, %s526
      %p528 = scmp.eq.s32.totalorder %s51, 0
      %p529 = por %p527, %p528
      %s531 = sadd.s32 %s530, 1
      %p534 = scmp.eq.s32.totalorder %s45, 1
      %p535 = scmp.ne.s32.totalorder %s530, %s532
      %p536 = scmp.eq.s32.totalorder %s45, 0
      %p537 = por %p535, %p536
      %p538 = scmp.ne.s32.totalorder %s530, %s532
      %p539 = scmp.eq.s32.totalorder %s50, 1
      %p540 = por %p538, %p539
      %p541 = scmp.ne.s32.totalorder %s532, %s533
      %p542 = scmp.eq.s32.totalorder %s50, 0
      %p543 = por %p541, %p542
      %p544 = scmp.ne.s32.totalorder %s532, %s533
      %p545 = scmp.eq.s32.totalorder %s51, 1
      %p546 = por %p544, %p545
      %p548 = scmp.ne.s32.totalorder %s533, %s547
      %p549 = scmp.eq.s32.totalorder %s51, 0
      %p550 = por %p548, %p549
      %s552 = sadd.s32 %s551, 1
      %p555 = scmp.eq.s32.totalorder %s45, 1
      %p556 = scmp.ne.s32.totalorder %s551, %s553
      %p557 = scmp.eq.s32.totalorder %s45, 0
      %p558 = por %p556, %p557
      %p559 = scmp.ne.s32.totalorder %s551, %s553
      %p560 = scmp.eq.s32.totalorder %s50, 1
      %p561 = por %p559, %p560
      %p562 = scmp.ne.s32.totalorder %s553, %s554
      %p563 = scmp.eq.s32.totalorder %s50, 0
      %p564 = por %p562, %p563
      %p565 = scmp.ne.s32.totalorder %s553, %s554
      %p566 = scmp.eq.s32.totalorder %s51, 1
      %p567 = por %p565, %p566
      %p569 = scmp.ne.s32.totalorder %s554, %s568
      %p570 = scmp.eq.s32.totalorder %s51, 0
      %p571 = por %p569, %p570
      %s573 = sadd.s32 %s572, 1
      %p576 = scmp.eq.s32.totalorder %s45, 1
      %p577 = scmp.ne.s32.totalorder %s572, %s574
      %p578 = scmp.eq.s32.totalorder %s45, 0
      %p579 = por %p577, %p578
      %p580 = scmp.ne.s32.totalorder %s572, %s574
      %p581 = scmp.eq.s32.totalorder %s50, 1
      %p582 = por %p580, %p581
      %p583 = scmp.ne.s32.totalorder %s574, %s575
      %p584 = scmp.eq.s32.totalorder %s50, 0
      %p585 = por %p583, %p584
      %p586 = scmp.ne.s32.totalorder %s574, %s575
      %p587 = scmp.eq.s32.totalorder %s51, 1
      %p588 = por %p586, %p587
      %p590 = scmp.ne.s32.totalorder %s575, %s589
      %p591 = scmp.eq.s32.totalorder %s51, 0
      %p592 = por %p590, %p591
      %s593 = ssub.s32 %s45, %s52
      %p594 = scmp.eq.s32.totalorder %s593, 0
      %s596 = sadd.s32 %s595, 1
      %s597 = scalar_select %p594, %s595, %s596
      %p600 = pneg %p594
      %p601 = scmp.eq.s32.totalorder %s45, 1
      %p602 = por %p600, %p601
      %p603 = scmp.ne.s32.totalorder %s595, %s598
      %p604 = scmp.eq.s32.totalorder %s45, 0
      %p605 = por %p603, %p604
      %p606 = scmp.ne.s32.totalorder %s595, %s598
      %p607 = scmp.eq.s32.totalorder %s50, 1
      %p608 = por %p606, %p607
      %p609 = scmp.ne.s32.totalorder %s598, %s599
      %p610 = scmp.eq.s32.totalorder %s50, 0
      %p611 = por %p609, %p610
      %p612 = scmp.ne.s32.totalorder %s598, %s599
      %p613 = scmp.eq.s32.totalorder %s51, 1
      %p614 = por %p612, %p613
      %p616 = scmp.ne.s32.totalorder %s599, %s615
      %p617 = scmp.eq.s32.totalorder %s51, 0
      %p618 = por %p616, %p617
      %p619 = scmp.le.s32.totalorder 1, %s45
      %p620 = scmp.lt.s32.totalorder %s45, 3
      %p621 = pnand %p619, %p620
      %p622 = pneg %p621
      // Predicated region
      $region9: #{tpu_custom_call.1} parent=5 // pred_check
        _
      $region10: #{tpu_custom_call.1} parent=5 // pred_check_branch
        %624 = sbr.rel (%p621) target = $region12
      $region11: #{tpu_custom_call.1} parent=5 // pred_region
        %s625 = ssub.s32 %s45, 1
        // Predicated region
        $region13: #{tpu_custom_call.1} parent=11 // pred_check
          %p626 = pneg %p144
        $region14: #{tpu_custom_call.1} parent=11 // pred_check_branch
          %628 = sbr.rel (%p626) target = $region16
        $region15: #{tpu_custom_call.1} parent=11 // pred_region
          %630 = vsyncadd [#allocation9], 0
          %s631 = sshll.u32 %s3, 4
          %s632 = int_to_ptr.hbm [resolvable:$true] %s631
          %s633 = sshll.u32 [#allocation8], 4
          %s634 = int_to_ptr.vmem [resolvable:$true] %s633
          %639 = dma.hbm_to_vmem [thread:$0]  %s632, 1024, %s634, [#allocation9], 64, 64, 4
        $region16: #{tpu_custom_call.1} parent=11 // pred_fallthru
          _
        // Predicated region
        $region17: #{tpu_custom_call.1} parent=11 // pred_check
          %p640 = pneg %p165
        $region18: #{tpu_custom_call.1} parent=11 // pred_check_branch
          %642 = sbr.rel (%p640) target = $region20
        $region19: #{tpu_custom_call.1} parent=11 // pred_region
          %644 = vsyncadd [#allocation9], 0
          %s646 = sshll.u32 %s4, 4
          %s647 = int_to_ptr.hbm [resolvable:$true] %s646
          %s648 = sshll.u32 [#allocation10], 4
          %s649 = int_to_ptr.vmem [resolvable:$true] %s648
          %651 = dma.hbm_to_vmem [thread:$0]  %s647, 16, %s649, [#allocation9]
        $region20: #{tpu_custom_call.1} parent=11 // pred_fallthru
          _
        // Predicated region
        $region21: #{tpu_custom_call.1} parent=11 // pred_check
          %p652 = pneg %p186
        $region22: #{tpu_custom_call.1} parent=11 // pred_check_branch
          %654 = sbr.rel (%p652) target = $region24
        $region23: #{tpu_custom_call.1} parent=11 // pred_region
          %656 = vsyncadd [#allocation12], 0
          %s657 = sshll.u32 %s5, 4
          %s658 = int_to_ptr.hbm [resolvable:$true] %s657
          %s659 = sshll.u32 [#allocation11], 4
          %s660 = int_to_ptr.vmem [resolvable:$true] %s659
          %665 = dma.hbm_to_vmem [thread:$0]  %s658, 2048, %s660, [#allocation12], 128, 128, 8
        $region24: #{tpu_custom_call.1} parent=11 // pred_fallthru
          _
        // Predicated region
        $region25: #{tpu_custom_call.1} parent=11 // pred_check
          %p666 = pneg %p207
        $region26: #{tpu_custom_call.1} parent=11 // pred_check_branch
          %668 = sbr.rel (%p666) target = $region28
        $region27: #{tpu_custom_call.1} parent=11 // pred_region
          _
        $region28: #{tpu_custom_call.1} parent=11 // pred_fallthru
          _
        // Predicated region
        $region29: #{tpu_custom_call.1} parent=11 // pred_check
          %p669 = pneg %p228
        $region30: #{tpu_custom_call.1} parent=11 // pred_check_branch
          %671 = sbr.rel (%p669) target = $region32
        $region31: #{tpu_custom_call.1} parent=11 // pred_region
          %673 = vsyncadd [#allocation12], 0
          %s674 = sshll.u32 %s7, 4
          %s675 = int_to_ptr.hbm [resolvable:$true] %s674
          %s676 = sshll.u32 [#allocation13], 4
          %s677 = int_to_ptr.vmem [resolvable:$true] %s676
          %682 = dma.hbm_to_vmem [thread:$0]  %s675, 1024, %s677, [#allocation12], 64, 64, 4
        $region32: #{tpu_custom_call.1} parent=11 // pred_fallthru
          _
        // Predicated region
        $region33: #{tpu_custom_call.1} parent=11 // pred_check
          %p683 = pneg %p249
        $region34: #{tpu_custom_call.1} parent=11 // pred_check_branch
          %685 = sbr.rel (%p683) target = $region36
        $region35: #{tpu_custom_call.1} parent=11 // pred_region
          _
        $region36: #{tpu_custom_call.1} parent=11 // pred_fallthru
          _
        // Predicated region
        $region37: #{tpu_custom_call.1} parent=11 // pred_check
          %p686 = pneg %p270
        $region38: #{tpu_custom_call.1} parent=11 // pred_check_branch
          %688 = sbr.rel (%p686) target = $region40
        $region39: #{tpu_custom_call.1} parent=11 // pred_region
          _
        $region40: #{tpu_custom_call.1} parent=11 // pred_fallthru
          _
        // Predicated region
        $region41: #{tpu_custom_call.1} parent=11 // pred_check
          %p689 = pneg %p291
        $region42: #{tpu_custom_call.1} parent=11 // pred_check_branch
          %691 = sbr.rel (%p689) target = $region44
        $region43: #{tpu_custom_call.1} parent=11 // pred_region
          _
        $region44: #{tpu_custom_call.1} parent=11 // pred_fallthru
          _
        // Predicated region
        $region45: #{tpu_custom_call.1} parent=11 // pred_check
          %p692 = pneg %p312
        $region46: #{tpu_custom_call.1} parent=11 // pred_check_branch
          %694 = sbr.rel (%p692) target = $region48
        $region47: #{tpu_custom_call.1} parent=11 // pred_region
          %696 = vsyncadd [#allocation15], 0
          %s697 = sshll.u32 %s11, 4
          %s698 = int_to_ptr.hbm [resolvable:$true] %s697
          %s699 = sshll.u32 [#allocation14], 4
          %s700 = int_to_ptr.vmem [resolvable:$true] %s699
          %705 = dma.hbm_to_vmem [thread:$0]  %s698, 1024, %s700, [#allocation15], 64, 64, 4
        $region48: #{tpu_custom_call.1} parent=11 // pred_fallthru
          _
        // Predicated region
        $region49: #{tpu_custom_call.1} parent=11 // pred_check
          %p706 = pneg %p333
        $region50: #{tpu_custom_call.1} parent=11 // pred_check_branch
          %708 = sbr.rel (%p706) target = $region52
        $region51: #{tpu_custom_call.1} parent=11 // pred_region
          _
        $region52: #{tpu_custom_call.1} parent=11 // pred_fallthru
          _
        // Predicated region
        $region53: #{tpu_custom_call.1} parent=11 // pred_check
          %p709 = pneg %p354
        $region54: #{tpu_custom_call.1} parent=11 // pred_check_branch
          %711 = sbr.rel (%p709) target = $region56
        $region55: #{tpu_custom_call.1} parent=11 // pred_region
          %713 = vsyncadd [#allocation15], 0
          %s714 = sshll.u32 %s13, 4
          %s715 = int_to_ptr.hbm [resolvable:$true] %s714
          %s716 = sshll.u32 [#allocation16], 4
          %s717 = int_to_ptr.vmem [resolvable:$true] %s716
          %722 = dma.hbm_to_vmem [thread:$0]  %s715, 2048, %s717, [#allocation15], 128, 128, 8
        $region56: #{tpu_custom_call.1} parent=11 // pred_fallthru
          _
        // Predicated region
        $region57: #{tpu_custom_call.1} parent=11 // pred_check
          %p723 = pneg %p375
        $region58: #{tpu_custom_call.1} parent=11 // pred_check_branch
          %725 = sbr.rel (%p723) target = $region60
        $region59: #{tpu_custom_call.1} parent=11 // pred_region
          _
        $region60: #{tpu_custom_call.1} parent=11 // pred_fallthru
          _
        // Predicated region
        $region61: #{tpu_custom_call.1} parent=11 // pred_check
          %p726 = pneg %p396
        $region62: #{tpu_custom_call.1} parent=11 // pred_check_branch
          %728 = sbr.rel (%p726) target = $region64
        $region63: #{tpu_custom_call.1} parent=11 // pred_region
          %730 = vsyncadd [#allocation18], 0
          %s731 = sshll.u32 %s15, 4
          %s732 = int_to_ptr.hbm [resolvable:$true] %s731
          %s733 = sshll.u32 [#allocation17], 4
          %s734 = int_to_ptr.vmem [resolvable:$true] %s733
          %739 = dma.hbm_to_vmem [thread:$0]  %s732, 1024, %s734, [#allocation18], 64, 64, 4
        $region64: #{tpu_custom_call.1} parent=11 // pred_fallthru
          _
        // Predicated region
        $region65: #{tpu_custom_call.1} parent=11 // pred_check
          %p740 = pneg %p417
        $region66: #{tpu_custom_call.1} parent=11 // pred_check_branch
          %742 = sbr.rel (%p740) target = $region68
        $region67: #{tpu_custom_call.1} parent=11 // pred_region
          _
        $region68: #{tpu_custom_call.1} parent=11 // pred_fallthru
          _
        // Predicated region
        $region69: #{tpu_custom_call.1} parent=11 // pred_check
          %p743 = pneg %p438
        $region70: #{tpu_custom_call.1} parent=11 // pred_check_branch
          %745 = sbr.rel (%p743) target = $region72
        $region71: #{tpu_custom_call.1} parent=11 // pred_region
          _
        $region72: #{tpu_custom_call.1} parent=11 // pred_fallthru
          _
        // Predicated region
        $region73: #{tpu_custom_call.1} parent=11 // pred_check
          %p746 = pneg %p459
        $region74: #{tpu_custom_call.1} parent=11 // pred_check_branch
          %748 = sbr.rel (%p746) target = $region76
        $region75: #{tpu_custom_call.1} parent=11 // pred_region
          _
        $region76: #{tpu_custom_call.1} parent=11 // pred_fallthru
          _
        // Predicated region
        $region77: #{tpu_custom_call.1} parent=11 // pred_check
          %p749 = pneg %p480
        $region78: #{tpu_custom_call.1} parent=11 // pred_check_branch
          %751 = sbr.rel (%p749) target = $region80
        $region79: #{tpu_custom_call.1} parent=11 // pred_region
          %753 = vsyncadd [#allocation18], 0
          %s754 = sshll.u32 %s19, 4
          %s755 = int_to_ptr.hbm [resolvable:$true] %s754
          %s756 = sshll.u32 [#allocation19], 4
          %s757 = int_to_ptr.vmem [resolvable:$true] %s756
          %762 = dma.hbm_to_vmem [thread:$0]  %s755, 2048, %s757, [#allocation18], 128, 128, 8
        $region80: #{tpu_custom_call.1} parent=11 // pred_fallthru
          _
        // Predicated region
        $region81: #{tpu_custom_call.1} parent=11 // pred_check
          %p763 = pneg %p501
        $region82: #{tpu_custom_call.1} parent=11 // pred_check_branch
          %765 = sbr.rel (%p763) target = $region84
        $region83: #{tpu_custom_call.1} parent=11 // pred_region
          _
        $region84: #{tpu_custom_call.1} parent=11 // pred_fallthru
          _
        // Predicated region
        $region85: #{tpu_custom_call.1} parent=11 // pred_check
          %p766 = pneg %p522
        $region86: #{tpu_custom_call.1} parent=11 // pred_check_branch
          %768 = sbr.rel (%p766) target = $region88
        $region87: #{tpu_custom_call.1} parent=11 // pred_region
          %770 = vsyncadd [#allocation21], 0
          %s771 = sshll.u32 %s21, 4
          %s772 = int_to_ptr.hbm [resolvable:$true] %s771
          %s773 = sshll.u32 [#allocation20], 4
          %s774 = int_to_ptr.vmem [resolvable:$true] %s773
          %779 = dma.hbm_to_vmem [thread:$0]  %s772, 2048, %s774, [#allocation21], 64, 64, 4
        $region88: #{tpu_custom_call.1} parent=11 // pred_fallthru
          _
        // Predicated region
        $region89: #{tpu_custom_call.1} parent=11 // pred_check
          %p780 = pneg %p543
        $region90: #{tpu_custom_call.1} parent=11 // pred_check_branch
          %782 = sbr.rel (%p780) target = $region92
        $region91: #{tpu_custom_call.1} parent=11 // pred_region
          _
        $region92: #{tpu_custom_call.1} parent=11 // pred_fallthru
          _
        // Predicated region
        $region93: #{tpu_custom_call.1} parent=11 // pred_check
          %p783 = pneg %p564
        $region94: #{tpu_custom_call.1} parent=11 // pred_check_branch
          %785 = sbr.rel (%p783) target = $region96
        $region95: #{tpu_custom_call.1} parent=11 // pred_region
          _
        $region96: #{tpu_custom_call.1} parent=11 // pred_fallthru
          _
        // Predicated region
        $region97: #{tpu_custom_call.1} parent=11 // pred_check
          %p786 = pneg %p585
        $region98: #{tpu_custom_call.1} parent=11 // pred_check_branch
          %788 = sbr.rel (%p786) target = $region100
        $region99: #{tpu_custom_call.1} parent=11 // pred_region
          _
        $region100: #{tpu_custom_call.1} parent=11 // pred_fallthru
          _
      $region12: #{tpu_custom_call.1} parent=5 // pred_fallthru
        _
      %p789 = scmp.lt.s32.totalorder %s45, 2
      // Predicated region
      $region101: #{tpu_custom_call.1} parent=5 // pred_check
        %p790 = pneg %p789
      $region102: #{tpu_custom_call.1} parent=5 // pred_check_branch
        %792 = sbr.rel (%p790) target = $region104
      $region103: #{tpu_custom_call.1} parent=5 // pred_region
        // Predicated region
        $region105: #{tpu_custom_call.1} parent=103 // pred_check
          %p793 = pneg %p65
        $region106: #{tpu_custom_call.1} parent=103 // pred_check_branch
          %795 = sbr.rel (%p793) target = $region108
        $region107: #{tpu_custom_call.1} parent=103 // pred_region
          %s796 = sand.u32 %s55, 1
          %s797 = scalar_lea.sflag [#allocation3], %s796
          %s798 = sand.u32 %s55, 1
          %s799 = smul.addr %s798, 16
          %s800 = scalar_lea.vmem [#allocation2], %s799
          %s801 = smul.u32 2, %s45
          %803 = vsyncadd %s797, 0
          %s804 = smul.addr %s801, 2
          %s805 = smul.addr %s804, 4
          %s806 = scalar_lea.hbm %s0, %s805
          %s807 = sshll.u32 %s806, 4
          %s808 = int_to_ptr.hbm [resolvable:$true] %s807
          %s809 = sshll.u32 %s800, 4
          %s810 = int_to_ptr.vmem [resolvable:$true] %s809
          %815 = dma.hbm_to_vmem [thread:$0]  %s808, 256, %s810, %s797, 64, 64, 4
        $region108: #{tpu_custom_call.1} parent=103 // pred_fallthru
          _
        // Predicated region
        $region109: #{tpu_custom_call.1} parent=103 // pred_check
          %p816 = pneg %p91
        $region110: #{tpu_custom_call.1} parent=103 // pred_check_branch
          %818 = sbr.rel (%p816) target = $region112
        $region111: #{tpu_custom_call.1} parent=103 // pred_region
          %s819 = sand.u32 %s45, 1
          %s820 = scalar_lea.sflag [#allocation6], %s819
          %s821 = sand.u32 %s81, 1
          %s822 = smul.addr %s821, 16
          %s823 = scalar_lea.vmem [#allocation5], %s822
          %s824 = smul.u32 2, %s45
          %826 = vsyncadd %s820, 0
          %s827 = smul.addr %s824, 2
          %s828 = smul.addr %s827, 4
          %s829 = scalar_lea.hbm %s1, %s828
          %s830 = sshll.u32 %s829, 4
          %s831 = int_to_ptr.hbm [resolvable:$true] %s830
          %s832 = sshll.u32 %s823, 4
          %s833 = int_to_ptr.vmem [resolvable:$true] %s832
          %838 = dma.hbm_to_vmem [thread:$0]  %s831, 256, %s833, %s820, 64, 64, 4
        $region112: #{tpu_custom_call.1} parent=103 // pred_fallthru
          _
        // Predicated region
        $region113: #{tpu_custom_call.1} parent=103 // pred_check
          %p839 = pneg %p117
        $region114: #{tpu_custom_call.1} parent=103 // pred_check_branch
          %841 = sbr.rel (%p839) target = $region116
        $region115: #{tpu_custom_call.1} parent=103 // pred_region
          %s842 = sand.u32 %s45, 1
          %s843 = scalar_lea.sflag [#allocation6], %s842
          %s844 = sand.u32 %s107, 1
          %s845 = smul.addr %s844, 2
          %s846 = scalar_lea.vmem [#allocation7], %s845
          %s847 = smul.u32 2, %s45
          %849 = vsyncadd %s843, 0
          %s850 = scalar_lea.hbm %s2, %s847
          %s851 = sshll.u32 %s850, 4
          %s852 = int_to_ptr.hbm [resolvable:$true] %s851
          %s853 = sshll.u32 %s846, 4
          %s854 = int_to_ptr.vmem [resolvable:$true] %s853
          %859 = dma.hbm_to_vmem [thread:$0]  %s852, 32, %s854, %s843, 16, 16, 1
        $region116: #{tpu_custom_call.1} parent=103 // pred_fallthru
          _
      $region104: #{tpu_custom_call.1} parent=5 // pred_fallthru
        _
      %p860 = scmp.le.s32.totalorder 1, %s45
      %p861 = scmp.lt.s32.totalorder %s45, 3
      %p862 = pnand %p860, %p861
      %p863 = pneg %p862
      // Predicated region
      $region117: #{tpu_custom_call.1} parent=5 // pred_check
        _
      $region118: #{tpu_custom_call.1} parent=5 // pred_check_branch
        %865 = sbr.rel (%p862) target = $region120
      $region119: #{tpu_custom_call.1} parent=5 // pred_region
        %s866 = ssub.s32 %s45, 1
        %s867 = sand.u32 %s58, 1
        %s868 = scalar_lea.sflag [#allocation3], %s867
        %s869 = sand.u32 %s58, 1
        %s870 = smul.addr %s869, 16
        %s871 = scalar_lea.vmem [#allocation2], %s870
        // Predicated region
        $region121: #{tpu_custom_call.1} parent=119 // pred_check
          %p872 = pneg %p71
        $region122: #{tpu_custom_call.1} parent=119 // pred_check_branch
          %874 = sbr.rel (%p872) target = $region124
        $region123: #{tpu_custom_call.1} parent=119 // pred_region
          %876 = dma.done %s868, 256
        $region124: #{tpu_custom_call.1} parent=119 // pred_fallthru
          _
        %s877 = sand.u32 %s50, 1
        %s878 = scalar_lea.sflag [#allocation6], %s877
        %s879 = sand.u32 %s84, 1
        %s880 = smul.addr %s879, 16
        %s881 = scalar_lea.vmem [#allocation5], %s880
        // Predicated region
        $region125: #{tpu_custom_call.1} parent=119 // pred_check
          %p882 = pneg %p97
        $region126: #{tpu_custom_call.1} parent=119 // pred_check_branch
          %884 = sbr.rel (%p882) target = $region128
        $region127: #{tpu_custom_call.1} parent=119 // pred_region
          %886 = dma.done %s878, 256
        $region128: #{tpu_custom_call.1} parent=119 // pred_fallthru
          _
        %s887 = sand.u32 %s50, 1
        %s888 = scalar_lea.sflag [#allocation6], %s887
        %s889 = sand.u32 %s110, 1
        %s890 = smul.addr %s889, 2
        %s891 = scalar_lea.vmem [#allocation7], %s890
        // Predicated region
        $region129: #{tpu_custom_call.1} parent=119 // pred_check
          %p892 = pneg %p123
        $region130: #{tpu_custom_call.1} parent=119 // pred_check_branch
          %894 = sbr.rel (%p892) target = $region132
        $region131: #{tpu_custom_call.1} parent=119 // pred_region
          %896 = dma.done %s888, 32
        $region132: #{tpu_custom_call.1} parent=119 // pred_fallthru
          _
        // Predicated region
        $region133: #{tpu_custom_call.1} parent=119 // pred_check
          %p897 = pneg %p144
        $region134: #{tpu_custom_call.1} parent=119 // pred_check_branch
          %899 = sbr.rel (%p897) target = $region136
        $region135: #{tpu_custom_call.1} parent=119 // pred_region
          %901 = dma.done [#allocation9], 1024
        $region136: #{tpu_custom_call.1} parent=119 // pred_fallthru
          _
        // Predicated region
        $region137: #{tpu_custom_call.1} parent=119 // pred_check
          %p902 = pneg %p165
        $region138: #{tpu_custom_call.1} parent=119 // pred_check_branch
          %904 = sbr.rel (%p902) target = $region140
        $region139: #{tpu_custom_call.1} parent=119 // pred_region
          %906 = dma.done [#allocation9], 16
        $region140: #{tpu_custom_call.1} parent=119 // pred_fallthru
          _
        // Predicated region
        $region141: #{tpu_custom_call.1} parent=119 // pred_check
          %p907 = pneg %p186
        $region142: #{tpu_custom_call.1} parent=119 // pred_check_branch
          %909 = sbr.rel (%p907) target = $region144
        $region143: #{tpu_custom_call.1} parent=119 // pred_region
          %911 = dma.done [#allocation12], 2048
        $region144: #{tpu_custom_call.1} parent=119 // pred_fallthru
          _
        // Predicated region
        $region145: #{tpu_custom_call.1} parent=119 // pred_check
          %p912 = pneg %p228
        $region146: #{tpu_custom_call.1} parent=119 // pred_check_branch
          %914 = sbr.rel (%p912) target = $region148
        $region147: #{tpu_custom_call.1} parent=119 // pred_region
          %916 = dma.done [#allocation12], 1024
        $region148: #{tpu_custom_call.1} parent=119 // pred_fallthru
          _
        // Predicated region
        $region149: #{tpu_custom_call.1} parent=119 // pred_check
          %p917 = pneg %p312
        $region150: #{tpu_custom_call.1} parent=119 // pred_check_branch
          %919 = sbr.rel (%p917) target = $region152
        $region151: #{tpu_custom_call.1} parent=119 // pred_region
          %921 = dma.done [#allocation15], 1024
        $region152: #{tpu_custom_call.1} parent=119 // pred_fallthru
          _
        // Predicated region
        $region153: #{tpu_custom_call.1} parent=119 // pred_check
          %p922 = pneg %p354
        $region154: #{tpu_custom_call.1} parent=119 // pred_check_branch
          %924 = sbr.rel (%p922) target = $region156
        $region155: #{tpu_custom_call.1} parent=119 // pred_region
          %926 = dma.done [#allocation15], 2048
        $region156: #{tpu_custom_call.1} parent=119 // pred_fallthru
          _
        // Predicated region
        $region157: #{tpu_custom_call.1} parent=119 // pred_check
          %p927 = pneg %p396
        $region158: #{tpu_custom_call.1} parent=119 // pred_check_branch
          %929 = sbr.rel (%p927) target = $region160
        $region159: #{tpu_custom_call.1} parent=119 // pred_region
          %931 = dma.done [#allocation18], 1024
        $region160: #{tpu_custom_call.1} parent=119 // pred_fallthru
          _
        // Predicated region
        $region161: #{tpu_custom_call.1} parent=119 // pred_check
          %p932 = pneg %p480
        $region162: #{tpu_custom_call.1} parent=119 // pred_check_branch
          %934 = sbr.rel (%p932) target = $region164
        $region163: #{tpu_custom_call.1} parent=119 // pred_region
          %936 = dma.done [#allocation18], 2048
        $region164: #{tpu_custom_call.1} parent=119 // pred_fallthru
          _
        // Predicated region
        $region165: #{tpu_custom_call.1} parent=119 // pred_check
          %p937 = pneg %p522
        $region166: #{tpu_custom_call.1} parent=119 // pred_check_branch
          %939 = sbr.rel (%p937) target = $region168
        $region167: #{tpu_custom_call.1} parent=119 // pred_region
          %941 = dma.done [#allocation21], 2048
        $region168: #{tpu_custom_call.1} parent=119 // pred_fallthru
          _
        %s942 = sand.u32 %s58, 1
        %s943 = scalar_lea.sflag [#allocation3], %s942
        %s944 = sand.u32 %s58, 1
        %s945 = smul.addr %s944, 16
        %s946 = scalar_lea.vmem [#allocation2], %s945
        %p947 = pneg %p71
        %p948 = pneg %p68
        %s949 = sand.u32 %s50, 1
        %s950 = scalar_lea.sflag [#allocation6], %s949
        %s951 = sand.u32 %s84, 1
        %s952 = smul.addr %s951, 16
        %s953 = scalar_lea.vmem [#allocation5], %s952
        %p954 = pneg %p97
        %p955 = pneg %p94
        %s956 = sand.u32 %s50, 1
        %s957 = scalar_lea.sflag [#allocation6], %s956
        %s958 = sand.u32 %s110, 1
        %s959 = smul.addr %s958, 2
        %s960 = scalar_lea.vmem [#allocation7], %s959
        %p961 = pneg %p123
        %p962 = pneg %p120
        %p963 = pneg %p144
        %p964 = pneg %p141
        %p965 = pneg %p165
        %p966 = pneg %p162
        %p967 = pneg %p186
        %p968 = pneg %p183
        %p969 = pneg %p207
        %p970 = pneg %p204
        %p971 = pneg %p228
        %p972 = pneg %p225
        %p973 = pneg %p249
        %p974 = pneg %p246
        %p975 = pneg %p270
        %p976 = pneg %p267
        %p977 = pneg %p291
        %p978 = pneg %p288
        %p979 = pneg %p312
        %p980 = pneg %p309
        %p981 = pneg %p333
        %p982 = pneg %p330
        %p983 = pneg %p354
        %p984 = pneg %p351
        %p985 = pneg %p375
        %p986 = pneg %p372
        %p987 = pneg %p396
        %p988 = pneg %p393
        %p989 = pneg %p417
        %p990 = pneg %p414
        %p991 = pneg %p438
        %p992 = pneg %p435
        %p993 = pneg %p459
        %p994 = pneg %p456
        %p995 = pneg %p480
        %p996 = pneg %p477
        %p997 = pneg %p501
        %p998 = pneg %p498
        %p999 = pneg %p522
        %p1000 = pneg %p519
        %p1001 = pneg %p543
        %p1002 = pneg %p540
        %p1003 = pneg %p564
        %p1004 = pneg %p561
        %p1005 = pneg %p585
        %p1006 = pneg %p582
        %p1007 = pneg %p611
        %p1008 = pneg %p608
        %s1009 = sand.u32 %s598, 1
        %s1010 = scalar_lea.sflag [#allocation4], %s1009
        %s1011 = sand.u32 %s598, 1
        %s1012 = smul.addr %s1011, 16
        %s1013 = scalar_lea.vmem [#allocation22], %s1012
        %s1014 = smul.u32 2, %s50
        %s1015 = smul.u32 2, %s50
        %s1016 = smul.u32 2, %s50
        %s1017 = smul.u32 2, %s50
        %v1019 = vld [vmem:[%s871] sm:$0xf]
        %v1020 = vld [vmem:[%s871 + $0x4] sm:$0xf]
        %v1021 = vld [vmem:[%s871 + $0x8] sm:$0xf]
        %v1022 = vld [vmem:[%s871 + $0xc] sm:$0xf]
        %v1023 = vld [vmem:[%s881] sm:$0xf]
        %v1024 = vld [vmem:[%s881 + $0x4] sm:$0xf]
        %v1025 = vld [vmem:[%s881 + $0x8] sm:$0xf]
        %v1026 = vld [vmem:[%s881 + $0xc] sm:$0xf]
        %v1027 = vlaneseq
        %v1028 = vshrl.u32 %v1027, 7
        %v1029 = vadd.s32 %v1028, 8
        %v1030 = vlaneseq
        %v1031 = vand.u32 %v1030, 127
        %vm1032 = vcmp.le.s32.totalorder %v1031, %v1028
        %vm1033 = vcmp.le.s32.totalorder %v1031, %v1029
        %v1034 = vld [vmem:[%s891] sm:$0x1]
        %v1035 = vld [vmem:[%s891 + $0x1] sm:$0x1]
        %vm1036 = vcmp.ne.f32.partialorder %v1034, 0.0
        %vm1037 = vcmp.ne.f32.partialorder %v1035, 0.0
        %v1038 = vld [vmem:[#allocation8] sm:$0xf]
        %v1039 = vld [vmem:[#allocation8 + $0x4] sm:$0xf]
        %v1040 = vld [vmem:[#allocation8 + $0x8] sm:$0xf]
        %v1041 = vld [vmem:[#allocation8 + $0xc] sm:$0xf]
        %v1042 = vld [vmem:[#allocation8 + $0x10] sm:$0xf]
        %v1043 = vld [vmem:[#allocation8 + $0x14] sm:$0xf]
        %v1044 = vld [vmem:[#allocation8 + $0x18] sm:$0xf]
        %v1045 = vld [vmem:[#allocation8 + $0x1c] sm:$0xf]
        %v1046 = vld [vmem:[#allocation8 + $0x20] sm:$0xf]
        %v1047 = vld [vmem:[#allocation8 + $0x24] sm:$0xf]
        %v1048 = vld [vmem:[#allocation8 + $0x28] sm:$0xf]
        %v1049 = vld [vmem:[#allocation8 + $0x2c] sm:$0xf]
        %v1050 = vld [vmem:[#allocation8 + $0x30] sm:$0xf]
        %v1051 = vld [vmem:[#allocation8 + $0x34] sm:$0xf]
        %v1052 = vld [vmem:[#allocation8 + $0x38] sm:$0xf]
        %v1053 = vld [vmem:[#allocation8 + $0x3c] sm:$0xf]
        %v1054 = vld [vmem:[#allocation10] sm:$0x1]
        %v1056 = vperm.slane %v1054, 0
        %v1062 = vunpack.c.l.b16 %v1019
        %v1063 = vunpack.c.l.b16 %v1020
        %v1064 = vunpack.c.l.b16 %v1021
        %v1065 = vunpack.c.l.b16 %v1022
        %v1066 = vpack.c.b16 %v1063, %v1062
        %v1067 = vpack.c.b16 %v1065, %v1064
        %v1086 = vunpack.c.l.b16 %v1038
        %v1087 = vunpack.c.l.b16 %v1039
        %v1088 = vunpack.c.l.b16 %v1040
        %v1089 = vunpack.c.l.b16 %v1041
        %v1090 = vunpack.c.l.b16 %v1042
        %v1091 = vunpack.c.l.b16 %v1043
        %v1092 = vunpack.c.l.b16 %v1044
        %v1093 = vunpack.c.l.b16 %v1045
        %v1094 = vunpack.c.l.b16 %v1046
        %v1095 = vunpack.c.l.b16 %v1047
        %v1096 = vunpack.c.l.b16 %v1048
        %v1097 = vunpack.c.l.b16 %v1049
        %v1098 = vunpack.c.l.b16 %v1050
        %v1099 = vunpack.c.l.b16 %v1051
        %v1100 = vunpack.c.l.b16 %v1052
        %v1101 = vunpack.c.l.b16 %v1053
        %v1102 = vpack.c.b16 %v1087, %v1086
        %v1103 = vpack.c.b16 %v1089, %v1088
        %v1104 = vpack.c.b16 %v1091, %v1090
        %v1105 = vpack.c.b16 %v1093, %v1092
        %v1106 = vpack.c.b16 %v1095, %v1094
        %v1107 = vpack.c.b16 %v1097, %v1096
        %v1108 = vpack.c.b16 %v1099, %v1098
        %v1109 = vpack.c.b16 %v1101, %v1100
        %1118 = vmatpush.bf16.msra.mxu0 %v1109
        %1119 = vmatpush.bf16.msra.mxu0 %v1108
        %1120 = vmatpush.bf16.msra.mxu0 %v1107
        %1121 = vmatpush.bf16.msra.mxu0 %v1106
        %1122 = vmatpush.bf16.msra.mxu0 %v1105
        %1123 = vmatpush.bf16.msra.mxu0 %v1104
        %1124 = vmatpush.bf16.msra.mxu0 %v1103
        %1125 = vmatpush.bf16.msra.mxu0 %v1102
        %1126 = vmatmul.bf16.gmra.mxu0 %v1066
        %v1127 = vpop.f32.mrf.mxu0
        %v1128 = vadd.f32 %v1056, %v1127
        %v1129 = vpop.f32.mrf.mxu0
        %v1130 = vadd.f32 %v1056, %v1129
        %1131 = vmatmul.bf16.gmra.mxu0 %v1067
        %v1132 = vpop.f32.mrf.mxu0
        %v1133 = vadd.f32 %v1056, %v1132
        %v1134 = vpop.f32.mrf.mxu0
        %v1135 = vadd.f32 %v1056, %v1134
        %1136 = vdwg.mxu0
        %v1137 = vpack.c.bf16 %v1128, %v1128
        %v1138 = vpack.c.bf16 %v1130, %v1130
        %v1139 = vpack.c.bf16 %v1133, %v1133
        %v1140 = vpack.c.bf16 %v1135, %v1135
        %v1141 = vld [vmem:[#allocation11] sm:$0xff]
        %v1142 = vld [vmem:[#allocation11 + $0x8] sm:$0xff]
        %v1143 = vld [vmem:[#allocation11 + $0x10] sm:$0xff]
        %v1144 = vld [vmem:[#allocation11 + $0x18] sm:$0xff]
        %v1145 = vld [vmem:[#allocation11 + $0x20] sm:$0xff]
        %v1146 = vld [vmem:[#allocation11 + $0x28] sm:$0xff]
        %v1147 = vld [vmem:[#allocation11 + $0x30] sm:$0xff]
        %v1148 = vld [vmem:[#allocation11 + $0x38] sm:$0xff]
        %v1149 = vld [vmem:[#allocation11 + $0x40] sm:$0xff]
        %v1150 = vld [vmem:[#allocation11 + $0x48] sm:$0xff]
        %v1151 = vld [vmem:[#allocation11 + $0x50] sm:$0xff]
        %v1152 = vld [vmem:[#allocation11 + $0x58] sm:$0xff]
        %v1153 = vld [vmem:[#allocation11 + $0x60] sm:$0xff]
        %v1154 = vld [vmem:[#allocation11 + $0x68] sm:$0xff]
        %v1155 = vld [vmem:[#allocation11 + $0x70] sm:$0xff]
        %v1156 = vld [vmem:[#allocation11 + $0x78] sm:$0xff]
        %v1157 = vld [vmem:[%s6] sm:$0x3]
        %v1159 = vperm.slane %v1157, 0
        %v1160 = vperm.slane %v1157, 1
        %v1179 = vunpack.c.l.b16 %v1141
        %v1180 = vunpack.c.h.b16 %v1141
        %v1181 = vunpack.c.l.b16 %v1142
        %v1182 = vunpack.c.h.b16 %v1142
        %v1183 = vunpack.c.l.b16 %v1143
        %v1184 = vunpack.c.h.b16 %v1143
        %v1185 = vunpack.c.l.b16 %v1144
        %v1186 = vunpack.c.h.b16 %v1144
        %v1187 = vunpack.c.l.b16 %v1145
        %v1188 = vunpack.c.h.b16 %v1145
        %v1189 = vunpack.c.l.b16 %v1146
        %v1190 = vunpack.c.h.b16 %v1146
        %v1191 = vunpack.c.l.b16 %v1147
        %v1192 = vunpack.c.h.b16 %v1147
        %v1193 = vunpack.c.l.b16 %v1148
        %v1194 = vunpack.c.h.b16 %v1148
        %v1195 = vunpack.c.l.b16 %v1149
        %v1196 = vunpack.c.h.b16 %v1149
        %v1197 = vunpack.c.l.b16 %v1150
        %v1198 = vunpack.c.h.b16 %v1150
        %v1199 = vunpack.c.l.b16 %v1151
        %v1200 = vunpack.c.h.b16 %v1151
        %v1201 = vunpack.c.l.b16 %v1152
        %v1202 = vunpack.c.h.b16 %v1152
        %v1203 = vunpack.c.l.b16 %v1153
        %v1204 = vunpack.c.h.b16 %v1153
        %v1205 = vunpack.c.l.b16 %v1154
        %v1206 = vunpack.c.h.b16 %v1154
        %v1207 = vunpack.c.l.b16 %v1155
        %v1208 = vunpack.c.h.b16 %v1155
        %v1209 = vunpack.c.l.b16 %v1156
        %v1210 = vunpack.c.h.b16 %v1156
        %v1211 = vpack.c.b16 %v1181, %v1179
        %v1212 = vpack.c.b16 %v1182, %v1180
        %v1213 = vpack.c.b16 %v1185, %v1183
        %v1214 = vpack.c.b16 %v1186, %v1184
        %v1215 = vpack.c.b16 %v1189, %v1187
        %v1216 = vpack.c.b16 %v1190, %v1188
        %v1217 = vpack.c.b16 %v1193, %v1191
        %v1218 = vpack.c.b16 %v1194, %v1192
        %v1219 = vpack.c.b16 %v1197, %v1195
        %v1220 = vpack.c.b16 %v1198, %v1196
        %v1221 = vpack.c.b16 %v1201, %v1199
        %v1222 = vpack.c.b16 %v1202, %v1200
        %v1223 = vpack.c.b16 %v1205, %v1203
        %v1224 = vpack.c.b16 %v1206, %v1204
        %v1225 = vpack.c.b16 %v1209, %v1207
        %v1226 = vpack.c.b16 %v1210, %v1208
        %1243 = vmatpush.bf16.msra.mxu0 %v1225
        %1244 = vmatpush.bf16.msra.mxu0 %v1223
        %1245 = vmatpush.bf16.msra.mxu0 %v1221
        %1246 = vmatpush.bf16.msra.mxu0 %v1219
        %1247 = vmatpush.bf16.msra.mxu0 %v1217
        %1248 = vmatpush.bf16.msra.mxu0 %v1215
        %1249 = vmatpush.bf16.msra.mxu0 %v1213
        %1250 = vmatpush.bf16.msra.mxu0 %v1211
        %1251 = vmatmul.bf16.gmra.mxu0 %v1066
        %v1252 = vpop.f32.mrf.mxu0
        %v1253 = vadd.f32 %v1159, %v1252
        %v1254 = vpop.f32.mrf.mxu0
        %v1255 = vadd.f32 %v1159, %v1254
        %1256 = vmatmul.bf16.gmra.mxu0 %v1067
        %v1257 = vpop.f32.mrf.mxu0
        %v1258 = vadd.f32 %v1159, %v1257
        %v1259 = vpop.f32.mrf.mxu0
        %v1260 = vadd.f32 %v1159, %v1259
        %1261 = vdwg.mxu0
        %1262 = vmatpush.bf16.msra.mxu0 %v1226
        %1263 = vmatpush.bf16.msra.mxu0 %v1224
        %1264 = vmatpush.bf16.msra.mxu0 %v1222
        %1265 = vmatpush.bf16.msra.mxu0 %v1220
        %1266 = vmatpush.bf16.msra.mxu0 %v1218
        %1267 = vmatpush.bf16.msra.mxu0 %v1216
        %1268 = vmatpush.bf16.msra.mxu0 %v1214
        %1269 = vmatpush.bf16.msra.mxu0 %v1212
        %1270 = vmatmul.bf16.gmra.mxu0 %v1066
        %v1271 = vpop.f32.mrf.mxu0
        %v1272 = vadd.f32 %v1160, %v1271
        %v1273 = vpop.f32.mrf.mxu0
        %v1274 = vadd.f32 %v1160, %v1273
        %1275 = vmatmul.bf16.gmra.mxu0 %v1067
        %v1276 = vpop.f32.mrf.mxu0
        %v1277 = vadd.f32 %v1160, %v1276
        %v1278 = vpop.f32.mrf.mxu0
        %v1279 = vadd.f32 %v1160, %v1278
        %1280 = vdwg.mxu0
        %v1281 = vpack.c.bf16 %v1272, %v1253
        %v1282 = vpack.c.bf16 %v1274, %v1255
        %v1283 = vpack.c.bf16 %v1277, %v1258
        %v1284 = vpack.c.bf16 %v1279, %v1260
        %v1289 = vrot.slane %v1281, 4
        %v1290 = vrot.slane %v1282, 4
        %v1291 = vrot.slane %v1283, 4
        %v1292 = vrot.slane %v1284, 4
        %v1295 = vunpack.c.l.b16 %v1137
        %v1296 = vunpack.c.l.b16 %v1138
        %v1297 = vpack.c.b16 %v1296, %v1295
        %v1298 = vunpack.c.l.b16 %v1281
        %v1299 = vunpack.c.l.b16 %v1282
        %v1300 = vpack.c.b16 %v1299, %v1298
        %vm1301 = vcmask 261120
        %v1303 = vsel %vm1301, %v1297, 0
        %v1306 = vsel %vm1301, %v1300, 0
        %1308 = vmatpush.bf16.xpose.msra.mxu0 0
        %1309 = vmatpush.bf16.xpose.msra.mxu0 0
        %1310 = vmatpush.bf16.xpose.msra.mxu0 0
        %1311 = vmatpush.bf16.xpose.msra.mxu0 0
        %1312 = vmatpush.bf16.xpose.msra.mxu0 0
        %1313 = vmatpush.bf16.xpose.msra.mxu0 0
        %1314 = vmatpush.bf16.xpose.msra.mxu0 0
        %1315 = vmatpush.bf16.xpose.msra.mxu0 %v1306
        %1316 = vmatmul.bf16.gmra.mxu0 %v1303
        %v1317 = vpop.f32.mrf.mxu0
        %v1318 = vadd.f32 0.0, %v1317
        %v1319 = vpop.f32.mrf.mxu0
        %v1320 = vadd.f32 0.0, %v1319
        %1321 = vdwg.mxu0
        %v1324 = vunpack.c.l.b16 %v1139
        %v1325 = vunpack.c.l.b16 %v1140
        %v1326 = vpack.c.b16 %v1325, %v1324
        %v1327 = vunpack.c.l.b16 %v1283
        %v1328 = vunpack.c.l.b16 %v1284
        %v1329 = vpack.c.b16 %v1328, %v1327
        %v1331 = vsel %vm1301, %v1326, 0
        %v1334 = vsel %vm1301, %v1329, 0
        %1336 = vmatpush.bf16.xpose.msra.mxu0 0
        %1337 = vmatpush.bf16.xpose.msra.mxu0 0
        %1338 = vmatpush.bf16.xpose.msra.mxu0 0
        %1339 = vmatpush.bf16.xpose.msra.mxu0 0
        %1340 = vmatpush.bf16.xpose.msra.mxu0 0
        %1341 = vmatpush.bf16.xpose.msra.mxu0 0
        %1342 = vmatpush.bf16.xpose.msra.mxu0 0
        %1343 = vmatpush.bf16.xpose.msra.mxu0 %v1334
        %1344 = vmatmul.bf16.gmra.mxu0 %v1331
        %v1345 = vpop.f32.mrf.mxu0
        %v1346 = vadd.f32 0.0, %v1345
        %v1347 = vpop.f32.mrf.mxu0
        %v1348 = vadd.f32 0.0, %v1347
        %1349 = vdwg.mxu0
        %v1350 = vmul.f32 %v1318, 0.17677669
        %v1351 = vmul.f32 %v1320, 0.17677669
        %v1352 = vmul.f32 %v1346, 0.17677669
        %v1353 = vmul.f32 %v1348, 0.17677669
        %v1354 = vsel %vm1032, 1, 0
        %v1355 = vsel %vm1033, 1, 0
        %vm1356 = vcmp.eq.s32.totalorder %v1354, 1
        %vm1357 = vcmp.eq.s32.totalorder %v1355, 1
        %v1358 = vsel %vm1356, %v1350, -1e+09
        %v1359 = vsel %vm1357, %v1351, -1e+09
        %v1360 = vsel %vm1356, %v1352, -1e+09
        %v1361 = vsel %vm1357, %v1353, -1e+09
        %vm1362 = vcmask 130048
        %v1363 = vsel %vm1362, %v1358, -inf
        %1364 = vmax.xlane.f32.xlu0 %v1363
        %v1365 = vpop.xlane.xlu0 %1364
        %v1366 = vsel %vm1362, %v1359, -inf
        %1367 = vmax.xlane.f32.xlu0 %v1366
        %v1368 = vpop.xlane.xlu0 %1367
        %v1369 = vsel %vm1362, %v1360, -inf
        %1370 = vmax.xlane.f32.xlu0 %v1369
        %v1371 = vpop.xlane.xlu0 %1370
        %v1372 = vsel %vm1362, %v1361, -inf
        %1373 = vmax.xlane.f32.xlu0 %v1372
        %v1374 = vpop.xlane.xlu0 %1373
        %v1375 = vsub.f32 %v1358, %v1365
        %v1376 = vsub.f32 %v1359, %v1368
        %v1377 = vsub.f32 %v1360, %v1371
        %v1378 = vsub.f32 %v1361, %v1374
        %v1379 = vmul.f32 %v1375, 1.442695
        %v1380 = vpow.pop %v1379
        %v1381 = vmul.f32 %v1376, 1.442695
        %v1382 = vpow.pop %v1381
        %v1383 = vmul.f32 %v1377, 1.442695
        %v1384 = vpow.pop %v1383
        %v1385 = vmul.f32 %v1378, 1.442695
        %v1386 = vpow.pop %v1385
        %v1387 = vsel %vm1362, %v1380, 0.0
        %1388 = vadd.xlane.f32.xlu0 %v1387
        %v1389 = vpop.xlane.xlu0 %1388
        %v1390 = vsel %vm1362, %v1382, 0.0
        %1391 = vadd.xlane.f32.xlu0 %v1390
        %v1392 = vpop.xlane.xlu0 %1391
        %v1393 = vsel %vm1362, %v1384, 0.0
        %1394 = vadd.xlane.f32.xlu0 %v1393
        %v1395 = vpop.xlane.xlu0 %1394
        %v1396 = vsel %vm1362, %v1386, 0.0
        %1397 = vadd.xlane.f32.xlu0 %v1396
        %v1398 = vpop.xlane.xlu0 %1397
        %v1399 = vrcp.pop %v1389
        %v1400 = vrcp.pop %v1392
        %v1401 = vrcp.pop %v1395
        %v1402 = vrcp.pop %v1398
        %v1403 = vmul.f32 %v1380, %v1399
        %v1404 = vmul.f32 %v1382, %v1400
        %v1405 = vmul.f32 %v1384, %v1401
        %v1406 = vmul.f32 %v1386, %v1402
        %v1407 = vpack.c.bf16 %v1403, %v1403
        %v1408 = vpack.c.bf16 %v1404, %v1404
        %v1409 = vpack.c.bf16 %v1405, %v1405
        %v1410 = vpack.c.bf16 %v1406, %v1406
        %v1413 = vunpack.c.l.b16 %v1407
        %v1414 = vunpack.c.l.b16 %v1408
        %v1415 = vpack.c.b16 %v1414, %v1413
        %v1416 = vunpack.c.l.b16 %v1289
        %v1417 = vunpack.c.l.b16 %v1290
        %v1418 = vpack.c.b16 %v1417, %v1416
        %v1421 = vsel %vm1362, %v1415, 0
        %1423 = vmatpush.bf16.msra.mxu0 0
        %1424 = vmatpush.bf16.msra.mxu0 0
        %1425 = vmatpush.bf16.msra.mxu0 0
        %1426 = vmatpush.bf16.msra.mxu0 0
        %1427 = vmatpush.bf16.msra.mxu0 0
        %1428 = vmatpush.bf16.msra.mxu0 0
        %1429 = vmatpush.bf16.msra.mxu0 0
        %1430 = vmatpush.bf16.msra.mxu0 %v1418
        %1431 = vmatmul.bf16.gmra.mxu0 %v1421
        %v1432 = vpop.f32.mrf.mxu0
        %v1433 = vadd.f32 0.0, %v1432
        %v1434 = vpop.f32.mrf.mxu0
        %v1435 = vadd.f32 0.0, %v1434
        %1436 = vdwg.mxu0
        %v1439 = vunpack.c.l.b16 %v1409
        %v1440 = vunpack.c.l.b16 %v1410
        %v1441 = vpack.c.b16 %v1440, %v1439
        %v1442 = vunpack.c.l.b16 %v1291
        %v1443 = vunpack.c.l.b16 %v1292
        %v1444 = vpack.c.b16 %v1443, %v1442
        %v1447 = vsel %vm1362, %v1441, 0
        %1449 = vmatpush.bf16.msra.mxu0 0
        %1450 = vmatpush.bf16.msra.mxu0 0
        %1451 = vmatpush.bf16.msra.mxu0 0
        %1452 = vmatpush.bf16.msra.mxu0 0
        %1453 = vmatpush.bf16.msra.mxu0 0
        %1454 = vmatpush.bf16.msra.mxu0 0
        %1455 = vmatpush.bf16.msra.mxu0 0
        %1456 = vmatpush.bf16.msra.mxu0 %v1444
        %1457 = vmatmul.bf16.gmra.mxu0 %v1447
        %v1458 = vpop.f32.mrf.mxu0
        %v1459 = vadd.f32 0.0, %v1458
        %v1460 = vpop.f32.mrf.mxu0
        %v1461 = vadd.f32 0.0, %v1460
        %1462 = vdwg.mxu0
        %v1463 = vpack.c.bf16 %v1433, %v1433
        %v1464 = vpack.c.bf16 %v1435, %v1435
        %v1465 = vpack.c.bf16 %v1459, %v1459
        %v1466 = vpack.c.bf16 %v1461, %v1461
        %1467 = vrot.lane.b32.xlu0 %v1281, 96
        %v1468 = vpop.permute.xlu0 %1467
        %1469 = vrot.lane.b32.xlu0 %v1282, 96
        %v1470 = vpop.permute.xlu0 %1469
        %1471 = vrot.lane.b32.xlu0 %v1283, 96
        %v1472 = vpop.permute.xlu0 %1471
        %1473 = vrot.lane.b32.xlu0 %v1284, 96
        %v1474 = vpop.permute.xlu0 %1473
        %v1475 = vrot.slane %v1468, 4
        %v1476 = vrot.slane %v1470, 4
        %v1477 = vrot.slane %v1472, 4
        %v1478 = vrot.slane %v1474, 4
        %1479 = vrot.lane.b32.xlu0 %v1297, 96
        %v1480 = vpop.permute.xlu0 %1479
        %1481 = vrot.lane.b32.xlu0 %v1300, 96
        %v1482 = vpop.permute.xlu0 %1481
        %v1484 = vsel %vm1301, %v1480, 0
        %v1487 = vsel %vm1301, %v1482, 0
        %1489 = vmatpush.bf16.xpose.msra.mxu0 0
        %1490 = vmatpush.bf16.xpose.msra.mxu0 0
        %1491 = vmatpush.bf16.xpose.msra.mxu0 0
        %1492 = vmatpush.bf16.xpose.msra.mxu0 0
        %1493 = vmatpush.bf16.xpose.msra.mxu0 0
        %1494 = vmatpush.bf16.xpose.msra.mxu0 0
        %1495 = vmatpush.bf16.xpose.msra.mxu0 0
        %1496 = vmatpush.bf16.xpose.msra.mxu0 %v1487
        %1497 = vmatmul.bf16.gmra.mxu0 %v1484
        %v1498 = vpop.f32.mrf.mxu0
        %v1499 = vadd.f32 0.0, %v1498
        %v1500 = vpop.f32.mrf.mxu0
        %v1501 = vadd.f32 0.0, %v1500
        %1502 = vdwg.mxu0
        %1503 = vrot.lane.b32.xlu0 %v1326, 96
        %v1504 = vpop.permute.xlu0 %1503
        %1505 = vrot.lane.b32.xlu0 %v1329, 96
        %v1506 = vpop.permute.xlu0 %1505
        %v1508 = vsel %vm1301, %v1504, 0
        %v1511 = vsel %vm1301, %v1506, 0
        %1513 = vmatpush.bf16.xpose.msra.mxu0 0
        %1514 = vmatpush.bf16.xpose.msra.mxu0 0
        %1515 = vmatpush.bf16.xpose.msra.mxu0 0
        %1516 = vmatpush.bf16.xpose.msra.mxu0 0
        %1517 = vmatpush.bf16.xpose.msra.mxu0 0
        %1518 = vmatpush.bf16.xpose.msra.mxu0 0
        %1519 = vmatpush.bf16.xpose.msra.mxu0 0
        %1520 = vmatpush.bf16.xpose.msra.mxu0 %v1511
        %1521 = vmatmul.bf16.gmra.mxu0 %v1508
        %v1522 = vpop.f32.mrf.mxu0
        %v1523 = vadd.f32 0.0, %v1522
        %v1524 = vpop.f32.mrf.mxu0
        %v1525 = vadd.f32 0.0, %v1524
        %1526 = vdwg.mxu0
        %v1527 = vmul.f32 %v1499, 0.17677669
        %v1528 = vmul.f32 %v1501, 0.17677669
        %v1529 = vmul.f32 %v1523, 0.17677669
        %v1530 = vmul.f32 %v1525, 0.17677669
        %v1531 = vsel %vm1356, %v1527, -1e+09
        %v1532 = vsel %vm1357, %v1528, -1e+09
        %v1533 = vsel %vm1356, %v1529, -1e+09
        %v1534 = vsel %vm1357, %v1530, -1e+09
        %v1535 = vsel %vm1362, %v1531, -inf
        %1536 = vmax.xlane.f32.xlu0 %v1535
        %v1537 = vpop.xlane.xlu0 %1536
        %v1538 = vsel %vm1362, %v1532, -inf
        %1539 = vmax.xlane.f32.xlu0 %v1538
        %v1540 = vpop.xlane.xlu0 %1539
        %v1541 = vsel %vm1362, %v1533, -inf
        %1542 = vmax.xlane.f32.xlu0 %v1541
        %v1543 = vpop.xlane.xlu0 %1542
        %v1544 = vsel %vm1362, %v1534, -inf
        %1545 = vmax.xlane.f32.xlu0 %v1544
        %v1546 = vpop.xlane.xlu0 %1545
        %v1547 = vsub.f32 %v1531, %v1537
        %v1548 = vsub.f32 %v1532, %v1540
        %v1549 = vsub.f32 %v1533, %v1543
        %v1550 = vsub.f32 %v1534, %v1546
        %v1551 = vmul.f32 %v1547, 1.442695
        %v1552 = vpow.pop %v1551
        %v1553 = vmul.f32 %v1548, 1.442695
        %v1554 = vpow.pop %v1553
        %v1555 = vmul.f32 %v1549, 1.442695
        %v1556 = vpow.pop %v1555
        %v1557 = vmul.f32 %v1550, 1.442695
        %v1558 = vpow.pop %v1557
        %v1559 = vsel %vm1362, %v1552, 0.0
        %1560 = vadd.xlane.f32.xlu0 %v1559
        %v1561 = vpop.xlane.xlu0 %1560
        %v1562 = vsel %vm1362, %v1554, 0.0
        %1563 = vadd.xlane.f32.xlu0 %v1562
        %v1564 = vpop.xlane.xlu0 %1563
        %v1565 = vsel %vm1362, %v1556, 0.0
        %1566 = vadd.xlane.f32.xlu0 %v1565
        %v1567 = vpop.xlane.xlu0 %1566
        %v1568 = vsel %vm1362, %v1558, 0.0
        %1569 = vadd.xlane.f32.xlu0 %v1568
        %v1570 = vpop.xlane.xlu0 %1569
        %v1571 = vrcp.pop %v1561
        %v1572 = vrcp.pop %v1564
        %v1573 = vrcp.pop %v1567
        %v1574 = vrcp.pop %v1570
        %v1575 = vmul.f32 %v1552, %v1571
        %v1576 = vmul.f32 %v1554, %v1572
        %v1577 = vmul.f32 %v1556, %v1573
        %v1578 = vmul.f32 %v1558, %v1574
        %v1579 = vpack.c.bf16 %v1575, %v1575
        %v1580 = vpack.c.bf16 %v1576, %v1576
        %v1581 = vpack.c.bf16 %v1577, %v1577
        %v1582 = vpack.c.bf16 %v1578, %v1578
        %v1585 = vunpack.c.l.b16 %v1579
        %v1586 = vunpack.c.l.b16 %v1580
        %v1587 = vpack.c.b16 %v1586, %v1585
        %v1588 = vunpack.c.l.b16 %v1475
        %v1589 = vunpack.c.l.b16 %v1476
        %v1590 = vpack.c.b16 %v1589, %v1588
        %v1593 = vsel %vm1362, %v1587, 0
        %1595 = vmatpush.bf16.msra.mxu0 0
        %1596 = vmatpush.bf16.msra.mxu0 0
        %1597 = vmatpush.bf16.msra.mxu0 0
        %1598 = vmatpush.bf16.msra.mxu0 0
        %1599 = vmatpush.bf16.msra.mxu0 0
        %1600 = vmatpush.bf16.msra.mxu0 0
        %1601 = vmatpush.bf16.msra.mxu0 0
        %1602 = vmatpush.bf16.msra.mxu0 %v1590
        %1603 = vmatmul.bf16.gmra.mxu0 %v1593
        %v1604 = vpop.f32.mrf.mxu0
        %v1605 = vadd.f32 0.0, %v1604
        %v1606 = vpop.f32.mrf.mxu0
        %v1607 = vadd.f32 0.0, %v1606
        %1608 = vdwg.mxu0
        %v1611 = vunpack.c.l.b16 %v1581
        %v1612 = vunpack.c.l.b16 %v1582
        %v1613 = vpack.c.b16 %v1612, %v1611
        %v1614 = vunpack.c.l.b16 %v1477
        %v1615 = vunpack.c.l.b16 %v1478
        %v1616 = vpack.c.b16 %v1615, %v1614
        %v1619 = vsel %vm1362, %v1613, 0
        %1621 = vmatpush.bf16.msra.mxu0 0
        %1622 = vmatpush.bf16.msra.mxu0 0
        %1623 = vmatpush.bf16.msra.mxu0 0
        %1624 = vmatpush.bf16.msra.mxu0 0
        %1625 = vmatpush.bf16.msra.mxu0 0
        %1626 = vmatpush.bf16.msra.mxu0 0
        %1627 = vmatpush.bf16.msra.mxu0 0
        %1628 = vmatpush.bf16.msra.mxu0 %v1616
        %1629 = vmatmul.bf16.gmra.mxu0 %v1619
        %v1630 = vpop.f32.mrf.mxu0
        %v1631 = vadd.f32 0.0, %v1630
        %v1632 = vpop.f32.mrf.mxu0
        %v1633 = vadd.f32 0.0, %v1632
        %1634 = vdwg.mxu0
        %v1635 = vpack.c.bf16 %v1605, %v1605
        %v1636 = vpack.c.bf16 %v1607, %v1607
        %v1637 = vpack.c.bf16 %v1631, %v1631
        %v1638 = vpack.c.bf16 %v1633, %v1633
        %1639 = vrot.lane.b32.xlu0 %v1281, 64
        %v1640 = vpop.permute.xlu0 %1639
        %1641 = vrot.lane.b32.xlu0 %v1282, 64
        %v1642 = vpop.permute.xlu0 %1641
        %1643 = vrot.lane.b32.xlu0 %v1283, 64
        %v1644 = vpop.permute.xlu0 %1643
        %1645 = vrot.lane.b32.xlu0 %v1284, 64
        %v1646 = vpop.permute.xlu0 %1645
        %v1647 = vrot.slane %v1640, 4
        %v1648 = vrot.slane %v1642, 4
        %v1649 = vrot.slane %v1644, 4
        %v1650 = vrot.slane %v1646, 4
        %1651 = vrot.lane.b32.xlu0 %v1297, 64
        %v1652 = vpop.permute.xlu0 %1651
        %1653 = vrot.lane.b32.xlu0 %v1300, 64
        %v1654 = vpop.permute.xlu0 %1653
        %v1656 = vsel %vm1301, %v1652, 0
        %v1659 = vsel %vm1301, %v1654, 0
        %1661 = vmatpush.bf16.xpose.msra.mxu0 0
        %1662 = vmatpush.bf16.xpose.msra.mxu0 0
        %1663 = vmatpush.bf16.xpose.msra.mxu0 0
        %1664 = vmatpush.bf16.xpose.msra.mxu0 0
        %1665 = vmatpush.bf16.xpose.msra.mxu0 0
        %1666 = vmatpush.bf16.xpose.msra.mxu0 0
        %1667 = vmatpush.bf16.xpose.msra.mxu0 0
        %1668 = vmatpush.bf16.xpose.msra.mxu0 %v1659
        %1669 = vmatmul.bf16.gmra.mxu0 %v1656
        %v1670 = vpop.f32.mrf.mxu0
        %v1671 = vadd.f32 0.0, %v1670
        %v1672 = vpop.f32.mrf.mxu0
        %v1673 = vadd.f32 0.0, %v1672
        %1674 = vdwg.mxu0
        %1675 = vrot.lane.b32.xlu0 %v1326, 64
        %v1676 = vpop.permute.xlu0 %1675
        %1677 = vrot.lane.b32.xlu0 %v1329, 64
        %v1678 = vpop.permute.xlu0 %1677
        %v1680 = vsel %vm1301, %v1676, 0
        %v1683 = vsel %vm1301, %v1678, 0
        %1685 = vmatpush.bf16.xpose.msra.mxu0 0
        %1686 = vmatpush.bf16.xpose.msra.mxu0 0
        %1687 = vmatpush.bf16.xpose.msra.mxu0 0
        %1688 = vmatpush.bf16.xpose.msra.mxu0 0
        %1689 = vmatpush.bf16.xpose.msra.mxu0 0
        %1690 = vmatpush.bf16.xpose.msra.mxu0 0
        %1691 = vmatpush.bf16.xpose.msra.mxu0 0
        %1692 = vmatpush.bf16.xpose.msra.mxu0 %v1683
        %1693 = vmatmul.bf16.gmra.mxu0 %v1680
        %v1694 = vpop.f32.mrf.mxu0
        %v1695 = vadd.f32 0.0, %v1694
        %v1696 = vpop.f32.mrf.mxu0
        %v1697 = vadd.f32 0.0, %v1696
        %1698 = vdwg.mxu0
        %v1699 = vmul.f32 %v1671, 0.17677669
        %v1700 = vmul.f32 %v1673, 0.17677669
        %v1701 = vmul.f32 %v1695, 0.17677669
        %v1702 = vmul.f32 %v1697, 0.17677669
        %v1703 = vsel %vm1356, %v1699, -1e+09
        %v1704 = vsel %vm1357, %v1700, -1e+09
        %v1705 = vsel %vm1356, %v1701, -1e+09
        %v1706 = vsel %vm1357, %v1702, -1e+09
        %v1707 = vsel %vm1362, %v1703, -inf
        %1708 = vmax.xlane.f32.xlu0 %v1707
        %v1709 = vpop.xlane.xlu0 %1708
        %v1710 = vsel %vm1362, %v1704, -inf
        %1711 = vmax.xlane.f32.xlu0 %v1710
        %v1712 = vpop.xlane.xlu0 %1711
        %v1713 = vsel %vm1362, %v1705, -inf
        %1714 = vmax.xlane.f32.xlu0 %v1713
        %v1715 = vpop.xlane.xlu0 %1714
        %v1716 = vsel %vm1362, %v1706, -inf
        %1717 = vmax.xlane.f32.xlu0 %v1716
        %v1718 = vpop.xlane.xlu0 %1717
        %v1719 = vsub.f32 %v1703, %v1709
        %v1720 = vsub.f32 %v1704, %v1712
        %v1721 = vsub.f32 %v1705, %v1715
        %v1722 = vsub.f32 %v1706, %v1718
        %v1723 = vmul.f32 %v1719, 1.442695
        %v1724 = vpow.pop %v1723
        %v1725 = vmul.f32 %v1720, 1.442695
        %v1726 = vpow.pop %v1725
        %v1727 = vmul.f32 %v1721, 1.442695
        %v1728 = vpow.pop %v1727
        %v1729 = vmul.f32 %v1722, 1.442695
        %v1730 = vpow.pop %v1729
        %v1731 = vsel %vm1362, %v1724, 0.0
        %1732 = vadd.xlane.f32.xlu0 %v1731
        %v1733 = vpop.xlane.xlu0 %1732
        %v1734 = vsel %vm1362, %v1726, 0.0
        %1735 = vadd.xlane.f32.xlu0 %v1734
        %v1736 = vpop.xlane.xlu0 %1735
        %v1737 = vsel %vm1362, %v1728, 0.0
        %1738 = vadd.xlane.f32.xlu0 %v1737
        %v1739 = vpop.xlane.xlu0 %1738
        %v1740 = vsel %vm1362, %v1730, 0.0
        %1741 = vadd.xlane.f32.xlu0 %v1740
        %v1742 = vpop.xlane.xlu0 %1741
        %v1743 = vrcp.pop %v1733
        %v1744 = vrcp.pop %v1736
        %v1745 = vrcp.pop %v1739
        %v1746 = vrcp.pop %v1742
        %v1747 = vmul.f32 %v1724, %v1743
        %v1748 = vmul.f32 %v1726, %v1744
        %v1749 = vmul.f32 %v1728, %v1745
        %v1750 = vmul.f32 %v1730, %v1746
        %v1751 = vpack.c.bf16 %v1747, %v1747
        %v1752 = vpack.c.bf16 %v1748, %v1748
        %v1753 = vpack.c.bf16 %v1749, %v1749
        %v1754 = vpack.c.bf16 %v1750, %v1750
        %v1757 = vunpack.c.l.b16 %v1751
        %v1758 = vunpack.c.l.b16 %v1752
        %v1759 = vpack.c.b16 %v1758, %v1757
        %v1760 = vunpack.c.l.b16 %v1647
        %v1761 = vunpack.c.l.b16 %v1648
        %v1762 = vpack.c.b16 %v1761, %v1760
        %v1765 = vsel %vm1362, %v1759, 0
        %1767 = vmatpush.bf16.msra.mxu0 0
        %1768 = vmatpush.bf16.msra.mxu0 0
        %1769 = vmatpush.bf16.msra.mxu0 0
        %1770 = vmatpush.bf16.msra.mxu0 0
        %1771 = vmatpush.bf16.msra.mxu0 0
        %1772 = vmatpush.bf16.msra.mxu0 0
        %1773 = vmatpush.bf16.msra.mxu0 0
        %1774 = vmatpush.bf16.msra.mxu0 %v1762
        %1775 = vmatmul.bf16.gmra.mxu0 %v1765
        %v1776 = vpop.f32.mrf.mxu0
        %v1777 = vadd.f32 0.0, %v1776
        %v1778 = vpop.f32.mrf.mxu0
        %v1779 = vadd.f32 0.0, %v1778
        %1780 = vdwg.mxu0
        %v1783 = vunpack.c.l.b16 %v1753
        %v1784 = vunpack.c.l.b16 %v1754
        %v1785 = vpack.c.b16 %v1784, %v1783
        %v1786 = vunpack.c.l.b16 %v1649
        %v1787 = vunpack.c.l.b16 %v1650
        %v1788 = vpack.c.b16 %v1787, %v1786
        %v1791 = vsel %vm1362, %v1785, 0
        %1793 = vmatpush.bf16.msra.mxu0 0
        %1794 = vmatpush.bf16.msra.mxu0 0
        %1795 = vmatpush.bf16.msra.mxu0 0
        %1796 = vmatpush.bf16.msra.mxu0 0
        %1797 = vmatpush.bf16.msra.mxu0 0
        %1798 = vmatpush.bf16.msra.mxu0 0
        %1799 = vmatpush.bf16.msra.mxu0 0
        %1800 = vmatpush.bf16.msra.mxu0 %v1788
        %1801 = vmatmul.bf16.gmra.mxu0 %v1791
        %v1802 = vpop.f32.mrf.mxu0
        %v1803 = vadd.f32 0.0, %v1802
        %v1804 = vpop.f32.mrf.mxu0
        %v1805 = vadd.f32 0.0, %v1804
        %1806 = vdwg.mxu0
        %v1807 = vpack.c.bf16 %v1777, %v1777
        %v1808 = vpack.c.bf16 %v1779, %v1779
        %v1809 = vpack.c.bf16 %v1803, %v1803
        %v1810 = vpack.c.bf16 %v1805, %v1805
        %1811 = vrot.lane.b32.xlu0 %v1281, 32
        %v1812 = vpop.permute.xlu0 %1811
        %1813 = vrot.lane.b32.xlu0 %v1282, 32
        %v1814 = vpop.permute.xlu0 %1813
        %1815 = vrot.lane.b32.xlu0 %v1283, 32
        %v1816 = vpop.permute.xlu0 %1815
        %1817 = vrot.lane.b32.xlu0 %v1284, 32
        %v1818 = vpop.permute.xlu0 %1817
        %v1819 = vrot.slane %v1812, 4
        %v1820 = vrot.slane %v1814, 4
        %v1821 = vrot.slane %v1816, 4
        %v1822 = vrot.slane %v1818, 4
        %1823 = vrot.lane.b32.xlu0 %v1297, 32
        %v1824 = vpop.permute.xlu0 %1823
        %1825 = vrot.lane.b32.xlu0 %v1300, 32
        %v1826 = vpop.permute.xlu0 %1825
        %v1828 = vsel %vm1301, %v1824, 0
        %v1831 = vsel %vm1301, %v1826, 0
        %1833 = vmatpush.bf16.xpose.msra.mxu0 0
        %1834 = vmatpush.bf16.xpose.msra.mxu0 0
        %1835 = vmatpush.bf16.xpose.msra.mxu0 0
        %1836 = vmatpush.bf16.xpose.msra.mxu0 0
        %1837 = vmatpush.bf16.xpose.msra.mxu0 0
        %1838 = vmatpush.bf16.xpose.msra.mxu0 0
        %1839 = vmatpush.bf16.xpose.msra.mxu0 0
        %1840 = vmatpush.bf16.xpose.msra.mxu0 %v1831
        %1841 = vmatmul.bf16.gmra.mxu0 %v1828
        %v1842 = vpop.f32.mrf.mxu0
        %v1843 = vadd.f32 0.0, %v1842
        %v1844 = vpop.f32.mrf.mxu0
        %v1845 = vadd.f32 0.0, %v1844
        %1846 = vdwg.mxu0
        %1847 = vrot.lane.b32.xlu0 %v1326, 32
        %v1848 = vpop.permute.xlu0 %1847
        %1849 = vrot.lane.b32.xlu0 %v1329, 32
        %v1850 = vpop.permute.xlu0 %1849
        %v1852 = vsel %vm1301, %v1848, 0
        %v1855 = vsel %vm1301, %v1850, 0
        %1857 = vmatpush.bf16.xpose.msra.mxu0 0
        %1858 = vmatpush.bf16.xpose.msra.mxu0 0
        %1859 = vmatpush.bf16.xpose.msra.mxu0 0
        %1860 = vmatpush.bf16.xpose.msra.mxu0 0
        %1861 = vmatpush.bf16.xpose.msra.mxu0 0
        %1862 = vmatpush.bf16.xpose.msra.mxu0 0
        %1863 = vmatpush.bf16.xpose.msra.mxu0 0
        %1864 = vmatpush.bf16.xpose.msra.mxu0 %v1855
        %1865 = vmatmul.bf16.gmra.mxu0 %v1852
        %v1866 = vpop.f32.mrf.mxu0
        %v1867 = vadd.f32 0.0, %v1866
        %v1868 = vpop.f32.mrf.mxu0
        %v1869 = vadd.f32 0.0, %v1868
        %1870 = vdwg.mxu0
        %v1871 = vmul.f32 %v1843, 0.17677669
        %v1872 = vmul.f32 %v1845, 0.17677669
        %v1873 = vmul.f32 %v1867, 0.17677669
        %v1874 = vmul.f32 %v1869, 0.17677669
        %v1875 = vsel %vm1356, %v1871, -1e+09
        %v1876 = vsel %vm1357, %v1872, -1e+09
        %v1877 = vsel %vm1356, %v1873, -1e+09
        %v1878 = vsel %vm1357, %v1874, -1e+09
        %v1879 = vsel %vm1362, %v1875, -inf
        %1880 = vmax.xlane.f32.xlu0 %v1879
        %v1881 = vpop.xlane.xlu0 %1880
        %v1882 = vsel %vm1362, %v1876, -inf
        %1883 = vmax.xlane.f32.xlu0 %v1882
        %v1884 = vpop.xlane.xlu0 %1883
        %v1885 = vsel %vm1362, %v1877, -inf
        %1886 = vmax.xlane.f32.xlu0 %v1885
        %v1887 = vpop.xlane.xlu0 %1886
        %v1888 = vsel %vm1362, %v1878, -inf
        %1889 = vmax.xlane.f32.xlu0 %v1888
        %v1890 = vpop.xlane.xlu0 %1889
        %v1891 = vsub.f32 %v1875, %v1881
        %v1892 = vsub.f32 %v1876, %v1884
        %v1893 = vsub.f32 %v1877, %v1887
        %v1894 = vsub.f32 %v1878, %v1890
        %v1895 = vmul.f32 %v1891, 1.442695
        %v1896 = vpow.pop %v1895
        %v1897 = vmul.f32 %v1892, 1.442695
        %v1898 = vpow.pop %v1897
        %v1899 = vmul.f32 %v1893, 1.442695
        %v1900 = vpow.pop %v1899
        %v1901 = vmul.f32 %v1894, 1.442695
        %v1902 = vpow.pop %v1901
        %v1903 = vsel %vm1362, %v1896, 0.0
        %1904 = vadd.xlane.f32.xlu0 %v1903
        %v1905 = vpop.xlane.xlu0 %1904
        %v1906 = vsel %vm1362, %v1898, 0.0
        %1907 = vadd.xlane.f32.xlu0 %v1906
        %v1908 = vpop.xlane.xlu0 %1907
        %v1909 = vsel %vm1362, %v1900, 0.0
        %1910 = vadd.xlane.f32.xlu0 %v1909
        %v1911 = vpop.xlane.xlu0 %1910
        %v1912 = vsel %vm1362, %v1902, 0.0
        %1913 = vadd.xlane.f32.xlu0 %v1912
        %v1914 = vpop.xlane.xlu0 %1913
        %v1915 = vrcp.pop %v1905
        %v1916 = vrcp.pop %v1908
        %v1917 = vrcp.pop %v1911
        %v1918 = vrcp.pop %v1914
        %v1919 = vmul.f32 %v1896, %v1915
        %v1920 = vmul.f32 %v1898, %v1916
        %v1921 = vmul.f32 %v1900, %v1917
        %v1922 = vmul.f32 %v1902, %v1918
        %v1923 = vpack.c.bf16 %v1919, %v1919
        %v1924 = vpack.c.bf16 %v1920, %v1920
        %v1925 = vpack.c.bf16 %v1921, %v1921
        %v1926 = vpack.c.bf16 %v1922, %v1922
        %v1929 = vunpack.c.l.b16 %v1923
        %v1930 = vunpack.c.l.b16 %v1924
        %v1931 = vpack.c.b16 %v1930, %v1929
        %v1932 = vunpack.c.l.b16 %v1819
        %v1933 = vunpack.c.l.b16 %v1820
        %v1934 = vpack.c.b16 %v1933, %v1932
        %v1937 = vsel %vm1362, %v1931, 0
        %1939 = vmatpush.bf16.msra.mxu0 0
        %1940 = vmatpush.bf16.msra.mxu0 0
        %1941 = vmatpush.bf16.msra.mxu0 0
        %1942 = vmatpush.bf16.msra.mxu0 0
        %1943 = vmatpush.bf16.msra.mxu0 0
        %1944 = vmatpush.bf16.msra.mxu0 0
        %1945 = vmatpush.bf16.msra.mxu0 0
        %1946 = vmatpush.bf16.msra.mxu0 %v1934
        %1947 = vmatmul.bf16.gmra.mxu0 %v1937
        %v1948 = vpop.f32.mrf.mxu0
        %v1949 = vadd.f32 0.0, %v1948
        %v1950 = vpop.f32.mrf.mxu0
        %v1951 = vadd.f32 0.0, %v1950
        %1952 = vdwg.mxu0
        %v1955 = vunpack.c.l.b16 %v1925
        %v1956 = vunpack.c.l.b16 %v1926
        %v1957 = vpack.c.b16 %v1956, %v1955
        %v1958 = vunpack.c.l.b16 %v1821
        %v1959 = vunpack.c.l.b16 %v1822
        %v1960 = vpack.c.b16 %v1959, %v1958
        %v1963 = vsel %vm1362, %v1957, 0
        %1965 = vmatpush.bf16.msra.mxu0 0
        %1966 = vmatpush.bf16.msra.mxu0 0
        %1967 = vmatpush.bf16.msra.mxu0 0
        %1968 = vmatpush.bf16.msra.mxu0 0
        %1969 = vmatpush.bf16.msra.mxu0 0
        %1970 = vmatpush.bf16.msra.mxu0 0
        %1971 = vmatpush.bf16.msra.mxu0 0
        %1972 = vmatpush.bf16.msra.mxu0 %v1960
        %1973 = vmatmul.bf16.gmra.mxu0 %v1963
        %v1974 = vpop.f32.mrf.mxu0
        %v1975 = vadd.f32 0.0, %v1974
        %v1976 = vpop.f32.mrf.mxu0
        %v1977 = vadd.f32 0.0, %v1976
        %1978 = vdwg.mxu0
        %v1979 = vpack.c.bf16 %v1949, %v1949
        %v1980 = vpack.c.bf16 %v1951, %v1951
        %v1981 = vpack.c.bf16 %v1975, %v1975
        %v1982 = vpack.c.bf16 %v1977, %v1977
        %v1987 = vunpack.c.l.b16 %v1463
        %v1988 = vunpack.c.l.b16 %v1464
        %v1989 = vunpack.c.l.b16 %v1465
        %v1990 = vunpack.c.l.b16 %v1466
        %v1991 = vpack.c.b16 %v1988, %v1987
        %v1992 = vpack.c.b16 %v1990, %v1989
        %v1997 = vunpack.c.l.b16 %v1635
        %v1998 = vunpack.c.l.b16 %v1636
        %v1999 = vunpack.c.l.b16 %v1637
        %v2000 = vunpack.c.l.b16 %v1638
        %v2001 = vpack.c.b16 %v1998, %v1997
        %v2002 = vpack.c.b16 %v2000, %v1999
        %2003 = vrot.lane.b32.xlu0 %v2001, 32
        %v2004 = vpop.permute.xlu0 %2003
        %2005 = vrot.lane.b32.xlu0 %v2002, 32
        %v2006 = vpop.permute.xlu0 %2005
        %v2011 = vunpack.c.l.b16 %v1807
        %v2012 = vunpack.c.l.b16 %v1808
        %v2013 = vunpack.c.l.b16 %v1809
        %v2014 = vunpack.c.l.b16 %v1810
        %v2015 = vpack.c.b16 %v2012, %v2011
        %v2016 = vpack.c.b16 %v2014, %v2013
        %2017 = vrot.lane.b32.xlu0 %v2015, 64
        %v2018 = vpop.permute.xlu0 %2017
        %2019 = vrot.lane.b32.xlu0 %v2016, 64
        %v2020 = vpop.permute.xlu0 %2019
        %v2025 = vunpack.c.l.b16 %v1979
        %v2026 = vunpack.c.l.b16 %v1980
        %v2027 = vunpack.c.l.b16 %v1981
        %v2028 = vunpack.c.l.b16 %v1982
        %v2029 = vpack.c.b16 %v2026, %v2025
        %v2030 = vpack.c.b16 %v2028, %v2027
        %2031 = vrot.lane.b32.xlu0 %v2029, 96
        %v2032 = vpop.permute.xlu0 %2031
        %2033 = vrot.lane.b32.xlu0 %v2030, 96
        %v2034 = vpop.permute.xlu0 %2033
        %v2037 = vsel %vm1301, %v1991, %v2004
        %v2040 = vsel %vm1301, %v1992, %v2006
        %vm2041 = vcmask 523264
        %v2043 = vsel %vm2041, %v2037, %v2018
        %v2045 = vsel %vm2041, %v2040, %v2020
        %vm2046 = vcmask 785408
        %v2048 = vsel %vm2046, %v2043, %v2032
        %v2051 = vsel %vm2046, %v2045, %v2034
        %v2053 = vld [vmem:[#allocation13] sm:$0xf]
        %v2054 = vld [vmem:[#allocation13 + $0x4] sm:$0xf]
        %v2055 = vld [vmem:[#allocation13 + $0x8] sm:$0xf]
        %v2056 = vld [vmem:[#allocation13 + $0xc] sm:$0xf]
        %v2057 = vld [vmem:[#allocation13 + $0x10] sm:$0xf]
        %v2058 = vld [vmem:[#allocation13 + $0x14] sm:$0xf]
        %v2059 = vld [vmem:[#allocation13 + $0x18] sm:$0xf]
        %v2060 = vld [vmem:[#allocation13 + $0x1c] sm:$0xf]
        %v2061 = vld [vmem:[#allocation13 + $0x20] sm:$0xf]
        %v2062 = vld [vmem:[#allocation13 + $0x24] sm:$0xf]
        %v2063 = vld [vmem:[#allocation13 + $0x28] sm:$0xf]
        %v2064 = vld [vmem:[#allocation13 + $0x2c] sm:$0xf]
        %v2065 = vld [vmem:[#allocation13 + $0x30] sm:$0xf]
        %v2066 = vld [vmem:[#allocation13 + $0x34] sm:$0xf]
        %v2067 = vld [vmem:[#allocation13 + $0x38] sm:$0xf]
        %v2068 = vld [vmem:[#allocation13 + $0x3c] sm:$0xf]
        %v2069 = vld [vmem:[%s8] sm:$0x1]
        %v2071 = vperm.slane %v2069, 0
        %v2089 = vunpack.c.l.b16 %v2053
        %v2090 = vunpack.c.l.b16 %v2054
        %v2091 = vunpack.c.l.b16 %v2055
        %v2092 = vunpack.c.l.b16 %v2056
        %v2093 = vunpack.c.l.b16 %v2057
        %v2094 = vunpack.c.l.b16 %v2058
        %v2095 = vunpack.c.l.b16 %v2059
        %v2096 = vunpack.c.l.b16 %v2060
        %v2097 = vunpack.c.l.b16 %v2061
        %v2098 = vunpack.c.l.b16 %v2062
        %v2099 = vunpack.c.l.b16 %v2063
        %v2100 = vunpack.c.l.b16 %v2064
        %v2101 = vunpack.c.l.b16 %v2065
        %v2102 = vunpack.c.l.b16 %v2066
        %v2103 = vunpack.c.l.b16 %v2067
        %v2104 = vunpack.c.l.b16 %v2068
        %v2105 = vpack.c.b16 %v2090, %v2089
        %v2106 = vpack.c.b16 %v2092, %v2091
        %v2107 = vpack.c.b16 %v2094, %v2093
        %v2108 = vpack.c.b16 %v2096, %v2095
        %v2109 = vpack.c.b16 %v2098, %v2097
        %v2110 = vpack.c.b16 %v2100, %v2099
        %v2111 = vpack.c.b16 %v2102, %v2101
        %v2112 = vpack.c.b16 %v2104, %v2103
        %2121 = vmatpush.bf16.msra.mxu0 %v2112
        %2122 = vmatpush.bf16.msra.mxu0 %v2111
        %2123 = vmatpush.bf16.msra.mxu0 %v2110
        %2124 = vmatpush.bf16.msra.mxu0 %v2109
        %2125 = vmatpush.bf16.msra.mxu0 %v2108
        %2126 = vmatpush.bf16.msra.mxu0 %v2107
        %2127 = vmatpush.bf16.msra.mxu0 %v2106
        %2128 = vmatpush.bf16.msra.mxu0 %v2105
        %2129 = vmatmul.bf16.gmra.mxu0 %v2048
        %v2130 = vpop.f32.mrf.mxu0
        %v2131 = vadd.f32 %v2071, %v2130
        %v2132 = vpop.f32.mrf.mxu0
        %v2133 = vadd.f32 %v2071, %v2132
        %2134 = vmatmul.bf16.gmra.mxu0 %v2051
        %v2135 = vpop.f32.mrf.mxu0
        %v2136 = vadd.f32 %v2071, %v2135
        %v2137 = vpop.f32.mrf.mxu0
        %v2138 = vadd.f32 %v2071, %v2137
        %2139 = vdwg.mxu0
        %v2140 = vunpack.c.l.bf16 %v1019
        %v2141 = vunpack.c.l.bf16 %v1020
        %v2142 = vunpack.c.l.bf16 %v1021
        %v2143 = vunpack.c.l.bf16 %v1022
        %v2144 = vadd.f32 %v2140, %v2131
        %v2145 = vadd.f32 %v2141, %v2133
        %v2146 = vadd.f32 %v2142, %v2136
        %v2147 = vadd.f32 %v2143, %v2138
        %v2148 = vld [vmem:[%s9] sm:$0x1]
        %v2149 = vld [vmem:[%s10] sm:$0x1]
        %2150 = vadd.xlane.f32.xlu0 %v2144
        %v2151 = vpop.xlane.xlu0 %2150
        %2152 = vadd.xlane.f32.xlu0 %v2145
        %v2153 = vpop.xlane.xlu0 %2152
        %2154 = vadd.xlane.f32.xlu0 %v2146
        %v2155 = vpop.xlane.xlu0 %2154
        %2156 = vadd.xlane.f32.xlu0 %v2147
        %v2157 = vpop.xlane.xlu0 %2156
        %v2158 = vrcp.pop 128.0
        %v2159 = vmul.f32 128.0, %v2158
        %v2160 = vsub.f32 1.0, %v2159
        %v2161 = vmul.f32 %v2158, %v2160
        %v2162 = vadd.f32 %v2158, %v2161
        %vm2163 = vweird.f32 %v2158
        %v2164 = vsel %vm2163, %v2158, %v2162
        %v2165 = vmul.f32 %v2151, %v2164
        %v2166 = vmul.f32 %v2153, %v2164
        %v2167 = vmul.f32 %v2155, %v2164
        %v2168 = vmul.f32 %v2157, %v2164
        %v2169 = vsub.f32 %v2144, %v2165
        %v2170 = vsub.f32 %v2145, %v2166
        %v2171 = vsub.f32 %v2146, %v2167
        %v2172 = vsub.f32 %v2147, %v2168
        %v2173 = vmul.f32 %v2169, %v2169
        %v2174 = vmul.f32 %v2170, %v2170
        %v2175 = vmul.f32 %v2171, %v2171
        %v2176 = vmul.f32 %v2172, %v2172
        %2177 = vadd.xlane.f32.xlu0 %v2173
        %v2178 = vpop.xlane.xlu0 %2177
        %2179 = vadd.xlane.f32.xlu0 %v2174
        %v2180 = vpop.xlane.xlu0 %2179
        %2181 = vadd.xlane.f32.xlu0 %v2175
        %v2182 = vpop.xlane.xlu0 %2181
        %2183 = vadd.xlane.f32.xlu0 %v2176
        %v2184 = vpop.xlane.xlu0 %2183
        %v2185 = vmul.f32 %v2178, %v2164
        %v2186 = vmul.f32 %v2180, %v2164
        %v2187 = vmul.f32 %v2182, %v2164
        %v2188 = vmul.f32 %v2184, %v2164
        %v2189 = vadd.f32 %v2185, 1e-05
        %v2190 = vadd.f32 %v2186, 1e-05
        %v2191 = vadd.f32 %v2187, 1e-05
        %v2192 = vadd.f32 %v2188, 1e-05
        %v2193 = vrsqrt.pop %v2189
        %v2194 = vmul.f32 %v2193, %v2189
        %v2195 = vmul.f32 %v2194, %v2193
        %v2196 = vmul.f32 0.5, %v2195
        %v2197 = vsub.f32 1.5, %v2196
        %v2198 = vmul.f32 %v2193, %v2197
        %vm2199 = vweird.f32 %v2189
        %vm2200 = vweird.f32 %v2193
        %vm2201 = vmor %vm2199, %vm2200
        %v2202 = vsel %vm2201, %v2193, %v2198
        %v2203 = vrsqrt.pop %v2190
        %v2204 = vmul.f32 %v2203, %v2190
        %v2205 = vmul.f32 %v2204, %v2203
        %v2206 = vmul.f32 0.5, %v2205
        %v2207 = vsub.f32 1.5, %v2206
        %v2208 = vmul.f32 %v2203, %v2207
        %vm2209 = vweird.f32 %v2190
        %vm2210 = vweird.f32 %v2203
        %vm2211 = vmor %vm2209, %vm2210
        %v2212 = vsel %vm2211, %v2203, %v2208
        %v2213 = vrsqrt.pop %v2191
        %v2214 = vmul.f32 %v2213, %v2191
        %v2215 = vmul.f32 %v2214, %v2213
        %v2216 = vmul.f32 0.5, %v2215
        %v2217 = vsub.f32 1.5, %v2216
        %v2218 = vmul.f32 %v2213, %v2217
        %vm2219 = vweird.f32 %v2191
        %vm2220 = vweird.f32 %v2213
        %vm2221 = vmor %vm2219, %vm2220
        %v2222 = vsel %vm2221, %v2213, %v2218
        %v2223 = vrsqrt.pop %v2192
        %v2224 = vmul.f32 %v2223, %v2192
        %v2225 = vmul.f32 %v2224, %v2223
        %v2226 = vmul.f32 0.5, %v2225
        %v2227 = vsub.f32 1.5, %v2226
        %v2228 = vmul.f32 %v2223, %v2227
        %vm2229 = vweird.f32 %v2192
        %vm2230 = vweird.f32 %v2223
        %vm2231 = vmor %vm2229, %vm2230
        %v2232 = vsel %vm2231, %v2223, %v2228
        %v2233 = vmul.f32 %v2169, %v2202
        %v2234 = vmul.f32 %v2170, %v2212
        %v2235 = vmul.f32 %v2171, %v2222
        %v2236 = vmul.f32 %v2172, %v2232
        %v2238 = vperm.slane %v2148, 0
        %v2240 = vmul.f32 %v2233, %v2238
        %v2241 = vmul.f32 %v2234, %v2238
        %v2242 = vmul.f32 %v2235, %v2238
        %v2243 = vmul.f32 %v2236, %v2238
        %v2245 = vperm.slane %v2149, 0
        %v2247 = vadd.f32 %v2240, %v2245
        %v2248 = vadd.f32 %v2241, %v2245
        %v2249 = vadd.f32 %v2242, %v2245
        %v2250 = vadd.f32 %v2243, %v2245
        %v2251 = vpack.c.bf16 %v2248, %v2247
        %v2252 = vpack.c.bf16 %v2250, %v2249
        %v2253 = vld [vmem:[#allocation14] sm:$0xf]
        %v2254 = vld [vmem:[#allocation14 + $0x4] sm:$0xf]
        %v2255 = vld [vmem:[#allocation14 + $0x8] sm:$0xf]
        %v2256 = vld [vmem:[#allocation14 + $0xc] sm:$0xf]
        %v2257 = vld [vmem:[#allocation14 + $0x10] sm:$0xf]
        %v2258 = vld [vmem:[#allocation14 + $0x14] sm:$0xf]
        %v2259 = vld [vmem:[#allocation14 + $0x18] sm:$0xf]
        %v2260 = vld [vmem:[#allocation14 + $0x1c] sm:$0xf]
        %v2261 = vld [vmem:[#allocation14 + $0x20] sm:$0xf]
        %v2262 = vld [vmem:[#allocation14 + $0x24] sm:$0xf]
        %v2263 = vld [vmem:[#allocation14 + $0x28] sm:$0xf]
        %v2264 = vld [vmem:[#allocation14 + $0x2c] sm:$0xf]
        %v2265 = vld [vmem:[#allocation14 + $0x30] sm:$0xf]
        %v2266 = vld [vmem:[#allocation14 + $0x34] sm:$0xf]
        %v2267 = vld [vmem:[#allocation14 + $0x38] sm:$0xf]
        %v2268 = vld [vmem:[#allocation14 + $0x3c] sm:$0xf]
        %v2269 = vld [vmem:[%s12] sm:$0x1]
        %v2271 = vperm.slane %v2269, 0
        %v2289 = vunpack.c.l.b16 %v2253
        %v2290 = vunpack.c.l.b16 %v2254
        %v2291 = vunpack.c.l.b16 %v2255
        %v2292 = vunpack.c.l.b16 %v2256
        %v2293 = vunpack.c.l.b16 %v2257
        %v2294 = vunpack.c.l.b16 %v2258
        %v2295 = vunpack.c.l.b16 %v2259
        %v2296 = vunpack.c.l.b16 %v2260
        %v2297 = vunpack.c.l.b16 %v2261
        %v2298 = vunpack.c.l.b16 %v2262
        %v2299 = vunpack.c.l.b16 %v2263
        %v2300 = vunpack.c.l.b16 %v2264
        %v2301 = vunpack.c.l.b16 %v2265
        %v2302 = vunpack.c.l.b16 %v2266
        %v2303 = vunpack.c.l.b16 %v2267
        %v2304 = vunpack.c.l.b16 %v2268
        %v2305 = vpack.c.b16 %v2290, %v2289
        %v2306 = vpack.c.b16 %v2292, %v2291
        %v2307 = vpack.c.b16 %v2294, %v2293
        %v2308 = vpack.c.b16 %v2296, %v2295
        %v2309 = vpack.c.b16 %v2298, %v2297
        %v2310 = vpack.c.b16 %v2300, %v2299
        %v2311 = vpack.c.b16 %v2302, %v2301
        %v2312 = vpack.c.b16 %v2304, %v2303
        %2321 = vmatpush.bf16.msra.mxu0 %v2312
        %2322 = vmatpush.bf16.msra.mxu0 %v2311
        %2323 = vmatpush.bf16.msra.mxu0 %v2310
        %2324 = vmatpush.bf16.msra.mxu0 %v2309
        %2325 = vmatpush.bf16.msra.mxu0 %v2308
        %2326 = vmatpush.bf16.msra.mxu0 %v2307
        %2327 = vmatpush.bf16.msra.mxu0 %v2306
        %2328 = vmatpush.bf16.msra.mxu0 %v2305
        %2329 = vmatmul.bf16.gmra.mxu0 %v2251
        %v2330 = vpop.f32.mrf.mxu0
        %v2331 = vadd.f32 %v2271, %v2330
        %v2332 = vpop.f32.mrf.mxu0
        %v2333 = vadd.f32 %v2271, %v2332
        %2334 = vmatmul.bf16.gmra.mxu0 %v2252
        %v2335 = vpop.f32.mrf.mxu0
        %v2336 = vadd.f32 %v2271, %v2335
        %v2337 = vpop.f32.mrf.mxu0
        %v2338 = vadd.f32 %v2271, %v2337
        %2339 = vdwg.mxu0
        %v2340 = vpack.c.bf16 %v2331, %v2331
        %v2341 = vpack.c.bf16 %v2333, %v2333
        %v2342 = vpack.c.bf16 %v2336, %v2336
        %v2343 = vpack.c.bf16 %v2338, %v2338
        %v2344 = vld [vmem:[#allocation16] sm:$0xff]
        %v2345 = vld [vmem:[#allocation16 + $0x8] sm:$0xff]
        %v2346 = vld [vmem:[#allocation16 + $0x10] sm:$0xff]
        %v2347 = vld [vmem:[#allocation16 + $0x18] sm:$0xff]
        %v2348 = vld [vmem:[#allocation16 + $0x20] sm:$0xff]
        %v2349 = vld [vmem:[#allocation16 + $0x28] sm:$0xff]
        %v2350 = vld [vmem:[#allocation16 + $0x30] sm:$0xff]
        %v2351 = vld [vmem:[#allocation16 + $0x38] sm:$0xff]
        %v2352 = vld [vmem:[#allocation16 + $0x40] sm:$0xff]
        %v2353 = vld [vmem:[#allocation16 + $0x48] sm:$0xff]
        %v2354 = vld [vmem:[#allocation16 + $0x50] sm:$0xff]
        %v2355 = vld [vmem:[#allocation16 + $0x58] sm:$0xff]
        %v2356 = vld [vmem:[#allocation16 + $0x60] sm:$0xff]
        %v2357 = vld [vmem:[#allocation16 + $0x68] sm:$0xff]
        %v2358 = vld [vmem:[#allocation16 + $0x70] sm:$0xff]
        %v2359 = vld [vmem:[#allocation16 + $0x78] sm:$0xff]
        %v2360 = vld [vmem:[%s14] sm:$0x3]
        %v2362 = vperm.slane %v2360, 0
        %v2363 = vperm.slane %v2360, 1
        %v2370 = vunpack.c.l.b16 %v1023
        %v2371 = vunpack.c.l.b16 %v1024
        %v2372 = vunpack.c.l.b16 %v1025
        %v2373 = vunpack.c.l.b16 %v1026
        %v2374 = vpack.c.b16 %v2371, %v2370
        %v2375 = vpack.c.b16 %v2373, %v2372
        %v2394 = vunpack.c.l.b16 %v2344
        %v2395 = vunpack.c.h.b16 %v2344
        %v2396 = vunpack.c.l.b16 %v2345
        %v2397 = vunpack.c.h.b16 %v2345
        %v2398 = vunpack.c.l.b16 %v2346
        %v2399 = vunpack.c.h.b16 %v2346
        %v2400 = vunpack.c.l.b16 %v2347
        %v2401 = vunpack.c.h.b16 %v2347
        %v2402 = vunpack.c.l.b16 %v2348
        %v2403 = vunpack.c.h.b16 %v2348
        %v2404 = vunpack.c.l.b16 %v2349
        %v2405 = vunpack.c.h.b16 %v2349
        %v2406 = vunpack.c.l.b16 %v2350
        %v2407 = vunpack.c.h.b16 %v2350
        %v2408 = vunpack.c.l.b16 %v2351
        %v2409 = vunpack.c.h.b16 %v2351
        %v2410 = vunpack.c.l.b16 %v2352
        %v2411 = vunpack.c.h.b16 %v2352
        %v2412 = vunpack.c.l.b16 %v2353
        %v2413 = vunpack.c.h.b16 %v2353
        %v2414 = vunpack.c.l.b16 %v2354
        %v2415 = vunpack.c.h.b16 %v2354
        %v2416 = vunpack.c.l.b16 %v2355
        %v2417 = vunpack.c.h.b16 %v2355
        %v2418 = vunpack.c.l.b16 %v2356
        %v2419 = vunpack.c.h.b16 %v2356
        %v2420 = vunpack.c.l.b16 %v2357
        %v2421 = vunpack.c.h.b16 %v2357
        %v2422 = vunpack.c.l.b16 %v2358
        %v2423 = vunpack.c.h.b16 %v2358
        %v2424 = vunpack.c.l.b16 %v2359
        %v2425 = vunpack.c.h.b16 %v2359
        %v2426 = vpack.c.b16 %v2396, %v2394
        %v2427 = vpack.c.b16 %v2397, %v2395
        %v2428 = vpack.c.b16 %v2400, %v2398
        %v2429 = vpack.c.b16 %v2401, %v2399
        %v2430 = vpack.c.b16 %v2404, %v2402
        %v2431 = vpack.c.b16 %v2405, %v2403
        %v2432 = vpack.c.b16 %v2408, %v2406
        %v2433 = vpack.c.b16 %v2409, %v2407
        %v2434 = vpack.c.b16 %v2412, %v2410
        %v2435 = vpack.c.b16 %v2413, %v2411
        %v2436 = vpack.c.b16 %v2416, %v2414
        %v2437 = vpack.c.b16 %v2417, %v2415
        %v2438 = vpack.c.b16 %v2420, %v2418
        %v2439 = vpack.c.b16 %v2421, %v2419
        %v2440 = vpack.c.b16 %v2424, %v2422
        %v2441 = vpack.c.b16 %v2425, %v2423
        %2458 = vmatpush.bf16.msra.mxu0 %v2440
        %2459 = vmatpush.bf16.msra.mxu0 %v2438
        %2460 = vmatpush.bf16.msra.mxu0 %v2436
        %2461 = vmatpush.bf16.msra.mxu0 %v2434
        %2462 = vmatpush.bf16.msra.mxu0 %v2432
        %2463 = vmatpush.bf16.msra.mxu0 %v2430
        %2464 = vmatpush.bf16.msra.mxu0 %v2428
        %2465 = vmatpush.bf16.msra.mxu0 %v2426
        %2466 = vmatmul.bf16.gmra.mxu0 %v2374
        %v2467 = vpop.f32.mrf.mxu0
        %v2468 = vadd.f32 %v2362, %v2467
        %v2469 = vpop.f32.mrf.mxu0
        %v2470 = vadd.f32 %v2362, %v2469
        %2471 = vmatmul.bf16.gmra.mxu0 %v2375
        %v2472 = vpop.f32.mrf.mxu0
        %v2473 = vadd.f32 %v2362, %v2472
        %v2474 = vpop.f32.mrf.mxu0
        %v2475 = vadd.f32 %v2362, %v2474
        %2476 = vdwg.mxu0
        %2477 = vmatpush.bf16.msra.mxu0 %v2441
        %2478 = vmatpush.bf16.msra.mxu0 %v2439
        %2479 = vmatpush.bf16.msra.mxu0 %v2437
        %2480 = vmatpush.bf16.msra.mxu0 %v2435
        %2481 = vmatpush.bf16.msra.mxu0 %v2433
        %2482 = vmatpush.bf16.msra.mxu0 %v2431
        %2483 = vmatpush.bf16.msra.mxu0 %v2429
        %2484 = vmatpush.bf16.msra.mxu0 %v2427
        %2485 = vmatmul.bf16.gmra.mxu0 %v2374
        %v2486 = vpop.f32.mrf.mxu0
        %v2487 = vadd.f32 %v2363, %v2486
        %v2488 = vpop.f32.mrf.mxu0
        %v2489 = vadd.f32 %v2363, %v2488
        %2490 = vmatmul.bf16.gmra.mxu0 %v2375
        %v2491 = vpop.f32.mrf.mxu0
        %v2492 = vadd.f32 %v2363, %v2491
        %v2493 = vpop.f32.mrf.mxu0
        %v2494 = vadd.f32 %v2363, %v2493
        %2495 = vdwg.mxu0
        %v2496 = vpack.c.bf16 %v2487, %v2468
        %v2497 = vpack.c.bf16 %v2489, %v2470
        %v2498 = vpack.c.bf16 %v2492, %v2473
        %v2499 = vpack.c.bf16 %v2494, %v2475
        %v2504 = vrot.slane %v2496, 4
        %v2505 = vrot.slane %v2497, 4
        %v2506 = vrot.slane %v2498, 4
        %v2507 = vrot.slane %v2499, 4
        %v2510 = vunpack.c.l.b16 %v2340
        %v2511 = vunpack.c.l.b16 %v2341
        %v2512 = vpack.c.b16 %v2511, %v2510
        %v2513 = vunpack.c.l.b16 %v2496
        %v2514 = vunpack.c.l.b16 %v2497
        %v2515 = vpack.c.b16 %v2514, %v2513
        %v2517 = vsel %vm1301, %v2512, 0
        %v2520 = vsel %vm1301, %v2515, 0
        %2522 = vmatpush.bf16.xpose.msra.mxu0 0
        %2523 = vmatpush.bf16.xpose.msra.mxu0 0
        %2524 = vmatpush.bf16.xpose.msra.mxu0 0
        %2525 = vmatpush.bf16.xpose.msra.mxu0 0
        %2526 = vmatpush.bf16.xpose.msra.mxu0 0
        %2527 = vmatpush.bf16.xpose.msra.mxu0 0
        %2528 = vmatpush.bf16.xpose.msra.mxu0 0
        %2529 = vmatpush.bf16.xpose.msra.mxu0 %v2520
        %2530 = vmatmul.bf16.gmra.mxu0 %v2517
        %v2531 = vpop.f32.mrf.mxu0
        %v2532 = vadd.f32 0.0, %v2531
        %v2533 = vpop.f32.mrf.mxu0
        %v2534 = vadd.f32 0.0, %v2533
        %2535 = vdwg.mxu0
        %v2538 = vunpack.c.l.b16 %v2342
        %v2539 = vunpack.c.l.b16 %v2343
        %v2540 = vpack.c.b16 %v2539, %v2538
        %v2541 = vunpack.c.l.b16 %v2498
        %v2542 = vunpack.c.l.b16 %v2499
        %v2543 = vpack.c.b16 %v2542, %v2541
        %v2545 = vsel %vm1301, %v2540, 0
        %v2548 = vsel %vm1301, %v2543, 0
        %2550 = vmatpush.bf16.xpose.msra.mxu0 0
        %2551 = vmatpush.bf16.xpose.msra.mxu0 0
        %2552 = vmatpush.bf16.xpose.msra.mxu0 0
        %2553 = vmatpush.bf16.xpose.msra.mxu0 0
        %2554 = vmatpush.bf16.xpose.msra.mxu0 0
        %2555 = vmatpush.bf16.xpose.msra.mxu0 0
        %2556 = vmatpush.bf16.xpose.msra.mxu0 0
        %2557 = vmatpush.bf16.xpose.msra.mxu0 %v2548
        %2558 = vmatmul.bf16.gmra.mxu0 %v2545
        %v2559 = vpop.f32.mrf.mxu0
        %v2560 = vadd.f32 0.0, %v2559
        %v2561 = vpop.f32.mrf.mxu0
        %v2562 = vadd.f32 0.0, %v2561
        %2563 = vdwg.mxu0
        %v2564 = vmul.f32 %v2532, 0.17677669
        %v2565 = vmul.f32 %v2534, 0.17677669
        %v2566 = vmul.f32 %v2560, 0.17677669
        %v2567 = vmul.f32 %v2562, 0.17677669
        %v2568 = vsel %vm1036, 1, 0
        %v2569 = vsel %vm1037, 1, 0
        %v2570 = vperm.slane %v2568, 0
        %v2571 = vperm.slane %v2569, 0
        %vm2572 = vcmp.eq.s32.totalorder %v2570, 1
        %vm2573 = vcmp.eq.s32.totalorder %v2571, 1
        %v2574 = vsel %vm2572, %v2564, -1e+09
        %v2575 = vsel %vm2572, %v2565, -1e+09
        %v2576 = vsel %vm2573, %v2566, -1e+09
        %v2577 = vsel %vm2573, %v2567, -1e+09
        %v2578 = vsel %vm1362, %v2574, -inf
        %2579 = vmax.xlane.f32.xlu0 %v2578
        %v2580 = vpop.xlane.xlu0 %2579
        %v2581 = vsel %vm1362, %v2575, -inf
        %2582 = vmax.xlane.f32.xlu0 %v2581
        %v2583 = vpop.xlane.xlu0 %2582
        %v2584 = vsel %vm1362, %v2576, -inf
        %2585 = vmax.xlane.f32.xlu0 %v2584
        %v2586 = vpop.xlane.xlu0 %2585
        %v2587 = vsel %vm1362, %v2577, -inf
        %2588 = vmax.xlane.f32.xlu0 %v2587
        %v2589 = vpop.xlane.xlu0 %2588
        %v2590 = vsub.f32 %v2574, %v2580
        %v2591 = vsub.f32 %v2575, %v2583
        %v2592 = vsub.f32 %v2576, %v2586
        %v2593 = vsub.f32 %v2577, %v2589
        %v2594 = vmul.f32 %v2590, 1.442695
        %v2595 = vpow.pop %v2594
        %v2596 = vmul.f32 %v2591, 1.442695
        %v2597 = vpow.pop %v2596
        %v2598 = vmul.f32 %v2592, 1.442695
        %v2599 = vpow.pop %v2598
        %v2600 = vmul.f32 %v2593, 1.442695
        %v2601 = vpow.pop %v2600
        %v2602 = vsel %vm1362, %v2595, 0.0
        %2603 = vadd.xlane.f32.xlu0 %v2602
        %v2604 = vpop.xlane.xlu0 %2603
        %v2605 = vsel %vm1362, %v2597, 0.0
        %2606 = vadd.xlane.f32.xlu0 %v2605
        %v2607 = vpop.xlane.xlu0 %2606
        %v2608 = vsel %vm1362, %v2599, 0.0
        %2609 = vadd.xlane.f32.xlu0 %v2608
        %v2610 = vpop.xlane.xlu0 %2609
        %v2611 = vsel %vm1362, %v2601, 0.0
        %2612 = vadd.xlane.f32.xlu0 %v2611
        %v2613 = vpop.xlane.xlu0 %2612
        %v2614 = vrcp.pop %v2604
        %v2615 = vrcp.pop %v2607
        %v2616 = vrcp.pop %v2610
        %v2617 = vrcp.pop %v2613
        %v2618 = vmul.f32 %v2595, %v2614
        %v2619 = vmul.f32 %v2597, %v2615
        %v2620 = vmul.f32 %v2599, %v2616
        %v2621 = vmul.f32 %v2601, %v2617
        %v2622 = vpack.c.bf16 %v2618, %v2618
        %v2623 = vpack.c.bf16 %v2619, %v2619
        %v2624 = vpack.c.bf16 %v2620, %v2620
        %v2625 = vpack.c.bf16 %v2621, %v2621
        %v2628 = vunpack.c.l.b16 %v2622
        %v2629 = vunpack.c.l.b16 %v2623
        %v2630 = vpack.c.b16 %v2629, %v2628
        %v2631 = vunpack.c.l.b16 %v2504
        %v2632 = vunpack.c.l.b16 %v2505
        %v2633 = vpack.c.b16 %v2632, %v2631
        %v2636 = vsel %vm1362, %v2630, 0
        %2638 = vmatpush.bf16.msra.mxu0 0
        %2639 = vmatpush.bf16.msra.mxu0 0
        %2640 = vmatpush.bf16.msra.mxu0 0
        %2641 = vmatpush.bf16.msra.mxu0 0
        %2642 = vmatpush.bf16.msra.mxu0 0
        %2643 = vmatpush.bf16.msra.mxu0 0
        %2644 = vmatpush.bf16.msra.mxu0 0
        %2645 = vmatpush.bf16.msra.mxu0 %v2633
        %2646 = vmatmul.bf16.gmra.mxu0 %v2636
        %v2647 = vpop.f32.mrf.mxu0
        %v2648 = vadd.f32 0.0, %v2647
        %v2649 = vpop.f32.mrf.mxu0
        %v2650 = vadd.f32 0.0, %v2649
        %2651 = vdwg.mxu0
        %v2654 = vunpack.c.l.b16 %v2624
        %v2655 = vunpack.c.l.b16 %v2625
        %v2656 = vpack.c.b16 %v2655, %v2654
        %v2657 = vunpack.c.l.b16 %v2506
        %v2658 = vunpack.c.l.b16 %v2507
        %v2659 = vpack.c.b16 %v2658, %v2657
        %v2662 = vsel %vm1362, %v2656, 0
        %2664 = vmatpush.bf16.msra.mxu0 0
        %2665 = vmatpush.bf16.msra.mxu0 0
        %2666 = vmatpush.bf16.msra.mxu0 0
        %2667 = vmatpush.bf16.msra.mxu0 0
        %2668 = vmatpush.bf16.msra.mxu0 0
        %2669 = vmatpush.bf16.msra.mxu0 0
        %2670 = vmatpush.bf16.msra.mxu0 0
        %2671 = vmatpush.bf16.msra.mxu0 %v2659
        %2672 = vmatmul.bf16.gmra.mxu0 %v2662
        %v2673 = vpop.f32.mrf.mxu0
        %v2674 = vadd.f32 0.0, %v2673
        %v2675 = vpop.f32.mrf.mxu0
        %v2676 = vadd.f32 0.0, %v2675
        %2677 = vdwg.mxu0
        %v2678 = vpack.c.bf16 %v2648, %v2648
        %v2679 = vpack.c.bf16 %v2650, %v2650
        %v2680 = vpack.c.bf16 %v2674, %v2674
        %v2681 = vpack.c.bf16 %v2676, %v2676
        %2682 = vrot.lane.b32.xlu0 %v2496, 96
        %v2683 = vpop.permute.xlu0 %2682
        %2684 = vrot.lane.b32.xlu0 %v2497, 96
        %v2685 = vpop.permute.xlu0 %2684
        %2686 = vrot.lane.b32.xlu0 %v2498, 96
        %v2687 = vpop.permute.xlu0 %2686
        %2688 = vrot.lane.b32.xlu0 %v2499, 96
        %v2689 = vpop.permute.xlu0 %2688
        %v2690 = vrot.slane %v2683, 4
        %v2691 = vrot.slane %v2685, 4
        %v2692 = vrot.slane %v2687, 4
        %v2693 = vrot.slane %v2689, 4
        %2694 = vrot.lane.b32.xlu0 %v2512, 96
        %v2695 = vpop.permute.xlu0 %2694
        %2696 = vrot.lane.b32.xlu0 %v2515, 96
        %v2697 = vpop.permute.xlu0 %2696
        %v2699 = vsel %vm1301, %v2695, 0
        %v2702 = vsel %vm1301, %v2697, 0
        %2704 = vmatpush.bf16.xpose.msra.mxu0 0
        %2705 = vmatpush.bf16.xpose.msra.mxu0 0
        %2706 = vmatpush.bf16.xpose.msra.mxu0 0
        %2707 = vmatpush.bf16.xpose.msra.mxu0 0
        %2708 = vmatpush.bf16.xpose.msra.mxu0 0
        %2709 = vmatpush.bf16.xpose.msra.mxu0 0
        %2710 = vmatpush.bf16.xpose.msra.mxu0 0
        %2711 = vmatpush.bf16.xpose.msra.mxu0 %v2702
        %2712 = vmatmul.bf16.gmra.mxu0 %v2699
        %v2713 = vpop.f32.mrf.mxu0
        %v2714 = vadd.f32 0.0, %v2713
        %v2715 = vpop.f32.mrf.mxu0
        %v2716 = vadd.f32 0.0, %v2715
        %2717 = vdwg.mxu0
        %2718 = vrot.lane.b32.xlu0 %v2540, 96
        %v2719 = vpop.permute.xlu0 %2718
        %2720 = vrot.lane.b32.xlu0 %v2543, 96
        %v2721 = vpop.permute.xlu0 %2720
        %v2723 = vsel %vm1301, %v2719, 0
        %v2726 = vsel %vm1301, %v2721, 0
        %2728 = vmatpush.bf16.xpose.msra.mxu0 0
        %2729 = vmatpush.bf16.xpose.msra.mxu0 0
        %2730 = vmatpush.bf16.xpose.msra.mxu0 0
        %2731 = vmatpush.bf16.xpose.msra.mxu0 0
        %2732 = vmatpush.bf16.xpose.msra.mxu0 0
        %2733 = vmatpush.bf16.xpose.msra.mxu0 0
        %2734 = vmatpush.bf16.xpose.msra.mxu0 0
        %2735 = vmatpush.bf16.xpose.msra.mxu0 %v2726
        %2736 = vmatmul.bf16.gmra.mxu0 %v2723
        %v2737 = vpop.f32.mrf.mxu0
        %v2738 = vadd.f32 0.0, %v2737
        %v2739 = vpop.f32.mrf.mxu0
        %v2740 = vadd.f32 0.0, %v2739
        %2741 = vdwg.mxu0
        %v2742 = vmul.f32 %v2714, 0.17677669
        %v2743 = vmul.f32 %v2716, 0.17677669
        %v2744 = vmul.f32 %v2738, 0.17677669
        %v2745 = vmul.f32 %v2740, 0.17677669
        %v2746 = vsel %vm2572, %v2742, -1e+09
        %v2747 = vsel %vm2572, %v2743, -1e+09
        %v2748 = vsel %vm2573, %v2744, -1e+09
        %v2749 = vsel %vm2573, %v2745, -1e+09
        %v2750 = vsel %vm1362, %v2746, -inf
        %2751 = vmax.xlane.f32.xlu0 %v2750
        %v2752 = vpop.xlane.xlu0 %2751
        %v2753 = vsel %vm1362, %v2747, -inf
        %2754 = vmax.xlane.f32.xlu0 %v2753
        %v2755 = vpop.xlane.xlu0 %2754
        %v2756 = vsel %vm1362, %v2748, -inf
        %2757 = vmax.xlane.f32.xlu0 %v2756
        %v2758 = vpop.xlane.xlu0 %2757
        %v2759 = vsel %vm1362, %v2749, -inf
        %2760 = vmax.xlane.f32.xlu0 %v2759
        %v2761 = vpop.xlane.xlu0 %2760
        %v2762 = vsub.f32 %v2746, %v2752
        %v2763 = vsub.f32 %v2747, %v2755
        %v2764 = vsub.f32 %v2748, %v2758
        %v2765 = vsub.f32 %v2749, %v2761
        %v2766 = vmul.f32 %v2762, 1.442695
        %v2767 = vpow.pop %v2766
        %v2768 = vmul.f32 %v2763, 1.442695
        %v2769 = vpow.pop %v2768
        %v2770 = vmul.f32 %v2764, 1.442695
        %v2771 = vpow.pop %v2770
        %v2772 = vmul.f32 %v2765, 1.442695
        %v2773 = vpow.pop %v2772
        %v2774 = vsel %vm1362, %v2767, 0.0
        %2775 = vadd.xlane.f32.xlu0 %v2774
        %v2776 = vpop.xlane.xlu0 %2775
        %v2777 = vsel %vm1362, %v2769, 0.0
        %2778 = vadd.xlane.f32.xlu0 %v2777
        %v2779 = vpop.xlane.xlu0 %2778
        %v2780 = vsel %vm1362, %v2771, 0.0
        %2781 = vadd.xlane.f32.xlu0 %v2780
        %v2782 = vpop.xlane.xlu0 %2781
        %v2783 = vsel %vm1362, %v2773, 0.0
        %2784 = vadd.xlane.f32.xlu0 %v2783
        %v2785 = vpop.xlane.xlu0 %2784
        %v2786 = vrcp.pop %v2776
        %v2787 = vrcp.pop %v2779
        %v2788 = vrcp.pop %v2782
        %v2789 = vrcp.pop %v2785
        %v2790 = vmul.f32 %v2767, %v2786
        %v2791 = vmul.f32 %v2769, %v2787
        %v2792 = vmul.f32 %v2771, %v2788
        %v2793 = vmul.f32 %v2773, %v2789
        %v2794 = vpack.c.bf16 %v2790, %v2790
        %v2795 = vpack.c.bf16 %v2791, %v2791
        %v2796 = vpack.c.bf16 %v2792, %v2792
        %v2797 = vpack.c.bf16 %v2793, %v2793
        %v2800 = vunpack.c.l.b16 %v2794
        %v2801 = vunpack.c.l.b16 %v2795
        %v2802 = vpack.c.b16 %v2801, %v2800
        %v2803 = vunpack.c.l.b16 %v2690
        %v2804 = vunpack.c.l.b16 %v2691
        %v2805 = vpack.c.b16 %v2804, %v2803
        %v2808 = vsel %vm1362, %v2802, 0
        %2810 = vmatpush.bf16.msra.mxu0 0
        %2811 = vmatpush.bf16.msra.mxu0 0
        %2812 = vmatpush.bf16.msra.mxu0 0
        %2813 = vmatpush.bf16.msra.mxu0 0
        %2814 = vmatpush.bf16.msra.mxu0 0
        %2815 = vmatpush.bf16.msra.mxu0 0
        %2816 = vmatpush.bf16.msra.mxu0 0
        %2817 = vmatpush.bf16.msra.mxu0 %v2805
        %2818 = vmatmul.bf16.gmra.mxu0 %v2808
        %v2819 = vpop.f32.mrf.mxu0
        %v2820 = vadd.f32 0.0, %v2819
        %v2821 = vpop.f32.mrf.mxu0
        %v2822 = vadd.f32 0.0, %v2821
        %2823 = vdwg.mxu0
        %v2826 = vunpack.c.l.b16 %v2796
        %v2827 = vunpack.c.l.b16 %v2797
        %v2828 = vpack.c.b16 %v2827, %v2826
        %v2829 = vunpack.c.l.b16 %v2692
        %v2830 = vunpack.c.l.b16 %v2693
        %v2831 = vpack.c.b16 %v2830, %v2829
        %v2834 = vsel %vm1362, %v2828, 0
        %2836 = vmatpush.bf16.msra.mxu0 0
        %2837 = vmatpush.bf16.msra.mxu0 0
        %2838 = vmatpush.bf16.msra.mxu0 0
        %2839 = vmatpush.bf16.msra.mxu0 0
        %2840 = vmatpush.bf16.msra.mxu0 0
        %2841 = vmatpush.bf16.msra.mxu0 0
        %2842 = vmatpush.bf16.msra.mxu0 0
        %2843 = vmatpush.bf16.msra.mxu0 %v2831
        %2844 = vmatmul.bf16.gmra.mxu0 %v2834
        %v2845 = vpop.f32.mrf.mxu0
        %v2846 = vadd.f32 0.0, %v2845
        %v2847 = vpop.f32.mrf.mxu0
        %v2848 = vadd.f32 0.0, %v2847
        %2849 = vdwg.mxu0
        %v2850 = vpack.c.bf16 %v2820, %v2820
        %v2851 = vpack.c.bf16 %v2822, %v2822
        %v2852 = vpack.c.bf16 %v2846, %v2846
        %v2853 = vpack.c.bf16 %v2848, %v2848
        %2854 = vrot.lane.b32.xlu0 %v2496, 64
        %v2855 = vpop.permute.xlu0 %2854
        %2856 = vrot.lane.b32.xlu0 %v2497, 64
        %v2857 = vpop.permute.xlu0 %2856
        %2858 = vrot.lane.b32.xlu0 %v2498, 64
        %v2859 = vpop.permute.xlu0 %2858
        %2860 = vrot.lane.b32.xlu0 %v2499, 64
        %v2861 = vpop.permute.xlu0 %2860
        %v2862 = vrot.slane %v2855, 4
        %v2863 = vrot.slane %v2857, 4
        %v2864 = vrot.slane %v2859, 4
        %v2865 = vrot.slane %v2861, 4
        %2866 = vrot.lane.b32.xlu0 %v2512, 64
        %v2867 = vpop.permute.xlu0 %2866
        %2868 = vrot.lane.b32.xlu0 %v2515, 64
        %v2869 = vpop.permute.xlu0 %2868
        %v2871 = vsel %vm1301, %v2867, 0
        %v2874 = vsel %vm1301, %v2869, 0
        %2876 = vmatpush.bf16.xpose.msra.mxu0 0
        %2877 = vmatpush.bf16.xpose.msra.mxu0 0
        %2878 = vmatpush.bf16.xpose.msra.mxu0 0
        %2879 = vmatpush.bf16.xpose.msra.mxu0 0
        %2880 = vmatpush.bf16.xpose.msra.mxu0 0
        %2881 = vmatpush.bf16.xpose.msra.mxu0 0
        %2882 = vmatpush.bf16.xpose.msra.mxu0 0
        %2883 = vmatpush.bf16.xpose.msra.mxu0 %v2874
        %2884 = vmatmul.bf16.gmra.mxu0 %v2871
        %v2885 = vpop.f32.mrf.mxu0
        %v2886 = vadd.f32 0.0, %v2885
        %v2887 = vpop.f32.mrf.mxu0
        %v2888 = vadd.f32 0.0, %v2887
        %2889 = vdwg.mxu0
        %2890 = vrot.lane.b32.xlu0 %v2540, 64
        %v2891 = vpop.permute.xlu0 %2890
        %2892 = vrot.lane.b32.xlu0 %v2543, 64
        %v2893 = vpop.permute.xlu0 %2892
        %v2895 = vsel %vm1301, %v2891, 0
        %v2898 = vsel %vm1301, %v2893, 0
        %2900 = vmatpush.bf16.xpose.msra.mxu0 0
        %2901 = vmatpush.bf16.xpose.msra.mxu0 0
        %2902 = vmatpush.bf16.xpose.msra.mxu0 0
        %2903 = vmatpush.bf16.xpose.msra.mxu0 0
        %2904 = vmatpush.bf16.xpose.msra.mxu0 0
        %2905 = vmatpush.bf16.xpose.msra.mxu0 0
        %2906 = vmatpush.bf16.xpose.msra.mxu0 0
        %2907 = vmatpush.bf16.xpose.msra.mxu0 %v2898
        %2908 = vmatmul.bf16.gmra.mxu0 %v2895
        %v2909 = vpop.f32.mrf.mxu0
        %v2910 = vadd.f32 0.0, %v2909
        %v2911 = vpop.f32.mrf.mxu0
        %v2912 = vadd.f32 0.0, %v2911
        %2913 = vdwg.mxu0
        %v2914 = vmul.f32 %v2886, 0.17677669
        %v2915 = vmul.f32 %v2888, 0.17677669
        %v2916 = vmul.f32 %v2910, 0.17677669
        %v2917 = vmul.f32 %v2912, 0.17677669
        %v2918 = vsel %vm2572, %v2914, -1e+09
        %v2919 = vsel %vm2572, %v2915, -1e+09
        %v2920 = vsel %vm2573, %v2916, -1e+09
        %v2921 = vsel %vm2573, %v2917, -1e+09
        %v2922 = vsel %vm1362, %v2918, -inf
        %2923 = vmax.xlane.f32.xlu0 %v2922
        %v2924 = vpop.xlane.xlu0 %2923
        %v2925 = vsel %vm1362, %v2919, -inf
        %2926 = vmax.xlane.f32.xlu0 %v2925
        %v2927 = vpop.xlane.xlu0 %2926
        %v2928 = vsel %vm1362, %v2920, -inf
        %2929 = vmax.xlane.f32.xlu0 %v2928
        %v2930 = vpop.xlane.xlu0 %2929
        %v2931 = vsel %vm1362, %v2921, -inf
        %2932 = vmax.xlane.f32.xlu0 %v2931
        %v2933 = vpop.xlane.xlu0 %2932
        %v2934 = vsub.f32 %v2918, %v2924
        %v2935 = vsub.f32 %v2919, %v2927
        %v2936 = vsub.f32 %v2920, %v2930
        %v2937 = vsub.f32 %v2921, %v2933
        %v2938 = vmul.f32 %v2934, 1.442695
        %v2939 = vpow.pop %v2938
        %v2940 = vmul.f32 %v2935, 1.442695
        %v2941 = vpow.pop %v2940
        %v2942 = vmul.f32 %v2936, 1.442695
        %v2943 = vpow.pop %v2942
        %v2944 = vmul.f32 %v2937, 1.442695
        %v2945 = vpow.pop %v2944
        %v2946 = vsel %vm1362, %v2939, 0.0
        %2947 = vadd.xlane.f32.xlu0 %v2946
        %v2948 = vpop.xlane.xlu0 %2947
        %v2949 = vsel %vm1362, %v2941, 0.0
        %2950 = vadd.xlane.f32.xlu0 %v2949
        %v2951 = vpop.xlane.xlu0 %2950
        %v2952 = vsel %vm1362, %v2943, 0.0
        %2953 = vadd.xlane.f32.xlu0 %v2952
        %v2954 = vpop.xlane.xlu0 %2953
        %v2955 = vsel %vm1362, %v2945, 0.0
        %2956 = vadd.xlane.f32.xlu0 %v2955
        %v2957 = vpop.xlane.xlu0 %2956
        %v2958 = vrcp.pop %v2948
        %v2959 = vrcp.pop %v2951
        %v2960 = vrcp.pop %v2954
        %v2961 = vrcp.pop %v2957
        %v2962 = vmul.f32 %v2939, %v2958
        %v2963 = vmul.f32 %v2941, %v2959
        %v2964 = vmul.f32 %v2943, %v2960
        %v2965 = vmul.f32 %v2945, %v2961
        %v2966 = vpack.c.bf16 %v2962, %v2962
        %v2967 = vpack.c.bf16 %v2963, %v2963
        %v2968 = vpack.c.bf16 %v2964, %v2964
        %v2969 = vpack.c.bf16 %v2965, %v2965
        %v2972 = vunpack.c.l.b16 %v2966
        %v2973 = vunpack.c.l.b16 %v2967
        %v2974 = vpack.c.b16 %v2973, %v2972
        %v2975 = vunpack.c.l.b16 %v2862
        %v2976 = vunpack.c.l.b16 %v2863
        %v2977 = vpack.c.b16 %v2976, %v2975
        %v2980 = vsel %vm1362, %v2974, 0
        %2982 = vmatpush.bf16.msra.mxu0 0
        %2983 = vmatpush.bf16.msra.mxu0 0
        %2984 = vmatpush.bf16.msra.mxu0 0
        %2985 = vmatpush.bf16.msra.mxu0 0
        %2986 = vmatpush.bf16.msra.mxu0 0
        %2987 = vmatpush.bf16.msra.mxu0 0
        %2988 = vmatpush.bf16.msra.mxu0 0
        %2989 = vmatpush.bf16.msra.mxu0 %v2977
        %2990 = vmatmul.bf16.gmra.mxu0 %v2980
        %v2991 = vpop.f32.mrf.mxu0
        %v2992 = vadd.f32 0.0, %v2991
        %v2993 = vpop.f32.mrf.mxu0
        %v2994 = vadd.f32 0.0, %v2993
        %2995 = vdwg.mxu0
        %v2998 = vunpack.c.l.b16 %v2968
        %v2999 = vunpack.c.l.b16 %v2969
        %v3000 = vpack.c.b16 %v2999, %v2998
        %v3001 = vunpack.c.l.b16 %v2864
        %v3002 = vunpack.c.l.b16 %v2865
        %v3003 = vpack.c.b16 %v3002, %v3001
        %v3006 = vsel %vm1362, %v3000, 0
        %3008 = vmatpush.bf16.msra.mxu0 0
        %3009 = vmatpush.bf16.msra.mxu0 0
        %3010 = vmatpush.bf16.msra.mxu0 0
        %3011 = vmatpush.bf16.msra.mxu0 0
        %3012 = vmatpush.bf16.msra.mxu0 0
        %3013 = vmatpush.bf16.msra.mxu0 0
        %3014 = vmatpush.bf16.msra.mxu0 0
        %3015 = vmatpush.bf16.msra.mxu0 %v3003
        %3016 = vmatmul.bf16.gmra.mxu0 %v3006
        %v3017 = vpop.f32.mrf.mxu0
        %v3018 = vadd.f32 0.0, %v3017
        %v3019 = vpop.f32.mrf.mxu0
        %v3020 = vadd.f32 0.0, %v3019
        %3021 = vdwg.mxu0
        %v3022 = vpack.c.bf16 %v2992, %v2992
        %v3023 = vpack.c.bf16 %v2994, %v2994
        %v3024 = vpack.c.bf16 %v3018, %v3018
        %v3025 = vpack.c.bf16 %v3020, %v3020
        %3026 = vrot.lane.b32.xlu0 %v2496, 32
        %v3027 = vpop.permute.xlu0 %3026
        %3028 = vrot.lane.b32.xlu0 %v2497, 32
        %v3029 = vpop.permute.xlu0 %3028
        %3030 = vrot.lane.b32.xlu0 %v2498, 32
        %v3031 = vpop.permute.xlu0 %3030
        %3032 = vrot.lane.b32.xlu0 %v2499, 32
        %v3033 = vpop.permute.xlu0 %3032
        %v3034 = vrot.slane %v3027, 4
        %v3035 = vrot.slane %v3029, 4
        %v3036 = vrot.slane %v3031, 4
        %v3037 = vrot.slane %v3033, 4
        %3038 = vrot.lane.b32.xlu0 %v2512, 32
        %v3039 = vpop.permute.xlu0 %3038
        %3040 = vrot.lane.b32.xlu0 %v2515, 32
        %v3041 = vpop.permute.xlu0 %3040
        %v3043 = vsel %vm1301, %v3039, 0
        %v3046 = vsel %vm1301, %v3041, 0
        %3048 = vmatpush.bf16.xpose.msra.mxu0 0
        %3049 = vmatpush.bf16.xpose.msra.mxu0 0
        %3050 = vmatpush.bf16.xpose.msra.mxu0 0
        %3051 = vmatpush.bf16.xpose.msra.mxu0 0
        %3052 = vmatpush.bf16.xpose.msra.mxu0 0
        %3053 = vmatpush.bf16.xpose.msra.mxu0 0
        %3054 = vmatpush.bf16.xpose.msra.mxu0 0
        %3055 = vmatpush.bf16.xpose.msra.mxu0 %v3046
        %3056 = vmatmul.bf16.gmra.mxu0 %v3043
        %v3057 = vpop.f32.mrf.mxu0
        %v3058 = vadd.f32 0.0, %v3057
        %v3059 = vpop.f32.mrf.mxu0
        %v3060 = vadd.f32 0.0, %v3059
        %3061 = vdwg.mxu0
        %3062 = vrot.lane.b32.xlu0 %v2540, 32
        %v3063 = vpop.permute.xlu0 %3062
        %3064 = vrot.lane.b32.xlu0 %v2543, 32
        %v3065 = vpop.permute.xlu0 %3064
        %v3067 = vsel %vm1301, %v3063, 0
        %v3070 = vsel %vm1301, %v3065, 0
        %3072 = vmatpush.bf16.xpose.msra.mxu0 0
        %3073 = vmatpush.bf16.xpose.msra.mxu0 0
        %3074 = vmatpush.bf16.xpose.msra.mxu0 0
        %3075 = vmatpush.bf16.xpose.msra.mxu0 0
        %3076 = vmatpush.bf16.xpose.msra.mxu0 0
        %3077 = vmatpush.bf16.xpose.msra.mxu0 0
        %3078 = vmatpush.bf16.xpose.msra.mxu0 0
        %3079 = vmatpush.bf16.xpose.msra.mxu0 %v3070
        %3080 = vmatmul.bf16.gmra.mxu0 %v3067
        %v3081 = vpop.f32.mrf.mxu0
        %v3082 = vadd.f32 0.0, %v3081
        %v3083 = vpop.f32.mrf.mxu0
        %v3084 = vadd.f32 0.0, %v3083
        %3085 = vdwg.mxu0
        %v3086 = vmul.f32 %v3058, 0.17677669
        %v3087 = vmul.f32 %v3060, 0.17677669
        %v3088 = vmul.f32 %v3082, 0.17677669
        %v3089 = vmul.f32 %v3084, 0.17677669
        %v3090 = vsel %vm2572, %v3086, -1e+09
        %v3091 = vsel %vm2572, %v3087, -1e+09
        %v3092 = vsel %vm2573, %v3088, -1e+09
        %v3093 = vsel %vm2573, %v3089, -1e+09
        %v3094 = vsel %vm1362, %v3090, -inf
        %3095 = vmax.xlane.f32.xlu0 %v3094
        %v3096 = vpop.xlane.xlu0 %3095
        %v3097 = vsel %vm1362, %v3091, -inf
        %3098 = vmax.xlane.f32.xlu0 %v3097
        %v3099 = vpop.xlane.xlu0 %3098
        %v3100 = vsel %vm1362, %v3092, -inf
        %3101 = vmax.xlane.f32.xlu0 %v3100
        %v3102 = vpop.xlane.xlu0 %3101
        %v3103 = vsel %vm1362, %v3093, -inf
        %3104 = vmax.xlane.f32.xlu0 %v3103
        %v3105 = vpop.xlane.xlu0 %3104
        %v3106 = vsub.f32 %v3090, %v3096
        %v3107 = vsub.f32 %v3091, %v3099
        %v3108 = vsub.f32 %v3092, %v3102
        %v3109 = vsub.f32 %v3093, %v3105
        %v3110 = vmul.f32 %v3106, 1.442695
        %v3111 = vpow.pop %v3110
        %v3112 = vmul.f32 %v3107, 1.442695
        %v3113 = vpow.pop %v3112
        %v3114 = vmul.f32 %v3108, 1.442695
        %v3115 = vpow.pop %v3114
        %v3116 = vmul.f32 %v3109, 1.442695
        %v3117 = vpow.pop %v3116
        %v3118 = vsel %vm1362, %v3111, 0.0
        %3119 = vadd.xlane.f32.xlu0 %v3118
        %v3120 = vpop.xlane.xlu0 %3119
        %v3121 = vsel %vm1362, %v3113, 0.0
        %3122 = vadd.xlane.f32.xlu0 %v3121
        %v3123 = vpop.xlane.xlu0 %3122
        %v3124 = vsel %vm1362, %v3115, 0.0
        %3125 = vadd.xlane.f32.xlu0 %v3124
        %v3126 = vpop.xlane.xlu0 %3125
        %v3127 = vsel %vm1362, %v3117, 0.0
        %3128 = vadd.xlane.f32.xlu0 %v3127
        %v3129 = vpop.xlane.xlu0 %3128
        %v3130 = vrcp.pop %v3120
        %v3131 = vrcp.pop %v3123
        %v3132 = vrcp.pop %v3126
        %v3133 = vrcp.pop %v3129
        %v3134 = vmul.f32 %v3111, %v3130
        %v3135 = vmul.f32 %v3113, %v3131
        %v3136 = vmul.f32 %v3115, %v3132
        %v3137 = vmul.f32 %v3117, %v3133
        %v3138 = vpack.c.bf16 %v3134, %v3134
        %v3139 = vpack.c.bf16 %v3135, %v3135
        %v3140 = vpack.c.bf16 %v3136, %v3136
        %v3141 = vpack.c.bf16 %v3137, %v3137
        %v3144 = vunpack.c.l.b16 %v3138
        %v3145 = vunpack.c.l.b16 %v3139
        %v3146 = vpack.c.b16 %v3145, %v3144
        %v3147 = vunpack.c.l.b16 %v3034
        %v3148 = vunpack.c.l.b16 %v3035
        %v3149 = vpack.c.b16 %v3148, %v3147
        %v3152 = vsel %vm1362, %v3146, 0
        %3154 = vmatpush.bf16.msra.mxu0 0
        %3155 = vmatpush.bf16.msra.mxu0 0
        %3156 = vmatpush.bf16.msra.mxu0 0
        %3157 = vmatpush.bf16.msra.mxu0 0
        %3158 = vmatpush.bf16.msra.mxu0 0
        %3159 = vmatpush.bf16.msra.mxu0 0
        %3160 = vmatpush.bf16.msra.mxu0 0
        %3161 = vmatpush.bf16.msra.mxu0 %v3149
        %3162 = vmatmul.bf16.gmra.mxu0 %v3152
        %v3163 = vpop.f32.mrf.mxu0
        %v3164 = vadd.f32 0.0, %v3163
        %v3165 = vpop.f32.mrf.mxu0
        %v3166 = vadd.f32 0.0, %v3165
        %3167 = vdwg.mxu0
        %v3170 = vunpack.c.l.b16 %v3140
        %v3171 = vunpack.c.l.b16 %v3141
        %v3172 = vpack.c.b16 %v3171, %v3170
        %v3173 = vunpack.c.l.b16 %v3036
        %v3174 = vunpack.c.l.b16 %v3037
        %v3175 = vpack.c.b16 %v3174, %v3173
        %v3178 = vsel %vm1362, %v3172, 0
        %3180 = vmatpush.bf16.msra.mxu0 0
        %3181 = vmatpush.bf16.msra.mxu0 0
        %3182 = vmatpush.bf16.msra.mxu0 0
        %3183 = vmatpush.bf16.msra.mxu0 0
        %3184 = vmatpush.bf16.msra.mxu0 0
        %3185 = vmatpush.bf16.msra.mxu0 0
        %3186 = vmatpush.bf16.msra.mxu0 0
        %3187 = vmatpush.bf16.msra.mxu0 %v3175
        %3188 = vmatmul.bf16.gmra.mxu0 %v3178
        %v3189 = vpop.f32.mrf.mxu0
        %v3190 = vadd.f32 0.0, %v3189
        %v3191 = vpop.f32.mrf.mxu0
        %v3192 = vadd.f32 0.0, %v3191
        %3193 = vdwg.mxu0
        %v3194 = vpack.c.bf16 %v3164, %v3164
        %v3195 = vpack.c.bf16 %v3166, %v3166
        %v3196 = vpack.c.bf16 %v3190, %v3190
        %v3197 = vpack.c.bf16 %v3192, %v3192
        %v3202 = vunpack.c.l.b16 %v2678
        %v3203 = vunpack.c.l.b16 %v2679
        %v3204 = vunpack.c.l.b16 %v2680
        %v3205 = vunpack.c.l.b16 %v2681
        %v3206 = vpack.c.b16 %v3203, %v3202
        %v3207 = vpack.c.b16 %v3205, %v3204
        %v3212 = vunpack.c.l.b16 %v2850
        %v3213 = vunpack.c.l.b16 %v2851
        %v3214 = vunpack.c.l.b16 %v2852
        %v3215 = vunpack.c.l.b16 %v2853
        %v3216 = vpack.c.b16 %v3213, %v3212
        %v3217 = vpack.c.b16 %v3215, %v3214
        %3218 = vrot.lane.b32.xlu0 %v3216, 32
        %v3219 = vpop.permute.xlu0 %3218
        %3220 = vrot.lane.b32.xlu0 %v3217, 32
        %v3221 = vpop.permute.xlu0 %3220
        %v3226 = vunpack.c.l.b16 %v3022
        %v3227 = vunpack.c.l.b16 %v3023
        %v3228 = vunpack.c.l.b16 %v3024
        %v3229 = vunpack.c.l.b16 %v3025
        %v3230 = vpack.c.b16 %v3227, %v3226
        %v3231 = vpack.c.b16 %v3229, %v3228
        %3232 = vrot.lane.b32.xlu0 %v3230, 64
        %v3233 = vpop.permute.xlu0 %3232
        %3234 = vrot.lane.b32.xlu0 %v3231, 64
        %v3235 = vpop.permute.xlu0 %3234
        %v3240 = vunpack.c.l.b16 %v3194
        %v3241 = vunpack.c.l.b16 %v3195
        %v3242 = vunpack.c.l.b16 %v3196
        %v3243 = vunpack.c.l.b16 %v3197
        %v3244 = vpack.c.b16 %v3241, %v3240
        %v3245 = vpack.c.b16 %v3243, %v3242
        %3246 = vrot.lane.b32.xlu0 %v3244, 96
        %v3247 = vpop.permute.xlu0 %3246
        %3248 = vrot.lane.b32.xlu0 %v3245, 96
        %v3249 = vpop.permute.xlu0 %3248
        %v3252 = vsel %vm1301, %v3206, %v3219
        %v3255 = vsel %vm1301, %v3207, %v3221
        %v3257 = vsel %vm2041, %v3252, %v3233
        %v3259 = vsel %vm2041, %v3255, %v3235
        %v3261 = vsel %vm2046, %v3257, %v3247
        %v3264 = vsel %vm2046, %v3259, %v3249
        %v3266 = vld [vmem:[#allocation17] sm:$0xf]
        %v3267 = vld [vmem:[#allocation17 + $0x4] sm:$0xf]
        %v3268 = vld [vmem:[#allocation17 + $0x8] sm:$0xf]
        %v3269 = vld [vmem:[#allocation17 + $0xc] sm:$0xf]
        %v3270 = vld [vmem:[#allocation17 + $0x10] sm:$0xf]
        %v3271 = vld [vmem:[#allocation17 + $0x14] sm:$0xf]
        %v3272 = vld [vmem:[#allocation17 + $0x18] sm:$0xf]
        %v3273 = vld [vmem:[#allocation17 + $0x1c] sm:$0xf]
        %v3274 = vld [vmem:[#allocation17 + $0x20] sm:$0xf]
        %v3275 = vld [vmem:[#allocation17 + $0x24] sm:$0xf]
        %v3276 = vld [vmem:[#allocation17 + $0x28] sm:$0xf]
        %v3277 = vld [vmem:[#allocation17 + $0x2c] sm:$0xf]
        %v3278 = vld [vmem:[#allocation17 + $0x30] sm:$0xf]
        %v3279 = vld [vmem:[#allocation17 + $0x34] sm:$0xf]
        %v3280 = vld [vmem:[#allocation17 + $0x38] sm:$0xf]
        %v3281 = vld [vmem:[#allocation17 + $0x3c] sm:$0xf]
        %v3282 = vld [vmem:[%s16] sm:$0x1]
        %v3284 = vperm.slane %v3282, 0
        %v3302 = vunpack.c.l.b16 %v3266
        %v3303 = vunpack.c.l.b16 %v3267
        %v3304 = vunpack.c.l.b16 %v3268
        %v3305 = vunpack.c.l.b16 %v3269
        %v3306 = vunpack.c.l.b16 %v3270
        %v3307 = vunpack.c.l.b16 %v3271
        %v3308 = vunpack.c.l.b16 %v3272
        %v3309 = vunpack.c.l.b16 %v3273
        %v3310 = vunpack.c.l.b16 %v3274
        %v3311 = vunpack.c.l.b16 %v3275
        %v3312 = vunpack.c.l.b16 %v3276
        %v3313 = vunpack.c.l.b16 %v3277
        %v3314 = vunpack.c.l.b16 %v3278
        %v3315 = vunpack.c.l.b16 %v3279
        %v3316 = vunpack.c.l.b16 %v3280
        %v3317 = vunpack.c.l.b16 %v3281
        %v3318 = vpack.c.b16 %v3303, %v3302
        %v3319 = vpack.c.b16 %v3305, %v3304
        %v3320 = vpack.c.b16 %v3307, %v3306
        %v3321 = vpack.c.b16 %v3309, %v3308
        %v3322 = vpack.c.b16 %v3311, %v3310
        %v3323 = vpack.c.b16 %v3313, %v3312
        %v3324 = vpack.c.b16 %v3315, %v3314
        %v3325 = vpack.c.b16 %v3317, %v3316
        %3334 = vmatpush.bf16.msra.mxu0 %v3325
        %3335 = vmatpush.bf16.msra.mxu0 %v3324
        %3336 = vmatpush.bf16.msra.mxu0 %v3323
        %3337 = vmatpush.bf16.msra.mxu0 %v3322
        %3338 = vmatpush.bf16.msra.mxu0 %v3321
        %3339 = vmatpush.bf16.msra.mxu0 %v3320
        %3340 = vmatpush.bf16.msra.mxu0 %v3319
        %3341 = vmatpush.bf16.msra.mxu0 %v3318
        %3342 = vmatmul.bf16.gmra.mxu0 %v3261
        %v3343 = vpop.f32.mrf.mxu0
        %v3344 = vadd.f32 %v3284, %v3343
        %v3345 = vpop.f32.mrf.mxu0
        %v3346 = vadd.f32 %v3284, %v3345
        %3347 = vmatmul.bf16.gmra.mxu0 %v3264
        %v3348 = vpop.f32.mrf.mxu0
        %v3349 = vadd.f32 %v3284, %v3348
        %v3350 = vpop.f32.mrf.mxu0
        %v3351 = vadd.f32 %v3284, %v3350
        %3352 = vdwg.mxu0
        %v3353 = vadd.f32 %v2247, %v3344
        %v3354 = vadd.f32 %v2248, %v3346
        %v3355 = vadd.f32 %v2249, %v3349
        %v3356 = vadd.f32 %v2250, %v3351
        %v3357 = vld [vmem:[%s17] sm:$0x1]
        %v3358 = vld [vmem:[%s18] sm:$0x1]
        %3359 = vadd.xlane.f32.xlu0 %v3353
        %v3360 = vpop.xlane.xlu0 %3359
        %3361 = vadd.xlane.f32.xlu0 %v3354
        %v3362 = vpop.xlane.xlu0 %3361
        %3363 = vadd.xlane.f32.xlu0 %v3355
        %v3364 = vpop.xlane.xlu0 %3363
        %3365 = vadd.xlane.f32.xlu0 %v3356
        %v3366 = vpop.xlane.xlu0 %3365
        %v3367 = vmul.f32 %v3360, %v2164
        %v3368 = vmul.f32 %v3362, %v2164
        %v3369 = vmul.f32 %v3364, %v2164
        %v3370 = vmul.f32 %v3366, %v2164
        %v3371 = vsub.f32 %v3353, %v3367
        %v3372 = vsub.f32 %v3354, %v3368
        %v3373 = vsub.f32 %v3355, %v3369
        %v3374 = vsub.f32 %v3356, %v3370
        %v3375 = vmul.f32 %v3371, %v3371
        %v3376 = vmul.f32 %v3372, %v3372
        %v3377 = vmul.f32 %v3373, %v3373
        %v3378 = vmul.f32 %v3374, %v3374
        %3379 = vadd.xlane.f32.xlu0 %v3375
        %v3380 = vpop.xlane.xlu0 %3379
        %3381 = vadd.xlane.f32.xlu0 %v3376
        %v3382 = vpop.xlane.xlu0 %3381
        %3383 = vadd.xlane.f32.xlu0 %v3377
        %v3384 = vpop.xlane.xlu0 %3383
        %3385 = vadd.xlane.f32.xlu0 %v3378
        %v3386 = vpop.xlane.xlu0 %3385
        %v3387 = vmul.f32 %v3380, %v2164
        %v3388 = vmul.f32 %v3382, %v2164
        %v3389 = vmul.f32 %v3384, %v2164
        %v3390 = vmul.f32 %v3386, %v2164
        %v3391 = vadd.f32 %v3387, 1e-05
        %v3392 = vadd.f32 %v3388, 1e-05
        %v3393 = vadd.f32 %v3389, 1e-05
        %v3394 = vadd.f32 %v3390, 1e-05
        %v3395 = vrsqrt.pop %v3391
        %v3396 = vmul.f32 %v3395, %v3391
        %v3397 = vmul.f32 %v3396, %v3395
        %v3398 = vmul.f32 0.5, %v3397
        %v3399 = vsub.f32 1.5, %v3398
        %v3400 = vmul.f32 %v3395, %v3399
        %vm3401 = vweird.f32 %v3391
        %vm3402 = vweird.f32 %v3395
        %vm3403 = vmor %vm3401, %vm3402
        %v3404 = vsel %vm3403, %v3395, %v3400
        %v3405 = vrsqrt.pop %v3392
        %v3406 = vmul.f32 %v3405, %v3392
        %v3407 = vmul.f32 %v3406, %v3405
        %v3408 = vmul.f32 0.5, %v3407
        %v3409 = vsub.f32 1.5, %v3408
        %v3410 = vmul.f32 %v3405, %v3409
        %vm3411 = vweird.f32 %v3392
        %vm3412 = vweird.f32 %v3405
        %vm3413 = vmor %vm3411, %vm3412
        %v3414 = vsel %vm3413, %v3405, %v3410
        %v3415 = vrsqrt.pop %v3393
        %v3416 = vmul.f32 %v3415, %v3393
        %v3417 = vmul.f32 %v3416, %v3415
        %v3418 = vmul.f32 0.5, %v3417
        %v3419 = vsub.f32 1.5, %v3418
        %v3420 = vmul.f32 %v3415, %v3419
        %vm3421 = vweird.f32 %v3393
        %vm3422 = vweird.f32 %v3415
        %vm3423 = vmor %vm3421, %vm3422
        %v3424 = vsel %vm3423, %v3415, %v3420
        %v3425 = vrsqrt.pop %v3394
        %v3426 = vmul.f32 %v3425, %v3394
        %v3427 = vmul.f32 %v3426, %v3425
        %v3428 = vmul.f32 0.5, %v3427
        %v3429 = vsub.f32 1.5, %v3428
        %v3430 = vmul.f32 %v3425, %v3429
        %vm3431 = vweird.f32 %v3394
        %vm3432 = vweird.f32 %v3425
        %vm3433 = vmor %vm3431, %vm3432
        %v3434 = vsel %vm3433, %v3425, %v3430
        %v3435 = vmul.f32 %v3371, %v3404
        %v3436 = vmul.f32 %v3372, %v3414
        %v3437 = vmul.f32 %v3373, %v3424
        %v3438 = vmul.f32 %v3374, %v3434
        %v3440 = vperm.slane %v3357, 0
        %v3442 = vmul.f32 %v3435, %v3440
        %v3443 = vmul.f32 %v3436, %v3440
        %v3444 = vmul.f32 %v3437, %v3440
        %v3445 = vmul.f32 %v3438, %v3440
        %v3447 = vperm.slane %v3358, 0
        %v3449 = vadd.f32 %v3442, %v3447
        %v3450 = vadd.f32 %v3443, %v3447
        %v3451 = vadd.f32 %v3444, %v3447
        %v3452 = vadd.f32 %v3445, %v3447
        %v3453 = vpack.c.bf16 %v3450, %v3449
        %v3454 = vpack.c.bf16 %v3452, %v3451
        %v3455 = vld [vmem:[#allocation19] sm:$0xff]
        %v3456 = vld [vmem:[#allocation19 + $0x8] sm:$0xff]
        %v3457 = vld [vmem:[#allocation19 + $0x10] sm:$0xff]
        %v3458 = vld [vmem:[#allocation19 + $0x18] sm:$0xff]
        %v3459 = vld [vmem:[#allocation19 + $0x20] sm:$0xff]
        %v3460 = vld [vmem:[#allocation19 + $0x28] sm:$0xff]
        %v3461 = vld [vmem:[#allocation19 + $0x30] sm:$0xff]
        %v3462 = vld [vmem:[#allocation19 + $0x38] sm:$0xff]
        %v3463 = vld [vmem:[#allocation19 + $0x40] sm:$0xff]
        %v3464 = vld [vmem:[#allocation19 + $0x48] sm:$0xff]
        %v3465 = vld [vmem:[#allocation19 + $0x50] sm:$0xff]
        %v3466 = vld [vmem:[#allocation19 + $0x58] sm:$0xff]
        %v3467 = vld [vmem:[#allocation19 + $0x60] sm:$0xff]
        %v3468 = vld [vmem:[#allocation19 + $0x68] sm:$0xff]
        %v3469 = vld [vmem:[#allocation19 + $0x70] sm:$0xff]
        %v3470 = vld [vmem:[#allocation19 + $0x78] sm:$0xff]
        %v3471 = vld [vmem:[%s20] sm:$0x3]
        %v3473 = vperm.slane %v3471, 0
        %v3474 = vperm.slane %v3471, 1
        %v3493 = vunpack.c.l.b16 %v3455
        %v3494 = vunpack.c.h.b16 %v3455
        %v3495 = vunpack.c.l.b16 %v3456
        %v3496 = vunpack.c.h.b16 %v3456
        %v3497 = vunpack.c.l.b16 %v3457
        %v3498 = vunpack.c.h.b16 %v3457
        %v3499 = vunpack.c.l.b16 %v3458
        %v3500 = vunpack.c.h.b16 %v3458
        %v3501 = vunpack.c.l.b16 %v3459
        %v3502 = vunpack.c.h.b16 %v3459
        %v3503 = vunpack.c.l.b16 %v3460
        %v3504 = vunpack.c.h.b16 %v3460
        %v3505 = vunpack.c.l.b16 %v3461
        %v3506 = vunpack.c.h.b16 %v3461
        %v3507 = vunpack.c.l.b16 %v3462
        %v3508 = vunpack.c.h.b16 %v3462
        %v3509 = vunpack.c.l.b16 %v3463
        %v3510 = vunpack.c.h.b16 %v3463
        %v3511 = vunpack.c.l.b16 %v3464
        %v3512 = vunpack.c.h.b16 %v3464
        %v3513 = vunpack.c.l.b16 %v3465
        %v3514 = vunpack.c.h.b16 %v3465
        %v3515 = vunpack.c.l.b16 %v3466
        %v3516 = vunpack.c.h.b16 %v3466
        %v3517 = vunpack.c.l.b16 %v3467
        %v3518 = vunpack.c.h.b16 %v3467
        %v3519 = vunpack.c.l.b16 %v3468
        %v3520 = vunpack.c.h.b16 %v3468
        %v3521 = vunpack.c.l.b16 %v3469
        %v3522 = vunpack.c.h.b16 %v3469
        %v3523 = vunpack.c.l.b16 %v3470
        %v3524 = vunpack.c.h.b16 %v3470
        %v3525 = vpack.c.b16 %v3495, %v3493
        %v3526 = vpack.c.b16 %v3496, %v3494
        %v3527 = vpack.c.b16 %v3499, %v3497
        %v3528 = vpack.c.b16 %v3500, %v3498
        %v3529 = vpack.c.b16 %v3503, %v3501
        %v3530 = vpack.c.b16 %v3504, %v3502
        %v3531 = vpack.c.b16 %v3507, %v3505
        %v3532 = vpack.c.b16 %v3508, %v3506
        %v3533 = vpack.c.b16 %v3511, %v3509
        %v3534 = vpack.c.b16 %v3512, %v3510
        %v3535 = vpack.c.b16 %v3515, %v3513
        %v3536 = vpack.c.b16 %v3516, %v3514
        %v3537 = vpack.c.b16 %v3519, %v3517
        %v3538 = vpack.c.b16 %v3520, %v3518
        %v3539 = vpack.c.b16 %v3523, %v3521
        %v3540 = vpack.c.b16 %v3524, %v3522
        %3557 = vmatpush.bf16.msra.mxu0 %v3539
        %3558 = vmatpush.bf16.msra.mxu0 %v3537
        %3559 = vmatpush.bf16.msra.mxu0 %v3535
        %3560 = vmatpush.bf16.msra.mxu0 %v3533
        %3561 = vmatpush.bf16.msra.mxu0 %v3531
        %3562 = vmatpush.bf16.msra.mxu0 %v3529
        %3563 = vmatpush.bf16.msra.mxu0 %v3527
        %3564 = vmatpush.bf16.msra.mxu0 %v3525
        %3565 = vmatmul.bf16.gmra.mxu0 %v3453
        %v3566 = vpop.f32.mrf.mxu0
        %v3567 = vadd.f32 %v3473, %v3566
        %v3568 = vpop.f32.mrf.mxu0
        %v3569 = vadd.f32 %v3473, %v3568
        %3570 = vmatmul.bf16.gmra.mxu0 %v3454
        %v3571 = vpop.f32.mrf.mxu0
        %v3572 = vadd.f32 %v3473, %v3571
        %v3573 = vpop.f32.mrf.mxu0
        %v3574 = vadd.f32 %v3473, %v3573
        %3575 = vdwg.mxu0
        %3576 = vmatpush.bf16.msra.mxu0 %v3540
        %3577 = vmatpush.bf16.msra.mxu0 %v3538
        %3578 = vmatpush.bf16.msra.mxu0 %v3536
        %3579 = vmatpush.bf16.msra.mxu0 %v3534
        %3580 = vmatpush.bf16.msra.mxu0 %v3532
        %3581 = vmatpush.bf16.msra.mxu0 %v3530
        %3582 = vmatpush.bf16.msra.mxu0 %v3528
        %3583 = vmatpush.bf16.msra.mxu0 %v3526
        %3584 = vmatmul.bf16.gmra.mxu0 %v3453
        %v3585 = vpop.f32.mrf.mxu0
        %v3586 = vadd.f32 %v3474, %v3585
        %v3587 = vpop.f32.mrf.mxu0
        %v3588 = vadd.f32 %v3474, %v3587
        %3589 = vmatmul.bf16.gmra.mxu0 %v3454
        %v3590 = vpop.f32.mrf.mxu0
        %v3591 = vadd.f32 %v3474, %v3590
        %v3592 = vpop.f32.mrf.mxu0
        %v3593 = vadd.f32 %v3474, %v3592
        %3594 = vdwg.mxu0
        %v3595 = vmax.f32 %v3567, 0.0
        %v3596 = vmax.f32 %v3586, 0.0
        %v3597 = vmax.f32 %v3569, 0.0
        %v3598 = vmax.f32 %v3588, 0.0
        %v3599 = vmax.f32 %v3572, 0.0
        %v3600 = vmax.f32 %v3591, 0.0
        %v3601 = vmax.f32 %v3574, 0.0
        %v3602 = vmax.f32 %v3593, 0.0
        %v3603 = vpack.c.bf16 %v3597, %v3595
        %v3604 = vpack.c.bf16 %v3598, %v3596
        %v3605 = vpack.c.bf16 %v3601, %v3599
        %v3606 = vpack.c.bf16 %v3602, %v3600
        %v3607 = vld [vmem:[#allocation20] sm:$0xf]
        %v3608 = vld [vmem:[#allocation20 + $0x4] sm:$0xf]
        %v3609 = vld [vmem:[#allocation20 + $0x8] sm:$0xf]
        %v3610 = vld [vmem:[#allocation20 + $0xc] sm:$0xf]
        %v3611 = vld [vmem:[#allocation20 + $0x10] sm:$0xf]
        %v3612 = vld [vmem:[#allocation20 + $0x14] sm:$0xf]
        %v3613 = vld [vmem:[#allocation20 + $0x18] sm:$0xf]
        %v3614 = vld [vmem:[#allocation20 + $0x1c] sm:$0xf]
        %v3615 = vld [vmem:[#allocation20 + $0x20] sm:$0xf]
        %v3616 = vld [vmem:[#allocation20 + $0x24] sm:$0xf]
        %v3617 = vld [vmem:[#allocation20 + $0x28] sm:$0xf]
        %v3618 = vld [vmem:[#allocation20 + $0x2c] sm:$0xf]
        %v3619 = vld [vmem:[#allocation20 + $0x30] sm:$0xf]
        %v3620 = vld [vmem:[#allocation20 + $0x34] sm:$0xf]
        %v3621 = vld [vmem:[#allocation20 + $0x38] sm:$0xf]
        %v3622 = vld [vmem:[#allocation20 + $0x3c] sm:$0xf]
        %v3623 = vld [vmem:[#allocation20 + $0x40] sm:$0xf]
        %v3624 = vld [vmem:[#allocation20 + $0x44] sm:$0xf]
        %v3625 = vld [vmem:[#allocation20 + $0x48] sm:$0xf]
        %v3626 = vld [vmem:[#allocation20 + $0x4c] sm:$0xf]
        %v3627 = vld [vmem:[#allocation20 + $0x50] sm:$0xf]
        %v3628 = vld [vmem:[#allocation20 + $0x54] sm:$0xf]
        %v3629 = vld [vmem:[#allocation20 + $0x58] sm:$0xf]
        %v3630 = vld [vmem:[#allocation20 + $0x5c] sm:$0xf]
        %v3631 = vld [vmem:[#allocation20 + $0x60] sm:$0xf]
        %v3632 = vld [vmem:[#allocation20 + $0x64] sm:$0xf]
        %v3633 = vld [vmem:[#allocation20 + $0x68] sm:$0xf]
        %v3634 = vld [vmem:[#allocation20 + $0x6c] sm:$0xf]
        %v3635 = vld [vmem:[#allocation20 + $0x70] sm:$0xf]
        %v3636 = vld [vmem:[#allocation20 + $0x74] sm:$0xf]
        %v3637 = vld [vmem:[#allocation20 + $0x78] sm:$0xf]
        %v3638 = vld [vmem:[#allocation20 + $0x7c] sm:$0xf]
        %v3639 = vld [vmem:[%s22] sm:$0x1]
        %v3641 = vperm.slane %v3639, 0
        %v3675 = vunpack.c.l.b16 %v3607
        %v3676 = vunpack.c.l.b16 %v3608
        %v3677 = vunpack.c.l.b16 %v3609
        %v3678 = vunpack.c.l.b16 %v3610
        %v3679 = vunpack.c.l.b16 %v3611
        %v3680 = vunpack.c.l.b16 %v3612
        %v3681 = vunpack.c.l.b16 %v3613
        %v3682 = vunpack.c.l.b16 %v3614
        %v3683 = vunpack.c.l.b16 %v3615
        %v3684 = vunpack.c.l.b16 %v3616
        %v3685 = vunpack.c.l.b16 %v3617
        %v3686 = vunpack.c.l.b16 %v3618
        %v3687 = vunpack.c.l.b16 %v3619
        %v3688 = vunpack.c.l.b16 %v3620
        %v3689 = vunpack.c.l.b16 %v3621
        %v3690 = vunpack.c.l.b16 %v3622
        %v3691 = vunpack.c.l.b16 %v3623
        %v3692 = vunpack.c.l.b16 %v3624
        %v3693 = vunpack.c.l.b16 %v3625
        %v3694 = vunpack.c.l.b16 %v3626
        %v3695 = vunpack.c.l.b16 %v3627
        %v3696 = vunpack.c.l.b16 %v3628
        %v3697 = vunpack.c.l.b16 %v3629
        %v3698 = vunpack.c.l.b16 %v3630
        %v3699 = vunpack.c.l.b16 %v3631
        %v3700 = vunpack.c.l.b16 %v3632
        %v3701 = vunpack.c.l.b16 %v3633
        %v3702 = vunpack.c.l.b16 %v3634
        %v3703 = vunpack.c.l.b16 %v3635
        %v3704 = vunpack.c.l.b16 %v3636
        %v3705 = vunpack.c.l.b16 %v3637
        %v3706 = vunpack.c.l.b16 %v3638
        %v3707 = vpack.c.b16 %v3676, %v3675
        %v3708 = vpack.c.b16 %v3678, %v3677
        %v3709 = vpack.c.b16 %v3680, %v3679
        %v3710 = vpack.c.b16 %v3682, %v3681
        %v3711 = vpack.c.b16 %v3684, %v3683
        %v3712 = vpack.c.b16 %v3686, %v3685
        %v3713 = vpack.c.b16 %v3688, %v3687
        %v3714 = vpack.c.b16 %v3690, %v3689
        %v3715 = vpack.c.b16 %v3692, %v3691
        %v3716 = vpack.c.b16 %v3694, %v3693
        %v3717 = vpack.c.b16 %v3696, %v3695
        %v3718 = vpack.c.b16 %v3698, %v3697
        %v3719 = vpack.c.b16 %v3700, %v3699
        %v3720 = vpack.c.b16 %v3702, %v3701
        %v3721 = vpack.c.b16 %v3704, %v3703
        %v3722 = vpack.c.b16 %v3706, %v3705
        %3739 = vmatpush.bf16.msra.mxu0 %v3714
        %3740 = vmatpush.bf16.msra.mxu0 %v3713
        %3741 = vmatpush.bf16.msra.mxu0 %v3712
        %3742 = vmatpush.bf16.msra.mxu0 %v3711
        %3743 = vmatpush.bf16.msra.mxu0 %v3710
        %3744 = vmatpush.bf16.msra.mxu0 %v3709
        %3745 = vmatpush.bf16.msra.mxu0 %v3708
        %3746 = vmatpush.bf16.msra.mxu0 %v3707
        %3747 = vmatmul.bf16.gmra.mxu0 %v3603
        %v3748 = vpop.f32.mrf.mxu0
        %v3749 = vadd.f32 %v3641, %v3748
        %v3750 = vpop.f32.mrf.mxu0
        %v3751 = vadd.f32 %v3641, %v3750
        %3752 = vmatmul.bf16.gmra.mxu0 %v3605
        %v3753 = vpop.f32.mrf.mxu0
        %v3754 = vadd.f32 %v3641, %v3753
        %v3755 = vpop.f32.mrf.mxu0
        %v3756 = vadd.f32 %v3641, %v3755
        %3757 = vdwg.mxu0
        %3758 = vmatpush.bf16.msra.mxu0 %v3722
        %3759 = vmatpush.bf16.msra.mxu0 %v3721
        %3760 = vmatpush.bf16.msra.mxu0 %v3720
        %3761 = vmatpush.bf16.msra.mxu0 %v3719
        %3762 = vmatpush.bf16.msra.mxu0 %v3718
        %3763 = vmatpush.bf16.msra.mxu0 %v3717
        %3764 = vmatpush.bf16.msra.mxu0 %v3716
        %3765 = vmatpush.bf16.msra.mxu0 %v3715
        %3766 = vmatmul.bf16.gmra.mxu0 %v3604
        %v3767 = vpop.f32.mrf.mxu0
        %v3768 = vadd.f32 %v3749, %v3767
        %v3769 = vpop.f32.mrf.mxu0
        %v3770 = vadd.f32 %v3751, %v3769
        %3771 = vmatmul.bf16.gmra.mxu0 %v3606
        %v3772 = vpop.f32.mrf.mxu0
        %v3773 = vadd.f32 %v3754, %v3772
        %v3774 = vpop.f32.mrf.mxu0
        %v3775 = vadd.f32 %v3756, %v3774
        %3776 = vdwg.mxu0
        %v3777 = vadd.f32 %v3449, %v3768
        %v3778 = vadd.f32 %v3450, %v3770
        %v3779 = vadd.f32 %v3451, %v3773
        %v3780 = vadd.f32 %v3452, %v3775
        %v3781 = vld [vmem:[%s23] sm:$0x1]
        %v3782 = vld [vmem:[%s24] sm:$0x1]
        %3783 = vadd.xlane.f32.xlu0 %v3777
        %v3784 = vpop.xlane.xlu0 %3783
        %3785 = vadd.xlane.f32.xlu0 %v3778
        %v3786 = vpop.xlane.xlu0 %3785
        %3787 = vadd.xlane.f32.xlu0 %v3779
        %v3788 = vpop.xlane.xlu0 %3787
        %3789 = vadd.xlane.f32.xlu0 %v3780
        %v3790 = vpop.xlane.xlu0 %3789
        %v3791 = vmul.f32 %v3784, %v2164
        %v3792 = vmul.f32 %v3786, %v2164
        %v3793 = vmul.f32 %v3788, %v2164
        %v3794 = vmul.f32 %v3790, %v2164
        %v3795 = vsub.f32 %v3777, %v3791
        %v3796 = vsub.f32 %v3778, %v3792
        %v3797 = vsub.f32 %v3779, %v3793
        %v3798 = vsub.f32 %v3780, %v3794
        %v3799 = vmul.f32 %v3795, %v3795
        %v3800 = vmul.f32 %v3796, %v3796
        %v3801 = vmul.f32 %v3797, %v3797
        %v3802 = vmul.f32 %v3798, %v3798
        %3803 = vadd.xlane.f32.xlu0 %v3799
        %v3804 = vpop.xlane.xlu0 %3803
        %3805 = vadd.xlane.f32.xlu0 %v3800
        %v3806 = vpop.xlane.xlu0 %3805
        %3807 = vadd.xlane.f32.xlu0 %v3801
        %v3808 = vpop.xlane.xlu0 %3807
        %3809 = vadd.xlane.f32.xlu0 %v3802
        %v3810 = vpop.xlane.xlu0 %3809
        %v3811 = vmul.f32 %v3804, %v2164
        %v3812 = vmul.f32 %v3806, %v2164
        %v3813 = vmul.f32 %v3808, %v2164
        %v3814 = vmul.f32 %v3810, %v2164
        %v3815 = vadd.f32 %v3811, 1e-05
        %v3816 = vadd.f32 %v3812, 1e-05
        %v3817 = vadd.f32 %v3813, 1e-05
        %v3818 = vadd.f32 %v3814, 1e-05
        %v3819 = vrsqrt.pop %v3815
        %v3820 = vmul.f32 %v3819, %v3815
        %v3821 = vmul.f32 %v3820, %v3819
        %v3822 = vmul.f32 0.5, %v3821
        %v3823 = vsub.f32 1.5, %v3822
        %v3824 = vmul.f32 %v3819, %v3823
        %vm3825 = vweird.f32 %v3815
        %vm3826 = vweird.f32 %v3819
        %vm3827 = vmor %vm3825, %vm3826
        %v3828 = vsel %vm3827, %v3819, %v3824
        %v3829 = vrsqrt.pop %v3816
        %v3830 = vmul.f32 %v3829, %v3816
        %v3831 = vmul.f32 %v3830, %v3829
        %v3832 = vmul.f32 0.5, %v3831
        %v3833 = vsub.f32 1.5, %v3832
        %v3834 = vmul.f32 %v3829, %v3833
        %vm3835 = vweird.f32 %v3816
        %vm3836 = vweird.f32 %v3829
        %vm3837 = vmor %vm3835, %vm3836
        %v3838 = vsel %vm3837, %v3829, %v3834
        %v3839 = vrsqrt.pop %v3817
        %v3840 = vmul.f32 %v3839, %v3817
        %v3841 = vmul.f32 %v3840, %v3839
        %v3842 = vmul.f32 0.5, %v3841
        %v3843 = vsub.f32 1.5, %v3842
        %v3844 = vmul.f32 %v3839, %v3843
        %vm3845 = vweird.f32 %v3817
        %vm3846 = vweird.f32 %v3839
        %vm3847 = vmor %vm3845, %vm3846
        %v3848 = vsel %vm3847, %v3839, %v3844
        %v3849 = vrsqrt.pop %v3818
        %v3850 = vmul.f32 %v3849, %v3818
        %v3851 = vmul.f32 %v3850, %v3849
        %v3852 = vmul.f32 0.5, %v3851
        %v3853 = vsub.f32 1.5, %v3852
        %v3854 = vmul.f32 %v3849, %v3853
        %vm3855 = vweird.f32 %v3818
        %vm3856 = vweird.f32 %v3849
        %vm3857 = vmor %vm3855, %vm3856
        %v3858 = vsel %vm3857, %v3849, %v3854
        %v3859 = vmul.f32 %v3795, %v3828
        %v3860 = vmul.f32 %v3796, %v3838
        %v3861 = vmul.f32 %v3797, %v3848
        %v3862 = vmul.f32 %v3798, %v3858
        %v3864 = vperm.slane %v3781, 0
        %v3866 = vmul.f32 %v3859, %v3864
        %v3867 = vmul.f32 %v3860, %v3864
        %v3868 = vmul.f32 %v3861, %v3864
        %v3869 = vmul.f32 %v3862, %v3864
        %v3871 = vperm.slane %v3782, 0
        %v3873 = vadd.f32 %v3866, %v3871
        %v3874 = vadd.f32 %v3867, %v3871
        %v3875 = vadd.f32 %v3868, %v3871
        %v3876 = vadd.f32 %v3869, %v3871
        %v3877 = vpack.c.bf16 %v3873, %v3873
        %v3878 = vpack.c.bf16 %v3874, %v3874
        %v3879 = vpack.c.bf16 %v3875, %v3875
        %v3880 = vpack.c.bf16 %v3876, %v3876
        %3881 = vst [vmem:[%s1013] sm:$0xf] %v3877
        %3882 = vst [vmem:[%s1013 + $0x4] sm:$0xf] %v3878
        %3883 = vst [vmem:[%s1013 + $0x8] sm:$0xf] %v3879
        %3884 = vst [vmem:[%s1013 + $0xc] sm:$0xf] %v3880
        %s3885 = sand.u32 %s598, 1
        %s3886 = scalar_lea.sflag [#allocation4], %s3885
        %s3887 = sand.u32 %s598, 1
        %s3888 = smul.addr %s3887, 16
        %s3889 = scalar_lea.vmem [#allocation22], %s3888
        // Predicated region
        $region169: #{tpu_custom_call.1} parent=119 // pred_check
          %p3890 = pneg %p608
        $region170: #{tpu_custom_call.1} parent=119 // pred_check_branch
          %3892 = sbr.rel (%p3890) target = $region172
        $region171: #{tpu_custom_call.1} parent=119 // pred_region
          %s3893 = smul.u32 2, %s50
          %3895 = vsyncadd %s3886, 0
          %s3896 = smul.addr %s3893, 2
          %s3897 = smul.addr %s3896, 4
          %s3898 = scalar_lea.hbm %s25, %s3897
          %s3899 = sshll.u32 %s3889, 4
          %s3900 = int_to_ptr.vmem [resolvable:$true] %s3899
          %s3901 = sshll.u32 %s3898, 4
          %s3902 = int_to_ptr.hbm [resolvable:$true] %s3901
          %3907 = dma.vmem_to_hbm [thread:$0]  %s3900, 256, %s3902, %s3886, 64, 64, 4
        $region172: #{tpu_custom_call.1} parent=119 // pred_fallthru
          _
      $region120: #{tpu_custom_call.1} parent=5 // pred_fallthru
        _
      %p3908 = scmp.le.s32.totalorder 2, %s45
      // Predicated region
      $region173: #{tpu_custom_call.1} parent=5 // pred_check
        %p3909 = pneg %p3908
      $region174: #{tpu_custom_call.1} parent=5 // pred_check_branch
        %3911 = sbr.rel (%p3909) target = $region176
      $region175: #{tpu_custom_call.1} parent=5 // pred_region
        %s3912 = ssub.s32 %s45, 2
        // Predicated region
        $region177: #{tpu_custom_call.1} parent=175 // pred_check
          %p3913 = pneg %p614
        $region178: #{tpu_custom_call.1} parent=175 // pred_check_branch
          %3915 = sbr.rel (%p3913) target = $region180
        $region179: #{tpu_custom_call.1} parent=175 // pred_region
          %s3916 = sand.u32 %s599, 1
          %s3917 = scalar_lea.sflag [#allocation4], %s3916
          %s3918 = sand.u32 %s599, 1
          %s3919 = smul.addr %s3918, 16
          %s3920 = scalar_lea.vmem [#allocation22], %s3919
          %3922 = dma.done %s3917, 256
        $region180: #{tpu_custom_call.1} parent=175 // pred_fallthru
          _
      $region176: #{tpu_custom_call.1} parent=5 // pred_fallthru
        _
    $region6: #{tpu_custom_call.1} parent=1 // loop_footer
      %s49 = sadd.s32 1, %s45
    $region7: #{tpu_custom_call.1} parent=1 // loop_footer_branch
      %44 = sbr.rel target = $region3
    $region8: #{tpu_custom_call.1} parent=1 // loop_exit
      _
    %3923 = vsyncpa [#allocation3], 1
    %s3924 = scalar_lea.sflag [#allocation3], 1
    %3925 = vsyncpa %s3924, 1
    %3926 = vsyncpa [#allocation6], 1
    %s3927 = scalar_lea.sflag [#allocation6], 1
    %3928 = vsyncpa %s3927, 1
    %3929 = vsyncpa [#allocation9], 1
    %3930 = vsyncpa [#allocation12], 1
    %3931 = vsyncpa [#allocation15], 1
    %3932 = vsyncpa [#allocation18], 1
    %3933 = vsyncpa [#allocation21], 1
    %3934 = vsyncpa [#allocation4], 1
    %s3935 = scalar_lea.sflag [#allocation4], 1
    %3936 = vsyncpa %s3935, 1

</llo_original>
